<compile_context>
chip_gen: v7x
topology: tpu7x:2x2x1
jax: 0.10.0
libtpu: 0.0.40
codegen_flags: <defaults>
</compile_context>

<pallas_src>
import functools
import math

import jax
import jax.numpy as jnp
from jax.experimental import pallas as pl
from jax.experimental.pallas import tpu as pltpu

H_DIM = 128          # actor hidden / embed dim
C_DIM = 32           # critic hidden dim (attend_dim == C_DIM for 1 head)
K_ROUNDS = 3         # message-passing rounds in the actor
LEAKY_SLOPE = 0.01
BN_EPS = 1e-5


# ----------------------------------------------------------------------------
# small helpers
# ----------------------------------------------------------------------------
def _leaky(x):
    return jnp.where(x > 0, x, LEAKY_SLOPE * x)


def _bdot(x, w):
    """bf16 MXU matmul with f32 accumulation (weights are pre-cast to bf16)."""
    return jnp.dot(x.astype(jnp.bfloat16), w, preferred_element_type=jnp.float32)


def _wspec(arr):
    """Constant (grid-invariant) full-block BlockSpec for a weight/bias."""
    nd = arr.ndim
    return pl.BlockSpec(arr.shape, lambda *_: (0,) * nd)


def _softmax_combine(logits, values):
    """Stable softmax over a small static list of (tb,1) logits; returns the
    softmax-weighted sum of `values`.  Denominator via EUP approx reciprocal."""
    m = logits[0]
    for l in logits[1:]:
        m = jnp.maximum(m, l)
    num = jnp.zeros_like(values[0])
    den = jnp.zeros_like(m)
    for l, v in zip(logits, values):
        w = jnp.exp(l - m)
        den = den + w
        num = num + w * v
    return num * pl.reciprocal(den, approx=True)


def _row_tile(n):
    """Row tile: full block for small batches, 256-row tiles otherwise
    (256 rows keeps per-tile activations far below v7x's 64 MiB VMEM)."""
    return 256 if (n >= 512 and n % 256 == 0) else n


# ----------------------------------------------------------------------------
# Kernel 1: sa-encoder front end (encoder + entity attention + entity update)
# ----------------------------------------------------------------------------
def _sa_front_kernel(ai_ref, lm_ref,
                     enc_w, enc_b, ee_w, ee_b,
                     ent_wq, ent_wkv, ent_wo,
                     ent_upd_wh, ent_upd_wm, ent_upd_b,
                     o_ref, *, n_entities, norm):
    ai = ai_ref[...]                                                   # (tb, 4+adim)
    lm = lm_ref[...]                                                   # (tb, 2*n_ent)

    h = jnp.maximum(_bdot(ai, enc_w[...]) + enc_b[...], 0.0)           # (tb, 128)
    q = _bdot(h, ent_wq[...]) * norm                                   # (tb, 128)

    logits, vals = [], []
    for e in range(n_entities):                                        # static loop
        he = jnp.maximum(_bdot(lm[:, 2 * e:2 * e + 2], ee_w[...]) + ee_b[...], 0.0)
        kv = _bdot(he, ent_wkv[...])                                   # (tb, 256) = K|V
        logits.append(jnp.sum(q * kv[:, :H_DIM], axis=-1, keepdims=True))
        vals.append(kv[:, H_DIM:])
    em = _softmax_combine(logits, vals)                                # (tb, 128)
    em = _bdot(em, ent_wo[...])                                        # (tb, 128)

    o_ref[...] = jnp.maximum(
        _bdot(h, ent_upd_wh[...]) + _bdot(em, ent_upd_wm[...]) + ent_upd_b[...], 0.0)


def sa_front(agent_inp, landmark, pp, *, tb):
    """agent_inp: (n_agents, B, 4+adim); landmark: (n_agents, B, 2*n_entities).
    Returns h in wide layout (B, n_agents*H_DIM): agent j -> lanes [128j, 128j+128)."""
    n_agents, B, in_dim = agent_inp.shape
    n_ent = landmark.shape[-1] // 2
    weights = (pp["enc_w"], pp["enc_b"], pp["ee_w"], pp["ee_b"],
               pp["ent_wq"], pp["ent_wkv"], pp["ent_wo"],
               pp["ent_upd_wh"], pp["ent_upd_wm"], pp["ent_upd_b"])
    return pl.pallas_call(
        functools.partial(_sa_front_kernel, n_entities=n_ent,
                          norm=1.0 / math.sqrt(H_DIM)),
        out_shape=jax.ShapeDtypeStruct((B, n_agents * H_DIM), jnp.float32),
        grid=(n_agents, B // tb),
        in_specs=[pl.BlockSpec((None, tb, in_dim), lambda a, b: (a, b, 0)),
                  pl.BlockSpec((None, tb, 2 * n_ent), lambda a, b: (a, b, 0))]
                 + [_wspec(w) for w in weights],
        # agent -> lane-group, batch -> rows: the transpose between the flat
        # per-agent layout and the wide layout is folded into the output DMA.
        out_specs=pl.BlockSpec((tb, H_DIM), lambda a, b: (b, a)),
        compiler_params=pltpu.CompilerParams(
            dimension_semantics=("parallel", "parallel")),
    )(agent_inp, landmark, *weights)


# ----------------------------------------------------------------------------
# Kernel 2: all K=3 message-passing rounds fused, h resident on-chip
# ----------------------------------------------------------------------------
def _msg_rounds_kernel(h_ref, wqkv, wo, upd_wh, upd_wm, upd_b, o_ref,
                       *, n_agents, norm):
    h = [h_ref[:, j * H_DIM:(j + 1) * H_DIM] for j in range(n_agents)]
    for _ in range(K_ROUNDS):                                          # static unroll
        Q, K, V = [], [], []
        for j in range(n_agents):
            qkv = _bdot(h[j], wqkv[...])                               # (tb, 384)
            Q.append(qkv[:, :H_DIM] * norm)
            K.append(qkv[:, H_DIM:2 * H_DIM])
            V.append(qkv[:, 2 * H_DIM:])
        new_h = []
        for i in range(n_agents):
            logits = [jnp.sum(Q[i] * K[j], axis=-1, keepdims=True)
                      for j in range(n_agents)]
            msg = _softmax_combine(logits, V)                          # (tb, 128)
            msg = _bdot(msg, wo[...])
            new_h.append(jnp.maximum(
                _bdot(h[i], upd_wh[...]) + _bdot(msg, upd_wm[...]) + upd_b[...], 0.0))
        h = new_h
    o_ref[...] = jnp.concatenate(h, axis=-1)


def msg_rounds(h_wide, pp, *, tb, n_agents):
    B, W = h_wide.shape
    weights = (pp["msg_wqkv"], pp["msg_wo"], pp["upd_wh"], pp["upd_wm"], pp["upd_b"])
    return pl.pallas_call(
        functools.partial(_msg_rounds_kernel, n_agents=n_agents,
                          norm=1.0 / math.sqrt(H_DIM)),
        out_shape=jax.ShapeDtypeStruct((B, W), jnp.float32),
        grid=(B // tb,),
        in_specs=[pl.BlockSpec((tb, W), lambda i: (i, 0))]
                 + [_wspec(w) for w in weights],
        out_specs=pl.BlockSpec((tb, W), lambda i: (i, 0)),
        compiler_params=pltpu.CompilerParams(dimension_semantics=("parallel",)),
    )(h_wide, *weights)


# ----------------------------------------------------------------------------
# Kernel 3: full-batch BatchNorm statistics (train-mode, affine=False)
# ----------------------------------------------------------------------------
def _bn_stats_kernel(x_ref, mean_ref, rstd_ref):
    x = x_ref[...]
    mean = jnp.mean(x, axis=0, keepdims=True)
    var = jnp.mean((x - mean) ** 2, axis=0, keepdims=True)   # biased, as in BN train
    mean_ref[...] = mean
    rstd_ref[...] = jax.lax.rsqrt(var + BN_EPS)


def bn_stats(x):
    # One full block so downstream row-tiling can never change the BN result.
    B, D = x.shape
    return pl.pallas_call(
        _bn_stats_kernel,
        out_shape=(jax.ShapeDtypeStruct((1, D), jnp.float32),
                   jax.ShapeDtypeStruct((1, D), jnp.float32)),
    )(x)


# ----------------------------------------------------------------------------
# Kernel 4: fused critic tail (state enc, key|val|sel, attention, c1, c2)
# ----------------------------------------------------------------------------
def _critic_tail_kernel(s_ref, mean_ref, rstd_ref, h_ref,
                        senc_w, senc_b, sel_w, kv_w, kv_b,
                        c1_w, c1_b, c2_w, c2_b, o_ref,
                        *, n_agents, agent_id, scale):
    s_n = (s_ref[...] - mean_ref[...]) * rstd_ref[...]                 # BN (affine=False)
    s_enc = _leaky(_bdot(s_n, senc_w[...]) + senc_b[...])              # (tb, 32)
    sel = _bdot(s_enc, sel_w[...]) * scale                             # (tb, 32)

    logits, vals = [], []
    for j in range(n_agents):                                          # static loop
        if j == agent_id:
            continue
        kv = _bdot(h_ref[:, j * H_DIM:(j + 1) * H_DIM], kv_w[...]) + kv_b[...]
        logits.append(jnp.sum(sel * kv[:, :C_DIM], axis=-1, keepdims=True))
        vals.append(_leaky(kv[:, C_DIM:]))
    other = _softmax_combine(logits, vals)                             # (tb, 32)

    critic_in = jnp.concatenate([s_enc, other], axis=-1)               # (tb, 64)
    hq = _leaky(_bdot(critic_in, c1_w[...]) + c1_b[...])               # (tb, 32)
    o_ref[...] = _bdot(hq, c2_w[...]) + c2_b[...]                      # (tb, adim)


def critic_tail(s_ag, mean, rstd, h_wide, pp, *, tb, n_agents, agent_id):
    B, sdim = s_ag.shape
    W = h_wide.shape[1]
    adim = pp["c2_b"].shape[1]
    weights = (pp["senc_w"], pp["senc_b"], pp["sel_w"], pp["kv_w"], pp["kv_b"],
               pp["c1_w"], pp["c1_b"], pp["c2_w"], pp["c2_b"])
    return pl.pallas_call(
        functools.partial(_critic_tail_kernel, n_agents=n_agents,
                          agent_id=agent_id, scale=1.0 / math.sqrt(C_DIM)),
        out_shape=jax.ShapeDtypeStruct((B, adim), jnp.float32),
        grid=(B // tb,),
        in_specs=[pl.BlockSpec((tb, sdim), lambda i: (i, 0)),
                  pl.BlockSpec((1, sdim), lambda i: (0, 0)),
                  pl.BlockSpec((1, sdim), lambda i: (0, 0)),
                  pl.BlockSpec((tb, W), lambda i: (i, 0))]
                 + [_wspec(w) for w in weights],
        out_specs=pl.BlockSpec((tb, adim), lambda i: (i, 0)),
        compiler_params=pltpu.CompilerParams(dimension_semantics=("parallel",)),
    )(s_ag, mean, rstd, h_wide, *weights)


# ----------------------------------------------------------------------------
# Forward pass (glue in plain JAX, compute in the fused kernels above)
# ----------------------------------------------------------------------------
def attention_critic_forward(pp, s, a, agent_id):
    """s: (n_agents, B, sdim), a: (n_agents, B, adim) -> q: (B, 1)."""
    n_agents, B, sdim = s.shape
    adim = a.shape[2]
    assert adim == 2, "reference code asserts action dim == 2"
    tb = _row_tile(B)

    # ---- Attention_Actor (sa_encoder, with_action=True) front end ----------
    agent_inp = jnp.concatenate([s[..., :4], a], axis=-1)              # (n_ag, B, 6)
    landmark = s[..., sdim - 2 * n_agents:]                            # (n_ag, B, 2*n_ent)
    h_wide = sa_front(agent_inp, landmark, pp, tb=tb)                  # (B, n_ag*128)

    # ---- K=3 message-passing rounds (single fused kernel) ------------------
    h_wide = msg_rounds(h_wide, pp, tb=tb, n_agents=n_agents)          # (B, n_ag*128)

    # ---- critic tail --------------------------------------------------------
    s_ag = s[agent_id]                                                 # (B, sdim)
    mean, rstd = bn_stats(s_ag)                                        # full-batch stats
    all_q = critic_tail(s_ag, mean, rstd, h_wide, pp, tb=tb,
                        n_agents=n_agents, agent_id=agent_id)          # (B, adim)

    int_acs = jnp.argmax(a[agent_id], axis=1)                          # (B,)
    q = jnp.take_along_axis(all_q, int_acs[:, None], axis=1)           # (B, 1)
    return q


# ----------------------------------------------------------------------------
# Deterministic parameters (logical f32) + packing into kernel-ready layout
# ----------------------------------------------------------------------------
def init_params(key, sdim, adim):
    def nrm(k, shape, scale=0.1):
        return (scale * jax.random.normal(k, shape)).astype(jnp.float32)

    zeros = lambda *shape: jnp.zeros(shape, jnp.float32)
    ks = iter(jax.random.split(key, 24))
    H, C = H_DIM, C_DIM
    return dict(
        enc_w=nrm(next(ks), (4 + adim, H)), enc_b=zeros(H),
        ee_w=nrm(next(ks), (2, H)), ee_b=zeros(H),
        ent_wq=nrm(next(ks), (H, H)), ent_wk=nrm(next(ks), (H, H)),
        ent_wv=nrm(next(ks), (H, H)), ent_wo=nrm(next(ks), (H, H)),
        ent_upd_w=nrm(next(ks), (2 * H, H)), ent_upd_b=zeros(H),
        msg_wq=nrm(next(ks), (H, H)), msg_wk=nrm(next(ks), (H, H)),
        msg_wv=nrm(next(ks), (H, H)), msg_wo=nrm(next(ks), (H, H)),
        upd_w=nrm(next(ks), (2 * H, H)), upd_b=zeros(H),
        senc_w=nrm(next(ks), (sdim, C)), senc_b=zeros(C),
        key_w=nrm(next(ks), (H, C)),                       # bias=False (reference)
        sel_w=nrm(next(ks), (C, C)),                       # bias=False (reference)
        val_w=nrm(next(ks), (H, C)), val_b=zeros(C),
        c1_w=nrm(next(ks), (2 * C, C)), c1_b=zeros(C),
        c2_w=nrm(next(ks), (C, adim)), c2_b=zeros(adim),
    )


def pack_params(p):
    """Fuse / cast weights into the layout the kernels expect: matmul weights in
    bf16 (MXU), biases in f32 (added after f32 accumulation), QKV / K|V / key|val
    projections concatenated so each kernel issues one lane-dense MXU pass."""
    bf = lambda w: w.astype(jnp.bfloat16)
    row = lambda b: b.reshape(1, -1).astype(jnp.float32)
    H, C = H_DIM, C_DIM
    return dict(
        enc_w=bf(p["enc_w"]), enc_b=row(p["enc_b"]),
        ee_w=bf(p["ee_w"]), ee_b=row(p["ee_b"]),
        ent_wq=bf(p["ent_wq"]),
        ent_wkv=bf(jnp.concatenate([p["ent_wk"], p["ent_wv"]], axis=1)),
        ent_wo=bf(p["ent_wo"]),
        ent_upd_wh=bf(p["ent_upd_w"][:H]), ent_upd_wm=bf(p["ent_upd_w"][H:]),
        ent_upd_b=row(p["ent_upd_b"]),
        msg_wqkv=bf(jnp.concatenate([p["msg_wq"], p["msg_wk"], p["msg_wv"]], axis=1)),
        msg_wo=bf(p["msg_wo"]),
        upd_wh=bf(p["upd_w"][:H]), upd_wm=bf(p["upd_w"][H:]), upd_b=row(p["upd_b"]),
        senc_w=bf(p["senc_w"]), senc_b=row(p["senc_b"]),
        sel_w=bf(p["sel_w"]),
        kv_w=bf(jnp.concatenate([p["key_w"], p["val_w"]], axis=1)),
        kv_b=row(jnp.concatenate([jnp.zeros((C,), jnp.float32), p["val_b"]])),
        c1_w=bf(p["c1_w"]), c1_b=row(p["c1_b"]),
        c2_w=bf(p["c2_w"]), c2_b=row(p["c2_b"]),
    )


# ----------------------------------------------------------------------------
if __name__ == "__main__":
    n_agents, B, sdim, adim = 3, 4, 10, 2
    agent_id = 1

    key = jax.random.PRNGKey(0)
    k_p, k_s, k_a = jax.random.split(key, 3)
    params = pack_params(init_params(k_p, sdim, adim))

    s = jax.random.normal(k_s, (n_agents, B, sdim), jnp.float32)
    a = jax.random.normal(k_a, (n_agents, B, adim), jnp.float32)

    fwd = jax.jit(functools.partial(attention_critic_forward, agent_id=agent_id))
    q = fwd(params, s, a)
    q = jax.block_until_ready(q)
    assert q.shape == (B, 1) and q.dtype == jnp.float32
    print("KERNEL_OK")
</pallas_src>

<mosaic_0001>
module attributes {stable_mosaic.version = 11 : i64} {
  func.func @_bn_stats_kernel(%arg0: memref<4x10xf32, #tpu.memory_space<vmem>>, %arg1: memref<1x10xf32, #tpu.memory_space<vmem>>, %arg2: memref<1x10xf32, #tpu.memory_space<vmem>>) attributes {dimension_semantics = [], scalar_prefetch = 0 : i64, scratch_operands = 0 : i64, tpu.core_type = #tpu.core_type<tc>} {
    %c0 = arith.constant 0 : index
    %c0_0 = arith.constant 0 : index
    %0 = vector.load %arg0[%c0, %c0_0] : memref<4x10xf32, #tpu.memory_space<vmem>>, vector<4x10xf32>
    %cst = arith.constant dense<0.000000e+00> : vector<10xf32>
    %1 = vector.multi_reduction <add>, %0, %cst [0] : vector<4x10xf32> to vector<10xf32>
    %2 = vector.shape_cast %1 : vector<10xf32> to vector<1x10xf32>
    %cst_1 = arith.constant 4.000000e+00 : f32
    %3 = vector.broadcast %cst_1 : f32 to vector<1x10xf32>
    %4 = arith.divf %2, %3 : vector<1x10xf32>
    %5 = vector.broadcast %4 : vector<1x10xf32> to vector<4x10xf32>
    %6 = arith.subf %0, %5 : vector<4x10xf32>
    %7 = arith.mulf %6, %6 : vector<4x10xf32>
    %cst_2 = arith.constant dense<0.000000e+00> : vector<10xf32>
    %8 = vector.multi_reduction <add>, %7, %cst_2 [0] : vector<4x10xf32> to vector<10xf32>
    %9 = vector.shape_cast %8 : vector<10xf32> to vector<1x10xf32>
    %cst_3 = arith.constant 4.000000e+00 : f32
    %10 = vector.broadcast %cst_3 : f32 to vector<1x10xf32>
    %11 = arith.divf %9, %10 : vector<1x10xf32>
    %c0_4 = arith.constant 0 : index
    %c0_5 = arith.constant 0 : index
    %12 = vector.load %arg1[%c0_4, %c0_5] : memref<1x10xf32, #tpu.memory_space<vmem>>, vector<1x10xf32>
    tpu.vector_store %arg1[%c0_4, %c0_5], %4 {strides = array<i32>} : memref<1x10xf32, #tpu.memory_space<vmem>>, vector<1x10xf32>,
    %cst_6 = arith.constant 9.99999974E-6 : f32
    %13 = vector.broadcast %cst_6 : f32 to vector<1x10xf32>
    %14 = arith.addf %11, %13 : vector<1x10xf32>
    %15 = math.rsqrt %14 : vector<1x10xf32>
    %c0_7 = arith.constant 0 : index
    %c0_8 = arith.constant 0 : index
    %16 = vector.load %arg2[%c0_7, %c0_8] : memref<1x10xf32, #tpu.memory_space<vmem>>, vector<1x10xf32>
    tpu.vector_store %arg2[%c0_7, %c0_8], %15 {strides = array<i32>} : memref<1x10xf32, #tpu.memory_space<vmem>>, vector<1x10xf32>,
    return
  }
}

module attributes {stable_mosaic.version = 11 : i64} {
  func.func @_msg_rounds_kernel(%arg0: i32, %arg1: memref<4x384xf32, #tpu.memory_space<vmem>>, %arg2: memref<128x384xbf16, #tpu.memory_space<vmem>>, %arg3: memref<128x128xbf16, #tpu.memory_space<vmem>>, %arg4: memref<128x128xbf16, #tpu.memory_space<vmem>>, %arg5: memref<128x128xbf16, #tpu.memory_space<vmem>>, %arg6: memref<1x128xf32, #tpu.memory_space<vmem>>, %arg7: memref<4x384xf32, #tpu.memory_space<vmem>>) attributes {dimension_semantics = [#tpu.dimension_semantics<parallel>], iteration_bounds = array<i64: 1>, scalar_prefetch = 0 : i64, scratch_operands = 0 : i64, tpu.core_type = #tpu.core_type<tc>, window_params = [{transform_indices = @transform_0, window_bounds = array<i64: 4, 384>}, {pipeline_mode = #tpu.pipeline_mode<synchronous>, transform_indices = @transform_1, window_bounds = array<i64: 128, 384>}, {pipeline_mode = #tpu.pipeline_mode<synchronous>, transform_indices = @transform_2, window_bounds = array<i64: 128, 128>}, {pipeline_mode = #tpu.pipeline_mode<synchronous>, transform_indices = @transform_3, window_bounds = array<i64: 128, 128>}, {pipeline_mode = #tpu.pipeline_mode<synchronous>, transform_indices = @transform_4, window_bounds = array<i64: 128, 128>}, {pipeline_mode = #tpu.pipeline_mode<synchronous>, transform_indices = @transform_5, window_bounds = array<i64: 1, 128>}, {transform_indices = @transform_6, window_bounds = array<i64: 4, 384>}]} {
    %c0 = arith.constant 0 : index
    %c0_0 = arith.constant 0 : index
    %0 = vector.load %arg1[%c0, %c0_0] : memref<4x384xf32, #tpu.memory_space<vmem>>, vector<4x128xf32>
    %c0_1 = arith.constant 0 : index
    %c128 = arith.constant 128 : index
    %1 = vector.load %arg1[%c0_1, %c128] : memref<4x384xf32, #tpu.memory_space<vmem>>, vector<4x128xf32>
    %c0_2 = arith.constant 0 : index
    %c256 = arith.constant 256 : index
    %2 = vector.load %arg1[%c0_2, %c256] : memref<4x384xf32, #tpu.memory_space<vmem>>, vector<4x128xf32>
    %c0_3 = arith.constant 0 : index
    %c0_4 = arith.constant 0 : index
    %3 = vector.load %arg2[%c0_3, %c0_4] : memref<128x384xbf16, #tpu.memory_space<vmem>>, vector<128x384xbf16>
    %4 = arith.truncf %0 : vector<4x128xf32> to vector<4x128xbf16>
    %cst = arith.constant dense<0.000000e+00> : vector<4x384xf32>
    %5 = tpu.matmul %4, %3, %cst {dimension_numbers = #tpu.dot_dimension_numbers<[1], [0], [0], [1], [0, 0, 1, 1], [], []>} : vector<4x128xbf16>, vector<128x384xbf16>, vector<4x384xf32> -> vector<4x384xf32>
    %6 = vector.extract_strided_slice %5 {offsets = [0, 0], sizes = [4, 128], strides = [1, 1]} : vector<4x384xf32> to vector<4x128xf32>
    %cst_5 = arith.constant 0.0883883461 : f32
    %7 = vector.broadcast %cst_5 : f32 to vector<4x128xf32>
    %8 = arith.mulf %6, %7 : vector<4x128xf32>
    %9 = vector.extract_strided_slice %5 {offsets = [0, 128], sizes = [4, 128], strides = [1, 1]} : vector<4x384xf32> to vector<4x128xf32>
    %10 = vector.extract_strided_slice %5 {offsets = [0, 256], sizes = [4, 128], strides = [1, 1]} : vector<4x384xf32> to vector<4x128xf32>
    %c0_6 = arith.constant 0 : index
    %c0_7 = arith.constant 0 : index
    %11 = vector.load %arg2[%c0_6, %c0_7] : memref<128x384xbf16, #tpu.memory_space<vmem>>, vector<128x384xbf16>
    %12 = arith.truncf %1 : vector<4x128xf32> to vector<4x128xbf16>
    %cst_8 = arith.constant dense<0.000000e+00> : vector<4x384xf32>
    %13 = tpu.matmul %12, %11, %cst_8 {dimension_numbers = #tpu.dot_dimension_numbers<[1], [0], [0], [1], [0, 0, 1, 1], [], []>} : vector<4x128xbf16>, vector<128x384xbf16>, vector<4x384xf32> -> vector<4x384xf32>
    %14 = vector.extract_strided_slice %13 {offsets = [0, 0], sizes = [4, 128], strides = [1, 1]} : vector<4x384xf32> to vector<4x128xf32>
    %cst_9 = arith.constant 0.0883883461 : f32
    %15 = vector.broadcast %cst_9 : f32 to vector<4x128xf32>
    %16 = arith.mulf %14, %15 : vector<4x128xf32>
    %17 = vector.extract_strided_slice %13 {offsets = [0, 128], sizes = [4, 128], strides = [1, 1]} : vector<4x384xf32> to vector<4x128xf32>
    %18 = vector.extract_strided_slice %13 {offsets = [0, 256], sizes = [4, 128], strides = [1, 1]} : vector<4x384xf32> to vector<4x128xf32>
    %c0_10 = arith.constant 0 : index
    %c0_11 = arith.constant 0 : index
    %19 = vector.load %arg2[%c0_10, %c0_11] : memref<128x384xbf16, #tpu.memory_space<vmem>>, vector<128x384xbf16>
    %20 = arith.truncf %2 : vector<4x128xf32> to vector<4x128xbf16>
    %cst_12 = arith.constant dense<0.000000e+00> : vector<4x384xf32>
    %21 = tpu.matmul %20, %19, %cst_12 {dimension_numbers = #tpu.dot_dimension_numbers<[1], [0], [0], [1], [0, 0, 1, 1], [], []>} : vector<4x128xbf16>, vector<128x384xbf16>, vector<4x384xf32> -> vector<4x384xf32>
    %22 = vector.extract_strided_slice %21 {offsets = [0, 0], sizes = [4, 128], strides = [1, 1]} : vector<4x384xf32> to vector<4x128xf32>
    %cst_13 = arith.constant 0.0883883461 : f32
    %23 = vector.broadcast %cst_13 : f32 to vector<4x128xf32>
    %24 = arith.mulf %22, %23 : vector<4x128xf32>
    %25 = vector.extract_strided_slice %21 {offsets = [0, 128], sizes = [4, 128], strides = [1, 1]} : vector<4x384xf32> to vector<4x128xf32>
    %26 = vector.extract_strided_slice %21 {offsets = [0, 256], sizes = [4, 128], strides = [1, 1]} : vector<4x384xf32> to vector<4x128xf32>
    %27 = arith.mulf %8, %9 : vector<4x128xf32>
    %cst_14 = arith.constant dense<0.000000e+00> : vector<4xf32>
    %28 = vector.multi_reduction <add>, %27, %cst_14 [1] : vector<4x128xf32> to vector<4xf32>
    %29 = vector.shape_cast %28 : vector<4xf32> to vector<4x1xf32>
    %30 = arith.mulf %8, %17 : vector<4x128xf32>
    %cst_15 = arith.constant dense<0.000000e+00> : vector<4xf32>
    %31 = vector.multi_reduction <add>, %30, %cst_15 [1] : vector<4x128xf32> to vector<4xf32>
    %32 = vector.shape_cast %31 : vector<4xf32> to vector<4x1xf32>
    %33 = arith.mulf %8, %25 : vector<4x128xf32>
    %cst_16 = arith.constant dense<0.000000e+00> : vector<4xf32>
    %34 = vector.multi_reduction <add>, %33, %cst_16 [1] : vector<4x128xf32> to vector<4xf32>
    %35 = vector.shape_cast %34 : vector<4xf32> to vector<4x1xf32>
    %36 = arith.maximumf %29, %32 : vector<4x1xf32>
    %37 = arith.maximumf %36, %35 : vector<4x1xf32>
    %cst_17 = arith.constant 0.000000e+00 : f32
    %38 = vector.broadcast %cst_17 : f32 to vector<4x128xf32>
    %cst_18 = arith.constant 0.000000e+00 : f32
    %39 = vector.broadcast %cst_18 : f32 to vector<4x1xf32>
    %40 = arith.subf %29, %37 : vector<4x1xf32>
    %41 = math.exp %40 : vector<4x1xf32>
    %42 = arith.addf %39, %41 : vector<4x1xf32>
    %43 = vector.broadcast %41 : vector<4x1xf32> to vector<4x128xf32>
    %44 = arith.mulf %43, %10 : vector<4x128xf32>
    %45 = arith.addf %38, %44 : vector<4x128xf32>
    %46 = arith.subf %32, %37 : vector<4x1xf32>
    %47 = math.exp %46 : vector<4x1xf32>
    %48 = arith.addf %42, %47 : vector<4x1xf32>
    %49 = vector.broadcast %47 : vector<4x1xf32> to vector<4x128xf32>
    %50 = arith.mulf %49, %18 : vector<4x128xf32>
    %51 = arith.addf %45, %50 : vector<4x128xf32>
    %52 = arith.subf %35, %37 : vector<4x1xf32>
    %53 = math.exp %52 : vector<4x1xf32>
    %54 = arith.addf %48, %53 : vector<4x1xf32>
    %55 = vector.broadcast %53 : vector<4x1xf32> to vector<4x128xf32>
    %56 = arith.mulf %55, %26 : vector<4x128xf32>
    %57 = arith.addf %51, %56 : vector<4x128xf32>
    %58 = tpu.reciprocal %54 {approx = true} : vector<4x1xf32> -> vector<4x1xf32>
    %59 = vector.broadcast %58 : vector<4x1xf32> to vector<4x128xf32>
    %60 = arith.mulf %57, %59 : vector<4x128xf32>
    %c0_19 = arith.constant 0 : index
    %c0_20 = arith.constant 0 : index
    %61 = vector.load %arg3[%c0_19, %c0_20] : memref<128x128xbf16, #tpu.memory_space<vmem>>, vector<128x128xbf16>
    %62 = arith.truncf %60 : vector<4x128xf32> to vector<4x128xbf16>
    %cst_21 = arith.constant dense<0.000000e+00> : vector<4x128xf32>
    %63 = tpu.matmul %62, %61, %cst_21 {dimension_numbers = #tpu.dot_dimension_numbers<[1], [0], [0], [1], [0, 0, 1, 1], [], []>} : vector<4x128xbf16>, vector<128x128xbf16>, vector<4x128xf32> -> vector<4x128xf32>
    %c0_22 = arith.constant 0 : index
    %c0_23 = arith.constant 0 : index
    %64 = vector.load %arg4[%c0_22, %c0_23] : memref<128x128xbf16, #tpu.memory_space<vmem>>, vector<128x128xbf16>
    %65 = arith.truncf %0 : vector<4x128xf32> to vector<4x128xbf16>
    %cst_24 = arith.constant dense<0.000000e+00> : vector<4x128xf32>
    %66 = tpu.matmul %65, %64, %cst_24 {dimension_numbers = #tpu.dot_dimension_numbers<[1], [0], [0], [1], [0, 0, 1, 1], [], []>} : vector<4x128xbf16>, vector<128x128xbf16>, vector<4x128xf32> -> vector<4x128xf32>
    %c0_25 = arith.constant 0 : index
    %c0_26 = arith.constant 0 : index
    %67 = vector.load %arg5[%c0_25, %c0_26] : memref<128x128xbf16, #tpu.memory_space<vmem>>, vector<128x128xbf16>
    %68 = arith.truncf %63 : vector<4x128xf32> to vector<4x128xbf16>
    %cst_27 = arith.constant dense<0.000000e+00> : vector<4x128xf32>
    %69 = tpu.matmul %68, %67, %cst_27 {dimension_numbers = #tpu.dot_dimension_numbers<[1], [0], [0], [1], [0, 0, 1, 1], [], []>} : vector<4x128xbf16>, vector<128x128xbf16>, vector<4x128xf32> -> vector<4x128xf32>
    %70 = arith.addf %66, %69 : vector<4x128xf32>
    %c0_28 = arith.constant 0 : index
    %c0_29 = arith.constant 0 : index
    %71 = vector.load %arg6[%c0_28, %c0_29] : memref<1x128xf32, #tpu.memory_space<vmem>>, vector<1x128xf32>
    %72 = vector.broadcast %71 : vector<1x128xf32> to vector<4x128xf32>
    %73 = arith.addf %70, %72 : vector<4x128xf32>
    %cst_30 = arith.constant 0.000000e+00 : f32
    %74 = vector.broadcast %cst_30 : f32 to vector<4x128xf32>
    %75 = arith.maximumf %73, %74 : vector<4x128xf32>
    %76 = arith.mulf %16, %9 : vector<4x128xf32>
    %cst_31 = arith.constant dense<0.000000e+00> : vector<4xf32>
    %77 = vector.multi_reduction <add>, %76, %cst_31 [1] : vector<4x128xf32> to vector<4xf32>
    %78 = vector.shape_cast %77 : vector<4xf32> to vector<4x1xf32>
    %79 = arith.mulf %16, %17 : vector<4x128xf32>
    %cst_32 = arith.constant dense<0.000000e+00> : vector<4xf32>
    %80 = vector.multi_reduction <add>, %79, %cst_32 [1] : vector<4x128xf32> to vector<4xf32>
    %81 = vector.shape_cast %80 : vector<4xf32> to vector<4x1xf32>
    %82 = arith.mulf %16, %25 : vector<4x128xf32>
    %cst_33 = arith.constant dense<0.000000e+00> : vector<4xf32>
    %83 = vector.multi_reduction <add>, %82, %cst_33 [1] : vector<4x128xf32> to vector<4xf32>
    %84 = vector.shape_cast %83 : vector<4xf32> to vector<4x1xf32>
    %85 = arith.maximumf %78, %81 : vector<4x1xf32>
    %86 = arith.maximumf %85, %84 : vector<4x1xf32>
    %cst_34 = arith.constant 0.000000e+00 : f32
    %87 = vector.broadcast %cst_34 : f32 to vector<4x128xf32>
    %cst_35 = arith.constant 0.000000e+00 : f32
    %88 = vector.broadcast %cst_35 : f32 to vector<4x1xf32>
    %89 = arith.subf %78, %86 : vector<4x1xf32>
    %90 = math.exp %89 : vector<4x1xf32>
    %91 = arith.addf %88, %90 : vector<4x1xf32>
    %92 = vector.broadcast %90 : vector<4x1xf32> to vector<4x128xf32>
    %93 = arith.mulf %92, %10 : vector<4x128xf32>
    %94 = arith.addf %87, %93 : vector<4x128xf32>
    %95 = arith.subf %81, %86 : vector<4x1xf32>
    %96 = math.exp %95 : vector<4x1xf32>
    %97 = arith.addf %91, %96 : vector<4x1xf32>
    %98 = vector.broadcast %96 : vector<4x1xf32> to vector<4x128xf32>
    %99 = arith.mulf %98, %18 : vector<4x128xf32>
    %100 = arith.addf %94, %99 : vector<4x128xf32>
    %101 = arith.subf %84, %86 : vector<4x1xf32>
    %102 = math.exp %101 : vector<4x1xf32>
    %103 = arith.addf %97, %102 : vector<4x1xf32>
    %104 = vector.broadcast %102 : vector<4x1xf32> to vector<4x128xf32>
    %105 = arith.mulf %104, %26 : vector<4x128xf32>
    %106 = arith.addf %100, %105 : vector<4x128xf32>
    %107 = tpu.reciprocal %103 {approx = true} : vector<4x1xf32> -> vector<4x1xf32>
    %108 = vector.broadcast %107 : vector<4x1xf32> to vector<4x128xf32>
    %109 = arith.mulf %106, %108 : vector<4x128xf32>
    %c0_36 = arith.constant 0 : index
    %c0_37 = arith.constant 0 : index
    %110 = vector.load %arg3[%c0_36, %c0_37] : memref<128x128xbf16, #tpu.memory_space<vmem>>, vector<128x128xbf16>
    %111 = arith.truncf %109 : vector<4x128xf32> to vector<4x128xbf16>
    %cst_38 = arith.constant dense<0.000000e+00> : vector<4x128xf32>
    %112 = tpu.matmul %111, %110, %cst_38 {dimension_numbers = #tpu.dot_dimension_numbers<[1], [0], [0], [1], [0, 0, 1, 1], [], []>} : vector<4x128xbf16>, vector<128x128xbf16>, vector<4x128xf32> -> vector<4x128xf32>
    %c0_39 = arith.constant 0 : index
    %c0_40 = arith.constant 0 : index
    %113 = vector.load %arg4[%c0_39, %c0_40] : memref<128x128xbf16, #tpu.memory_space<vmem>>, vector<128x128xbf16>
    %114 = arith.truncf %1 : vector<4x128xf32> to vector<4x128xbf16>
    %cst_41 = arith.constant dense<0.000000e+00> : vector<4x128xf32>
    %115 = tpu.matmul %114, %113, %cst_41 {dimension_numbers = #tpu.dot_dimension_numbers<[1], [0], [0], [1], [0, 0, 1, 1], [], []>} : vector<4x128xbf16>, vector<128x128xbf16>, vector<4x128xf32> -> vector<4x128xf32>
    %c0_42 = arith.constant 0 : index
    %c0_43 = arith.constant 0 : index
    %116 = vector.load %arg5[%c0_42, %c0_43] : memref<128x128xbf16, #tpu.memory_space<vmem>>, vector<128x128xbf16>
    %117 = arith.truncf %112 : vector<4x128xf32> to vector<4x128xbf16>
    %cst_44 = arith.constant dense<0.000000e+00> : vector<4x128xf32>
    %118 = tpu.matmul %117, %116, %cst_44 {dimension_numbers = #tpu.dot_dimension_numbers<[1], [0], [0], [1], [0, 0, 1, 1], [], []>} : vector<4x128xbf16>, vector<128x128xbf16>, vector<4x128xf32> -> vector<4x128xf32>
    %119 = arith.addf %115, %118 : vector<4x128xf32>
    %c0_45 = arith.constant 0 : index
    %c0_46 = arith.constant 0 : index
    %120 = vector.load %arg6[%c0_45, %c0_46] : memref<1x128xf32, #tpu.memory_space<vmem>>, vector<1x128xf32>
    %121 = vector.broadcast %120 : vector<1x128xf32> to vector<4x128xf32>
    %122 = arith.addf %119, %121 : vector<4x128xf32>
    %cst_47 = arith.constant 0.000000e+00 : f32
    %123 = vector.broadcast %cst_47 : f32 to vector<4x128xf32>
    %124 = arith.maximumf %122, %123 : vector<4x128xf32>
    %125 = arith.mulf %24, %9 : vector<4x128xf32>
    %cst_48 = arith.constant dense<0.000000e+00> : vector<4xf32>
    %126 = vector.multi_reduction <add>, %125, %cst_48 [1] : vector<4x128xf32> to vector<4xf32>
    %127 = vector.shape_cast %126 : vector<4xf32> to vector<4x1xf32>
    %128 = arith.mulf %24, %17 : vector<4x128xf32>
    %cst_49 = arith.constant dense<0.000000e+00> : vector<4xf32>
    %129 = vector.multi_reduction <add>, %128, %cst_49 [1] : vector<4x128xf32> to vector<4xf32>
    %130 = vector.shape_cast %129 : vector<4xf32> to vector<4x1xf32>
    %131 = arith.mulf %24, %25 : vector<4x128xf32>
    %cst_50 = arith.constant dense<0.000000e+00> : vector<4xf32>
    %132 = vector.multi_reduction <add>, %131, %cst_50 [1] : vector<4x128xf32> to vector<4xf32>
    %133 = vector.shape_cast %132 : vector<4xf32> to vector<4x1xf32>
    %134 = arith.maximumf %127, %130 : vector<4x1xf32>
    %135 = arith.maximumf %134, %133 : vector<4x1xf32>
    %cst_51 = arith.constant 0.000000e+00 : f32
    %136 = vector.broadcast %cst_51 : f32 to vector<4x128xf32>
    %cst_52 = arith.constant 0.000000e+00 : f32
    %137 = vector.broadcast %cst_52 : f32 to vector<4x1xf32>
    %138 = arith.subf %127, %135 : vector<4x1xf32>
    %139 = math.exp %138 : vector<4x1xf32>
    %140 = arith.addf %137, %139 : vector<4x1xf32>
    %141 = vector.broadcast %139 : vector<4x1xf32> to vector<4x128xf32>
    %142 = arith.mulf %141, %10 : vector<4x128xf32>
    %143 = arith.addf %136, %142 : vector<4x128xf32>
    %144 = arith.subf %130, %135 : vector<4x1xf32>
    %145 = math.exp %144 : vector<4x1xf32>
    %146 = arith.addf %140, %145 : vector<4x1xf32>
    %147 = vector.broadcast %145 : vector<4x1xf32> to vector<4x128xf32>
    %148 = arith.mulf %147, %18 : vector<4x128xf32>
    %149 = arith.addf %143, %148 : vector<4x128xf32>
    %150 = arith.subf %133, %135 : vector<4x1xf32>
    %151 = math.exp %150 : vector<4x1xf32>
    %152 = arith.addf %146, %151 : vector<4x1xf32>
    %153 = vector.broadcast %151 : vector<4x1xf32> to vector<4x128xf32>
    %154 = arith.mulf %153, %26 : vector<4x128xf32>
    %155 = arith.addf %149, %154 : vector<4x128xf32>
    %156 = tpu.reciprocal %152 {approx = true} : vector<4x1xf32> -> vector<4x1xf32>
    %157 = vector.broadcast %156 : vector<4x1xf32> to vector<4x128xf32>
    %158 = arith.mulf %155, %157 : vector<4x128xf32>
    %c0_53 = arith.constant 0 : index
    %c0_54 = arith.constant 0 : index
    %159 = vector.load %arg3[%c0_53, %c0_54] : memref<128x128xbf16, #tpu.memory_space<vmem>>, vector<128x128xbf16>
    %160 = arith.truncf %158 : vector<4x128xf32> to vector<4x128xbf16>
    %cst_55 = arith.constant dense<0.000000e+00> : vector<4x128xf32>
    %161 = tpu.matmul %160, %159, %cst_55 {dimension_numbers = #tpu.dot_dimension_numbers<[1], [0], [0], [1], [0, 0, 1, 1], [], []>} : vector<4x128xbf16>, vector<128x128xbf16>, vector<4x128xf32> -> vector<4x128xf32>
    %c0_56 = arith.constant 0 : index
    %c0_57 = arith.constant 0 : index
    %162 = vector.load %arg4[%c0_56, %c0_57] : memref<128x128xbf16, #tpu.memory_space<vmem>>, vector<128x128xbf16>
    %163 = arith.truncf %2 : vector<4x128xf32> to vector<4x128xbf16>
    %cst_58 = arith.constant dense<0.000000e+00> : vector<4x128xf32>
    %164 = tpu.matmul %163, %162, %cst_58 {dimension_numbers = #tpu.dot_dimension_numbers<[1], [0], [0], [1], [0, 0, 1, 1], [], []>} : vector<4x128xbf16>, vector<128x128xbf16>, vector<4x128xf32> -> vector<4x128xf32>
    %c0_59 = arith.constant 0 : index
    %c0_60 = arith.constant 0 : index
    %165 = vector.load %arg5[%c0_59, %c0_60] : memref<128x128xbf16, #tpu.memory_space<vmem>>, vector<128x128xbf16>
    %166 = arith.truncf %161 : vector<4x128xf32> to vector<4x128xbf16>
    %cst_61 = arith.constant dense<0.000000e+00> : vector<4x128xf32>
    %167 = tpu.matmul %166, %165, %cst_61 {dimension_numbers = #tpu.dot_dimension_numbers<[1], [0], [0], [1], [0, 0, 1, 1], [], []>} : vector<4x128xbf16>, vector<128x128xbf16>, vector<4x128xf32> -> vector<4x128xf32>
    %168 = arith.addf %164, %167 : vector<4x128xf32>
    %c0_62 = arith.constant 0 : index
    %c0_63 = arith.constant 0 : index
    %169 = vector.load %arg6[%c0_62, %c0_63] : memref<1x128xf32, #tpu.memory_space<vmem>>, vector<1x128xf32>
    %170 = vector.broadcast %169 : vector<1x128xf32> to vector<4x128xf32>
    %171 = arith.addf %168, %170 : vector<4x128xf32>
    %cst_64 = arith.constant 0.000000e+00 : f32
    %172 = vector.broadcast %cst_64 : f32 to vector<4x128xf32>
    %173 = arith.maximumf %171, %172 : vector<4x128xf32>
    %c0_65 = arith.constant 0 : index
    %c0_66 = arith.constant 0 : index
    %174 = vector.load %arg2[%c0_65, %c0_66] : memref<128x384xbf16, #tpu.memory_space<vmem>>, vector<128x384xbf16>
    %175 = arith.truncf %75 : vector<4x128xf32> to vector<4x128xbf16>
    %cst_67 = arith.constant dense<0.000000e+00> : vector<4x384xf32>
    %176 = tpu.matmul %175, %174, %cst_67 {dimension_numbers = #tpu.dot_dimension_numbers<[1], [0], [0], [1], [0, 0, 1, 1], [], []>} : vector<4x128xbf16>, vector<128x384xbf16>, vector<4x384xf32> -> vector<4x384xf32>
    %177 = vector.extract_strided_slice %176 {offsets = [0, 0], sizes = [4, 128], strides = [1, 1]} : vector<4x384xf32> to vector<4x128xf32>
    %cst_68 = arith.constant 0.0883883461 : f32
    %178 = vector.broadcast %cst_68 : f32 to vector<4x128xf32>
    %179 = arith.mulf %177, %178 : vector<4x128xf32>
    %180 = vector.extract_strided_slice %176 {offsets = [0, 128], sizes = [4, 128], strides = [1, 1]} : vector<4x384xf32> to vector<4x128xf32>
    %181 = vector.extract_strided_slice %176 {offsets = [0, 256], sizes = [4, 128], strides = [1, 1]} : vector<4x384xf32> to vector<4x128xf32>
    %c0_69 = arith.constant 0 : index
    %c0_70 = arith.constant 0 : index
    %182 = vector.load %arg2[%c0_69, %c0_70] : memref<128x384xbf16, #tpu.memory_space<vmem>>, vector<128x384xbf16>
    %183 = arith.truncf %124 : vector<4x128xf32> to vector<4x128xbf16>
    %cst_71 = arith.constant dense<0.000000e+00> : vector<4x384xf32>
    %184 = tpu.matmul %183, %182, %cst_71 {dimension_numbers = #tpu.dot_dimension_numbers<[1], [0], [0], [1], [0, 0, 1, 1], [], []>} : vector<4x128xbf16>, vector<128x384xbf16>, vector<4x384xf32> -> vector<4x384xf32>
    %185 = vector.extract_strided_slice %184 {offsets = [0, 0], sizes = [4, 128], strides = [1, 1]} : vector<4x384xf32> to vector<4x128xf32>
    %cst_72 = arith.constant 0.0883883461 : f32
    %186 = vector.broadcast %cst_72 : f32 to vector<4x128xf32>
    %187 = arith.mulf %185, %186 : vector<4x128xf32>
    %188 = vector.extract_strided_slice %184 {offsets = [0, 128], sizes = [4, 128], strides = [1, 1]} : vector<4x384xf32> to vector<4x128xf32>
    %189 = vector.extract_strided_slice %184 {offsets = [0, 256], sizes = [4, 128], strides = [1, 1]} : vector<4x384xf32> to vector<4x128xf32>
    %c0_73 = arith.constant 0 : index
    %c0_74 = arith.constant 0 : index
    %190 = vector.load %arg2[%c0_73, %c0_74] : memref<128x384xbf16, #tpu.memory_space<vmem>>, vector<128x384xbf16>
    %191 = arith.truncf %173 : vector<4x128xf32> to vector<4x128xbf16>
    %cst_75 = arith.constant dense<0.000000e+00> : vector<4x384xf32>
    %192 = tpu.matmul %191, %190, %cst_75 {dimension_numbers = #tpu.dot_dimension_numbers<[1], [0], [0], [1], [0, 0, 1, 1], [], []>} : vector<4x128xbf16>, vector<128x384xbf16>, vector<4x384xf32> -> vector<4x384xf32>
    %193 = vector.extract_strided_slice %192 {offsets = [0, 0], sizes = [4, 128], strides = [1, 1]} : vector<4x384xf32> to vector<4x128xf32>
    %cst_76 = arith.constant 0.0883883461 : f32
    %194 = vector.broadcast %cst_76 : f32 to vector<4x128xf32>
    %195 = arith.mulf %193, %194 : vector<4x128xf32>
    %196 = vector.extract_strided_slice %192 {offsets = [0, 128], sizes = [4, 128], strides = [1, 1]} : vector<4x384xf32> to vector<4x128xf32>
    %197 = vector.extract_strided_slice %192 {offsets = [0, 256], sizes = [4, 128], strides = [1, 1]} : vector<4x384xf32> to vector<4x128xf32>
    %198 = arith.mulf %179, %180 : vector<4x128xf32>
    %cst_77 = arith.constant dense<0.000000e+00> : vector<4xf32>
    %199 = vector.multi_reduction <add>, %198, %cst_77 [1] : vector<4x128xf32> to vector<4xf32>
    %200 = vector.shape_cast %199 : vector<4xf32> to vector<4x1xf32>
    %201 = arith.mulf %179, %188 : vector<4x128xf32>
    %cst_78 = arith.constant dense<0.000000e+00> : vector<4xf32>
    %202 = vector.multi_reduction <add>, %201, %cst_78 [1] : vector<4x128xf32> to vector<4xf32>
    %203 = vector.shape_cast %202 : vector<4xf32> to vector<4x1xf32>
    %204 = arith.mulf %179, %196 : vector<4x128xf32>
    %cst_79 = arith.constant dense<0.000000e+00> : vector<4xf32>
    %205 = vector.multi_reduction <add>, %204, %cst_79 [1] : vector<4x128xf32> to vector<4xf32>
    %206 = vector.shape_cast %205 : vector<4xf32> to vector<4x1xf32>
    %207 = arith.maximumf %200, %203 : vector<4x1xf32>
    %208 = arith.maximumf %207, %206 : vector<4x1xf32>
    %cst_80 = arith.constant 0.000000e+00 : f32
    %209 = vector.broadcast %cst_80 : f32 to vector<4x128xf32>
    %cst_81 = arith.constant 0.000000e+00 : f32
    %210 = vector.broadcast %cst_81 : f32 to vector<4x1xf32>
    %211 = arith.subf %200, %208 : vector<4x1xf32>
    %212 = math.exp %211 : vector<4x1xf32>
    %213 = arith.addf %210, %212 : vector<4x1xf32>
    %214 = vector.broadcast %212 : vector<4x1xf32> to vector<4x128xf32>
    %215 = arith.mulf %214, %181 : vector<4x128xf32>
    %216 = arith.addf %209, %215 : vector<4x128xf32>
    %217 = arith.subf %203, %208 : vector<4x1xf32>
    %218 = math.exp %217 : vector<4x1xf32>
    %219 = arith.addf %213, %218 : vector<4x1xf32>
    %220 = vector.broadcast %218 : vector<4x1xf32> to vector<4x128xf32>
    %221 = arith.mulf %220, %189 : vector<4x128xf32>
    %222 = arith.addf %216, %221 : vector<4x128xf32>
    %223 = arith.subf %206, %208 : vector<4x1xf32>
    %224 = math.exp %223 : vector<4x1xf32>
    %225 = arith.addf %219, %224 : vector<4x1xf32>
    %226 = vector.broadcast %224 : vector<4x1xf32> to vector<4x128xf32>
    %227 = arith.mulf %226, %197 : vector<4x128xf32>
    %228 = arith.addf %222, %227 : vector<4x128xf32>
    %229 = tpu.reciprocal %225 {approx = true} : vector<4x1xf32> -> vector<4x1xf32>
    %230 = vector.broadcast %229 : vector<4x1xf32> to vector<4x128xf32>
    %231 = arith.mulf %228, %230 : vector<4x128xf32>
    %c0_82 = arith.constant 0 : index
    %c0_83 = arith.constant 0 : index
    %232 = vector.load %arg3[%c0_82, %c0_83] : memref<128x128xbf16, #tpu.memory_space<vmem>>, vector<128x128xbf16>
    %233 = arith.truncf %231 : vector<4x128xf32> to vector<4x128xbf16>
    %cst_84 = arith.constant dense<0.000000e+00> : vector<4x128xf32>
    %234 = tpu.matmul %233, %232, %cst_84 {dimension_numbers = #tpu.dot_dimension_numbers<[1], [0], [0], [1], [0, 0, 1, 1], [], []>} : vector<4x128xbf16>, vector<128x128xbf16>, vector<4x128xf32> -> vector<4x128xf32>
    %c0_85 = arith.constant 0 : index
    %c0_86 = arith.constant 0 : index
    %235 = vector.load %arg4[%c0_85, %c0_86] : memref<128x128xbf16, #tpu.memory_space<vmem>>, vector<128x128xbf16>
    %236 = arith.truncf %75 : vector<4x128xf32> to vector<4x128xbf16>
    %cst_87 = arith.constant dense<0.000000e+00> : vector<4x128xf32>
    %237 = tpu.matmul %236, %235, %cst_87 {dimension_numbers = #tpu.dot_dimension_numbers<[1], [0], [0], [1], [0, 0, 1, 1], [], []>} : vector<4x128xbf16>, vector<128x128xbf16>, vector<4x128xf32> -> vector<4x128xf32>
    %c0_88 = arith.constant 0 : index
    %c0_89 = arith.constant 0 : index
    %238 = vector.load %arg5[%c0_88, %c0_89] : memref<128x128xbf16, #tpu.memory_space<vmem>>, vector<128x128xbf16>
    %239 = arith.truncf %234 : vector<4x128xf32> to vector<4x128xbf16>
    %cst_90 = arith.constant dense<0.000000e+00> : vector<4x128xf32>
    %240 = tpu.matmul %239, %238, %cst_90 {dimension_numbers = #tpu.dot_dimension_numbers<[1], [0], [0], [1], [0, 0, 1, 1], [], []>} : vector<4x128xbf16>, vector<128x128xbf16>, vector<4x128xf32> -> vector<4x128xf32>
    %241 = arith.addf %237, %240 : vector<4x128xf32>
    %c0_91 = arith.constant 0 : index
    %c0_92 = arith.constant 0 : index
    %242 = vector.load %arg6[%c0_91, %c0_92] : memref<1x128xf32, #tpu.memory_space<vmem>>, vector<1x128xf32>
    %243 = vector.broadcast %242 : vector<1x128xf32> to vector<4x128xf32>
    %244 = arith.addf %241, %243 : vector<4x128xf32>
    %cst_93 = arith.constant 0.000000e+00 : f32
    %245 = vector.broadcast %cst_93 : f32 to vector<4x128xf32>
    %246 = arith.maximumf %244, %245 : vector<4x128xf32>
    %247 = arith.mulf %187, %180 : vector<4x128xf32>
    %cst_94 = arith.constant dense<0.000000e+00> : vector<4xf32>
    %248 = vector.multi_reduction <add>, %247, %cst_94 [1] : vector<4x128xf32> to vector<4xf32>
    %249 = vector.shape_cast %248 : vector<4xf32> to vector<4x1xf32>
    %250 = arith.mulf %187, %188 : vector<4x128xf32>
    %cst_95 = arith.constant dense<0.000000e+00> : vector<4xf32>
    %251 = vector.multi_reduction <add>, %250, %cst_95 [1] : vector<4x128xf32> to vector<4xf32>
    %252 = vector.shape_cast %251 : vector<4xf32> to vector<4x1xf32>
    %253 = arith.mulf %187, %196 : vector<4x128xf32>
    %cst_96 = arith.constant dense<0.000000e+00> : vector<4xf32>
    %254 = vector.multi_reduction <add>, %253, %cst_96 [1] : vector<4x128xf32> to vector<4xf32>
    %255 = vector.shape_cast %254 : vector<4xf32> to vector<4x1xf32>
    %256 = arith.maximumf %249, %252 : vector<4x1xf32>
    %257 = arith.maximumf %256, %255 : vector<4x1xf32>
    %cst_97 = arith.constant 0.000000e+00 : f32
    %258 = vector.broadcast %cst_97 : f32 to vector<4x128xf32>
    %cst_98 = arith.constant 0.000000e+00 : f32
    %259 = vector.broadcast %cst_98 : f32 to vector<4x1xf32>
    %260 = arith.subf %249, %257 : vector<4x1xf32>
    %261 = math.exp %260 : vector<4x1xf32>
    %262 = arith.addf %259, %261 : vector<4x1xf32>
    %263 = vector.broadcast %261 : vector<4x1xf32> to vector<4x128xf32>
    %264 = arith.mulf %263, %181 : vector<4x128xf32>
    %265 = arith.addf %258, %264 : vector<4x128xf32>
    %266 = arith.subf %252, %257 : vector<4x1xf32>
    %267 = math.exp %266 : vector<4x1xf32>
    %268 = arith.addf %262, %267 : vector<4x1xf32>
    %269 = vector.broadcast %267 : vector<4x1xf32> to vector<4x128xf32>
    %270 = arith.mulf %269, %189 : vector<4x128xf32>
    %271 = arith.addf %265, %270 : vector<4x128xf32>
    %272 = arith.subf %255, %257 : vector<4x1xf32>
    %273 = math.exp %272 : vector<4x1xf32>
    %274 = arith.addf %268, %273 : vector<4x1xf32>
    %275 = vector.broadcast %273 : vector<4x1xf32> to vector<4x128xf32>
    %276 = arith.mulf %275, %197 : vector<4x128xf32>
    %277 = arith.addf %271, %276 : vector<4x128xf32>
    %278 = tpu.reciprocal %274 {approx = true} : vector<4x1xf32> -> vector<4x1xf32>
    %279 = vector.broadcast %278 : vector<4x1xf32> to vector<4x128xf32>
    %280 = arith.mulf %277, %279 : vector<4x128xf32>
    %c0_99 = arith.constant 0 : index
    %c0_100 = arith.constant 0 : index
    %281 = vector.load %arg3[%c0_99, %c0_100] : memref<128x128xbf16, #tpu.memory_space<vmem>>, vector<128x128xbf16>
    %282 = arith.truncf %280 : vector<4x128xf32> to vector<4x128xbf16>
    %cst_101 = arith.constant dense<0.000000e+00> : vector<4x128xf32>
    %283 = tpu.matmul %282, %281, %cst_101 {dimension_numbers = #tpu.dot_dimension_numbers<[1], [0], [0], [1], [0, 0, 1, 1], [], []>} : vector<4x128xbf16>, vector<128x128xbf16>, vector<4x128xf32> -> vector<4x128xf32>
    %c0_102 = arith.constant 0 : index
    %c0_103 = arith.constant 0 : index
    %284 = vector.load %arg4[%c0_102, %c0_103] : memref<128x128xbf16, #tpu.memory_space<vmem>>, vector<128x128xbf16>
    %285 = arith.truncf %124 : vector<4x128xf32> to vector<4x128xbf16>
    %cst_104 = arith.constant dense<0.000000e+00> : vector<4x128xf32>
    %286 = tpu.matmul %285, %284, %cst_104 {dimension_numbers = #tpu.dot_dimension_numbers<[1], [0], [0], [1], [0, 0, 1, 1], [], []>} : vector<4x128xbf16>, vector<128x128xbf16>, vector<4x128xf32> -> vector<4x128xf32>
    %c0_105 = arith.constant 0 : index
    %c0_106 = arith.constant 0 : index
    %287 = vector.load %arg5[%c0_105, %c0_106] : memref<128x128xbf16, #tpu.memory_space<vmem>>, vector<128x128xbf16>
    %288 = arith.truncf %283 : vector<4x128xf32> to vector<4x128xbf16>
    %cst_107 = arith.constant dense<0.000000e+00> : vector<4x128xf32>
    %289 = tpu.matmul %288, %287, %cst_107 {dimension_numbers = #tpu.dot_dimension_numbers<[1], [0], [0], [1], [0, 0, 1, 1], [], []>} : vector<4x128xbf16>, vector<128x128xbf16>, vector<4x128xf32> -> vector<4x128xf32>
    %290 = arith.addf %286, %289 : vector<4x128xf32>
    %c0_108 = arith.constant 0 : index
    %c0_109 = arith.constant 0 : index
    %291 = vector.load %arg6[%c0_108, %c0_109] : memref<1x128xf32, #tpu.memory_space<vmem>>, vector<1x128xf32>
    %292 = vector.broadcast %291 : vector<1x128xf32> to vector<4x128xf32>
    %293 = arith.addf %290, %292 : vector<4x128xf32>
    %cst_110 = arith.constant 0.000000e+00 : f32
    %294 = vector.broadcast %cst_110 : f32 to vector<4x128xf32>
    %295 = arith.maximumf %293, %294 : vector<4x128xf32>
    %296 = arith.mulf %195, %180 : vector<4x128xf32>
    %cst_111 = arith.constant dense<0.000000e+00> : vector<4xf32>
    %297 = vector.multi_reduction <add>, %296, %cst_111 [1] : vector<4x128xf32> to vector<4xf32>
    %298 = vector.shape_cast %297 : vector<4xf32> to vector<4x1xf32>
    %299 = arith.mulf %195, %188 : vector<4x128xf32>
    %cst_112 = arith.constant dense<0.000000e+00> : vector<4xf32>
    %300 = vector.multi_reduction <add>, %299, %cst_112 [1] : vector<4x128xf32> to vector<4xf32>
    %301 = vector.shape_cast %300 : vector<4xf32> to vector<4x1xf32>
    %302 = arith.mulf %195, %196 : vector<4x128xf32>
    %cst_113 = arith.constant dense<0.000000e+00> : vector<4xf32>
    %303 = vector.multi_reduction <add>, %302, %cst_113 [1] : vector<4x128xf32> to vector<4xf32>
    %304 = vector.shape_cast %303 : vector<4xf32> to vector<4x1xf32>
    %305 = arith.maximumf %298, %301 : vector<4x1xf32>
    %306 = arith.maximumf %305, %304 : vector<4x1xf32>
    %cst_114 = arith.constant 0.000000e+00 : f32
    %307 = vector.broadcast %cst_114 : f32 to vector<4x128xf32>
    %cst_115 = arith.constant 0.000000e+00 : f32
    %308 = vector.broadcast %cst_115 : f32 to vector<4x1xf32>
    %309 = arith.subf %298, %306 : vector<4x1xf32>
    %310 = math.exp %309 : vector<4x1xf32>
    %311 = arith.addf %308, %310 : vector<4x1xf32>
    %312 = vector.broadcast %310 : vector<4x1xf32> to vector<4x128xf32>
    %313 = arith.mulf %312, %181 : vector<4x128xf32>
    %314 = arith.addf %307, %313 : vector<4x128xf32>
    %315 = arith.subf %301, %306 : vector<4x1xf32>
    %316 = math.exp %315 : vector<4x1xf32>
    %317 = arith.addf %311, %316 : vector<4x1xf32>
    %318 = vector.broadcast %316 : vector<4x1xf32> to vector<4x128xf32>
    %319 = arith.mulf %318, %189 : vector<4x128xf32>
    %320 = arith.addf %314, %319 : vector<4x128xf32>
    %321 = arith.subf %304, %306 : vector<4x1xf32>
    %322 = math.exp %321 : vector<4x1xf32>
    %323 = arith.addf %317, %322 : vector<4x1xf32>
    %324 = vector.broadcast %322 : vector<4x1xf32> to vector<4x128xf32>
    %325 = arith.mulf %324, %197 : vector<4x128xf32>
    %326 = arith.addf %320, %325 : vector<4x128xf32>
    %327 = tpu.reciprocal %323 {approx = true} : vector<4x1xf32> -> vector<4x1xf32>
    %328 = vector.broadcast %327 : vector<4x1xf32> to vector<4x128xf32>
    %329 = arith.mulf %326, %328 : vector<4x128xf32>
    %c0_116 = arith.constant 0 : index
    %c0_117 = arith.constant 0 : index
    %330 = vector.load %arg3[%c0_116, %c0_117] : memref<128x128xbf16, #tpu.memory_space<vmem>>, vector<128x128xbf16>
    %331 = arith.truncf %329 : vector<4x128xf32> to vector<4x128xbf16>
    %cst_118 = arith.constant dense<0.000000e+00> : vector<4x128xf32>
    %332 = tpu.matmul %331, %330, %cst_118 {dimension_numbers = #tpu.dot_dimension_numbers<[1], [0], [0], [1], [0, 0, 1, 1], [], []>} : vector<4x128xbf16>, vector<128x128xbf16>, vector<4x128xf32> -> vector<4x128xf32>
    %c0_119 = arith.constant 0 : index
    %c0_120 = arith.constant 0 : index
    %333 = vector.load %arg4[%c0_119, %c0_120] : memref<128x128xbf16, #tpu.memory_space<vmem>>, vector<128x128xbf16>
    %334 = arith.truncf %173 : vector<4x128xf32> to vector<4x128xbf16>
    %cst_121 = arith.constant dense<0.000000e+00> : vector<4x128xf32>
    %335 = tpu.matmul %334, %333, %cst_121 {dimension_numbers = #tpu.dot_dimension_numbers<[1], [0], [0], [1], [0, 0, 1, 1], [], []>} : vector<4x128xbf16>, vector<128x128xbf16>, vector<4x128xf32> -> vector<4x128xf32>
    %c0_122 = arith.constant 0 : index
    %c0_123 = arith.constant 0 : index
    %336 = vector.load %arg5[%c0_122, %c0_123] : memref<128x128xbf16, #tpu.memory_space<vmem>>, vector<128x128xbf16>
    %337 = arith.truncf %332 : vector<4x128xf32> to vector<4x128xbf16>
    %cst_124 = arith.constant dense<0.000000e+00> : vector<4x128xf32>
    %338 = tpu.matmul %337, %336, %cst_124 {dimension_numbers = #tpu.dot_dimension_numbers<[1], [0], [0], [1], [0, 0, 1, 1], [], []>} : vector<4x128xbf16>, vector<128x128xbf16>, vector<4x128xf32> -> vector<4x128xf32>
    %339 = arith.addf %335, %338 : vector<4x128xf32>
    %c0_125 = arith.constant 0 : index
    %c0_126 = arith.constant 0 : index
    %340 = vector.load %arg6[%c0_125, %c0_126] : memref<1x128xf32, #tpu.memory_space<vmem>>, vector<1x128xf32>
    %341 = vector.broadcast %340 : vector<1x128xf32> to vector<4x128xf32>
    %342 = arith.addf %339, %341 : vector<4x128xf32>
    %cst_127 = arith.constant 0.000000e+00 : f32
    %343 = vector.broadcast %cst_127 : f32 to vector<4x128xf32>
    %344 = arith.maximumf %342, %343 : vector<4x128xf32>
    %c0_128 = arith.constant 0 : index
    %c0_129 = arith.constant 0 : index
    %345 = vector.load %arg2[%c0_128, %c0_129] : memref<128x384xbf16, #tpu.memory_space<vmem>>, vector<128x384xbf16>
    %346 = arith.truncf %246 : vector<4x128xf32> to vector<4x128xbf16>
    %cst_130 = arith.constant dense<0.000000e+00> : vector<4x384xf32>
    %347 = tpu.matmul %346, %345, %cst_130 {dimension_numbers = #tpu.dot_dimension_numbers<[1], [0], [0], [1], [0, 0, 1, 1], [], []>} : vector<4x128xbf16>, vector<128x384xbf16>, vector<4x384xf32> -> vector<4x384xf32>
    %348 = vector.extract_strided_slice %347 {offsets = [0, 0], sizes = [4, 128], strides = [1, 1]} : vector<4x384xf32> to vector<4x128xf32>
    %cst_131 = arith.constant 0.0883883461 : f32
    %349 = vector.broadcast %cst_131 : f32 to vector<4x128xf32>
    %350 = arith.mulf %348, %349 : vector<4x128xf32>
    %351 = vector.extract_strided_slice %347 {offsets = [0, 128], sizes = [4, 128], strides = [1, 1]} : vector<4x384xf32> to vector<4x128xf32>
    %352 = vector.extract_strided_slice %347 {offsets = [0, 256], sizes = [4, 128], strides = [1, 1]} : vector<4x384xf32> to vector<4x128xf32>
    %c0_132 = arith.constant 0 : index
    %c0_133 = arith.constant 0 : index
    %353 = vector.load %arg2[%c0_132, %c0_133] : memref<128x384xbf16, #tpu.memory_space<vmem>>, vector<128x384xbf16>
    %354 = arith.truncf %295 : vector<4x128xf32> to vector<4x128xbf16>
    %cst_134 = arith.constant dense<0.000000e+00> : vector<4x384xf32>
    %355 = tpu.matmul %354, %353, %cst_134 {dimension_numbers = #tpu.dot_dimension_numbers<[1], [0], [0], [1], [0, 0, 1, 1], [], []>} : vector<4x128xbf16>, vector<128x384xbf16>, vector<4x384xf32> -> vector<4x384xf32>
    %356 = vector.extract_strided_slice %355 {offsets = [0, 0], sizes = [4, 128], strides = [1, 1]} : vector<4x384xf32> to vector<4x128xf32>
    %cst_135 = arith.constant 0.0883883461 : f32
    %357 = vector.broadcast %cst_135 : f32 to vector<4x128xf32>
    %358 = arith.mulf %356, %357 : vector<4x128xf32>
    %359 = vector.extract_strided_slice %355 {offsets = [0, 128], sizes = [4, 128], strides = [1, 1]} : vector<4x384xf32> to vector<4x128xf32>
    %360 = vector.extract_strided_slice %355 {offsets = [0, 256], sizes = [4, 128], strides = [1, 1]} : vector<4x384xf32> to vector<4x128xf32>
    %c0_136 = arith.constant 0 : index
    %c0_137 = arith.constant 0 : index
    %361 = vector.load %arg2[%c0_136, %c0_137] : memref<128x384xbf16, #tpu.memory_space<vmem>>, vector<128x384xbf16>
    %362 = arith.truncf %344 : vector<4x128xf32> to vector<4x128xbf16>
    %cst_138 = arith.constant dense<0.000000e+00> : vector<4x384xf32>
    %363 = tpu.matmul %362, %361, %cst_138 {dimension_numbers = #tpu.dot_dimension_numbers<[1], [0], [0], [1], [0, 0, 1, 1], [], []>} : vector<4x128xbf16>, vector<128x384xbf16>, vector<4x384xf32> -> vector<4x384xf32>
    %364 = vector.extract_strided_slice %363 {offsets = [0, 0], sizes = [4, 128], strides = [1, 1]} : vector<4x384xf32> to vector<4x128xf32>
    %cst_139 = arith.constant 0.0883883461 : f32
    %365 = vector.broadcast %cst_139 : f32 to vector<4x128xf32>
    %366 = arith.mulf %364, %365 : vector<4x128xf32>
    %367 = vector.extract_strided_slice %363 {offsets = [0, 128], sizes = [4, 128], strides = [1, 1]} : vector<4x384xf32> to vector<4x128xf32>
    %368 = vector.extract_strided_slice %363 {offsets = [0, 256], sizes = [4, 128], strides = [1, 1]} : vector<4x384xf32> to vector<4x128xf32>
    %369 = arith.mulf %350, %351 : vector<4x128xf32>
    %cst_140 = arith.constant dense<0.000000e+00> : vector<4xf32>
    %370 = vector.multi_reduction <add>, %369, %cst_140 [1] : vector<4x128xf32> to vector<4xf32>
    %371 = vector.shape_cast %370 : vector<4xf32> to vector<4x1xf32>
    %372 = arith.mulf %350, %359 : vector<4x128xf32>
    %cst_141 = arith.constant dense<0.000000e+00> : vector<4xf32>
    %373 = vector.multi_reduction <add>, %372, %cst_141 [1] : vector<4x128xf32> to vector<4xf32>
    %374 = vector.shape_cast %373 : vector<4xf32> to vector<4x1xf32>
    %375 = arith.mulf %350, %367 : vector<4x128xf32>
    %cst_142 = arith.constant dense<0.000000e+00> : vector<4xf32>
    %376 = vector.multi_reduction <add>, %375, %cst_142 [1] : vector<4x128xf32> to vector<4xf32>
    %377 = vector.shape_cast %376 : vector<4xf32> to vector<4x1xf32>
    %378 = arith.maximumf %371, %374 : vector<4x1xf32>
    %379 = arith.maximumf %378, %377 : vector<4x1xf32>
    %cst_143 = arith.constant 0.000000e+00 : f32
    %380 = vector.broadcast %cst_143 : f32 to vector<4x128xf32>
    %cst_144 = arith.constant 0.000000e+00 : f32
    %381 = vector.broadcast %cst_144 : f32 to vector<4x1xf32>
    %382 = arith.subf %371, %379 : vector<4x1xf32>
    %383 = math.exp %382 : vector<4x1xf32>
    %384 = arith.addf %381, %383 : vector<4x1xf32>
    %385 = vector.broadcast %383 : vector<4x1xf32> to vector<4x128xf32>
    %386 = arith.mulf %385, %352 : vector<4x128xf32>
    %387 = arith.addf %380, %386 : vector<4x128xf32>
    %388 = arith.subf %374, %379 : vector<4x1xf32>
    %389 = math.exp %388 : vector<4x1xf32>
    %390 = arith.addf %384, %389 : vector<4x1xf32>
    %391 = vector.broadcast %389 : vector<4x1xf32> to vector<4x128xf32>
    %392 = arith.mulf %391, %360 : vector<4x128xf32>
    %393 = arith.addf %387, %392 : vector<4x128xf32>
    %394 = arith.subf %377, %379 : vector<4x1xf32>
    %395 = math.exp %394 : vector<4x1xf32>
    %396 = arith.addf %390, %395 : vector<4x1xf32>
    %397 = vector.broadcast %395 : vector<4x1xf32> to vector<4x128xf32>
    %398 = arith.mulf %397, %368 : vector<4x128xf32>
    %399 = arith.addf %393, %398 : vector<4x128xf32>
    %400 = tpu.reciprocal %396 {approx = true} : vector<4x1xf32> -> vector<4x1xf32>
    %401 = vector.broadcast %400 : vector<4x1xf32> to vector<4x128xf32>
    %402 = arith.mulf %399, %401 : vector<4x128xf32>
    %c0_145 = arith.constant 0 : index
    %c0_146 = arith.constant 0 : index
    %403 = vector.load %arg3[%c0_145, %c0_146] : memref<128x128xbf16, #tpu.memory_space<vmem>>, vector<128x128xbf16>
    %404 = arith.truncf %402 : vector<4x128xf32> to vector<4x128xbf16>
    %cst_147 = arith.constant dense<0.000000e+00> : vector<4x128xf32>
    %405 = tpu.matmul %404, %403, %cst_147 {dimension_numbers = #tpu.dot_dimension_numbers<[1], [0], [0], [1], [0, 0, 1, 1], [], []>} : vector<4x128xbf16>, vector<128x128xbf16>, vector<4x128xf32> -> vector<4x128xf32>
    %c0_148 = arith.constant 0 : index
    %c0_149 = arith.constant 0 : index
    %406 = vector.load %arg4[%c0_148, %c0_149] : memref<128x128xbf16, #tpu.memory_space<vmem>>, vector<128x128xbf16>
    %407 = arith.truncf %246 : vector<4x128xf32> to vector<4x128xbf16>
    %cst_150 = arith.constant dense<0.000000e+00> : vector<4x128xf32>
    %408 = tpu.matmul %407, %406, %cst_150 {dimension_numbers = #tpu.dot_dimension_numbers<[1], [0], [0], [1], [0, 0, 1, 1], [], []>} : vector<4x128xbf16>, vector<128x128xbf16>, vector<4x128xf32> -> vector<4x128xf32>
    %c0_151 = arith.constant 0 : index
    %c0_152 = arith.constant 0 : index
    %409 = vector.load %arg5[%c0_151, %c0_152] : memref<128x128xbf16, #tpu.memory_space<vmem>>, vector<128x128xbf16>
    %410 = arith.truncf %405 : vector<4x128xf32> to vector<4x128xbf16>
    %cst_153 = arith.constant dense<0.000000e+00> : vector<4x128xf32>
    %411 = tpu.matmul %410, %409, %cst_153 {dimension_numbers = #tpu.dot_dimension_numbers<[1], [0], [0], [1], [0, 0, 1, 1], [], []>} : vector<4x128xbf16>, vector<128x128xbf16>, vector<4x128xf32> -> vector<4x128xf32>
    %412 = arith.addf %408, %411 : vector<4x128xf32>
    %c0_154 = arith.constant 0 : index
    %c0_155 = arith.constant 0 : index
    %413 = vector.load %arg6[%c0_154, %c0_155] : memref<1x128xf32, #tpu.memory_space<vmem>>, vector<1x128xf32>
    %414 = vector.broadcast %413 : vector<1x128xf32> to vector<4x128xf32>
    %415 = arith.addf %412, %414 : vector<4x128xf32>
    %cst_156 = arith.constant 0.000000e+00 : f32
    %416 = vector.broadcast %cst_156 : f32 to vector<4x128xf32>
    %417 = arith.maximumf %415, %416 : vector<4x128xf32>
    %418 = arith.mulf %358, %351 : vector<4x128xf32>
    %cst_157 = arith.constant dense<0.000000e+00> : vector<4xf32>
    %419 = vector.multi_reduction <add>, %418, %cst_157 [1] : vector<4x128xf32> to vector<4xf32>
    %420 = vector.shape_cast %419 : vector<4xf32> to vector<4x1xf32>
    %421 = arith.mulf %358, %359 : vector<4x128xf32>
    %cst_158 = arith.constant dense<0.000000e+00> : vector<4xf32>
    %422 = vector.multi_reduction <add>, %421, %cst_158 [1] : vector<4x128xf32> to vector<4xf32>
    %423 = vector.shape_cast %422 : vector<4xf32> to vector<4x1xf32>
    %424 = arith.mulf %358, %367 : vector<4x128xf32>
    %cst_159 = arith.constant dense<0.000000e+00> : vector<4xf32>
    %425 = vector.multi_reduction <add>, %424, %cst_159 [1] : vector<4x128xf32> to vector<4xf32>
    %426 = vector.shape_cast %425 : vector<4xf32> to vector<4x1xf32>
    %427 = arith.maximumf %420, %423 : vector<4x1xf32>
    %428 = arith.maximumf %427, %426 : vector<4x1xf32>
    %cst_160 = arith.constant 0.000000e+00 : f32
    %429 = vector.broadcast %cst_160 : f32 to vector<4x128xf32>
    %cst_161 = arith.constant 0.000000e+00 : f32
    %430 = vector.broadcast %cst_161 : f32 to vector<4x1xf32>
    %431 = arith.subf %420, %428 : vector<4x1xf32>
    %432 = math.exp %431 : vector<4x1xf32>
    %433 = arith.addf %430, %432 : vector<4x1xf32>
    %434 = vector.broadcast %432 : vector<4x1xf32> to vector<4x128xf32>
    %435 = arith.mulf %434, %352 : vector<4x128xf32>
    %436 = arith.addf %429, %435 : vector<4x128xf32>
    %437 = arith.subf %423, %428 : vector<4x1xf32>
    %438 = math.exp %437 : vector<4x1xf32>
    %439 = arith.addf %433, %438 : vector<4x1xf32>
    %440 = vector.broadcast %438 : vector<4x1xf32> to vector<4x128xf32>
    %441 = arith.mulf %440, %360 : vector<4x128xf32>
    %442 = arith.addf %436, %441 : vector<4x128xf32>
    %443 = arith.subf %426, %428 : vector<4x1xf32>
    %444 = math.exp %443 : vector<4x1xf32>
    %445 = arith.addf %439, %444 : vector<4x1xf32>
    %446 = vector.broadcast %444 : vector<4x1xf32> to vector<4x128xf32>
    %447 = arith.mulf %446, %368 : vector<4x128xf32>
    %448 = arith.addf %442, %447 : vector<4x128xf32>
    %449 = tpu.reciprocal %445 {approx = true} : vector<4x1xf32> -> vector<4x1xf32>
    %450 = vector.broadcast %449 : vector<4x1xf32> to vector<4x128xf32>
    %451 = arith.mulf %448, %450 : vector<4x128xf32>
    %c0_162 = arith.constant 0 : index
    %c0_163 = arith.constant 0 : index
    %452 = vector.load %arg3[%c0_162, %c0_163] : memref<128x128xbf16, #tpu.memory_space<vmem>>, vector<128x128xbf16>
    %453 = arith.truncf %451 : vector<4x128xf32> to vector<4x128xbf16>
    %cst_164 = arith.constant dense<0.000000e+00> : vector<4x128xf32>
    %454 = tpu.matmul %453, %452, %cst_164 {dimension_numbers = #tpu.dot_dimension_numbers<[1], [0], [0], [1], [0, 0, 1, 1], [], []>} : vector<4x128xbf16>, vector<128x128xbf16>, vector<4x128xf32> -> vector<4x128xf32>
    %c0_165 = arith.constant 0 : index
    %c0_166 = arith.constant 0 : index
    %455 = vector.load %arg4[%c0_165, %c0_166] : memref<128x128xbf16, #tpu.memory_space<vmem>>, vector<128x128xbf16>
    %456 = arith.truncf %295 : vector<4x128xf32> to vector<4x128xbf16>
    %cst_167 = arith.constant dense<0.000000e+00> : vector<4x128xf32>
    %457 = tpu.matmul %456, %455, %cst_167 {dimension_numbers = #tpu.dot_dimension_numbers<[1], [0], [0], [1], [0, 0, 1, 1], [], []>} : vector<4x128xbf16>, vector<128x128xbf16>, vector<4x128xf32> -> vector<4x128xf32>
    %c0_168 = arith.constant 0 : index
    %c0_169 = arith.constant 0 : index
    %458 = vector.load %arg5[%c0_168, %c0_169] : memref<128x128xbf16, #tpu.memory_space<vmem>>, vector<128x128xbf16>
    %459 = arith.truncf %454 : vector<4x128xf32> to vector<4x128xbf16>
    %cst_170 = arith.constant dense<0.000000e+00> : vector<4x128xf32>
    %460 = tpu.matmul %459, %458, %cst_170 {dimension_numbers = #tpu.dot_dimension_numbers<[1], [0], [0], [1], [0, 0, 1, 1], [], []>} : vector<4x128xbf16>, vector<128x128xbf16>, vector<4x128xf32> -> vector<4x128xf32>
    %461 = arith.addf %457, %460 : vector<4x128xf32>
    %c0_171 = arith.constant 0 : index
    %c0_172 = arith.constant 0 : index
    %462 = vector.load %arg6[%c0_171, %c0_172] : memref<1x128xf32, #tpu.memory_space<vmem>>, vector<1x128xf32>
    %463 = vector.broadcast %462 : vector<1x128xf32> to vector<4x128xf32>
    %464 = arith.addf %461, %463 : vector<4x128xf32>
    %cst_173 = arith.constant 0.000000e+00 : f32
    %465 = vector.broadcast %cst_173 : f32 to vector<4x128xf32>
    %466 = arith.maximumf %464, %465 : vector<4x128xf32>
    %467 = arith.mulf %366, %351 : vector<4x128xf32>
    %cst_174 = arith.constant dense<0.000000e+00> : vector<4xf32>
    %468 = vector.multi_reduction <add>, %467, %cst_174 [1] : vector<4x128xf32> to vector<4xf32>
    %469 = vector.shape_cast %468 : vector<4xf32> to vector<4x1xf32>
    %470 = arith.mulf %366, %359 : vector<4x128xf32>
    %cst_175 = arith.constant dense<0.000000e+00> : vector<4xf32>
    %471 = vector.multi_reduction <add>, %470, %cst_175 [1] : vector<4x128xf32> to vector<4xf32>
    %472 = vector.shape_cast %471 : vector<4xf32> to vector<4x1xf32>
    %473 = arith.mulf %366, %367 : vector<4x128xf32>
    %cst_176 = arith.constant dense<0.000000e+00> : vector<4xf32>
    %474 = vector.multi_reduction <add>, %473, %cst_176 [1] : vector<4x128xf32> to vector<4xf32>
    %475 = vector.shape_cast %474 : vector<4xf32> to vector<4x1xf32>
    %476 = arith.maximumf %469, %472 : vector<4x1xf32>
    %477 = arith.maximumf %476, %475 : vector<4x1xf32>
    %cst_177 = arith.constant 0.000000e+00 : f32
    %478 = vector.broadcast %cst_177 : f32 to vector<4x128xf32>
    %cst_178 = arith.constant 0.000000e+00 : f32
    %479 = vector.broadcast %cst_178 : f32 to vector<4x1xf32>
    %480 = arith.subf %469, %477 : vector<4x1xf32>
    %481 = math.exp %480 : vector<4x1xf32>
    %482 = arith.addf %479, %481 : vector<4x1xf32>
    %483 = vector.broadcast %481 : vector<4x1xf32> to vector<4x128xf32>
    %484 = arith.mulf %483, %352 : vector<4x128xf32>
    %485 = arith.addf %478, %484 : vector<4x128xf32>
    %486 = arith.subf %472, %477 : vector<4x1xf32>
    %487 = math.exp %486 : vector<4x1xf32>
    %488 = arith.addf %482, %487 : vector<4x1xf32>
    %489 = vector.broadcast %487 : vector<4x1xf32> to vector<4x128xf32>
    %490 = arith.mulf %489, %360 : vector<4x128xf32>
    %491 = arith.addf %485, %490 : vector<4x128xf32>
    %492 = arith.subf %475, %477 : vector<4x1xf32>
    %493 = math.exp %492 : vector<4x1xf32>
    %494 = arith.addf %488, %493 : vector<4x1xf32>
    %495 = vector.broadcast %493 : vector<4x1xf32> to vector<4x128xf32>
    %496 = arith.mulf %495, %368 : vector<4x128xf32>
    %497 = arith.addf %491, %496 : vector<4x128xf32>
    %498 = tpu.reciprocal %494 {approx = true} : vector<4x1xf32> -> vector<4x1xf32>
    %499 = vector.broadcast %498 : vector<4x1xf32> to vector<4x128xf32>
    %500 = arith.mulf %497, %499 : vector<4x128xf32>
    %c0_179 = arith.constant 0 : index
    %c0_180 = arith.constant 0 : index
    %501 = vector.load %arg3[%c0_179, %c0_180] : memref<128x128xbf16, #tpu.memory_space<vmem>>, vector<128x128xbf16>
    %502 = arith.truncf %500 : vector<4x128xf32> to vector<4x128xbf16>
    %cst_181 = arith.constant dense<0.000000e+00> : vector<4x128xf32>
    %503 = tpu.matmul %502, %501, %cst_181 {dimension_numbers = #tpu.dot_dimension_numbers<[1], [0], [0], [1], [0, 0, 1, 1], [], []>} : vector<4x128xbf16>, vector<128x128xbf16>, vector<4x128xf32> -> vector<4x128xf32>
    %c0_182 = arith.constant 0 : index
    %c0_183 = arith.constant 0 : index
    %504 = vector.load %arg4[%c0_182, %c0_183] : memref<128x128xbf16, #tpu.memory_space<vmem>>, vector<128x128xbf16>
    %505 = arith.truncf %344 : vector<4x128xf32> to vector<4x128xbf16>
    %cst_184 = arith.constant dense<0.000000e+00> : vector<4x128xf32>
    %506 = tpu.matmul %505, %504, %cst_184 {dimension_numbers = #tpu.dot_dimension_numbers<[1], [0], [0], [1], [0, 0, 1, 1], [], []>} : vector<4x128xbf16>, vector<128x128xbf16>, vector<4x128xf32> -> vector<4x128xf32>
    %c0_185 = arith.constant 0 : index
    %c0_186 = arith.constant 0 : index
    %507 = vector.load %arg5[%c0_185, %c0_186] : memref<128x128xbf16, #tpu.memory_space<vmem>>, vector<128x128xbf16>
    %508 = arith.truncf %503 : vector<4x128xf32> to vector<4x128xbf16>
    %cst_187 = arith.constant dense<0.000000e+00> : vector<4x128xf32>
    %509 = tpu.matmul %508, %507, %cst_187 {dimension_numbers = #tpu.dot_dimension_numbers<[1], [0], [0], [1], [0, 0, 1, 1], [], []>} : vector<4x128xbf16>, vector<128x128xbf16>, vector<4x128xf32> -> vector<4x128xf32>
    %510 = arith.addf %506, %509 : vector<4x128xf32>
    %c0_188 = arith.constant 0 : index
    %c0_189 = arith.constant 0 : index
    %511 = vector.load %arg6[%c0_188, %c0_189] : memref<1x128xf32, #tpu.memory_space<vmem>>, vector<1x128xf32>
    %512 = vector.broadcast %511 : vector<1x128xf32> to vector<4x128xf32>
    %513 = arith.addf %510, %512 : vector<4x128xf32>
    %cst_190 = arith.constant 0.000000e+00 : f32
    %514 = vector.broadcast %cst_190 : f32 to vector<4x128xf32>
    %515 = arith.maximumf %513, %514 : vector<4x128xf32>
    %516 = tpu.concatenate %417, %466, %515 in 1 : vector<4x128xf32>, vector<4x128xf32>, vector<4x128xf32> -> vector<4x384xf32>
    %c0_191 = arith.constant 0 : index
    %c0_192 = arith.constant 0 : index
    %517 = vector.load %arg7[%c0_191, %c0_192] : memref<4x384xf32, #tpu.memory_space<vmem>>, vector<4x384xf32>
    tpu.vector_store %arg7[%c0_191, %c0_192], %516 {strides = array<i32>} : memref<4x384xf32, #tpu.memory_space<vmem>>, vector<4x384xf32>,
    return
  }
  func.func @transform_0(%arg0: i32) -> (i32, i32) {
    %c0_i32 = arith.constant 0 : i32
    %c0_i32_0 = arith.constant 0 : i32
    return %arg0, %c0_i32 : i32, i32
  }
  func.func @transform_1(%arg0: i32) -> (i32, i32) {
    %c0_i32 = arith.constant 0 : i32
    %c0_i32_0 = arith.constant 0 : i32
    %c0_i32_1 = arith.constant 0 : i32
    return %c0_i32, %c0_i32_0 : i32, i32
  }
  func.func @transform_2(%arg0: i32) -> (i32, i32) {
    %c0_i32 = arith.constant 0 : i32
    %c0_i32_0 = arith.constant 0 : i32
    %c0_i32_1 = arith.constant 0 : i32
    return %c0_i32, %c0_i32_0 : i32, i32
  }
  func.func @transform_3(%arg0: i32) -> (i32, i32) {
    %c0_i32 = arith.constant 0 : i32
    %c0_i32_0 = arith.constant 0 : i32
    %c0_i32_1 = arith.constant 0 : i32
    return %c0_i32, %c0_i32_0 : i32, i32
  }
  func.func @transform_4(%arg0: i32) -> (i32, i32) {
    %c0_i32 = arith.constant 0 : i32
    %c0_i32_0 = arith.constant 0 : i32
    %c0_i32_1 = arith.constant 0 : i32
    return %c0_i32, %c0_i32_0 : i32, i32
  }
  func.func @transform_5(%arg0: i32) -> (i32, i32) {
    %c0_i32 = arith.constant 0 : i32
    %c0_i32_0 = arith.constant 0 : i32
    %c0_i32_1 = arith.constant 0 : i32
    return %c0_i32, %c0_i32_0 : i32, i32
  }
  func.func @transform_6(%arg0: i32) -> (i32, i32) {
    %c0_i32 = arith.constant 0 : i32
    %c0_i32_0 = arith.constant 0 : i32
    return %arg0, %c0_i32 : i32, i32
  }
}

module attributes {stable_mosaic.version = 11 : i64} {
  func.func @_sa_front_kernel(%arg0: i32, %arg1: i32, %arg2: memref<1x4x6xf32, #tpu.memory_space<vmem>>, %arg3: memref<1x4x6xf32, #tpu.memory_space<vmem>>, %arg4: memref<6x128xbf16, #tpu.memory_space<vmem>>, %arg5: memref<1x128xf32, #tpu.memory_space<vmem>>, %arg6: memref<2x128xbf16, #tpu.memory_space<vmem>>, %arg7: memref<1x128xf32, #tpu.memory_space<vmem>>, %arg8: memref<128x128xbf16, #tpu.memory_space<vmem>>, %arg9: memref<128x256xbf16, #tpu.memory_space<vmem>>, %arg10: memref<128x128xbf16, #tpu.memory_space<vmem>>, %arg11: memref<128x128xbf16, #tpu.memory_space<vmem>>, %arg12: memref<128x128xbf16, #tpu.memory_space<vmem>>, %arg13: memref<1x128xf32, #tpu.memory_space<vmem>>, %arg14: memref<4x128xf32, #tpu.memory_space<vmem>>) attributes {dimension_semantics = [#tpu.dimension_semantics<parallel>, #tpu.dimension_semantics<parallel>], iteration_bounds = array<i64: 3, 1>, scalar_prefetch = 0 : i64, scratch_operands = 0 : i64, tpu.core_type = #tpu.core_type<tc>, window_params = [{transform_indices = @transform_0, window_bounds = array<i64: 1, 4, 6>}, {transform_indices = @transform_1, window_bounds = array<i64: 1, 4, 6>}, {pipeline_mode = #tpu.pipeline_mode<synchronous>, transform_indices = @transform_2, window_bounds = array<i64: 6, 128>}, {pipeline_mode = #tpu.pipeline_mode<synchronous>, transform_indices = @transform_3, window_bounds = array<i64: 1, 128>}, {pipeline_mode = #tpu.pipeline_mode<synchronous>, transform_indices = @transform_4, window_bounds = array<i64: 2, 128>}, {pipeline_mode = #tpu.pipeline_mode<synchronous>, transform_indices = @transform_5, window_bounds = array<i64: 1, 128>}, {pipeline_mode = #tpu.pipeline_mode<synchronous>, transform_indices = @transform_6, window_bounds = array<i64: 128, 128>}, {pipeline_mode = #tpu.pipeline_mode<synchronous>, transform_indices = @transform_7, window_bounds = array<i64: 128, 256>}, {pipeline_mode = #tpu.pipeline_mode<synchronous>, transform_indices = @transform_8, window_bounds = array<i64: 128, 128>}, {pipeline_mode = #tpu.pipeline_mode<synchronous>, transform_indices = @transform_9, window_bounds = array<i64: 128, 128>}, {pipeline_mode = #tpu.pipeline_mode<synchronous>, transform_indices = @transform_10, window_bounds = array<i64: 128, 128>}, {pipeline_mode = #tpu.pipeline_mode<synchronous>, transform_indices = @transform_11, window_bounds = array<i64: 1, 128>}, {transform_indices = @transform_12, window_bounds = array<i64: 4, 128>}]} {
    %c0 = arith.constant 0 : index
    %c0_0 = arith.constant 0 : index
    %c0_1 = arith.constant 0 : index
    %0 = vector.load %arg2[%c0, %c0_0, %c0_1] : memref<1x4x6xf32, #tpu.memory_space<vmem>>, vector<1x4x6xf32>
    %1 = vector.shape_cast %0 : vector<1x4x6xf32> to vector<4x6xf32>
    %c0_2 = arith.constant 0 : index
    %c0_3 = arith.constant 0 : index
    %c0_4 = arith.constant 0 : index
    %2 = vector.load %arg3[%c0_2, %c0_3, %c0_4] : memref<1x4x6xf32, #tpu.memory_space<vmem>>, vector<1x4x6xf32>
    %3 = vector.shape_cast %2 : vector<1x4x6xf32> to vector<4x6xf32>
    %c0_5 = arith.constant 0 : index
    %c0_6 = arith.constant 0 : index
    %4 = vector.load %arg4[%c0_5, %c0_6] : memref<6x128xbf16, #tpu.memory_space<vmem>>, vector<6x128xbf16>
    %5 = arith.truncf %1 : vector<4x6xf32> to vector<4x6xbf16>
    %cst = arith.constant dense<0.000000e+00> : vector<4x128xf32>
    %6 = tpu.matmul %5, %4, %cst {dimension_numbers = #tpu.dot_dimension_numbers<[1], [0], [0], [1], [0, 0, 1, 1], [], []>} : vector<4x6xbf16>, vector<6x128xbf16>, vector<4x128xf32> -> vector<4x128xf32>
    %c0_7 = arith.constant 0 : index
    %c0_8 = arith.constant 0 : index
    %7 = vector.load %arg5[%c0_7, %c0_8] : memref<1x128xf32, #tpu.memory_space<vmem>>, vector<1x128xf32>
    %8 = vector.broadcast %7 : vector<1x128xf32> to vector<4x128xf32>
    %9 = arith.addf %6, %8 : vector<4x128xf32>
    %cst_9 = arith.constant 0.000000e+00 : f32
    %10 = vector.broadcast %cst_9 : f32 to vector<4x128xf32>
    %11 = arith.maximumf %9, %10 : vector<4x128xf32>
    %c0_10 = arith.constant 0 : index
    %c0_11 = arith.constant 0 : index
    %12 = vector.load %arg8[%c0_10, %c0_11] : memref<128x128xbf16, #tpu.memory_space<vmem>>, vector<128x128xbf16>
    %13 = arith.truncf %11 : vector<4x128xf32> to vector<4x128xbf16>
    %cst_12 = arith.constant dense<0.000000e+00> : vector<4x128xf32>
    %14 = tpu.matmul %13, %12, %cst_12 {dimension_numbers = #tpu.dot_dimension_numbers<[1], [0], [0], [1], [0, 0, 1, 1], [], []>} : vector<4x128xbf16>, vector<128x128xbf16>, vector<4x128xf32> -> vector<4x128xf32>
    %cst_13 = arith.constant 0.0883883461 : f32
    %15 = vector.broadcast %cst_13 : f32 to vector<4x128xf32>
    %16 = arith.mulf %14, %15 : vector<4x128xf32>
    %17 = vector.extract_strided_slice %3 {offsets = [0, 0], sizes = [4, 2], strides = [1, 1]} : vector<4x6xf32> to vector<4x2xf32>
    %c0_14 = arith.constant 0 : index
    %c0_15 = arith.constant 0 : index
    %18 = vector.load %arg6[%c0_14, %c0_15] : memref<2x128xbf16, #tpu.memory_space<vmem>>, vector<2x128xbf16>
    %19 = arith.truncf %17 : vector<4x2xf32> to vector<4x2xbf16>
    %cst_16 = arith.constant dense<0.000000e+00> : vector<4x128xf32>
    %20 = tpu.matmul %19, %18, %cst_16 {dimension_numbers = #tpu.dot_dimension_numbers<[1], [0], [0], [1], [0, 0, 1, 1], [], []>} : vector<4x2xbf16>, vector<2x128xbf16>, vector<4x128xf32> -> vector<4x128xf32>
    %c0_17 = arith.constant 0 : index
    %c0_18 = arith.constant 0 : index
    %21 = vector.load %arg7[%c0_17, %c0_18] : memref<1x128xf32, #tpu.memory_space<vmem>>, vector<1x128xf32>
    %22 = vector.broadcast %21 : vector<1x128xf32> to vector<4x128xf32>
    %23 = arith.addf %20, %22 : vector<4x128xf32>
    %cst_19 = arith.constant 0.000000e+00 : f32
    %24 = vector.broadcast %cst_19 : f32 to vector<4x128xf32>
    %25 = arith.maximumf %23, %24 : vector<4x128xf32>
    %c0_20 = arith.constant 0 : index
    %c0_21 = arith.constant 0 : index
    %26 = vector.load %arg9[%c0_20, %c0_21] : memref<128x256xbf16, #tpu.memory_space<vmem>>, vector<128x256xbf16>
    %27 = arith.truncf %25 : vector<4x128xf32> to vector<4x128xbf16>
    %cst_22 = arith.constant dense<0.000000e+00> : vector<4x256xf32>
    %28 = tpu.matmul %27, %26, %cst_22 {dimension_numbers = #tpu.dot_dimension_numbers<[1], [0], [0], [1], [0, 0, 1, 1], [], []>} : vector<4x128xbf16>, vector<128x256xbf16>, vector<4x256xf32> -> vector<4x256xf32>
    %29 = vector.extract_strided_slice %28 {offsets = [0, 0], sizes = [4, 128], strides = [1, 1]} : vector<4x256xf32> to vector<4x128xf32>
    %30 = arith.mulf %16, %29 : vector<4x128xf32>
    %cst_23 = arith.constant dense<0.000000e+00> : vector<4xf32>
    %31 = vector.multi_reduction <add>, %30, %cst_23 [1] : vector<4x128xf32> to vector<4xf32>
    %32 = vector.shape_cast %31 : vector<4xf32> to vector<4x1xf32>
    %33 = vector.extract_strided_slice %28 {offsets = [0, 128], sizes = [4, 128], strides = [1, 1]} : vector<4x256xf32> to vector<4x128xf32>
    %34 = vector.extract_strided_slice %3 {offsets = [0, 2], sizes = [4, 2], strides = [1, 1]} : vector<4x6xf32> to vector<4x2xf32>
    %c0_24 = arith.constant 0 : index
    %c0_25 = arith.constant 0 : index
    %35 = vector.load %arg6[%c0_24, %c0_25] : memref<2x128xbf16, #tpu.memory_space<vmem>>, vector<2x128xbf16>
    %36 = arith.truncf %34 : vector<4x2xf32> to vector<4x2xbf16>
    %cst_26 = arith.constant dense<0.000000e+00> : vector<4x128xf32>
    %37 = tpu.matmul %36, %35, %cst_26 {dimension_numbers = #tpu.dot_dimension_numbers<[1], [0], [0], [1], [0, 0, 1, 1], [], []>} : vector<4x2xbf16>, vector<2x128xbf16>, vector<4x128xf32> -> vector<4x128xf32>
    %c0_27 = arith.constant 0 : index
    %c0_28 = arith.constant 0 : index
    %38 = vector.load %arg7[%c0_27, %c0_28] : memref<1x128xf32, #tpu.memory_space<vmem>>, vector<1x128xf32>
    %39 = vector.broadcast %38 : vector<1x128xf32> to vector<4x128xf32>
    %40 = arith.addf %37, %39 : vector<4x128xf32>
    %cst_29 = arith.constant 0.000000e+00 : f32
    %41 = vector.broadcast %cst_29 : f32 to vector<4x128xf32>
    %42 = arith.maximumf %40, %41 : vector<4x128xf32>
    %c0_30 = arith.constant 0 : index
    %c0_31 = arith.constant 0 : index
    %43 = vector.load %arg9[%c0_30, %c0_31] : memref<128x256xbf16, #tpu.memory_space<vmem>>, vector<128x256xbf16>
    %44 = arith.truncf %42 : vector<4x128xf32> to vector<4x128xbf16>
    %cst_32 = arith.constant dense<0.000000e+00> : vector<4x256xf32>
    %45 = tpu.matmul %44, %43, %cst_32 {dimension_numbers = #tpu.dot_dimension_numbers<[1], [0], [0], [1], [0, 0, 1, 1], [], []>} : vector<4x128xbf16>, vector<128x256xbf16>, vector<4x256xf32> -> vector<4x256xf32>
    %46 = vector.extract_strided_slice %45 {offsets = [0, 0], sizes = [4, 128], strides = [1, 1]} : vector<4x256xf32> to vector<4x128xf32>
    %47 = arith.mulf %16, %46 : vector<4x128xf32>
    %cst_33 = arith.constant dense<0.000000e+00> : vector<4xf32>
    %48 = vector.multi_reduction <add>, %47, %cst_33 [1] : vector<4x128xf32> to vector<4xf32>
    %49 = vector.shape_cast %48 : vector<4xf32> to vector<4x1xf32>
    %50 = vector.extract_strided_slice %45 {offsets = [0, 128], sizes = [4, 128], strides = [1, 1]} : vector<4x256xf32> to vector<4x128xf32>
    %51 = vector.extract_strided_slice %3 {offsets = [0, 4], sizes = [4, 2], strides = [1, 1]} : vector<4x6xf32> to vector<4x2xf32>
    %c0_34 = arith.constant 0 : index
    %c0_35 = arith.constant 0 : index
    %52 = vector.load %arg6[%c0_34, %c0_35] : memref<2x128xbf16, #tpu.memory_space<vmem>>, vector<2x128xbf16>
    %53 = arith.truncf %51 : vector<4x2xf32> to vector<4x2xbf16>
    %cst_36 = arith.constant dense<0.000000e+00> : vector<4x128xf32>
    %54 = tpu.matmul %53, %52, %cst_36 {dimension_numbers = #tpu.dot_dimension_numbers<[1], [0], [0], [1], [0, 0, 1, 1], [], []>} : vector<4x2xbf16>, vector<2x128xbf16>, vector<4x128xf32> -> vector<4x128xf32>
    %c0_37 = arith.constant 0 : index
    %c0_38 = arith.constant 0 : index
    %55 = vector.load %arg7[%c0_37, %c0_38] : memref<1x128xf32, #tpu.memory_space<vmem>>, vector<1x128xf32>
    %56 = vector.broadcast %55 : vector<1x128xf32> to vector<4x128xf32>
    %57 = arith.addf %54, %56 : vector<4x128xf32>
    %cst_39 = arith.constant 0.000000e+00 : f32
    %58 = vector.broadcast %cst_39 : f32 to vector<4x128xf32>
    %59 = arith.maximumf %57, %58 : vector<4x128xf32>
    %c0_40 = arith.constant 0 : index
    %c0_41 = arith.constant 0 : index
    %60 = vector.load %arg9[%c0_40, %c0_41] : memref<128x256xbf16, #tpu.memory_space<vmem>>, vector<128x256xbf16>
    %61 = arith.truncf %59 : vector<4x128xf32> to vector<4x128xbf16>
    %cst_42 = arith.constant dense<0.000000e+00> : vector<4x256xf32>
    %62 = tpu.matmul %61, %60, %cst_42 {dimension_numbers = #tpu.dot_dimension_numbers<[1], [0], [0], [1], [0, 0, 1, 1], [], []>} : vector<4x128xbf16>, vector<128x256xbf16>, vector<4x256xf32> -> vector<4x256xf32>
    %63 = vector.extract_strided_slice %62 {offsets = [0, 0], sizes = [4, 128], strides = [1, 1]} : vector<4x256xf32> to vector<4x128xf32>
    %64 = arith.mulf %16, %63 : vector<4x128xf32>
    %cst_43 = arith.constant dense<0.000000e+00> : vector<4xf32>
    %65 = vector.multi_reduction <add>, %64, %cst_43 [1] : vector<4x128xf32> to vector<4xf32>
    %66 = vector.shape_cast %65 : vector<4xf32> to vector<4x1xf32>
    %67 = vector.extract_strided_slice %62 {offsets = [0, 128], sizes = [4, 128], strides = [1, 1]} : vector<4x256xf32> to vector<4x128xf32>
    %68 = arith.maximumf %32, %49 : vector<4x1xf32>
    %69 = arith.maximumf %68, %66 : vector<4x1xf32>
    %cst_44 = arith.constant 0.000000e+00 : f32
    %70 = vector.broadcast %cst_44 : f32 to vector<4x128xf32>
    %cst_45 = arith.constant 0.000000e+00 : f32
    %71 = vector.broadcast %cst_45 : f32 to vector<4x1xf32>
    %72 = arith.subf %32, %69 : vector<4x1xf32>
    %73 = math.exp %72 : vector<4x1xf32>
    %74 = arith.addf %71, %73 : vector<4x1xf32>
    %75 = vector.broadcast %73 : vector<4x1xf32> to vector<4x128xf32>
    %76 = arith.mulf %75, %33 : vector<4x128xf32>
    %77 = arith.addf %70, %76 : vector<4x128xf32>
    %78 = arith.subf %49, %69 : vector<4x1xf32>
    %79 = math.exp %78 : vector<4x1xf32>
    %80 = arith.addf %74, %79 : vector<4x1xf32>
    %81 = vector.broadcast %79 : vector<4x1xf32> to vector<4x128xf32>
    %82 = arith.mulf %81, %50 : vector<4x128xf32>
    %83 = arith.addf %77, %82 : vector<4x128xf32>
    %84 = arith.subf %66, %69 : vector<4x1xf32>
    %85 = math.exp %84 : vector<4x1xf32>
    %86 = arith.addf %80, %85 : vector<4x1xf32>
    %87 = vector.broadcast %85 : vector<4x1xf32> to vector<4x128xf32>
    %88 = arith.mulf %87, %67 : vector<4x128xf32>
    %89 = arith.addf %83, %88 : vector<4x128xf32>
    %90 = tpu.reciprocal %86 {approx = true} : vector<4x1xf32> -> vector<4x1xf32>
    %91 = vector.broadcast %90 : vector<4x1xf32> to vector<4x128xf32>
    %92 = arith.mulf %89, %91 : vector<4x128xf32>
    %c0_46 = arith.constant 0 : index
    %c0_47 = arith.constant 0 : index
    %93 = vector.load %arg10[%c0_46, %c0_47] : memref<128x128xbf16, #tpu.memory_space<vmem>>, vector<128x128xbf16>
    %94 = arith.truncf %92 : vector<4x128xf32> to vector<4x128xbf16>
    %cst_48 = arith.constant dense<0.000000e+00> : vector<4x128xf32>
    %95 = tpu.matmul %94, %93, %cst_48 {dimension_numbers = #tpu.dot_dimension_numbers<[1], [0], [0], [1], [0, 0, 1, 1], [], []>} : vector<4x128xbf16>, vector<128x128xbf16>, vector<4x128xf32> -> vector<4x128xf32>
    %c0_49 = arith.constant 0 : index
    %c0_50 = arith.constant 0 : index
    %96 = vector.load %arg11[%c0_49, %c0_50] : memref<128x128xbf16, #tpu.memory_space<vmem>>, vector<128x128xbf16>
    %97 = arith.truncf %11 : vector<4x128xf32> to vector<4x128xbf16>
    %cst_51 = arith.constant dense<0.000000e+00> : vector<4x128xf32>
    %98 = tpu.matmul %97, %96, %cst_51 {dimension_numbers = #tpu.dot_dimension_numbers<[1], [0], [0], [1], [0, 0, 1, 1], [], []>} : vector<4x128xbf16>, vector<128x128xbf16>, vector<4x128xf32> -> vector<4x128xf32>
    %c0_52 = arith.constant 0 : index
    %c0_53 = arith.constant 0 : index
    %99 = vector.load %arg12[%c0_52, %c0_53] : memref<128x128xbf16, #tpu.memory_space<vmem>>, vector<128x128xbf16>
    %100 = arith.truncf %95 : vector<4x128xf32> to vector<4x128xbf16>
    %cst_54 = arith.constant dense<0.000000e+00> : vector<4x128xf32>
    %101 = tpu.matmul %100, %99, %cst_54 {dimension_numbers = #tpu.dot_dimension_numbers<[1], [0], [0], [1], [0, 0, 1, 1], [], []>} : vector<4x128xbf16>, vector<128x128xbf16>, vector<4x128xf32> -> vector<4x128xf32>
    %102 = arith.addf %98, %101 : vector<4x128xf32>
    %c0_55 = arith.constant 0 : index
    %c0_56 = arith.constant 0 : index
    %103 = vector.load %arg13[%c0_55, %c0_56] : memref<1x128xf32, #tpu.memory_space<vmem>>, vector<1x128xf32>
    %104 = vector.broadcast %103 : vector<1x128xf32> to vector<4x128xf32>
    %105 = arith.addf %102, %104 : vector<4x128xf32>
    %cst_57 = arith.constant 0.000000e+00 : f32
    %106 = vector.broadcast %cst_57 : f32 to vector<4x128xf32>
    %107 = arith.maximumf %105, %106 : vector<4x128xf32>
    %c0_58 = arith.constant 0 : index
    %c0_59 = arith.constant 0 : index
    %108 = vector.load %arg14[%c0_58, %c0_59] : memref<4x128xf32, #tpu.memory_space<vmem>>, vector<4x128xf32>
    tpu.vector_store %arg14[%c0_58, %c0_59], %107 {strides = array<i32>} : memref<4x128xf32, #tpu.memory_space<vmem>>, vector<4x128xf32>,
    return
  }
  func.func @transform_0(%arg0: i32, %arg1: i32) -> (i32, i32, i32) {
    %c0_i32 = arith.constant 0 : i32
    %c0_i32_0 = arith.constant 0 : i32
    return %arg0, %arg1, %c0_i32 : i32, i32, i32
  }
  func.func @transform_1(%arg0: i32, %arg1: i32) -> (i32, i32, i32) {
    %c0_i32 = arith.constant 0 : i32
    %c0_i32_0 = arith.constant 0 : i32
    return %arg0, %arg1, %c0_i32 : i32, i32, i32
  }
  func.func @transform_2(%arg0: i32, %arg1: i32) -> (i32, i32) {
    %c0_i32 = arith.constant 0 : i32
    %c0_i32_0 = arith.constant 0 : i32
    %c0_i32_1 = arith.constant 0 : i32
    return %c0_i32, %c0_i32_0 : i32, i32
  }
  func.func @transform_3(%arg0: i32, %arg1: i32) -> (i32, i32) {
    %c0_i32 = arith.constant 0 : i32
    %c0_i32_0 = arith.constant 0 : i32
    %c0_i32_1 = arith.constant 0 : i32
    return %c0_i32, %c0_i32_0 : i32, i32
  }
  func.func @transform_4(%arg0: i32, %arg1: i32) -> (i32, i32) {
    %c0_i32 = arith.constant 0 : i32
    %c0_i32_0 = arith.constant 0 : i32
    %c0_i32_1 = arith.constant 0 : i32
    return %c0_i32, %c0_i32_0 : i32, i32
  }
  func.func @transform_5(%arg0: i32, %arg1: i32) -> (i32, i32) {
    %c0_i32 = arith.constant 0 : i32
    %c0_i32_0 = arith.constant 0 : i32
    %c0_i32_1 = arith.constant 0 : i32
    return %c0_i32, %c0_i32_0 : i32, i32
  }
  func.func @transform_6(%arg0: i32, %arg1: i32) -> (i32, i32) {
    %c0_i32 = arith.constant 0 : i32
    %c0_i32_0 = arith.constant 0 : i32
    %c0_i32_1 = arith.constant 0 : i32
    return %c0_i32, %c0_i32_0 : i32, i32
  }
  func.func @transform_7(%arg0: i32, %arg1: i32) -> (i32, i32) {
    %c0_i32 = arith.constant 0 : i32
    %c0_i32_0 = arith.constant 0 : i32
    %c0_i32_1 = arith.constant 0 : i32
    return %c0_i32, %c0_i32_0 : i32, i32
  }
  func.func @transform_8(%arg0: i32, %arg1: i32) -> (i32, i32) {
    %c0_i32 = arith.constant 0 : i32
    %c0_i32_0 = arith.constant 0 : i32
    %c0_i32_1 = arith.constant 0 : i32
    return %c0_i32, %c0_i32_0 : i32, i32
  }
  func.func @transform_9(%arg0: i32, %arg1: i32) -> (i32, i32) {
    %c0_i32 = arith.constant 0 : i32
    %c0_i32_0 = arith.constant 0 : i32
    %c0_i32_1 = arith.constant 0 : i32
    return %c0_i32, %c0_i32_0 : i32, i32
  }
  func.func @transform_10(%arg0: i32, %arg1: i32) -> (i32, i32) {
    %c0_i32 = arith.constant 0 : i32
    %c0_i32_0 = arith.constant 0 : i32
    %c0_i32_1 = arith.constant 0 : i32
    return %c0_i32, %c0_i32_0 : i32, i32
  }
  func.func @transform_11(%arg0: i32, %arg1: i32) -> (i32, i32) {
    %c0_i32 = arith.constant 0 : i32
    %c0_i32_0 = arith.constant 0 : i32
    %c0_i32_1 = arith.constant 0 : i32
    return %c0_i32, %c0_i32_0 : i32, i32
  }
  func.func @transform_12(%arg0: i32, %arg1: i32) -> (i32, i32) {
    %c0_i32 = arith.constant 0 : i32
    return %arg1, %arg0 : i32, i32
  }
}

module attributes {stable_mosaic.version = 11 : i64} {
  func.func @_critic_tail_kernel(%arg0: i32, %arg1: memref<4x10xf32, #tpu.memory_space<vmem>>, %arg2: memref<1x10xf32, #tpu.memory_space<vmem>>, %arg3: memref<1x10xf32, #tpu.memory_space<vmem>>, %arg4: memref<4x384xf32, #tpu.memory_space<vmem>>, %arg5: memref<10x32xbf16, #tpu.memory_space<vmem>>, %arg6: memref<1x32xf32, #tpu.memory_space<vmem>>, %arg7: memref<32x32xbf16, #tpu.memory_space<vmem>>, %arg8: memref<128x64xbf16, #tpu.memory_space<vmem>>, %arg9: memref<1x64xf32, #tpu.memory_space<vmem>>, %arg10: memref<64x32xbf16, #tpu.memory_space<vmem>>, %arg11: memref<1x32xf32, #tpu.memory_space<vmem>>, %arg12: memref<32x2xbf16, #tpu.memory_space<vmem>>, %arg13: memref<1x2xf32, #tpu.memory_space<vmem>>, %arg14: memref<4x2xf32, #tpu.memory_space<vmem>>) attributes {dimension_semantics = [#tpu.dimension_semantics<parallel>], iteration_bounds = array<i64: 1>, scalar_prefetch = 0 : i64, scratch_operands = 0 : i64, tpu.core_type = #tpu.core_type<tc>, window_params = [{transform_indices = @transform_0, window_bounds = array<i64: 4, 10>}, {pipeline_mode = #tpu.pipeline_mode<synchronous>, transform_indices = @transform_1, window_bounds = array<i64: 1, 10>}, {pipeline_mode = #tpu.pipeline_mode<synchronous>, transform_indices = @transform_2, window_bounds = array<i64: 1, 10>}, {transform_indices = @transform_3, window_bounds = array<i64: 4, 384>}, {pipeline_mode = #tpu.pipeline_mode<synchronous>, transform_indices = @transform_4, window_bounds = array<i64: 10, 32>}, {pipeline_mode = #tpu.pipeline_mode<synchronous>, transform_indices = @transform_5, window_bounds = array<i64: 1, 32>}, {pipeline_mode = #tpu.pipeline_mode<synchronous>, transform_indices = @transform_6, window_bounds = array<i64: 32, 32>}, {pipeline_mode = #tpu.pipeline_mode<synchronous>, transform_indices = @transform_7, window_bounds = array<i64: 128, 64>}, {pipeline_mode = #tpu.pipeline_mode<synchronous>, transform_indices = @transform_8, window_bounds = array<i64: 1, 64>}, {pipeline_mode = #tpu.pipeline_mode<synchronous>, transform_indices = @transform_9, window_bounds = array<i64: 64, 32>}, {pipeline_mode = #tpu.pipeline_mode<synchronous>, transform_indices = @transform_10, window_bounds = array<i64: 1, 32>}, {pipeline_mode = #tpu.pipeline_mode<synchronous>, transform_indices = @transform_11, window_bounds = array<i64: 32, 2>}, {pipeline_mode = #tpu.pipeline_mode<synchronous>, transform_indices = @transform_12, window_bounds = array<i64: 1, 2>}, {transform_indices = @transform_13, window_bounds = array<i64: 4, 2>}]} {
    %c0 = arith.constant 0 : index
    %c0_0 = arith.constant 0 : index
    %0 = vector.load %arg1[%c0, %c0_0] : memref<4x10xf32, #tpu.memory_space<vmem>>, vector<4x10xf32>
    %c0_1 = arith.constant 0 : index
    %c0_2 = arith.constant 0 : index
    %1 = vector.load %arg2[%c0_1, %c0_2] : memref<1x10xf32, #tpu.memory_space<vmem>>, vector<1x10xf32>
    %2 = vector.broadcast %1 : vector<1x10xf32> to vector<4x10xf32>
    %3 = arith.subf %0, %2 : vector<4x10xf32>
    %c0_3 = arith.constant 0 : index
    %c0_4 = arith.constant 0 : index
    %4 = vector.load %arg3[%c0_3, %c0_4] : memref<1x10xf32, #tpu.memory_space<vmem>>, vector<1x10xf32>
    %5 = vector.broadcast %4 : vector<1x10xf32> to vector<4x10xf32>
    %6 = arith.mulf %3, %5 : vector<4x10xf32>
    %c0_5 = arith.constant 0 : index
    %c0_6 = arith.constant 0 : index
    %7 = vector.load %arg5[%c0_5, %c0_6] : memref<10x32xbf16, #tpu.memory_space<vmem>>, vector<10x32xbf16>
    %8 = arith.truncf %6 : vector<4x10xf32> to vector<4x10xbf16>
    %cst = arith.constant dense<0.000000e+00> : vector<4x32xf32>
    %9 = tpu.matmul %8, %7, %cst {dimension_numbers = #tpu.dot_dimension_numbers<[1], [0], [0], [1], [0, 0, 1, 1], [], []>} : vector<4x10xbf16>, vector<10x32xbf16>, vector<4x32xf32> -> vector<4x32xf32>
    %c0_7 = arith.constant 0 : index
    %c0_8 = arith.constant 0 : index
    %10 = vector.load %arg6[%c0_7, %c0_8] : memref<1x32xf32, #tpu.memory_space<vmem>>, vector<1x32xf32>
    %11 = vector.broadcast %10 : vector<1x32xf32> to vector<4x32xf32>
    %12 = arith.addf %9, %11 : vector<4x32xf32>
    %cst_9 = arith.constant 0.000000e+00 : f32
    %13 = vector.broadcast %cst_9 : f32 to vector<4x32xf32>
    %14 = arith.cmpf ogt, %12, %13 : vector<4x32xf32>
    %cst_10 = arith.constant 0.00999999977 : f32
    %15 = vector.broadcast %cst_10 : f32 to vector<4x32xf32>
    %16 = arith.mulf %15, %12 : vector<4x32xf32>
    %17 = arith.select %14, %12, %16 : vector<4x32xi1>, vector<4x32xf32>
    %c0_11 = arith.constant 0 : index
    %c0_12 = arith.constant 0 : index
    %18 = vector.load %arg7[%c0_11, %c0_12] : memref<32x32xbf16, #tpu.memory_space<vmem>>, vector<32x32xbf16>
    %19 = arith.truncf %17 : vector<4x32xf32> to vector<4x32xbf16>
    %cst_13 = arith.constant dense<0.000000e+00> : vector<4x32xf32>
    %20 = tpu.matmul %19, %18, %cst_13 {dimension_numbers = #tpu.dot_dimension_numbers<[1], [0], [0], [1], [0, 0, 1, 1], [], []>} : vector<4x32xbf16>, vector<32x32xbf16>, vector<4x32xf32> -> vector<4x32xf32>
    %cst_14 = arith.constant 0.176776692 : f32
    %21 = vector.broadcast %cst_14 : f32 to vector<4x32xf32>
    %22 = arith.mulf %20, %21 : vector<4x32xf32>
    %c0_15 = arith.constant 0 : index
    %c0_16 = arith.constant 0 : index
    %23 = vector.load %arg4[%c0_15, %c0_16] : memref<4x384xf32, #tpu.memory_space<vmem>>, vector<4x128xf32>
    %c0_17 = arith.constant 0 : index
    %c0_18 = arith.constant 0 : index
    %24 = vector.load %arg8[%c0_17, %c0_18] : memref<128x64xbf16, #tpu.memory_space<vmem>>, vector<128x64xbf16>
    %25 = arith.truncf %23 : vector<4x128xf32> to vector<4x128xbf16>
    %cst_19 = arith.constant dense<0.000000e+00> : vector<4x64xf32>
    %26 = tpu.matmul %25, %24, %cst_19 {dimension_numbers = #tpu.dot_dimension_numbers<[1], [0], [0], [1], [0, 0, 1, 1], [], []>} : vector<4x128xbf16>, vector<128x64xbf16>, vector<4x64xf32> -> vector<4x64xf32>
    %c0_20 = arith.constant 0 : index
    %c0_21 = arith.constant 0 : index
    %27 = vector.load %arg9[%c0_20, %c0_21] : memref<1x64xf32, #tpu.memory_space<vmem>>, vector<1x64xf32>
    %28 = vector.broadcast %27 : vector<1x64xf32> to vector<4x64xf32>
    %29 = arith.addf %26, %28 : vector<4x64xf32>
    %30 = vector.extract_strided_slice %29 {offsets = [0, 0], sizes = [4, 32], strides = [1, 1]} : vector<4x64xf32> to vector<4x32xf32>
    %31 = arith.mulf %22, %30 : vector<4x32xf32>
    %cst_22 = arith.constant dense<0.000000e+00> : vector<4xf32>
    %32 = vector.multi_reduction <add>, %31, %cst_22 [1] : vector<4x32xf32> to vector<4xf32>
    %33 = vector.shape_cast %32 : vector<4xf32> to vector<4x1xf32>
    %34 = vector.extract_strided_slice %29 {offsets = [0, 32], sizes = [4, 32], strides = [1, 1]} : vector<4x64xf32> to vector<4x32xf32>
    %cst_23 = arith.constant 0.000000e+00 : f32
    %35 = vector.broadcast %cst_23 : f32 to vector<4x32xf32>
    %36 = arith.cmpf ogt, %34, %35 : vector<4x32xf32>
    %cst_24 = arith.constant 0.00999999977 : f32
    %37 = vector.broadcast %cst_24 : f32 to vector<4x32xf32>
    %38 = arith.mulf %37, %34 : vector<4x32xf32>
    %39 = arith.select %36, %34, %38 : vector<4x32xi1>, vector<4x32xf32>
    %c0_25 = arith.constant 0 : index
    %c256 = arith.constant 256 : index
    %40 = vector.load %arg4[%c0_25, %c256] : memref<4x384xf32, #tpu.memory_space<vmem>>, vector<4x128xf32>
    %c0_26 = arith.constant 0 : index
    %c0_27 = arith.constant 0 : index
    %41 = vector.load %arg8[%c0_26, %c0_27] : memref<128x64xbf16, #tpu.memory_space<vmem>>, vector<128x64xbf16>
    %42 = arith.truncf %40 : vector<4x128xf32> to vector<4x128xbf16>
    %cst_28 = arith.constant dense<0.000000e+00> : vector<4x64xf32>
    %43 = tpu.matmul %42, %41, %cst_28 {dimension_numbers = #tpu.dot_dimension_numbers<[1], [0], [0], [1], [0, 0, 1, 1], [], []>} : vector<4x128xbf16>, vector<128x64xbf16>, vector<4x64xf32> -> vector<4x64xf32>
    %c0_29 = arith.constant 0 : index
    %c0_30 = arith.constant 0 : index
    %44 = vector.load %arg9[%c0_29, %c0_30] : memref<1x64xf32, #tpu.memory_space<vmem>>, vector<1x64xf32>
    %45 = vector.broadcast %44 : vector<1x64xf32> to vector<4x64xf32>
    %46 = arith.addf %43, %45 : vector<4x64xf32>
    %47 = vector.extract_strided_slice %46 {offsets = [0, 0], sizes = [4, 32], strides = [1, 1]} : vector<4x64xf32> to vector<4x32xf32>
    %48 = arith.mulf %22, %47 : vector<4x32xf32>
    %cst_31 = arith.constant dense<0.000000e+00> : vector<4xf32>
    %49 = vector.multi_reduction <add>, %48, %cst_31 [1] : vector<4x32xf32> to vector<4xf32>
    %50 = vector.shape_cast %49 : vector<4xf32> to vector<4x1xf32>
    %51 = vector.extract_strided_slice %46 {offsets = [0, 32], sizes = [4, 32], strides = [1, 1]} : vector<4x64xf32> to vector<4x32xf32>
    %cst_32 = arith.constant 0.000000e+00 : f32
    %52 = vector.broadcast %cst_32 : f32 to vector<4x32xf32>
    %53 = arith.cmpf ogt, %51, %52 : vector<4x32xf32>
    %cst_33 = arith.constant 0.00999999977 : f32
    %54 = vector.broadcast %cst_33 : f32 to vector<4x32xf32>
    %55 = arith.mulf %54, %51 : vector<4x32xf32>
    %56 = arith.select %53, %51, %55 : vector<4x32xi1>, vector<4x32xf32>
    %57 = arith.maximumf %33, %50 : vector<4x1xf32>
    %cst_34 = arith.constant 0.000000e+00 : f32
    %58 = vector.broadcast %cst_34 : f32 to vector<4x32xf32>
    %cst_35 = arith.constant 0.000000e+00 : f32
    %59 = vector.broadcast %cst_35 : f32 to vector<4x1xf32>
    %60 = arith.subf %33, %57 : vector<4x1xf32>
    %61 = math.exp %60 : vector<4x1xf32>
    %62 = arith.addf %59, %61 : vector<4x1xf32>
    %63 = vector.broadcast %61 : vector<4x1xf32> to vector<4x32xf32>
    %64 = arith.mulf %63, %39 : vector<4x32xf32>
    %65 = arith.addf %58, %64 : vector<4x32xf32>
    %66 = arith.subf %50, %57 : vector<4x1xf32>
    %67 = math.exp %66 : vector<4x1xf32>
    %68 = arith.addf %62, %67 : vector<4x1xf32>
    %69 = vector.broadcast %67 : vector<4x1xf32> to vector<4x32xf32>
    %70 = arith.mulf %69, %56 : vector<4x32xf32>
    %71 = arith.addf %65, %70 : vector<4x32xf32>
    %72 = tpu.reciprocal %68 {approx = true} : vector<4x1xf32> -> vector<4x1xf32>
    %73 = vector.broadcast %72 : vector<4x1xf32> to vector<4x32xf32>
    %74 = arith.mulf %71, %73 : vector<4x32xf32>
    %75 = tpu.concatenate %17, %74 in 1 : vector<4x32xf32>, vector<4x32xf32> -> vector<4x64xf32>
    %c0_36 = arith.constant 0 : index
    %c0_37 = arith.constant 0 : index
    %76 = vector.load %arg10[%c0_36, %c0_37] : memref<64x32xbf16, #tpu.memory_space<vmem>>, vector<64x32xbf16>
    %77 = arith.truncf %75 : vector<4x64xf32> to vector<4x64xbf16>
    %cst_38 = arith.constant dense<0.000000e+00> : vector<4x32xf32>
    %78 = tpu.matmul %77, %76, %cst_38 {dimension_numbers = #tpu.dot_dimension_numbers<[1], [0], [0], [1], [0, 0, 1, 1], [], []>} : vector<4x64xbf16>, vector<64x32xbf16>, vector<4x32xf32> -> vector<4x32xf32>
    %c0_39 = arith.constant 0 : index
    %c0_40 = arith.constant 0 : index
    %79 = vector.load %arg11[%c0_39, %c0_40] : memref<1x32xf32, #tpu.memory_space<vmem>>, vector<1x32xf32>
    %80 = vector.broadcast %79 : vector<1x32xf32> to vector<4x32xf32>
    %81 = arith.addf %78, %80 : vector<4x32xf32>
    %cst_41 = arith.constant 0.000000e+00 : f32
    %82 = vector.broadcast %cst_41 : f32 to vector<4x32xf32>
    %83 = arith.cmpf ogt, %81, %82 : vector<4x32xf32>
    %cst_42 = arith.constant 0.00999999977 : f32
    %84 = vector.broadcast %cst_42 : f32 to vector<4x32xf32>
    %85 = arith.mulf %84, %81 : vector<4x32xf32>
    %86 = arith.select %83, %81, %85 : vector<4x32xi1>, vector<4x32xf32>
    %c0_43 = arith.constant 0 : index
    %c0_44 = arith.constant 0 : index
    %87 = vector.load %arg12[%c0_43, %c0_44] : memref<32x2xbf16, #tpu.memory_space<vmem>>, vector<32x2xbf16>
    %88 = arith.truncf %86 : vector<4x32xf32> to vector<4x32xbf16>
    %cst_45 = arith.constant dense<0.000000e+00> : vector<4x2xf32>
    %89 = tpu.matmul %88, %87, %cst_45 {dimension_numbers = #tpu.dot_dimension_numbers<[1], [0], [0], [1], [0, 0, 1, 1], [], []>} : vector<4x32xbf16>, vector<32x2xbf16>, vector<4x2xf32> -> vector<4x2xf32>
    %c0_46 = arith.constant 0 : index
    %c0_47 = arith.constant 0 : index
    %90 = vector.load %arg13[%c0_46, %c0_47] : memref<1x2xf32, #tpu.memory_space<vmem>>, vector<1x2xf32>
    %91 = vector.broadcast %90 : vector<1x2xf32> to vector<4x2xf32>
    %92 = arith.addf %89, %91 : vector<4x2xf32>
    %c0_48 = arith.constant 0 : index
    %c0_49 = arith.constant 0 : index
    %93 = vector.load %arg14[%c0_48, %c0_49] : memref<4x2xf32, #tpu.memory_space<vmem>>, vector<4x2xf32>
    tpu.vector_store %arg14[%c0_48, %c0_49], %92 {strides = array<i32>} : memref<4x2xf32, #tpu.memory_space<vmem>>, vector<4x2xf32>,
    return
  }
  func.func @transform_0(%arg0: i32) -> (i32, i32) {
    %c0_i32 = arith.constant 0 : i32
    %c0_i32_0 = arith.constant 0 : i32
    return %arg0, %c0_i32 : i32, i32
  }
  func.func @transform_1(%arg0: i32) -> (i32, i32) {
    %c0_i32 = arith.constant 0 : i32
    %c0_i32_0 = arith.constant 0 : i32
    %c0_i32_1 = arith.constant 0 : i32
    return %c0_i32, %c0_i32_0 : i32, i32
  }
  func.func @transform_2(%arg0: i32) -> (i32, i32) {
    %c0_i32 = arith.constant 0 : i32
    %c0_i32_0 = arith.constant 0 : i32
    %c0_i32_1 = arith.constant 0 : i32
    return %c0_i32, %c0_i32_0 : i32, i32
  }
  func.func @transform_3(%arg0: i32) -> (i32, i32) {
    %c0_i32 = arith.constant 0 : i32
    %c0_i32_0 = arith.constant 0 : i32
    return %arg0, %c0_i32 : i32, i32
  }
  func.func @transform_4(%arg0: i32) -> (i32, i32) {
    %c0_i32 = arith.constant 0 : i32
    %c0_i32_0 = arith.constant 0 : i32
    %c0_i32_1 = arith.constant 0 : i32
    return %c0_i32, %c0_i32_0 : i32, i32
  }
  func.func @transform_5(%arg0: i32) -> (i32, i32) {
    %c0_i32 = arith.constant 0 : i32
    %c0_i32_0 = arith.constant 0 : i32
    %c0_i32_1 = arith.constant 0 : i32
    return %c0_i32, %c0_i32_0 : i32, i32
  }
  func.func @transform_6(%arg0: i32) -> (i32, i32) {
    %c0_i32 = arith.constant 0 : i32
    %c0_i32_0 = arith.constant 0 : i32
    %c0_i32_1 = arith.constant 0 : i32
    return %c0_i32, %c0_i32_0 : i32, i32
  }
  func.func @transform_7(%arg0: i32) -> (i32, i32) {
    %c0_i32 = arith.constant 0 : i32
    %c0_i32_0 = arith.constant 0 : i32
    %c0_i32_1 = arith.constant 0 : i32
    return %c0_i32, %c0_i32_0 : i32, i32
  }
  func.func @transform_8(%arg0: i32) -> (i32, i32) {
    %c0_i32 = arith.constant 0 : i32
    %c0_i32_0 = arith.constant 0 : i32
    %c0_i32_1 = arith.constant 0 : i32
    return %c0_i32, %c0_i32_0 : i32, i32
  }
  func.func @transform_9(%arg0: i32) -> (i32, i32) {
    %c0_i32 = arith.constant 0 : i32
    %c0_i32_0 = arith.constant 0 : i32
    %c0_i32_1 = arith.constant 0 : i32
    return %c0_i32, %c0_i32_0 : i32, i32
  }
  func.func @transform_10(%arg0: i32) -> (i32, i32) {
    %c0_i32 = arith.constant 0 : i32
    %c0_i32_0 = arith.constant 0 : i32
    %c0_i32_1 = arith.constant 0 : i32
    return %c0_i32, %c0_i32_0 : i32, i32
  }
  func.func @transform_11(%arg0: i32) -> (i32, i32) {
    %c0_i32 = arith.constant 0 : i32
    %c0_i32_0 = arith.constant 0 : i32
    %c0_i32_1 = arith.constant 0 : i32
    return %c0_i32, %c0_i32_0 : i32, i32
  }
  func.func @transform_12(%arg0: i32) -> (i32, i32) {
    %c0_i32 = arith.constant 0 : i32
    %c0_i32_0 = arith.constant 0 : i32
    %c0_i32_1 = arith.constant 0 : i32
    return %c0_i32, %c0_i32_0 : i32, i32
  }
  func.func @transform_13(%arg0: i32) -> (i32, i32) {
    %c0_i32 = arith.constant 0 : i32
    %c0_i32_0 = arith.constant 0 : i32
    return %arg0, %c0_i32 : i32, i32
  }
}

</mosaic_0001>

<llo_original>
// kernel: attention_critic_forward.6
$region0: #{attention_critic_forward.6}
  #allocation0 [shape = 'u32[]', space=smem, size = 0x4, offset = 0x4, fixed_abs, tag = 'smem constant byte address 0x4 - core index']
  #allocation1 [shape = 'u32[144,128]{1,0:T(1,128)}', space=vmem, size = 0x12000, scoped, tag = 'internal scratch']
  %s0 = inlined_call_operand.vmem [shape: f32[4,10], index: 0, kind: input, shape index: {}]
  %s1 = inlined_call_operand.vmem [shape: f32[1,10], index: 1, kind: output, shape index: {0}]
  %s2 = inlined_call_operand.vmem [shape: f32[1,10], index: 2, kind: output, shape index: {1}]
  %3 = xla_tuple %s1, %s2
  %s4 = sld [smem:[#allocation0]]
  $region22: #{attention_critic_forward.6} parent=0
    _
  %s6 = ssub.s32 1, %s4
  %s7 = scalar_select 0, %s6, %s4
  // Predicated region
  $region2: #{attention_critic_forward.6} parent=0 // pred_check
    _
  $region3: #{attention_critic_forward.6} parent=0 // pred_check_branch
    %9 = sbr.rel (0) target = $region5
  $region4: #{attention_critic_forward.6} parent=0 // pred_region
    _
  $region5: #{attention_critic_forward.6} parent=0 // pred_fallthru
    _
  %v10 = vld [vmem:[%s0] sm:$0xf]
  %vm11 = vcmask 76800
  %v12 = vsel %vm11, %v10, 0.0
  %v13 = vrot.slane %v12, 4
  %v14 = vadd.f32 %v12, %v13
  %v15 = vrot.slane %v14, 2
  %v16 = vadd.f32 %v14, %v15
  %v17 = vrot.slane %v16, 1
  %v18 = vadd.f32 %v16, %v17
  %v19 = vrcp.pop 4.0
  %v20 = vmul.f32 %v18, %v19
  %v21 = vsub.f32 %v10, %v20
  %v22 = vmul.f32 %v21, %v21
  %v23 = vsel %vm11, %v22, 0.0
  %v24 = vrot.slane %v23, 4
  %v25 = vadd.f32 %v23, %v24
  %v26 = vrot.slane %v25, 2
  %v27 = vadd.f32 %v25, %v26
  %v28 = vrot.slane %v27, 1
  %v29 = vadd.f32 %v27, %v28
  %v30 = vmul.f32 %v29, %v19
  %vm31 = vcmask 73728
  %32 = vst.msk [vmem:[%s1] sm:$0x1] %vm31, %v20
  %v33 = vadd.f32 %v30, 1e-05
  %v34 = vrsqrt.pop %v33
  %35 = vst.msk [vmem:[%s2] sm:$0x1] %vm31, %v34
  // Predicated region
  $region6: #{attention_critic_forward.6} parent=0 // pred_check
    _
  $region7: #{attention_critic_forward.6} parent=0 // pred_check_branch
    %37 = sbr.rel (0) target = $region9
  $region8: #{attention_critic_forward.6} parent=0 // pred_region
    _
  $region9: #{attention_critic_forward.6} parent=0 // pred_fallthru
    _
  // Predicated region
  $region10: #{attention_critic_forward.6} parent=0 // pred_check
    _
  $region11: #{attention_critic_forward.6} parent=0 // pred_check_branch
    %39 = sbr.rel (0) target = $region13
  $region12: #{attention_critic_forward.6} parent=0 // pred_region
    _
  $region13: #{attention_critic_forward.6} parent=0 // pred_fallthru
    _
  // Predicated region
  $region14: #{attention_critic_forward.6} parent=0 // pred_check
    _
  $region15: #{attention_critic_forward.6} parent=0 // pred_check_branch
    %41 = sbr.rel (0) target = $region17
  $region16: #{attention_critic_forward.6} parent=0 // pred_region
    _
  $region17: #{attention_critic_forward.6} parent=0 // pred_fallthru
    _
  // Predicated region
  $region18: #{attention_critic_forward.6} parent=0 // pred_check
    _
  $region19: #{attention_critic_forward.6} parent=0 // pred_check_branch
    %43 = sbr.rel (0) target = $region21
  $region20: #{attention_critic_forward.6} parent=0 // pred_region
    _
  $region21: #{attention_critic_forward.6} parent=0 // pred_fallthru
    _

// kernel: attention_critic_forward.7
$region0: #{attention_critic_forward.7}
  #allocation0 [shape = 'u32[]', space=smem, size = 0x4, offset = 0x4, fixed_abs, tag = 'smem constant byte address 0x4 - core index']
  #allocation1 [shape = 'u32[144,128]{1,0:T(1,128)}', space=vmem, size = 0x12000, scoped, tag = 'internal scratch']
  %s0 = inlined_call_operand.vmem [shape: f32[4,10], index: 0, kind: input, shape index: {}]
  %s1 = inlined_call_operand.vmem [shape: f32[1,10], index: 1, kind: input, shape index: {}]
  %s2 = inlined_call_operand.vmem [shape: f32[1,10], index: 2, kind: input, shape index: {}]
  %s3 = inlined_call_operand.vmem [shape: f32[4,384], index: 3, kind: input, shape index: {}]
  %s4 = inlined_call_operand.vmem [shape: bf16[10,32], index: 4, kind: input, shape index: {}]
  %s5 = inlined_call_operand.vmem [shape: f32[1,32], index: 5, kind: input, shape index: {}]
  %s6 = inlined_call_operand.vmem [shape: bf16[32,32], index: 6, kind: input, shape index: {}]
  %s7 = inlined_call_operand.vmem [shape: bf16[128,64], index: 7, kind: input, shape index: {}]
  %s8 = inlined_call_operand.vmem [shape: f32[1,64], index: 8, kind: input, shape index: {}]
  %s9 = inlined_call_operand.vmem [shape: bf16[64,32], index: 9, kind: input, shape index: {}]
  %s10 = inlined_call_operand.vmem [shape: f32[1,32], index: 10, kind: input, shape index: {}]
  %s11 = inlined_call_operand.vmem [shape: bf16[32,2], index: 11, kind: input, shape index: {}]
  %s12 = inlined_call_operand.vmem [shape: f32[1,2], index: 12, kind: input, shape index: {}]
  %s13 = inlined_call_operand.vmem [shape: f32[4,2], index: 13, kind: output, shape index: {}]
  %s14 = sld [smem:[#allocation0]]
  $region62: #{attention_critic_forward.7} parent=0
    _
  %s16 = ssub.s32 1, %s14
  %s17 = scalar_select 0, %s16, %s14
  // Predicated region
  $region2: #{attention_critic_forward.7} parent=0 // pred_check
    _
  $region3: #{attention_critic_forward.7} parent=0 // pred_check_branch
    %19 = sbr.rel (0) target = $region5
  $region4: #{attention_critic_forward.7} parent=0 // pred_region
    _
  $region5: #{attention_critic_forward.7} parent=0 // pred_fallthru
    _
  // Predicated region
  $region6: #{attention_critic_forward.7} parent=0 // pred_check
    _
  $region7: #{attention_critic_forward.7} parent=0 // pred_check_branch
    %21 = sbr.rel (0) target = $region9
  $region8: #{attention_critic_forward.7} parent=0 // pred_region
    _
  $region9: #{attention_critic_forward.7} parent=0 // pred_fallthru
    _
  // Predicated region
  $region10: #{attention_critic_forward.7} parent=0 // pred_check
    _
  $region11: #{attention_critic_forward.7} parent=0 // pred_check_branch
    %23 = sbr.rel (0) target = $region13
  $region12: #{attention_critic_forward.7} parent=0 // pred_region
    _
  $region13: #{attention_critic_forward.7} parent=0 // pred_fallthru
    _
  // Predicated region
  $region14: #{attention_critic_forward.7} parent=0 // pred_check
    _
  $region15: #{attention_critic_forward.7} parent=0 // pred_check_branch
    %25 = sbr.rel (0) target = $region17
  $region16: #{attention_critic_forward.7} parent=0 // pred_region
    _
  $region17: #{attention_critic_forward.7} parent=0 // pred_fallthru
    _
  // Predicated region
  $region18: #{attention_critic_forward.7} parent=0 // pred_check
    _
  $region19: #{attention_critic_forward.7} parent=0 // pred_check_branch
    %27 = sbr.rel (0) target = $region21
  $region20: #{attention_critic_forward.7} parent=0 // pred_region
    _
  $region21: #{attention_critic_forward.7} parent=0 // pred_fallthru
    _
  // Predicated region
  $region22: #{attention_critic_forward.7} parent=0 // pred_check
    _
  $region23: #{attention_critic_forward.7} parent=0 // pred_check_branch
    %29 = sbr.rel (0) target = $region25
  $region24: #{attention_critic_forward.7} parent=0 // pred_region
    _
  $region25: #{attention_critic_forward.7} parent=0 // pred_fallthru
    _
  // Predicated region
  $region26: #{attention_critic_forward.7} parent=0 // pred_check
    _
  $region27: #{attention_critic_forward.7} parent=0 // pred_check_branch
    %31 = sbr.rel (0) target = $region29
  $region28: #{attention_critic_forward.7} parent=0 // pred_region
    _
  $region29: #{attention_critic_forward.7} parent=0 // pred_fallthru
    _
  // Predicated region
  $region30: #{attention_critic_forward.7} parent=0 // pred_check
    _
  $region31: #{attention_critic_forward.7} parent=0 // pred_check_branch
    %33 = sbr.rel (0) target = $region33
  $region32: #{attention_critic_forward.7} parent=0 // pred_region
    _
  $region33: #{attention_critic_forward.7} parent=0 // pred_fallthru
    _
  // Predicated region
  $region34: #{attention_critic_forward.7} parent=0 // pred_check
    _
  $region35: #{attention_critic_forward.7} parent=0 // pred_check_branch
    %35 = sbr.rel (0) target = $region37
  $region36: #{attention_critic_forward.7} parent=0 // pred_region
    _
  $region37: #{attention_critic_forward.7} parent=0 // pred_fallthru
    _
  // Predicated region
  $region38: #{attention_critic_forward.7} parent=0 // pred_check
    _
  $region39: #{attention_critic_forward.7} parent=0 // pred_check_branch
    %37 = sbr.rel (0) target = $region41
  $region40: #{attention_critic_forward.7} parent=0 // pred_region
    _
  $region41: #{attention_critic_forward.7} parent=0 // pred_fallthru
    _
  // Predicated region
  $region42: #{attention_critic_forward.7} parent=0 // pred_check
    _
  $region43: #{attention_critic_forward.7} parent=0 // pred_check_branch
    %39 = sbr.rel (0) target = $region45
  $region44: #{attention_critic_forward.7} parent=0 // pred_region
    _
  $region45: #{attention_critic_forward.7} parent=0 // pred_fallthru
    _
  // Predicated region
  $region46: #{attention_critic_forward.7} parent=0 // pred_check
    _
  $region47: #{attention_critic_forward.7} parent=0 // pred_check_branch
    %41 = sbr.rel (0) target = $region49
  $region48: #{attention_critic_forward.7} parent=0 // pred_region
    _
  $region49: #{attention_critic_forward.7} parent=0 // pred_fallthru
    _
  // Predicated region
  $region50: #{attention_critic_forward.7} parent=0 // pred_check
    _
  $region51: #{attention_critic_forward.7} parent=0 // pred_check_branch
    %43 = sbr.rel (0) target = $region53
  $region52: #{attention_critic_forward.7} parent=0 // pred_region
    _
  $region53: #{attention_critic_forward.7} parent=0 // pred_fallthru
    _
  %v45 = vld [vmem:[%s0] sm:$0xf]
  %v46 = vld [vmem:[%s1] sm:$0x1]
  %v48 = vlaneseq
  %v49 = vshrl.u32 %v48, 7
  %v50 = vsub.s32 0, %v49
  %v51 = vrot.slane %v46, %v50
  %v53 = vsub.f32 %v45, %v51
  %v54 = vld [vmem:[%s2] sm:$0x1]
  %v56 = vlaneseq
  %v57 = vshrl.u32 %v56, 7
  %v58 = vsub.s32 0, %v57
  %v59 = vrot.slane %v54, %v58
  %v61 = vmul.f32 %v53, %v59
  %v62 = vld [vmem:[%s4] sm:$0xf]
  %v63 = vld [vmem:[%s4 + $0x4] sm:$0x1]
  %v64 = vpack.c.bf16 %v61, %v61
  %v65 = vld [vmem:[%s5] sm:$0x1]
  %v67 = vlaneseq
  %v68 = vshrl.u32 %v67, 7
  %v69 = vsub.s32 0, %v68
  %v70 = vrot.slane %v65, %v69
  %v74 = vunpack.c.l.b16 %v62
  %v75 = vunpack.c.l.b16 %v63
  %v76 = vpack.c.b16 %v75, %v74
  %vm77 = vcmask 80896
  %v79 = vsel %vm77, %v64, 0
  %vm81 = vcmask 1044480
  %v83 = vsel %vm81, %v76, 0
  %85 = vmatprep.subr.bf16.mxu0 0
  %86 = vmatpush1.bf16.msra.mxu0 %v83
  %87 = vmatprep.subr.bf16.mxu0 0
  %88 = vmatpush1.bf16.msra.mxu0 0
  %89 = vmatprep.subr.bf16.mxu0 0
  %90 = vmatpush1.bf16.msra.mxu0 0
  %91 = vmatprep.subr.bf16.mxu0 0
  %92 = vmatpush1.bf16.msra.mxu0 0
  %93 = vmatprep.subr.bf16.mxu0 0
  %94 = vmatpush1.bf16.msra.mxu0 0
  %95 = vmatprep.subr.bf16.mxu0 0
  %96 = vmatpush1.bf16.msra.mxu0 0
  %97 = vmatprep.subr.bf16.mxu0 0
  %98 = vmatpush1.bf16.msra.mxu0 0
  %99 = vmatprep.subr.bf16.mxu0 0
  %100 = vmatpush1.bf16.msra.mxu0 0
  %101 = vmatprep.subr.bf16.mxu0 0
  %102 = vmatpush1.bf16.msra.mxu0 0
  %103 = vmatprep.subr.bf16.mxu0 0
  %104 = vmatpush1.bf16.msra.mxu0 0
  %105 = vmatprep.subr.bf16.mxu0 0
  %106 = vmatpush1.bf16.msra.mxu0 0
  %107 = vmatprep.subr.bf16.mxu0 0
  %108 = vmatpush1.bf16.msra.mxu0 0
  %109 = vmatprep.subr.bf16.mxu0 0
  %110 = vmatpush1.bf16.msra.mxu0 0
  %111 = vmatprep.subr.bf16.mxu0 0
  %112 = vmatpush1.bf16.msra.mxu0 0
  %113 = vmatprep.subr.bf16.mxu0 0
  %114 = vmatpush1.bf16.msra.mxu0 0
  %115 = vmatprep.subr.bf16.mxu0 0
  %116 = vmatpush1.bf16.msra.mxu0 0
  %117 = vmatprep.mubr.bf16.mxu0 0
  %118 = vmatmul.mubr.bf16.gmra.mrb[0].mxu0 %v79
  %v119 = vpop.f32.mrb[0].mxu0
  %v120 = vadd.f32 %v70, %v119
  %v121 = vpop.f32.mrb[0].mxu0
  %v122 = vpop.f32.mrb[0].mxu0
  %v123 = vpop.f32.mrb[0].mxu0
  %124 = vdwg.mxu0
  %vm125 = vcmp.gt.f32.partialorder %v120, 0.0
  %v126 = vmul.f32 %v120, 0.01
  %v127 = vsel %vm125, %v120, %v126
  %v128 = vld [vmem:[%s6] sm:$0xf]
  %v129 = vld [vmem:[%s6 + $0x4] sm:$0xf]
  %v130 = vld [vmem:[%s6 + $0x8] sm:$0xf]
  %v131 = vld [vmem:[%s6 + $0xc] sm:$0xf]
  %v132 = vpack.c.bf16 %v127, %v127
  %v137 = vunpack.c.l.b16 %v128
  %v138 = vunpack.c.l.b16 %v129
  %v139 = vunpack.c.l.b16 %v130
  %v140 = vunpack.c.l.b16 %v131
  %v141 = vpack.c.b16 %v138, %v137
  %v142 = vpack.c.b16 %v140, %v139
  %vm145 = vcmask 261120
  %v147 = vsel %vm145, %v132, 0
  %149 = vmatprep.subr.bf16.mxu0 0
  %150 = vmatpush1.bf16.msra.mxu0 %v141
  %151 = vmatprep.subr.bf16.mxu0 0
  %152 = vmatpush1.bf16.msra.mxu0 %v142
  %153 = vmatprep.subr.bf16.mxu0 0
  %154 = vmatpush1.bf16.msra.mxu0 0
  %155 = vmatprep.subr.bf16.mxu0 0
  %156 = vmatpush1.bf16.msra.mxu0 0
  %157 = vmatprep.subr.bf16.mxu0 0
  %158 = vmatpush1.bf16.msra.mxu0 0
  %159 = vmatprep.subr.bf16.mxu0 0
  %160 = vmatpush1.bf16.msra.mxu0 0
  %161 = vmatprep.subr.bf16.mxu0 0
  %162 = vmatpush1.bf16.msra.mxu0 0
  %163 = vmatprep.subr.bf16.mxu0 0
  %164 = vmatpush1.bf16.msra.mxu0 0
  %165 = vmatprep.subr.bf16.mxu0 0
  %166 = vmatpush1.bf16.msra.mxu0 0
  %167 = vmatprep.subr.bf16.mxu0 0
  %168 = vmatpush1.bf16.msra.mxu0 0
  %169 = vmatprep.subr.bf16.mxu0 0
  %170 = vmatpush1.bf16.msra.mxu0 0
  %171 = vmatprep.subr.bf16.mxu0 0
  %172 = vmatpush1.bf16.msra.mxu0 0
  %173 = vmatprep.subr.bf16.mxu0 0
  %174 = vmatpush1.bf16.msra.mxu0 0
  %175 = vmatprep.subr.bf16.mxu0 0
  %176 = vmatpush1.bf16.msra.mxu0 0
  %177 = vmatprep.subr.bf16.mxu0 0
  %178 = vmatpush1.bf16.msra.mxu0 0
  %179 = vmatprep.subr.bf16.mxu0 0
  %180 = vmatpush1.bf16.msra.mxu0 0
  %181 = vmatprep.mubr.bf16.mxu0 0
  %182 = vmatmul.mubr.bf16.gmra.mrb[0].mxu0 %v147
  %v183 = vpop.f32.mrb[0].mxu0
  %v184 = vadd.f32 0.0, %v183
  %v185 = vpop.f32.mrb[0].mxu0
  %v186 = vpop.f32.mrb[0].mxu0
  %v187 = vpop.f32.mrb[0].mxu0
  %188 = vdwg.mxu0
  %v189 = vmul.f32 %v184, 0.17677669
  %v190 = vld [vmem:[%s3] sm:$0xf]
  %v191 = vld [vmem:[%s7] sm:$0xf]
  %v192 = vld [vmem:[%s7 + $0x4] sm:$0xf]
  %v193 = vld [vmem:[%s7 + $0x8] sm:$0xf]
  %v194 = vld [vmem:[%s7 + $0xc] sm:$0xf]
  %v195 = vld [vmem:[%s7 + $0x10] sm:$0xf]
  %v196 = vld [vmem:[%s7 + $0x14] sm:$0xf]
  %v197 = vld [vmem:[%s7 + $0x18] sm:$0xf]
  %v198 = vld [vmem:[%s7 + $0x1c] sm:$0xf]
  %v199 = vld [vmem:[%s7 + $0x20] sm:$0xf]
  %v200 = vld [vmem:[%s7 + $0x24] sm:$0xf]
  %v201 = vld [vmem:[%s7 + $0x28] sm:$0xf]
  %v202 = vld [vmem:[%s7 + $0x2c] sm:$0xf]
  %v203 = vld [vmem:[%s7 + $0x30] sm:$0xf]
  %v204 = vld [vmem:[%s7 + $0x34] sm:$0xf]
  %v205 = vld [vmem:[%s7 + $0x38] sm:$0xf]
  %v206 = vld [vmem:[%s7 + $0x3c] sm:$0xf]
  %v207 = vpack.c.bf16 %v190, %v190
  %v208 = vld [vmem:[%s8] sm:$0x1]
  %v210 = vlaneseq
  %v211 = vshrl.u32 %v210, 7
  %v212 = vsub.s32 0, %v211
  %v213 = vrot.slane %v208, %v212
  %v231 = vunpack.c.l.b16 %v191
  %v232 = vunpack.c.l.b16 %v192
  %v233 = vunpack.c.l.b16 %v193
  %v234 = vunpack.c.l.b16 %v194
  %v235 = vunpack.c.l.b16 %v195
  %v236 = vunpack.c.l.b16 %v196
  %v237 = vunpack.c.l.b16 %v197
  %v238 = vunpack.c.l.b16 %v198
  %v239 = vunpack.c.l.b16 %v199
  %v240 = vunpack.c.l.b16 %v200
  %v241 = vunpack.c.l.b16 %v201
  %v242 = vunpack.c.l.b16 %v202
  %v243 = vunpack.c.l.b16 %v203
  %v244 = vunpack.c.l.b16 %v204
  %v245 = vunpack.c.l.b16 %v205
  %v246 = vunpack.c.l.b16 %v206
  %v247 = vpack.c.b16 %v232, %v231
  %v248 = vpack.c.b16 %v234, %v233
  %v249 = vpack.c.b16 %v236, %v235
  %v250 = vpack.c.b16 %v238, %v237
  %v251 = vpack.c.b16 %v240, %v239
  %v252 = vpack.c.b16 %v242, %v241
  %v253 = vpack.c.b16 %v244, %v243
  %v254 = vpack.c.b16 %v246, %v245
  %263 = vmatprep.subr.bf16.mxu0 0
  %264 = vmatpush1.bf16.msra.mxu0 %v247
  %265 = vmatprep.subr.bf16.mxu0 0
  %266 = vmatpush1.bf16.msra.mxu0 %v248
  %267 = vmatprep.subr.bf16.mxu0 0
  %268 = vmatpush1.bf16.msra.mxu0 %v249
  %269 = vmatprep.subr.bf16.mxu0 0
  %270 = vmatpush1.bf16.msra.mxu0 %v250
  %271 = vmatprep.subr.bf16.mxu0 0
  %272 = vmatpush1.bf16.msra.mxu0 %v251
  %273 = vmatprep.subr.bf16.mxu0 0
  %274 = vmatpush1.bf16.msra.mxu0 %v252
  %275 = vmatprep.subr.bf16.mxu0 0
  %276 = vmatpush1.bf16.msra.mxu0 %v253
  %277 = vmatprep.subr.bf16.mxu0 0
  %278 = vmatpush1.bf16.msra.mxu0 %v254
  %279 = vmatprep.subr.bf16.mxu0 0
  %280 = vmatpush1.bf16.msra.mxu0 0
  %281 = vmatprep.subr.bf16.mxu0 0
  %282 = vmatpush1.bf16.msra.mxu0 0
  %283 = vmatprep.subr.bf16.mxu0 0
  %284 = vmatpush1.bf16.msra.mxu0 0
  %285 = vmatprep.subr.bf16.mxu0 0
  %286 = vmatpush1.bf16.msra.mxu0 0
  %287 = vmatprep.subr.bf16.mxu0 0
  %288 = vmatpush1.bf16.msra.mxu0 0
  %289 = vmatprep.subr.bf16.mxu0 0
  %290 = vmatpush1.bf16.msra.mxu0 0
  %291 = vmatprep.subr.bf16.mxu0 0
  %292 = vmatpush1.bf16.msra.mxu0 0
  %293 = vmatprep.subr.bf16.mxu0 0
  %294 = vmatpush1.bf16.msra.mxu0 0
  %295 = vmatprep.mubr.bf16.mxu0 0
  %296 = vmatmul.mubr.bf16.gmra.mrb[0].mxu0 %v207
  %v297 = vpop.f32.mrb[0].mxu0
  %v298 = vadd.f32 %v213, %v297
  %v299 = vpop.f32.mrb[0].mxu0
  %v300 = vpop.f32.mrb[0].mxu0
  %v301 = vpop.f32.mrb[0].mxu0
  %302 = vdwg.mxu0
  %v303 = vmul.f32 %v189, %v298
  %vm304 = vcmask 257024
  %v305 = vsel %vm304, %v303, 0.0
  %306 = vadd.xlane.f32.xlu0 %v305
  %v307 = vpop.xlane.xlu0 %306
  %vm308 = vcmp.gt.f32.partialorder %v298, 0.0
  %v309 = vmul.f32 %v298, 0.01
  %v310 = vsel %vm308, %v298, %v309
  %v311 = vld [vmem:[%s3 + $0x8] sm:$0xf]
  %v312 = vpack.c.bf16 %v311, %v311
  %313 = vmatprep.subr.bf16.mxu0 0
  %314 = vmatpush1.bf16.msra.mxu0 %v247
  %315 = vmatprep.subr.bf16.mxu0 0
  %316 = vmatpush1.bf16.msra.mxu0 %v248
  %317 = vmatprep.subr.bf16.mxu0 0
  %318 = vmatpush1.bf16.msra.mxu0 %v249
  %319 = vmatprep.subr.bf16.mxu0 0
  %320 = vmatpush1.bf16.msra.mxu0 %v250
  %321 = vmatprep.subr.bf16.mxu0 0
  %322 = vmatpush1.bf16.msra.mxu0 %v251
  %323 = vmatprep.subr.bf16.mxu0 0
  %324 = vmatpush1.bf16.msra.mxu0 %v252
  %325 = vmatprep.subr.bf16.mxu0 0
  %326 = vmatpush1.bf16.msra.mxu0 %v253
  %327 = vmatprep.subr.bf16.mxu0 0
  %328 = vmatpush1.bf16.msra.mxu0 %v254
  %329 = vmatprep.subr.bf16.mxu0 0
  %330 = vmatpush1.bf16.msra.mxu0 0
  %331 = vmatprep.subr.bf16.mxu0 0
  %332 = vmatpush1.bf16.msra.mxu0 0
  %333 = vmatprep.subr.bf16.mxu0 0
  %334 = vmatpush1.bf16.msra.mxu0 0
  %335 = vmatprep.subr.bf16.mxu0 0
  %336 = vmatpush1.bf16.msra.mxu0 0
  %337 = vmatprep.subr.bf16.mxu0 0
  %338 = vmatpush1.bf16.msra.mxu0 0
  %339 = vmatprep.subr.bf16.mxu0 0
  %340 = vmatpush1.bf16.msra.mxu0 0
  %341 = vmatprep.subr.bf16.mxu0 0
  %342 = vmatpush1.bf16.msra.mxu0 0
  %343 = vmatprep.subr.bf16.mxu0 0
  %344 = vmatpush1.bf16.msra.mxu0 0
  %345 = vmatprep.mubr.bf16.mxu0 0
  %346 = vmatmul.mubr.bf16.gmra.mrb[0].mxu0 %v312
  %v347 = vpop.f32.mrb[0].mxu0
  %v348 = vadd.f32 %v213, %v347
  %v349 = vpop.f32.mrb[0].mxu0
  %v350 = vpop.f32.mrb[0].mxu0
  %v351 = vpop.f32.mrb[0].mxu0
  %352 = vdwg.mxu0
  %v353 = vmul.f32 %v189, %v348
  %v354 = vsel %vm304, %v353, 0.0
  %355 = vadd.xlane.f32.xlu0 %v354
  %v356 = vpop.xlane.xlu0 %355
  %vm357 = vcmp.gt.f32.partialorder %v348, 0.0
  %v358 = vmul.f32 %v348, 0.01
  %v359 = vsel %vm357, %v348, %v358
  %v360 = vmax.f32 %v307, %v356
  %v361 = vsub.f32 %v307, %v360
  %v362 = vmul.f32 %v361, 1.442695
  %v363 = vpow.pop %v362
  %v364 = vadd.f32 %v363, 0.0
  %v365 = vmul.f32 %v363, %v310
  %v366 = vadd.f32 %v365, 0.0
  %v367 = vsub.f32 %v356, %v360
  %v368 = vmul.f32 %v367, 1.442695
  %v369 = vpow.pop %v368
  %v370 = vadd.f32 %v364, %v369
  %v371 = vmul.f32 %v369, %v359
  %v372 = vadd.f32 %v366, %v371
  %v373 = vrcp.pop %v370
  %v374 = vmul.f32 %v372, %v373
  %v375 = vsel %vm145, %v127, %v374
  %v376 = vld [vmem:[%s9] sm:$0xf]
  %v377 = vld [vmem:[%s9 + $0x4] sm:$0xf]
  %v378 = vld [vmem:[%s9 + $0x8] sm:$0xf]
  %v379 = vld [vmem:[%s9 + $0xc] sm:$0xf]
  %v380 = vld [vmem:[%s9 + $0x10] sm:$0xf]
  %v381 = vld [vmem:[%s9 + $0x14] sm:$0xf]
  %v382 = vld [vmem:[%s9 + $0x18] sm:$0xf]
  %v383 = vld [vmem:[%s9 + $0x1c] sm:$0xf]
  %v384 = vpack.c.bf16 %v375, %v375
  %v385 = vld [vmem:[%s10] sm:$0x1]
  %v387 = vlaneseq
  %v388 = vshrl.u32 %v387, 7
  %v389 = vsub.s32 0, %v388
  %v390 = vrot.slane %v385, %v389
  %v400 = vunpack.c.l.b16 %v376
  %v401 = vunpack.c.l.b16 %v377
  %v402 = vunpack.c.l.b16 %v378
  %v403 = vunpack.c.l.b16 %v379
  %v404 = vunpack.c.l.b16 %v380
  %v405 = vunpack.c.l.b16 %v381
  %v406 = vunpack.c.l.b16 %v382
  %v407 = vunpack.c.l.b16 %v383
  %v408 = vpack.c.b16 %v401, %v400
  %v409 = vpack.c.b16 %v403, %v402
  %v410 = vpack.c.b16 %v405, %v404
  %v411 = vpack.c.b16 %v407, %v406
  %vm416 = vcmask 523264
  %v418 = vsel %vm416, %v384, 0
  %420 = vmatprep.subr.bf16.mxu0 0
  %421 = vmatpush1.bf16.msra.mxu0 %v408
  %422 = vmatprep.subr.bf16.mxu0 0
  %423 = vmatpush1.bf16.msra.mxu0 %v409
  %424 = vmatprep.subr.bf16.mxu0 0
  %425 = vmatpush1.bf16.msra.mxu0 %v410
  %426 = vmatprep.subr.bf16.mxu0 0
  %427 = vmatpush1.bf16.msra.mxu0 %v411
  %428 = vmatprep.subr.bf16.mxu0 0
  %429 = vmatpush1.bf16.msra.mxu0 0
  %430 = vmatprep.subr.bf16.mxu0 0
  %431 = vmatpush1.bf16.msra.mxu0 0
  %432 = vmatprep.subr.bf16.mxu0 0
  %433 = vmatpush1.bf16.msra.mxu0 0
  %434 = vmatprep.subr.bf16.mxu0 0
  %435 = vmatpush1.bf16.msra.mxu0 0
  %436 = vmatprep.subr.bf16.mxu0 0
  %437 = vmatpush1.bf16.msra.mxu0 0
  %438 = vmatprep.subr.bf16.mxu0 0
  %439 = vmatpush1.bf16.msra.mxu0 0
  %440 = vmatprep.subr.bf16.mxu0 0
  %441 = vmatpush1.bf16.msra.mxu0 0
  %442 = vmatprep.subr.bf16.mxu0 0
  %443 = vmatpush1.bf16.msra.mxu0 0
  %444 = vmatprep.subr.bf16.mxu0 0
  %445 = vmatpush1.bf16.msra.mxu0 0
  %446 = vmatprep.subr.bf16.mxu0 0
  %447 = vmatpush1.bf16.msra.mxu0 0
  %448 = vmatprep.subr.bf16.mxu0 0
  %449 = vmatpush1.bf16.msra.mxu0 0
  %450 = vmatprep.subr.bf16.mxu0 0
  %451 = vmatpush1.bf16.msra.mxu0 0
  %452 = vmatprep.mubr.bf16.mxu0 0
  %453 = vmatmul.mubr.bf16.gmra.mrb[0].mxu0 %v418
  %v454 = vpop.f32.mrb[0].mxu0
  %v455 = vadd.f32 %v390, %v454
  %v456 = vpop.f32.mrb[0].mxu0
  %v457 = vpop.f32.mrb[0].mxu0
  %v458 = vpop.f32.mrb[0].mxu0
  %459 = vdwg.mxu0
  %vm460 = vcmp.gt.f32.partialorder %v455, 0.0
  %v461 = vmul.f32 %v455, 0.01
  %v462 = vsel %vm460, %v455, %v461
  %v463 = vld [vmem:[%s11] sm:$0xf]
  %v464 = vld [vmem:[%s11 + $0x4] sm:$0xf]
  %v465 = vld [vmem:[%s11 + $0x8] sm:$0xf]
  %v466 = vld [vmem:[%s11 + $0xc] sm:$0xf]
  %v467 = vpack.c.bf16 %v462, %v462
  %v468 = vld [vmem:[%s12] sm:$0x1]
  %v470 = vlaneseq
  %v471 = vshrl.u32 %v470, 7
  %v472 = vsub.s32 0, %v471
  %v473 = vrot.slane %v468, %v472
  %v479 = vunpack.c.l.b16 %v463
  %v480 = vunpack.c.l.b16 %v464
  %v481 = vunpack.c.l.b16 %v465
  %v482 = vunpack.c.l.b16 %v466
  %v483 = vpack.c.b16 %v480, %v479
  %v484 = vpack.c.b16 %v482, %v481
  %v488 = vsel %vm145, %v467, 0
  %490 = vmatprep.subr.bf16.mxu0 0
  %491 = vmatpush1.bf16.msra.mxu0 %v483
  %492 = vmatprep.subr.bf16.mxu0 0
  %493 = vmatpush1.bf16.msra.mxu0 %v484
  %494 = vmatprep.subr.bf16.mxu0 0
  %495 = vmatpush1.bf16.msra.mxu0 0
  %496 = vmatprep.subr.bf16.mxu0 0
  %497 = vmatpush1.bf16.msra.mxu0 0
  %498 = vmatprep.subr.bf16.mxu0 0
  %499 = vmatpush1.bf16.msra.mxu0 0
  %500 = vmatprep.subr.bf16.mxu0 0
  %501 = vmatpush1.bf16.msra.mxu0 0
  %502 = vmatprep.subr.bf16.mxu0 0
  %503 = vmatpush1.bf16.msra.mxu0 0
  %504 = vmatprep.subr.bf16.mxu0 0
  %505 = vmatpush1.bf16.msra.mxu0 0
  %506 = vmatprep.subr.bf16.mxu0 0
  %507 = vmatpush1.bf16.msra.mxu0 0
  %508 = vmatprep.subr.bf16.mxu0 0
  %509 = vmatpush1.bf16.msra.mxu0 0
  %510 = vmatprep.subr.bf16.mxu0 0
  %511 = vmatpush1.bf16.msra.mxu0 0
  %512 = vmatprep.subr.bf16.mxu0 0
  %513 = vmatpush1.bf16.msra.mxu0 0
  %514 = vmatprep.subr.bf16.mxu0 0
  %515 = vmatpush1.bf16.msra.mxu0 0
  %516 = vmatprep.subr.bf16.mxu0 0
  %517 = vmatpush1.bf16.msra.mxu0 0
  %518 = vmatprep.subr.bf16.mxu0 0
  %519 = vmatpush1.bf16.msra.mxu0 0
  %520 = vmatprep.subr.bf16.mxu0 0
  %521 = vmatpush1.bf16.msra.mxu0 0
  %522 = vmatprep.mubr.bf16.mxu0 0
  %523 = vmatmul.mubr.bf16.gmra.mrb[0].mxu0 %v488
  %v524 = vpop.f32.mrb[0].mxu0
  %v525 = vadd.f32 %v473, %v524
  %v526 = vpop.f32.mrb[0].mxu0
  %v527 = vpop.f32.mrb[0].mxu0
  %v528 = vpop.f32.mrb[0].mxu0
  %529 = vdwg.mxu0
  %vm530 = vcmask 11264
  %531 = vst.msk [vmem:[%s13] sm:$0xf] %vm530, %v525
  // Predicated region
  $region54: #{attention_critic_forward.7} parent=0 // pred_check
    _
  $region55: #{attention_critic_forward.7} parent=0 // pred_check_branch
    %533 = sbr.rel (0) target = $region57
  $region56: #{attention_critic_forward.7} parent=0 // pred_region
    _
  $region57: #{attention_critic_forward.7} parent=0 // pred_fallthru
    _
  // Predicated region
  $region58: #{attention_critic_forward.7} parent=0 // pred_check
    _
  $region59: #{attention_critic_forward.7} parent=0 // pred_check_branch
    %535 = sbr.rel (0) target = $region61
  $region60: #{attention_critic_forward.7} parent=0 // pred_region
    _
  $region61: #{attention_critic_forward.7} parent=0 // pred_fallthru
    _

// kernel: attention_critic_forward.4
$region0: #{attention_critic_forward.4}
  #allocation0 [shape = 'u32[]', space=smem, size = 0x4, offset = 0x4, fixed_abs, tag = 'smem constant byte address 0x4 - core index']
  #allocation1 [shape = 'u32[144,128]{1,0:T(1,128)}', space=vmem, size = 0x12000, scoped, tag = 'internal scratch']
  %s0 = inlined_call_operand.vmem [shape: f32[3,4,6], index: 0, kind: input, shape index: {}]
  %s1 = inlined_call_operand.vmem [shape: f32[3,4,6], index: 1, kind: input, shape index: {}]
  %s2 = inlined_call_operand.vmem [shape: bf16[6,128], index: 2, kind: input, shape index: {}]
  %s3 = inlined_call_operand.vmem [shape: f32[1,128], index: 3, kind: input, shape index: {}]
  %s4 = inlined_call_operand.vmem [shape: bf16[2,128], index: 4, kind: input, shape index: {}]
  %s5 = inlined_call_operand.vmem [shape: f32[1,128], index: 5, kind: input, shape index: {}]
  %s6 = inlined_call_operand.vmem [shape: bf16[128,128], index: 6, kind: input, shape index: {}]
  %s7 = inlined_call_operand.vmem [shape: bf16[128,256], index: 7, kind: input, shape index: {}]
  %s8 = inlined_call_operand.hbm [shape: bf16[128,128], index: 8, kind: input, shape index: {}]
  %s9 = inlined_call_operand.hbm [shape: bf16[128,128], index: 9, kind: input, shape index: {}]
  %s10 = inlined_call_operand.hbm [shape: bf16[128,128], index: 10, kind: input, shape index: {}]
  %s11 = inlined_call_operand.vmem [shape: f32[1,128], index: 11, kind: input, shape index: {}]
  %s12 = inlined_call_operand.vmem [shape: f32[4,384], index: 12, kind: output, shape index: {}]
  %s13 = sld [smem:[#allocation0]]
  $region93: #{attention_critic_forward.4} parent=0
    _
  %s15 = ssub.s32 1, %s13
  %s16 = scalar_select 0, %s15, %s13
  $region1: #{attention_critic_forward.4} parent=0
    #allocation2 [shape = 'u8[32768]{0}', space=vmem, size = 0x8000, scoped, tag = 'input window, operand 8, single buffered']
    #allocation3 [shape = 's32[2]{0}', space=sflag, size = 0x8, scoped, tag = 'scoped memory for attention_critic_forward.4']
    #allocation4 [shape = 'u8[32768]{0}', space=vmem, size = 0x8000, scoped, tag = 'input window, operand 9, single buffered']
    #allocation5 [shape = 's32[1]{0}', space=sflag, size = 0x4, scoped, tag = 'scoped memory for attention_critic_forward.4']
    #allocation6 [shape = 'u8[32768]{0}', space=vmem, size = 0x8000, scoped, tag = 'input window, operand 10, single buffered']
    %17 = vsyncpa [#allocation3], 0
    %18 = vsyncpa [#allocation5], 0
    loop: start=0, step=1, limit=5
    $region2: #{attention_critic_forward.4} parent=1 // loop_pre_header
      _
    $region3: #{attention_critic_forward.4} parent=1 // loop_header
      %s20 = sphi 0, %s24
      %p21 = scmp.ge.s32.totalorder %s20, 5
      %s27 = sphi 0, %s39
      %s28 = sphi 0, %s35
      %s29 = sphi 0, %s27
      %s30 = sphi 0, %s28
      %s31 = sphi 0, %s29
      %s32 = sphi 0, %s30
      %s44 = sphi 0, %s46
      %s47 = sphi 0, %s44
      %s48 = sphi 0, %s47
      %s64 = sphi 0, %s48
      %s72 = sphi 0, %s74
      %s75 = sphi 0, %s72
      %s76 = sphi 0, %s75
      %s92 = sphi 0, %s76
      %s96 = sphi 0, %s96
      %s98 = sphi 0, %s96
      %s99 = sphi 0, %s98
      %s113 = sphi 0, %s99
      %s117 = sphi 0, %s117
      %s119 = sphi 0, %s117
      %s120 = sphi 0, %s119
      %s134 = sphi 0, %s120
      %s138 = sphi 0, %s138
      %s140 = sphi 0, %s138
      %s141 = sphi 0, %s140
      %s155 = sphi 0, %s141
      %s159 = sphi 0, %s159
      %s161 = sphi 0, %s159
      %s162 = sphi 0, %s161
      %s176 = sphi 0, %s162
      %s180 = sphi 0, %s180
      %s182 = sphi 0, %s180
      %s183 = sphi 0, %s182
      %s197 = sphi 0, %s183
      %s201 = sphi 0, %s201
      %s203 = sphi 0, %s201
      %s204 = sphi 0, %s203
      %s218 = sphi 0, %s204
      %s222 = sphi 0, %s222
      %s224 = sphi 0, %s222
      %s225 = sphi 0, %s224
      %s239 = sphi 0, %s225
      %s243 = sphi 0, %s243
      %s245 = sphi 0, %s243
      %s246 = sphi 0, %s245
      %s260 = sphi 0, %s246
      %s264 = sphi 0, %s264
      %s266 = sphi 0, %s264
      %s267 = sphi 0, %s266
      %s281 = sphi 0, %s267
      %s285 = sphi 0, %s285
      %s287 = sphi 0, %s285
      %s288 = sphi 0, %s287
      %s302 = sphi 0, %s288
      %s310 = sphi 0, %s312
      %s313 = sphi 0, %s310
      %s314 = sphi 0, %s313
      %s330 = sphi 0, %s314
    $region4: #{attention_critic_forward.4} parent=1 // loop_header_branch
      %23 = sbr.rel (%p21) target = $region8
    $region5: #{attention_critic_forward.4} parent=1 // loop_body
      %s25 = ssub.s32 %s20, 1
      %s26 = ssub.s32 %s20, 2
      %s33 = sadd.s32 1, %s28
      %p34 = scmp.ge.s32.totalorder %s33, 1
      %s35 = scalar_select %p34, 0, %s33
      %s36 = sadd.s32 1, %s27
      %s37 = scalar_select %p34, %s36, %s27
      %p38 = scmp.ge.s32.totalorder %s37, 3
      %s39 = scalar_select %p38, 0, %s37
      %s40 = ssub.s32 %s27, %s39
      %s41 = ssub.s32 %s28, %s35
      %s42 = sor.u32 %s40, %s41
      %p43 = scmp.eq.s32.totalorder %s42, 0
      %s45 = sadd.s32 %s44, 1
      %s46 = scalar_select %p43, %s44, %s45
      %p49 = pneg %p43
      %p50 = scmp.eq.s32.totalorder %s20, 2
      %p51 = por %p49, %p50
      %p52 = scmp.ne.s32.totalorder %s44, %s47
      %p53 = scmp.eq.s32.totalorder %s20, 0
      %p54 = por %p52, %p53
      %p55 = scmp.ne.s32.totalorder %s44, %s47
      %p56 = scmp.eq.s32.totalorder %s25, 2
      %p57 = por %p55, %p56
      %p58 = scmp.ne.s32.totalorder %s47, %s48
      %p59 = scmp.eq.s32.totalorder %s25, 0
      %p60 = por %p58, %p59
      %p61 = scmp.ne.s32.totalorder %s47, %s48
      %p62 = scmp.eq.s32.totalorder %s26, 2
      %p63 = por %p61, %p62
      %p65 = scmp.ne.s32.totalorder %s48, %s64
      %p66 = scmp.eq.s32.totalorder %s26, 0
      %p67 = por %p65, %p66
      %s68 = ssub.s32 %s27, %s39
      %s69 = ssub.s32 %s28, %s35
      %s70 = sor.u32 %s68, %s69
      %p71 = scmp.eq.s32.totalorder %s70, 0
      %s73 = sadd.s32 %s72, 1
      %s74 = scalar_select %p71, %s72, %s73
      %p77 = pneg %p71
      %p78 = scmp.eq.s32.totalorder %s20, 2
      %p79 = por %p77, %p78
      %p80 = scmp.ne.s32.totalorder %s72, %s75
      %p81 = scmp.eq.s32.totalorder %s20, 0
      %p82 = por %p80, %p81
      %p83 = scmp.ne.s32.totalorder %s72, %s75
      %p84 = scmp.eq.s32.totalorder %s25, 2
      %p85 = por %p83, %p84
      %p86 = scmp.ne.s32.totalorder %s75, %s76
      %p87 = scmp.eq.s32.totalorder %s25, 0
      %p88 = por %p86, %p87
      %p89 = scmp.ne.s32.totalorder %s75, %s76
      %p90 = scmp.eq.s32.totalorder %s26, 2
      %p91 = por %p89, %p90
      %p93 = scmp.ne.s32.totalorder %s76, %s92
      %p94 = scmp.eq.s32.totalorder %s26, 0
      %p95 = por %p93, %p94
      %s97 = sadd.s32 %s96, 1
      %p100 = scmp.eq.s32.totalorder %s20, 2
      %p101 = scmp.ne.s32.totalorder %s96, %s98
      %p102 = scmp.eq.s32.totalorder %s20, 0
      %p103 = por %p101, %p102
      %p104 = scmp.ne.s32.totalorder %s96, %s98
      %p105 = scmp.eq.s32.totalorder %s25, 2
      %p106 = por %p104, %p105
      %p107 = scmp.ne.s32.totalorder %s98, %s99
      %p108 = scmp.eq.s32.totalorder %s25, 0
      %p109 = por %p107, %p108
      %p110 = scmp.ne.s32.totalorder %s98, %s99
      %p111 = scmp.eq.s32.totalorder %s26, 2
      %p112 = por %p110, %p111
      %p114 = scmp.ne.s32.totalorder %s99, %s113
      %p115 = scmp.eq.s32.totalorder %s26, 0
      %p116 = por %p114, %p115
      %s118 = sadd.s32 %s117, 1
      %p121 = scmp.eq.s32.totalorder %s20, 2
      %p122 = scmp.ne.s32.totalorder %s117, %s119
      %p123 = scmp.eq.s32.totalorder %s20, 0
      %p124 = por %p122, %p123
      %p125 = scmp.ne.s32.totalorder %s117, %s119
      %p126 = scmp.eq.s32.totalorder %s25, 2
      %p127 = por %p125, %p126
      %p128 = scmp.ne.s32.totalorder %s119, %s120
      %p129 = scmp.eq.s32.totalorder %s25, 0
      %p130 = por %p128, %p129
      %p131 = scmp.ne.s32.totalorder %s119, %s120
      %p132 = scmp.eq.s32.totalorder %s26, 2
      %p133 = por %p131, %p132
      %p135 = scmp.ne.s32.totalorder %s120, %s134
      %p136 = scmp.eq.s32.totalorder %s26, 0
      %p137 = por %p135, %p136
      %s139 = sadd.s32 %s138, 1
      %p142 = scmp.eq.s32.totalorder %s20, 2
      %p143 = scmp.ne.s32.totalorder %s138, %s140
      %p144 = scmp.eq.s32.totalorder %s20, 0
      %p145 = por %p143, %p144
      %p146 = scmp.ne.s32.totalorder %s138, %s140
      %p147 = scmp.eq.s32.totalorder %s25, 2
      %p148 = por %p146, %p147
      %p149 = scmp.ne.s32.totalorder %s140, %s141
      %p150 = scmp.eq.s32.totalorder %s25, 0
      %p151 = por %p149, %p150
      %p152 = scmp.ne.s32.totalorder %s140, %s141
      %p153 = scmp.eq.s32.totalorder %s26, 2
      %p154 = por %p152, %p153
      %p156 = scmp.ne.s32.totalorder %s141, %s155
      %p157 = scmp.eq.s32.totalorder %s26, 0
      %p158 = por %p156, %p157
      %s160 = sadd.s32 %s159, 1
      %p163 = scmp.eq.s32.totalorder %s20, 2
      %p164 = scmp.ne.s32.totalorder %s159, %s161
      %p165 = scmp.eq.s32.totalorder %s20, 0
      %p166 = por %p164, %p165
      %p167 = scmp.ne.s32.totalorder %s159, %s161
      %p168 = scmp.eq.s32.totalorder %s25, 2
      %p169 = por %p167, %p168
      %p170 = scmp.ne.s32.totalorder %s161, %s162
      %p171 = scmp.eq.s32.totalorder %s25, 0
      %p172 = por %p170, %p171
      %p173 = scmp.ne.s32.totalorder %s161, %s162
      %p174 = scmp.eq.s32.totalorder %s26, 2
      %p175 = por %p173, %p174
      %p177 = scmp.ne.s32.totalorder %s162, %s176
      %p178 = scmp.eq.s32.totalorder %s26, 0
      %p179 = por %p177, %p178
      %s181 = sadd.s32 %s180, 1
      %p184 = scmp.eq.s32.totalorder %s20, 2
      %p185 = scmp.ne.s32.totalorder %s180, %s182
      %p186 = scmp.eq.s32.totalorder %s20, 0
      %p187 = por %p185, %p186
      %p188 = scmp.ne.s32.totalorder %s180, %s182
      %p189 = scmp.eq.s32.totalorder %s25, 2
      %p190 = por %p188, %p189
      %p191 = scmp.ne.s32.totalorder %s182, %s183
      %p192 = scmp.eq.s32.totalorder %s25, 0
      %p193 = por %p191, %p192
      %p194 = scmp.ne.s32.totalorder %s182, %s183
      %p195 = scmp.eq.s32.totalorder %s26, 2
      %p196 = por %p194, %p195
      %p198 = scmp.ne.s32.totalorder %s183, %s197
      %p199 = scmp.eq.s32.totalorder %s26, 0
      %p200 = por %p198, %p199
      %s202 = sadd.s32 %s201, 1
      %p205 = scmp.eq.s32.totalorder %s20, 2
      %p206 = scmp.ne.s32.totalorder %s201, %s203
      %p207 = scmp.eq.s32.totalorder %s20, 0
      %p208 = por %p206, %p207
      %p209 = scmp.ne.s32.totalorder %s201, %s203
      %p210 = scmp.eq.s32.totalorder %s25, 2
      %p211 = por %p209, %p210
      %p212 = scmp.ne.s32.totalorder %s203, %s204
      %p213 = scmp.eq.s32.totalorder %s25, 0
      %p214 = por %p212, %p213
      %p215 = scmp.ne.s32.totalorder %s203, %s204
      %p216 = scmp.eq.s32.totalorder %s26, 2
      %p217 = por %p215, %p216
      %p219 = scmp.ne.s32.totalorder %s204, %s218
      %p220 = scmp.eq.s32.totalorder %s26, 0
      %p221 = por %p219, %p220
      %s223 = sadd.s32 %s222, 1
      %p226 = scmp.eq.s32.totalorder %s20, 2
      %p227 = scmp.ne.s32.totalorder %s222, %s224
      %p228 = scmp.eq.s32.totalorder %s20, 0
      %p229 = por %p227, %p228
      %p230 = scmp.ne.s32.totalorder %s222, %s224
      %p231 = scmp.eq.s32.totalorder %s25, 2
      %p232 = por %p230, %p231
      %p233 = scmp.ne.s32.totalorder %s224, %s225
      %p234 = scmp.eq.s32.totalorder %s25, 0
      %p235 = por %p233, %p234
      %p236 = scmp.ne.s32.totalorder %s224, %s225
      %p237 = scmp.eq.s32.totalorder %s26, 2
      %p238 = por %p236, %p237
      %p240 = scmp.ne.s32.totalorder %s225, %s239
      %p241 = scmp.eq.s32.totalorder %s26, 0
      %p242 = por %p240, %p241
      %s244 = sadd.s32 %s243, 1
      %p247 = scmp.eq.s32.totalorder %s20, 2
      %p248 = scmp.ne.s32.totalorder %s243, %s245
      %p249 = scmp.eq.s32.totalorder %s20, 0
      %p250 = por %p248, %p249
      %p251 = scmp.ne.s32.totalorder %s243, %s245
      %p252 = scmp.eq.s32.totalorder %s25, 2
      %p253 = por %p251, %p252
      %p254 = scmp.ne.s32.totalorder %s245, %s246
      %p255 = scmp.eq.s32.totalorder %s25, 0
      %p256 = por %p254, %p255
      %p257 = scmp.ne.s32.totalorder %s245, %s246
      %p258 = scmp.eq.s32.totalorder %s26, 2
      %p259 = por %p257, %p258
      %p261 = scmp.ne.s32.totalorder %s246, %s260
      %p262 = scmp.eq.s32.totalorder %s26, 0
      %p263 = por %p261, %p262
      %s265 = sadd.s32 %s264, 1
      %p268 = scmp.eq.s32.totalorder %s20, 2
      %p269 = scmp.ne.s32.totalorder %s264, %s266
      %p270 = scmp.eq.s32.totalorder %s20, 0
      %p271 = por %p269, %p270
      %p272 = scmp.ne.s32.totalorder %s264, %s266
      %p273 = scmp.eq.s32.totalorder %s25, 2
      %p274 = por %p272, %p273
      %p275 = scmp.ne.s32.totalorder %s266, %s267
      %p276 = scmp.eq.s32.totalorder %s25, 0
      %p277 = por %p275, %p276
      %p278 = scmp.ne.s32.totalorder %s266, %s267
      %p279 = scmp.eq.s32.totalorder %s26, 2
      %p280 = por %p278, %p279
      %p282 = scmp.ne.s32.totalorder %s267, %s281
      %p283 = scmp.eq.s32.totalorder %s26, 0
      %p284 = por %p282, %p283
      %s286 = sadd.s32 %s285, 1
      %p289 = scmp.eq.s32.totalorder %s20, 2
      %p290 = scmp.ne.s32.totalorder %s285, %s287
      %p291 = scmp.eq.s32.totalorder %s20, 0
      %p292 = por %p290, %p291
      %p293 = scmp.ne.s32.totalorder %s285, %s287
      %p294 = scmp.eq.s32.totalorder %s25, 2
      %p295 = por %p293, %p294
      %p296 = scmp.ne.s32.totalorder %s287, %s288
      %p297 = scmp.eq.s32.totalorder %s25, 0
      %p298 = por %p296, %p297
      %p299 = scmp.ne.s32.totalorder %s287, %s288
      %p300 = scmp.eq.s32.totalorder %s26, 2
      %p301 = por %p299, %p300
      %p303 = scmp.ne.s32.totalorder %s288, %s302
      %p304 = scmp.eq.s32.totalorder %s26, 0
      %p305 = por %p303, %p304
      %s306 = ssub.s32 %s28, %s35
      %s307 = ssub.s32 %s27, %s39
      %s308 = sor.u32 %s306, %s307
      %p309 = scmp.eq.s32.totalorder %s308, 0
      %s311 = sadd.s32 %s310, 1
      %s312 = scalar_select %p309, %s310, %s311
      %p315 = pneg %p309
      %p316 = scmp.eq.s32.totalorder %s20, 2
      %p317 = por %p315, %p316
      %p318 = scmp.ne.s32.totalorder %s310, %s313
      %p319 = scmp.eq.s32.totalorder %s20, 0
      %p320 = por %p318, %p319
      %p321 = scmp.ne.s32.totalorder %s310, %s313
      %p322 = scmp.eq.s32.totalorder %s25, 2
      %p323 = por %p321, %p322
      %p324 = scmp.ne.s32.totalorder %s313, %s314
      %p325 = scmp.eq.s32.totalorder %s25, 0
      %p326 = por %p324, %p325
      %p327 = scmp.ne.s32.totalorder %s313, %s314
      %p328 = scmp.eq.s32.totalorder %s26, 2
      %p329 = por %p327, %p328
      %p331 = scmp.ne.s32.totalorder %s314, %s330
      %p332 = scmp.eq.s32.totalorder %s26, 0
      %p333 = por %p331, %p332
      %p334 = scmp.le.s32.totalorder 1, %s20
      %p335 = scmp.lt.s32.totalorder %s20, 4
      %p336 = pnand %p334, %p335
      %p337 = pneg %p336
      // Predicated region
      $region9: #{attention_critic_forward.4} parent=5 // pred_check
        _
      $region10: #{attention_critic_forward.4} parent=5 // pred_check_branch
        %339 = sbr.rel (%p336) target = $region12
      $region11: #{attention_critic_forward.4} parent=5 // pred_region
        %s340 = ssub.s32 %s20, 1
        // Predicated region
        $region13: #{attention_critic_forward.4} parent=11 // pred_check
          %p341 = pneg %p109
        $region14: #{attention_critic_forward.4} parent=11 // pred_check_branch
          %343 = sbr.rel (%p341) target = $region16
        $region15: #{attention_critic_forward.4} parent=11 // pred_region
          _
        $region16: #{attention_critic_forward.4} parent=11 // pred_fallthru
          _
        // Predicated region
        $region17: #{attention_critic_forward.4} parent=11 // pred_check
          %p344 = pneg %p130
        $region18: #{attention_critic_forward.4} parent=11 // pred_check_branch
          %346 = sbr.rel (%p344) target = $region20
        $region19: #{attention_critic_forward.4} parent=11 // pred_region
          _
        $region20: #{attention_critic_forward.4} parent=11 // pred_fallthru
          _
        // Predicated region
        $region21: #{attention_critic_forward.4} parent=11 // pred_check
          %p347 = pneg %p151
        $region22: #{attention_critic_forward.4} parent=11 // pred_check_branch
          %349 = sbr.rel (%p347) target = $region24
        $region23: #{attention_critic_forward.4} parent=11 // pred_region
          _
        $region24: #{attention_critic_forward.4} parent=11 // pred_fallthru
          _
        // Predicated region
        $region25: #{attention_critic_forward.4} parent=11 // pred_check
          %p350 = pneg %p172
        $region26: #{attention_critic_forward.4} parent=11 // pred_check_branch
          %352 = sbr.rel (%p350) target = $region28
        $region27: #{attention_critic_forward.4} parent=11 // pred_region
          _
        $region28: #{attention_critic_forward.4} parent=11 // pred_fallthru
          _
        // Predicated region
        $region29: #{attention_critic_forward.4} parent=11 // pred_check
          %p353 = pneg %p193
        $region30: #{attention_critic_forward.4} parent=11 // pred_check_branch
          %355 = sbr.rel (%p353) target = $region32
        $region31: #{attention_critic_forward.4} parent=11 // pred_region
          _
        $region32: #{attention_critic_forward.4} parent=11 // pred_fallthru
          _
        // Predicated region
        $region33: #{attention_critic_forward.4} parent=11 // pred_check
          %p356 = pneg %p214
        $region34: #{attention_critic_forward.4} parent=11 // pred_check_branch
          %358 = sbr.rel (%p356) target = $region36
        $region35: #{attention_critic_forward.4} parent=11 // pred_region
          _
        $region36: #{attention_critic_forward.4} parent=11 // pred_fallthru
          _
        // Predicated region
        $region37: #{attention_critic_forward.4} parent=11 // pred_check
          %p359 = pneg %p235
        $region38: #{attention_critic_forward.4} parent=11 // pred_check_branch
          %361 = sbr.rel (%p359) target = $region40
        $region39: #{attention_critic_forward.4} parent=11 // pred_region
          %s363 = ssub.s32 1024, 1024
          %364 = vsyncadd [#allocation3], %s363
          %s365 = sshll.u32 [#allocation2], 4
          %s366 = int_to_ptr.vmem [resolvable:$true] %s365
          %371 = dma.hbm_to_vmem [thread:$0]  %s8, 1024, %s366, [#allocation3], 64, 64, 4
        $region40: #{attention_critic_forward.4} parent=11 // pred_fallthru
          _
        // Predicated region
        $region41: #{attention_critic_forward.4} parent=11 // pred_check
          %p372 = pneg %p256
        $region42: #{attention_critic_forward.4} parent=11 // pred_check_branch
          %374 = sbr.rel (%p372) target = $region44
        $region43: #{attention_critic_forward.4} parent=11 // pred_region
          %s376 = ssub.s32 1024, 1024
          %377 = vsyncadd [#allocation5], %s376
          %s378 = sshll.u32 [#allocation4], 4
          %s379 = int_to_ptr.vmem [resolvable:$true] %s378
          %384 = dma.hbm_to_vmem [thread:$0]  %s9, 1024, %s379, [#allocation5], 64, 64, 4
        $region44: #{attention_critic_forward.4} parent=11 // pred_fallthru
          _
        // Predicated region
        $region45: #{attention_critic_forward.4} parent=11 // pred_check
          %p385 = pneg %p277
        $region46: #{attention_critic_forward.4} parent=11 // pred_check_branch
          %387 = sbr.rel (%p385) target = $region48
        $region47: #{attention_critic_forward.4} parent=11 // pred_region
          %s389 = ssub.s32 1024, 1024
          %390 = vsyncadd [#allocation5], %s389
          %s391 = sshll.u32 [#allocation6], 4
          %s392 = int_to_ptr.vmem [resolvable:$true] %s391
          %397 = dma.hbm_to_vmem [thread:$0]  %s10, 1024, %s392, [#allocation5], 64, 64, 4
        $region48: #{attention_critic_forward.4} parent=11 // pred_fallthru
          _
        // Predicated region
        $region49: #{attention_critic_forward.4} parent=11 // pred_check
          %p398 = pneg %p298
        $region50: #{attention_critic_forward.4} parent=11 // pred_check_branch
          %400 = sbr.rel (%p398) target = $region52
        $region51: #{attention_critic_forward.4} parent=11 // pred_region
          _
        $region52: #{attention_critic_forward.4} parent=11 // pred_fallthru
          _
      $region12: #{attention_critic_forward.4} parent=5 // pred_fallthru
        _
      %p401 = scmp.lt.s32.totalorder %s20, 3
      // Predicated region
      $region53: #{attention_critic_forward.4} parent=5 // pred_check
        %p402 = pneg %p401
      $region54: #{attention_critic_forward.4} parent=5 // pred_check_branch
        %404 = sbr.rel (%p402) target = $region56
      $region55: #{attention_critic_forward.4} parent=5 // pred_region
        // Predicated region
        $region57: #{attention_critic_forward.4} parent=55 // pred_check
          %p405 = pneg %p54
        $region58: #{attention_critic_forward.4} parent=55 // pred_check_branch
          %407 = sbr.rel (%p405) target = $region60
        $region59: #{attention_critic_forward.4} parent=55 // pred_region
          %p408 = scmp.lt.s32.totalorder %s27, 2
          %s409 = scalar_select %p408, %s27, 2
          %p410 = scmp.lt.s32.totalorder %s28, 0
          %s411 = scalar_select %p410, %s28, 0
          %s412 = sadd.s32 %s411, %s409
          %s413 = smul.addr %s412, 4
          %s414 = scalar_lea.vmem %s0, %s413
        $region60: #{attention_critic_forward.4} parent=55 // pred_fallthru
          _
        // Predicated region
        $region61: #{attention_critic_forward.4} parent=55 // pred_check
          %p415 = pneg %p82
        $region62: #{attention_critic_forward.4} parent=55 // pred_check_branch
          %417 = sbr.rel (%p415) target = $region64
        $region63: #{attention_critic_forward.4} parent=55 // pred_region
          %p418 = scmp.lt.s32.totalorder %s27, 2
          %s419 = scalar_select %p418, %s27, 2
          %p420 = scmp.lt.s32.totalorder %s28, 0
          %s421 = scalar_select %p420, %s28, 0
          %s422 = sadd.s32 %s421, %s419
          %s423 = smul.addr %s422, 4
          %s424 = scalar_lea.vmem %s1, %s423
        $region64: #{attention_critic_forward.4} parent=55 // pred_fallthru
          _
      $region56: #{attention_critic_forward.4} parent=5 // pred_fallthru
        _
      %p425 = scmp.le.s32.totalorder 1, %s20
      %p426 = scmp.lt.s32.totalorder %s20, 4
      %p427 = pnand %p425, %p426
      %p428 = pneg %p427
      // Predicated region
      $region65: #{attention_critic_forward.4} parent=5 // pred_check
        _
      $region66: #{attention_critic_forward.4} parent=5 // pred_check_branch
        %430 = sbr.rel (%p427) target = $region68
      $region67: #{attention_critic_forward.4} parent=5 // pred_region
        %s431 = ssub.s32 %s20, 1
        // Predicated region
        $region69: #{attention_critic_forward.4} parent=67 // pred_check
          %p432 = pneg %p235
        $region70: #{attention_critic_forward.4} parent=67 // pred_check_branch
          %434 = sbr.rel (%p432) target = $region72
        $region71: #{attention_critic_forward.4} parent=67 // pred_region
          %435 = dma.done [#allocation3], 1024
        $region72: #{attention_critic_forward.4} parent=67 // pred_fallthru
          _
        // Predicated region
        $region73: #{attention_critic_forward.4} parent=67 // pred_check
          %p436 = pneg %p256
        $region74: #{attention_critic_forward.4} parent=67 // pred_check_branch
          %438 = sbr.rel (%p436) target = $region76
        $region75: #{attention_critic_forward.4} parent=67 // pred_region
          %439 = dma.done [#allocation5], 1024
        $region76: #{attention_critic_forward.4} parent=67 // pred_fallthru
          _
        // Predicated region
        $region77: #{attention_critic_forward.4} parent=67 // pred_check
          %p440 = pneg %p277
        $region78: #{attention_critic_forward.4} parent=67 // pred_check_branch
          %442 = sbr.rel (%p440) target = $region80
        $region79: #{attention_critic_forward.4} parent=67 // pred_region
          %443 = dma.done [#allocation5], 1024
        $region80: #{attention_critic_forward.4} parent=67 // pred_fallthru
          _
        %p444 = scmp.lt.s32.totalorder %s29, 2
        %s445 = scalar_select %p444, %s29, 2
        %p446 = scmp.lt.s32.totalorder %s30, 0
        %s447 = scalar_select %p446, %s30, 0
        %s448 = sadd.s32 %s447, %s445
        %s449 = smul.addr %s448, 4
        %s450 = scalar_lea.vmem %s0, %s449
        %p451 = pneg %p60
        %p452 = pneg %p57
        %p453 = scmp.lt.s32.totalorder %s29, 2
        %s454 = scalar_select %p453, %s29, 2
        %p455 = scmp.lt.s32.totalorder %s30, 0
        %s456 = scalar_select %p455, %s30, 0
        %s457 = sadd.s32 %s456, %s454
        %s458 = smul.addr %s457, 4
        %s459 = scalar_lea.vmem %s1, %s458
        %p460 = pneg %p88
        %p461 = pneg %p85
        %p462 = pneg %p109
        %p463 = pneg %p106
        %p464 = pneg %p130
        %p465 = pneg %p127
        %p466 = pneg %p151
        %p467 = pneg %p148
        %p468 = pneg %p172
        %p469 = pneg %p169
        %p470 = pneg %p193
        %p471 = pneg %p190
        %p472 = pneg %p214
        %p473 = pneg %p211
        %p474 = pneg %p235
        %p475 = pneg %p232
        %p476 = pneg %p256
        %p477 = pneg %p253
        %p478 = pneg %p277
        %p479 = pneg %p274
        %p480 = pneg %p298
        %p481 = pneg %p295
        %p482 = pneg %p326
        %p483 = pneg %p323
        %p484 = scmp.lt.s32.totalorder %s30, 0
        %s485 = scalar_select %p484, %s30, 0
        %p486 = scmp.lt.s32.totalorder %s29, 2
        %s487 = scalar_select %p486, %s29, 2
        %s488 = smul.addr %s485, 3
        %s489 = sadd.s32 %s487, %s488
        %s490 = smul.addr %s489, 4
        %s491 = scalar_lea.vmem %s12, %s490
        %p492 = scmp.lt.s32.totalorder %s29, 2
        %s493 = scalar_select %p492, %s29, 2
        %p494 = scmp.lt.s32.totalorder %s30, 0
        %s495 = scalar_select %p494, %s30, 0
        %s496 = sadd.s32 %s495, %s493
        %s497 = smul.addr %s496, 4
        %s498 = scalar_lea.vmem %s0, %s497
        %p499 = scmp.lt.s32.totalorder %s29, 2
        %s500 = scalar_select %p499, %s29, 2
        %p501 = scmp.lt.s32.totalorder %s30, 0
        %s502 = scalar_select %p501, %s30, 0
        %s503 = sadd.s32 %s502, %s500
        %s504 = smul.addr %s503, 4
        %s505 = scalar_lea.vmem %s1, %s504
        %p506 = scmp.lt.s32.totalorder %s30, 0
        %s507 = scalar_select %p506, %s30, 0
        %p508 = scmp.lt.s32.totalorder %s29, 2
        %s509 = scalar_select %p508, %s29, 2
        %s510 = smul.addr %s507, 3
        %s511 = sadd.s32 %s509, %s510
        %s512 = smul.addr %s511, 4
        %s513 = scalar_lea.vmem %s12, %s512
        %v515 = vld [vmem:[%s498] sm:$0xf]
        %v516 = vld [vmem:[%s505] sm:$0xf]
        %v517 = vld [vmem:[%s2] sm:$0x7]
        %v518 = vpack.c.bf16 %v515, %v515
        %v519 = vld [vmem:[%s3] sm:$0x1]
        %v521 = vlaneseq
        %v522 = vshrl.u32 %v521, 7
        %v523 = vsub.s32 0, %v522
        %v524 = vrot.slane %v519, %v523
        %vm526 = vcmask 48128
        %v528 = vsel %vm526, %v518, 0
        %vm530 = vcmask 1042432
        %v532 = vsel %vm530, %v517, 0
        %534 = vmatprep.subr.bf16.mxu0 0
        %535 = vmatpush1.bf16.msra.mxu0 %v532
        %536 = vmatprep.subr.bf16.mxu0 0
        %537 = vmatpush1.bf16.msra.mxu0 0
        %538 = vmatprep.subr.bf16.mxu0 0
        %539 = vmatpush1.bf16.msra.mxu0 0
        %540 = vmatprep.subr.bf16.mxu0 0
        %541 = vmatpush1.bf16.msra.mxu0 0
        %542 = vmatprep.subr.bf16.mxu0 0
        %543 = vmatpush1.bf16.msra.mxu0 0
        %544 = vmatprep.subr.bf16.mxu0 0
        %545 = vmatpush1.bf16.msra.mxu0 0
        %546 = vmatprep.subr.bf16.mxu0 0
        %547 = vmatpush1.bf16.msra.mxu0 0
        %548 = vmatprep.subr.bf16.mxu0 0
        %549 = vmatpush1.bf16.msra.mxu0 0
        %550 = vmatprep.subr.bf16.mxu0 0
        %551 = vmatpush1.bf16.msra.mxu0 0
        %552 = vmatprep.subr.bf16.mxu0 0
        %553 = vmatpush1.bf16.msra.mxu0 0
        %554 = vmatprep.subr.bf16.mxu0 0
        %555 = vmatpush1.bf16.msra.mxu0 0
        %556 = vmatprep.subr.bf16.mxu0 0
        %557 = vmatpush1.bf16.msra.mxu0 0
        %558 = vmatprep.subr.bf16.mxu0 0
        %559 = vmatpush1.bf16.msra.mxu0 0
        %560 = vmatprep.subr.bf16.mxu0 0
        %561 = vmatpush1.bf16.msra.mxu0 0
        %562 = vmatprep.subr.bf16.mxu0 0
        %563 = vmatpush1.bf16.msra.mxu0 0
        %564 = vmatprep.subr.bf16.mxu0 0
        %565 = vmatpush1.bf16.msra.mxu0 0
        %566 = vmatprep.mubr.bf16.mxu0 0
        %567 = vmatmul.mubr.bf16.gmra.mrb[0].mxu0 %v528
        %v568 = vpop.f32.mrb[0].mxu0
        %v569 = vadd.f32 %v524, %v568
        %v570 = vpop.f32.mrb[0].mxu0
        %v571 = vpop.f32.mrb[0].mxu0
        %v572 = vpop.f32.mrb[0].mxu0
        %573 = vdwg.mxu0
        %v574 = vmax.f32 %v569, 0.0
        %v575 = vld [vmem:[%s6] sm:$0xf]
        %v576 = vld [vmem:[%s6 + $0x4] sm:$0xf]
        %v577 = vld [vmem:[%s6 + $0x8] sm:$0xf]
        %v578 = vld [vmem:[%s6 + $0xc] sm:$0xf]
        %v579 = vld [vmem:[%s6 + $0x10] sm:$0xf]
        %v580 = vld [vmem:[%s6 + $0x14] sm:$0xf]
        %v581 = vld [vmem:[%s6 + $0x18] sm:$0xf]
        %v582 = vld [vmem:[%s6 + $0x1c] sm:$0xf]
        %v583 = vld [vmem:[%s6 + $0x20] sm:$0xf]
        %v584 = vld [vmem:[%s6 + $0x24] sm:$0xf]
        %v585 = vld [vmem:[%s6 + $0x28] sm:$0xf]
        %v586 = vld [vmem:[%s6 + $0x2c] sm:$0xf]
        %v587 = vld [vmem:[%s6 + $0x30] sm:$0xf]
        %v588 = vld [vmem:[%s6 + $0x34] sm:$0xf]
        %v589 = vld [vmem:[%s6 + $0x38] sm:$0xf]
        %v590 = vld [vmem:[%s6 + $0x3c] sm:$0xf]
        %v591 = vpack.c.bf16 %v574, %v574
        %v608 = vunpack.c.l.b16 %v575
        %v609 = vunpack.c.l.b16 %v576
        %v610 = vunpack.c.l.b16 %v577
        %v611 = vunpack.c.l.b16 %v578
        %v612 = vunpack.c.l.b16 %v579
        %v613 = vunpack.c.l.b16 %v580
        %v614 = vunpack.c.l.b16 %v581
        %v615 = vunpack.c.l.b16 %v582
        %v616 = vunpack.c.l.b16 %v583
        %v617 = vunpack.c.l.b16 %v584
        %v618 = vunpack.c.l.b16 %v585
        %v619 = vunpack.c.l.b16 %v586
        %v620 = vunpack.c.l.b16 %v587
        %v621 = vunpack.c.l.b16 %v588
        %v622 = vunpack.c.l.b16 %v589
        %v623 = vunpack.c.l.b16 %v590
        %v624 = vpack.c.b16 %v609, %v608
        %v625 = vpack.c.b16 %v611, %v610
        %v626 = vpack.c.b16 %v613, %v612
        %v627 = vpack.c.b16 %v615, %v614
        %v628 = vpack.c.b16 %v617, %v616
        %v629 = vpack.c.b16 %v619, %v618
        %v630 = vpack.c.b16 %v621, %v620
        %v631 = vpack.c.b16 %v623, %v622
        %640 = vmatprep.subr.bf16.mxu0 0
        %641 = vmatpush1.bf16.msra.mxu0 %v624
        %642 = vmatprep.subr.bf16.mxu0 0
        %643 = vmatpush1.bf16.msra.mxu0 %v625
        %644 = vmatprep.subr.bf16.mxu0 0
        %645 = vmatpush1.bf16.msra.mxu0 %v626
        %646 = vmatprep.subr.bf16.mxu0 0
        %647 = vmatpush1.bf16.msra.mxu0 %v627
        %648 = vmatprep.subr.bf16.mxu0 0
        %649 = vmatpush1.bf16.msra.mxu0 %v628
        %650 = vmatprep.subr.bf16.mxu0 0
        %651 = vmatpush1.bf16.msra.mxu0 %v629
        %652 = vmatprep.subr.bf16.mxu0 0
        %653 = vmatpush1.bf16.msra.mxu0 %v630
        %654 = vmatprep.subr.bf16.mxu0 0
        %655 = vmatpush1.bf16.msra.mxu0 %v631
        %656 = vmatprep.subr.bf16.mxu0 0
        %657 = vmatpush1.bf16.msra.mxu0 0
        %658 = vmatprep.subr.bf16.mxu0 0
        %659 = vmatpush1.bf16.msra.mxu0 0
        %660 = vmatprep.subr.bf16.mxu0 0
        %661 = vmatpush1.bf16.msra.mxu0 0
        %662 = vmatprep.subr.bf16.mxu0 0
        %663 = vmatpush1.bf16.msra.mxu0 0
        %664 = vmatprep.subr.bf16.mxu0 0
        %665 = vmatpush1.bf16.msra.mxu0 0
        %666 = vmatprep.subr.bf16.mxu0 0
        %667 = vmatpush1.bf16.msra.mxu0 0
        %668 = vmatprep.subr.bf16.mxu0 0
        %669 = vmatpush1.bf16.msra.mxu0 0
        %670 = vmatprep.subr.bf16.mxu0 0
        %671 = vmatpush1.bf16.msra.mxu0 0
        %672 = vmatprep.mubr.bf16.mxu0 0
        %673 = vmatmul.mubr.bf16.gmra.mrb[0].mxu0 %v591
        %v674 = vpop.f32.mrb[0].mxu0
        %v675 = vadd.f32 0.0, %v674
        %v676 = vpop.f32.mrb[0].mxu0
        %v677 = vpop.f32.mrb[0].mxu0
        %v678 = vpop.f32.mrb[0].mxu0
        %679 = vdwg.mxu0
        %v680 = vmul.f32 %v675, 0.088388346
        %v681 = vld [vmem:[%s4] sm:$0x1]
        %v682 = vpack.c.bf16 %v516, %v516
        %v683 = vld [vmem:[%s5] sm:$0x1]
        %v685 = vlaneseq
        %v686 = vshrl.u32 %v685, 7
        %v687 = vsub.s32 0, %v686
        %v688 = vrot.slane %v683, %v687
        %vm690 = vcmask 15360
        %v692 = vsel %vm690, %v682, 0
        %vm694 = vcmask 1040384
        %v696 = vsel %vm694, %v681, 0
        %698 = vmatprep.subr.bf16.mxu0 0
        %699 = vmatpush1.bf16.msra.mxu0 %v696
        %700 = vmatprep.subr.bf16.mxu0 0
        %701 = vmatpush1.bf16.msra.mxu0 0
        %702 = vmatprep.subr.bf16.mxu0 0
        %703 = vmatpush1.bf16.msra.mxu0 0
        %704 = vmatprep.subr.bf16.mxu0 0
        %705 = vmatpush1.bf16.msra.mxu0 0
        %706 = vmatprep.subr.bf16.mxu0 0
        %707 = vmatpush1.bf16.msra.mxu0 0
        %708 = vmatprep.subr.bf16.mxu0 0
        %709 = vmatpush1.bf16.msra.mxu0 0
        %710 = vmatprep.subr.bf16.mxu0 0
        %711 = vmatpush1.bf16.msra.mxu0 0
        %712 = vmatprep.subr.bf16.mxu0 0
        %713 = vmatpush1.bf16.msra.mxu0 0
        %714 = vmatprep.subr.bf16.mxu0 0
        %715 = vmatpush1.bf16.msra.mxu0 0
        %716 = vmatprep.subr.bf16.mxu0 0
        %717 = vmatpush1.bf16.msra.mxu0 0
        %718 = vmatprep.subr.bf16.mxu0 0
        %719 = vmatpush1.bf16.msra.mxu0 0
        %720 = vmatprep.subr.bf16.mxu0 0
        %721 = vmatpush1.bf16.msra.mxu0 0
        %722 = vmatprep.subr.bf16.mxu0 0
        %723 = vmatpush1.bf16.msra.mxu0 0
        %724 = vmatprep.subr.bf16.mxu0 0
        %725 = vmatpush1.bf16.msra.mxu0 0
        %726 = vmatprep.subr.bf16.mxu0 0
        %727 = vmatpush1.bf16.msra.mxu0 0
        %728 = vmatprep.subr.bf16.mxu0 0
        %729 = vmatpush1.bf16.msra.mxu0 0
        %730 = vmatprep.mubr.bf16.mxu0 0
        %731 = vmatmul.mubr.bf16.gmra.mrb[0].mxu0 %v692
        %v732 = vpop.f32.mrb[0].mxu0
        %v733 = vadd.f32 %v688, %v732
        %v734 = vpop.f32.mrb[0].mxu0
        %v735 = vpop.f32.mrb[0].mxu0
        %v736 = vpop.f32.mrb[0].mxu0
        %737 = vdwg.mxu0
        %v738 = vmax.f32 %v733, 0.0
        %v739 = vld [vmem:[%s7] sm:$0xff]
        %v740 = vld [vmem:[%s7 + $0x8] sm:$0xff]
        %v741 = vld [vmem:[%s7 + $0x10] sm:$0xff]
        %v742 = vld [vmem:[%s7 + $0x18] sm:$0xff]
        %v743 = vld [vmem:[%s7 + $0x20] sm:$0xff]
        %v744 = vld [vmem:[%s7 + $0x28] sm:$0xff]
        %v745 = vld [vmem:[%s7 + $0x30] sm:$0xff]
        %v746 = vld [vmem:[%s7 + $0x38] sm:$0xff]
        %v747 = vld [vmem:[%s7 + $0x40] sm:$0xff]
        %v748 = vld [vmem:[%s7 + $0x48] sm:$0xff]
        %v749 = vld [vmem:[%s7 + $0x50] sm:$0xff]
        %v750 = vld [vmem:[%s7 + $0x58] sm:$0xff]
        %v751 = vld [vmem:[%s7 + $0x60] sm:$0xff]
        %v752 = vld [vmem:[%s7 + $0x68] sm:$0xff]
        %v753 = vld [vmem:[%s7 + $0x70] sm:$0xff]
        %v754 = vld [vmem:[%s7 + $0x78] sm:$0xff]
        %v755 = vpack.c.bf16 %v738, %v738
        %v772 = vunpack.c.l.b16 %v739
        %v773 = vunpack.c.h.b16 %v739
        %v774 = vunpack.c.l.b16 %v740
        %v775 = vunpack.c.h.b16 %v740
        %v776 = vunpack.c.l.b16 %v741
        %v777 = vunpack.c.h.b16 %v741
        %v778 = vunpack.c.l.b16 %v742
        %v779 = vunpack.c.h.b16 %v742
        %v780 = vunpack.c.l.b16 %v743
        %v781 = vunpack.c.h.b16 %v743
        %v782 = vunpack.c.l.b16 %v744
        %v783 = vunpack.c.h.b16 %v744
        %v784 = vunpack.c.l.b16 %v745
        %v785 = vunpack.c.h.b16 %v745
        %v786 = vunpack.c.l.b16 %v746
        %v787 = vunpack.c.h.b16 %v746
        %v788 = vunpack.c.l.b16 %v747
        %v789 = vunpack.c.h.b16 %v747
        %v790 = vunpack.c.l.b16 %v748
        %v791 = vunpack.c.h.b16 %v748
        %v792 = vunpack.c.l.b16 %v749
        %v793 = vunpack.c.h.b16 %v749
        %v794 = vunpack.c.l.b16 %v750
        %v795 = vunpack.c.h.b16 %v750
        %v796 = vunpack.c.l.b16 %v751
        %v797 = vunpack.c.h.b16 %v751
        %v798 = vunpack.c.l.b16 %v752
        %v799 = vunpack.c.h.b16 %v752
        %v800 = vunpack.c.l.b16 %v753
        %v801 = vunpack.c.h.b16 %v753
        %v802 = vunpack.c.l.b16 %v754
        %v803 = vunpack.c.h.b16 %v754
        %v804 = vpack.c.b16 %v774, %v772
        %v805 = vpack.c.b16 %v775, %v773
        %v806 = vpack.c.b16 %v778, %v776
        %v807 = vpack.c.b16 %v779, %v777
        %v808 = vpack.c.b16 %v782, %v780
        %v809 = vpack.c.b16 %v783, %v781
        %v810 = vpack.c.b16 %v786, %v784
        %v811 = vpack.c.b16 %v787, %v785
        %v812 = vpack.c.b16 %v790, %v788
        %v813 = vpack.c.b16 %v791, %v789
        %v814 = vpack.c.b16 %v794, %v792
        %v815 = vpack.c.b16 %v795, %v793
        %v816 = vpack.c.b16 %v798, %v796
        %v817 = vpack.c.b16 %v799, %v797
        %v818 = vpack.c.b16 %v802, %v800
        %v819 = vpack.c.b16 %v803, %v801
        %836 = vmatprep.subr.bf16.mxu0 %v805
        %837 = vmatpush1.bf16.msra.mxu0 %v804
        %838 = vmatprep.subr.bf16.mxu0 %v807
        %839 = vmatpush1.bf16.msra.mxu0 %v806
        %840 = vmatprep.subr.bf16.mxu0 %v809
        %841 = vmatpush1.bf16.msra.mxu0 %v808
        %842 = vmatprep.subr.bf16.mxu0 %v811
        %843 = vmatpush1.bf16.msra.mxu0 %v810
        %844 = vmatprep.subr.bf16.mxu0 %v813
        %845 = vmatpush1.bf16.msra.mxu0 %v812
        %846 = vmatprep.subr.bf16.mxu0 %v815
        %847 = vmatpush1.bf16.msra.mxu0 %v814
        %848 = vmatprep.subr.bf16.mxu0 %v817
        %849 = vmatpush1.bf16.msra.mxu0 %v816
        %850 = vmatprep.subr.bf16.mxu0 %v819
        %851 = vmatpush1.bf16.msra.mxu0 %v818
        %852 = vmatprep.subr.bf16.mxu0 0
        %853 = vmatpush1.bf16.msra.mxu0 0
        %854 = vmatprep.subr.bf16.mxu0 0
        %855 = vmatpush1.bf16.msra.mxu0 0
        %856 = vmatprep.subr.bf16.mxu0 0
        %857 = vmatpush1.bf16.msra.mxu0 0
        %858 = vmatprep.subr.bf16.mxu0 0
        %859 = vmatpush1.bf16.msra.mxu0 0
        %860 = vmatprep.subr.bf16.mxu0 0
        %861 = vmatpush1.bf16.msra.mxu0 0
        %862 = vmatprep.subr.bf16.mxu0 0
        %863 = vmatpush1.bf16.msra.mxu0 0
        %864 = vmatprep.subr.bf16.mxu0 0
        %865 = vmatpush1.bf16.msra.mxu0 0
        %866 = vmatprep.subr.bf16.mxu0 0
        %867 = vmatpush1.bf16.msra.mxu0 0
        %868 = vmatprep.mubr.bf16.mxu0 0
        %869 = vmatmul.mubr.bf16.gmra.mrb[0].mxu0 %v755
        %v870 = vpop.f32.mrb[0].mxu0
        %v871 = vadd.f32 0.0, %v870
        %v872 = vpop.f32.mrb[0].mxu0
        %v873 = vadd.f32 0.0, %v872
        %v874 = vpop.f32.mrb[0].mxu0
        %v875 = vpop.f32.mrb[0].mxu0
        %876 = vdwg.mxu0
        %v877 = vmul.f32 %v680, %v871
        %vm878 = vcmask 1043456
        %v879 = vsel %vm878, %v877, 0.0
        %880 = vadd.xlane.f32.xlu0 %v879
        %v881 = vpop.xlane.xlu0 %880
        %883 = vrot.lane.b32.xlu0 %v682, 126
        %v884 = vpop.permute.xlu0 %883
        %v886 = vsel %vm690, %v884, 0
        %888 = vmatprep.subr.bf16.mxu0 0
        %889 = vmatpush1.bf16.msra.mxu0 %v696
        %890 = vmatprep.subr.bf16.mxu0 0
        %891 = vmatpush1.bf16.msra.mxu0 0
        %892 = vmatprep.subr.bf16.mxu0 0
        %893 = vmatpush1.bf16.msra.mxu0 0
        %894 = vmatprep.subr.bf16.mxu0 0
        %895 = vmatpush1.bf16.msra.mxu0 0
        %896 = vmatprep.subr.bf16.mxu0 0
        %897 = vmatpush1.bf16.msra.mxu0 0
        %898 = vmatprep.subr.bf16.mxu0 0
        %899 = vmatpush1.bf16.msra.mxu0 0
        %900 = vmatprep.subr.bf16.mxu0 0
        %901 = vmatpush1.bf16.msra.mxu0 0
        %902 = vmatprep.subr.bf16.mxu0 0
        %903 = vmatpush1.bf16.msra.mxu0 0
        %904 = vmatprep.subr.bf16.mxu0 0
        %905 = vmatpush1.bf16.msra.mxu0 0
        %906 = vmatprep.subr.bf16.mxu0 0
        %907 = vmatpush1.bf16.msra.mxu0 0
        %908 = vmatprep.subr.bf16.mxu0 0
        %909 = vmatpush1.bf16.msra.mxu0 0
        %910 = vmatprep.subr.bf16.mxu0 0
        %911 = vmatpush1.bf16.msra.mxu0 0
        %912 = vmatprep.subr.bf16.mxu0 0
        %913 = vmatpush1.bf16.msra.mxu0 0
        %914 = vmatprep.subr.bf16.mxu0 0
        %915 = vmatpush1.bf16.msra.mxu0 0
        %916 = vmatprep.subr.bf16.mxu0 0
        %917 = vmatpush1.bf16.msra.mxu0 0
        %918 = vmatprep.subr.bf16.mxu0 0
        %919 = vmatpush1.bf16.msra.mxu0 0
        %920 = vmatprep.mubr.bf16.mxu0 0
        %921 = vmatmul.mubr.bf16.gmra.mrb[0].mxu0 %v886
        %v922 = vpop.f32.mrb[0].mxu0
        %v923 = vadd.f32 %v688, %v922
        %v924 = vpop.f32.mrb[0].mxu0
        %v925 = vpop.f32.mrb[0].mxu0
        %v926 = vpop.f32.mrb[0].mxu0
        %927 = vdwg.mxu0
        %v928 = vmax.f32 %v923, 0.0
        %v929 = vpack.c.bf16 %v928, %v928
        %930 = vmatprep.subr.bf16.mxu0 %v805
        %931 = vmatpush1.bf16.msra.mxu0 %v804
        %932 = vmatprep.subr.bf16.mxu0 %v807
        %933 = vmatpush1.bf16.msra.mxu0 %v806
        %934 = vmatprep.subr.bf16.mxu0 %v809
        %935 = vmatpush1.bf16.msra.mxu0 %v808
        %936 = vmatprep.subr.bf16.mxu0 %v811
        %937 = vmatpush1.bf16.msra.mxu0 %v810
        %938 = vmatprep.subr.bf16.mxu0 %v813
        %939 = vmatpush1.bf16.msra.mxu0 %v812
        %940 = vmatprep.subr.bf16.mxu0 %v815
        %941 = vmatpush1.bf16.msra.mxu0 %v814
        %942 = vmatprep.subr.bf16.mxu0 %v817
        %943 = vmatpush1.bf16.msra.mxu0 %v816
        %944 = vmatprep.subr.bf16.mxu0 %v819
        %945 = vmatpush1.bf16.msra.mxu0 %v818
        %946 = vmatprep.subr.bf16.mxu0 0
        %947 = vmatpush1.bf16.msra.mxu0 0
        %948 = vmatprep.subr.bf16.mxu0 0
        %949 = vmatpush1.bf16.msra.mxu0 0
        %950 = vmatprep.subr.bf16.mxu0 0
        %951 = vmatpush1.bf16.msra.mxu0 0
        %952 = vmatprep.subr.bf16.mxu0 0
        %953 = vmatpush1.bf16.msra.mxu0 0
        %954 = vmatprep.subr.bf16.mxu0 0
        %955 = vmatpush1.bf16.msra.mxu0 0
        %956 = vmatprep.subr.bf16.mxu0 0
        %957 = vmatpush1.bf16.msra.mxu0 0
        %958 = vmatprep.subr.bf16.mxu0 0
        %959 = vmatpush1.bf16.msra.mxu0 0
        %960 = vmatprep.subr.bf16.mxu0 0
        %961 = vmatpush1.bf16.msra.mxu0 0
        %962 = vmatprep.mubr.bf16.mxu0 0
        %963 = vmatmul.mubr.bf16.gmra.mrb[0].mxu0 %v929
        %v964 = vpop.f32.mrb[0].mxu0
        %v965 = vadd.f32 0.0, %v964
        %v966 = vpop.f32.mrb[0].mxu0
        %v967 = vadd.f32 0.0, %v966
        %v968 = vpop.f32.mrb[0].mxu0
        %v969 = vpop.f32.mrb[0].mxu0
        %970 = vdwg.mxu0
        %v971 = vmul.f32 %v680, %v965
        %v972 = vsel %vm878, %v971, 0.0
        %973 = vadd.xlane.f32.xlu0 %v972
        %v974 = vpop.xlane.xlu0 %973
        %975 = vrot.lane.b32.xlu0 %v682, 124
        %v976 = vpop.permute.xlu0 %975
        %v978 = vsel %vm690, %v976, 0
        %980 = vmatprep.subr.bf16.mxu0 0
        %981 = vmatpush1.bf16.msra.mxu0 %v696
        %982 = vmatprep.subr.bf16.mxu0 0
        %983 = vmatpush1.bf16.msra.mxu0 0
        %984 = vmatprep.subr.bf16.mxu0 0
        %985 = vmatpush1.bf16.msra.mxu0 0
        %986 = vmatprep.subr.bf16.mxu0 0
        %987 = vmatpush1.bf16.msra.mxu0 0
        %988 = vmatprep.subr.bf16.mxu0 0
        %989 = vmatpush1.bf16.msra.mxu0 0
        %990 = vmatprep.subr.bf16.mxu0 0
        %991 = vmatpush1.bf16.msra.mxu0 0
        %992 = vmatprep.subr.bf16.mxu0 0
        %993 = vmatpush1.bf16.msra.mxu0 0
        %994 = vmatprep.subr.bf16.mxu0 0
        %995 = vmatpush1.bf16.msra.mxu0 0
        %996 = vmatprep.subr.bf16.mxu0 0
        %997 = vmatpush1.bf16.msra.mxu0 0
        %998 = vmatprep.subr.bf16.mxu0 0
        %999 = vmatpush1.bf16.msra.mxu0 0
        %1000 = vmatprep.subr.bf16.mxu0 0
        %1001 = vmatpush1.bf16.msra.mxu0 0
        %1002 = vmatprep.subr.bf16.mxu0 0
        %1003 = vmatpush1.bf16.msra.mxu0 0
        %1004 = vmatprep.subr.bf16.mxu0 0
        %1005 = vmatpush1.bf16.msra.mxu0 0
        %1006 = vmatprep.subr.bf16.mxu0 0
        %1007 = vmatpush1.bf16.msra.mxu0 0
        %1008 = vmatprep.subr.bf16.mxu0 0
        %1009 = vmatpush1.bf16.msra.mxu0 0
        %1010 = vmatprep.subr.bf16.mxu0 0
        %1011 = vmatpush1.bf16.msra.mxu0 0
        %1012 = vmatprep.mubr.bf16.mxu0 0
        %1013 = vmatmul.mubr.bf16.gmra.mrb[0].mxu0 %v978
        %v1014 = vpop.f32.mrb[0].mxu0
        %v1015 = vadd.f32 %v688, %v1014
        %v1016 = vpop.f32.mrb[0].mxu0
        %v1017 = vpop.f32.mrb[0].mxu0
        %v1018 = vpop.f32.mrb[0].mxu0
        %1019 = vdwg.mxu0
        %v1020 = vmax.f32 %v1015, 0.0
        %v1021 = vpack.c.bf16 %v1020, %v1020
        %1022 = vmatprep.subr.bf16.mxu0 %v805
        %1023 = vmatpush1.bf16.msra.mxu0 %v804
        %1024 = vmatprep.subr.bf16.mxu0 %v807
        %1025 = vmatpush1.bf16.msra.mxu0 %v806
        %1026 = vmatprep.subr.bf16.mxu0 %v809
        %1027 = vmatpush1.bf16.msra.mxu0 %v808
        %1028 = vmatprep.subr.bf16.mxu0 %v811
        %1029 = vmatpush1.bf16.msra.mxu0 %v810
        %1030 = vmatprep.subr.bf16.mxu0 %v813
        %1031 = vmatpush1.bf16.msra.mxu0 %v812
        %1032 = vmatprep.subr.bf16.mxu0 %v815
        %1033 = vmatpush1.bf16.msra.mxu0 %v814
        %1034 = vmatprep.subr.bf16.mxu0 %v817
        %1035 = vmatpush1.bf16.msra.mxu0 %v816
        %1036 = vmatprep.subr.bf16.mxu0 %v819
        %1037 = vmatpush1.bf16.msra.mxu0 %v818
        %1038 = vmatprep.subr.bf16.mxu0 0
        %1039 = vmatpush1.bf16.msra.mxu0 0
        %1040 = vmatprep.subr.bf16.mxu0 0
        %1041 = vmatpush1.bf16.msra.mxu0 0
        %1042 = vmatprep.subr.bf16.mxu0 0
        %1043 = vmatpush1.bf16.msra.mxu0 0
        %1044 = vmatprep.subr.bf16.mxu0 0
        %1045 = vmatpush1.bf16.msra.mxu0 0
        %1046 = vmatprep.subr.bf16.mxu0 0
        %1047 = vmatpush1.bf16.msra.mxu0 0
        %1048 = vmatprep.subr.bf16.mxu0 0
        %1049 = vmatpush1.bf16.msra.mxu0 0
        %1050 = vmatprep.subr.bf16.mxu0 0
        %1051 = vmatpush1.bf16.msra.mxu0 0
        %1052 = vmatprep.subr.bf16.mxu0 0
        %1053 = vmatpush1.bf16.msra.mxu0 0
        %1054 = vmatprep.mubr.bf16.mxu0 0
        %1055 = vmatmul.mubr.bf16.gmra.mrb[0].mxu0 %v1021
        %v1056 = vpop.f32.mrb[0].mxu0
        %v1057 = vadd.f32 0.0, %v1056
        %v1058 = vpop.f32.mrb[0].mxu0
        %v1059 = vadd.f32 0.0, %v1058
        %v1060 = vpop.f32.mrb[0].mxu0
        %v1061 = vpop.f32.mrb[0].mxu0
        %1062 = vdwg.mxu0
        %v1063 = vmul.f32 %v680, %v1057
        %v1064 = vsel %vm878, %v1063, 0.0
        %1065 = vadd.xlane.f32.xlu0 %v1064
        %v1066 = vpop.xlane.xlu0 %1065
        %v1067 = vmax.f32 %v881, %v974
        %v1068 = vmax.f32 %v1067, %v1066
        %v1069 = vsub.f32 %v881, %v1068
        %v1070 = vmul.f32 %v1069, 1.442695
        %v1071 = vpow.pop %v1070
        %v1072 = vadd.f32 %v1071, 0.0
        %v1073 = vmul.f32 %v1071, %v873
        %v1074 = vadd.f32 %v1073, 0.0
        %v1075 = vsub.f32 %v974, %v1068
        %v1076 = vmul.f32 %v1075, 1.442695
        %v1077 = vpow.pop %v1076
        %v1078 = vadd.f32 %v1072, %v1077
        %v1079 = vmul.f32 %v1077, %v967
        %v1080 = vadd.f32 %v1074, %v1079
        %v1081 = vsub.f32 %v1066, %v1068
        %v1082 = vmul.f32 %v1081, 1.442695
        %v1083 = vpow.pop %v1082
        %v1084 = vadd.f32 %v1078, %v1083
        %v1085 = vmul.f32 %v1083, %v1059
        %v1086 = vadd.f32 %v1080, %v1085
        %v1087 = vrcp.pop %v1084
        %v1088 = vmul.f32 %v1086, %v1087
        %v1089 = vld [vmem:[#allocation2] sm:$0xf]
        %v1090 = vld [vmem:[#allocation2 + $0x4] sm:$0xf]
        %v1091 = vld [vmem:[#allocation2 + $0x8] sm:$0xf]
        %v1092 = vld [vmem:[#allocation2 + $0xc] sm:$0xf]
        %v1093 = vld [vmem:[#allocation2 + $0x10] sm:$0xf]
        %v1094 = vld [vmem:[#allocation2 + $0x14] sm:$0xf]
        %v1095 = vld [vmem:[#allocation2 + $0x18] sm:$0xf]
        %v1096 = vld [vmem:[#allocation2 + $0x1c] sm:$0xf]
        %v1097 = vld [vmem:[#allocation2 + $0x20] sm:$0xf]
        %v1098 = vld [vmem:[#allocation2 + $0x24] sm:$0xf]
        %v1099 = vld [vmem:[#allocation2 + $0x28] sm:$0xf]
        %v1100 = vld [vmem:[#allocation2 + $0x2c] sm:$0xf]
        %v1101 = vld [vmem:[#allocation2 + $0x30] sm:$0xf]
        %v1102 = vld [vmem:[#allocation2 + $0x34] sm:$0xf]
        %v1103 = vld [vmem:[#allocation2 + $0x38] sm:$0xf]
        %v1104 = vld [vmem:[#allocation2 + $0x3c] sm:$0xf]
        %v1105 = vpack.c.bf16 %v1088, %v1088
        %v1122 = vunpack.c.l.b16 %v1089
        %v1123 = vunpack.c.l.b16 %v1090
        %v1124 = vunpack.c.l.b16 %v1091
        %v1125 = vunpack.c.l.b16 %v1092
        %v1126 = vunpack.c.l.b16 %v1093
        %v1127 = vunpack.c.l.b16 %v1094
        %v1128 = vunpack.c.l.b16 %v1095
        %v1129 = vunpack.c.l.b16 %v1096
        %v1130 = vunpack.c.l.b16 %v1097
        %v1131 = vunpack.c.l.b16 %v1098
        %v1132 = vunpack.c.l.b16 %v1099
        %v1133 = vunpack.c.l.b16 %v1100
        %v1134 = vunpack.c.l.b16 %v1101
        %v1135 = vunpack.c.l.b16 %v1102
        %v1136 = vunpack.c.l.b16 %v1103
        %v1137 = vunpack.c.l.b16 %v1104
        %v1138 = vpack.c.b16 %v1123, %v1122
        %v1139 = vpack.c.b16 %v1125, %v1124
        %v1140 = vpack.c.b16 %v1127, %v1126
        %v1141 = vpack.c.b16 %v1129, %v1128
        %v1142 = vpack.c.b16 %v1131, %v1130
        %v1143 = vpack.c.b16 %v1133, %v1132
        %v1144 = vpack.c.b16 %v1135, %v1134
        %v1145 = vpack.c.b16 %v1137, %v1136
        %1154 = vmatprep.subr.bf16.mxu0 0
        %1155 = vmatpush1.bf16.msra.mxu0 %v1138
        %1156 = vmatprep.subr.bf16.mxu0 0
        %1157 = vmatpush1.bf16.msra.mxu0 %v1139
        %1158 = vmatprep.subr.bf16.mxu0 0
        %1159 = vmatpush1.bf16.msra.mxu0 %v1140
        %1160 = vmatprep.subr.bf16.mxu0 0
        %1161 = vmatpush1.bf16.msra.mxu0 %v1141
        %1162 = vmatprep.subr.bf16.mxu0 0
        %1163 = vmatpush1.bf16.msra.mxu0 %v1142
        %1164 = vmatprep.subr.bf16.mxu0 0
        %1165 = vmatpush1.bf16.msra.mxu0 %v1143
        %1166 = vmatprep.subr.bf16.mxu0 0
        %1167 = vmatpush1.bf16.msra.mxu0 %v1144
        %1168 = vmatprep.subr.bf16.mxu0 0
        %1169 = vmatpush1.bf16.msra.mxu0 %v1145
        %1170 = vmatprep.subr.bf16.mxu0 0
        %1171 = vmatpush1.bf16.msra.mxu0 0
        %1172 = vmatprep.subr.bf16.mxu0 0
        %1173 = vmatpush1.bf16.msra.mxu0 0
        %1174 = vmatprep.subr.bf16.mxu0 0
        %1175 = vmatpush1.bf16.msra.mxu0 0
        %1176 = vmatprep.subr.bf16.mxu0 0
        %1177 = vmatpush1.bf16.msra.mxu0 0
        %1178 = vmatprep.subr.bf16.mxu0 0
        %1179 = vmatpush1.bf16.msra.mxu0 0
        %1180 = vmatprep.subr.bf16.mxu0 0
        %1181 = vmatpush1.bf16.msra.mxu0 0
        %1182 = vmatprep.subr.bf16.mxu0 0
        %1183 = vmatpush1.bf16.msra.mxu0 0
        %1184 = vmatprep.subr.bf16.mxu0 0
        %1185 = vmatpush1.bf16.msra.mxu0 0
        %1186 = vmatprep.mubr.bf16.mxu0 0
        %1187 = vmatmul.mubr.bf16.gmra.mrb[0].mxu0 %v1105
        %v1188 = vpop.f32.mrb[0].mxu0
        %v1189 = vadd.f32 0.0, %v1188
        %v1190 = vpop.f32.mrb[0].mxu0
        %v1191 = vpop.f32.mrb[0].mxu0
        %v1192 = vpop.f32.mrb[0].mxu0
        %1193 = vdwg.mxu0
        %v1194 = vld [vmem:[#allocation4] sm:$0xf]
        %v1195 = vld [vmem:[#allocation4 + $0x4] sm:$0xf]
        %v1196 = vld [vmem:[#allocation4 + $0x8] sm:$0xf]
        %v1197 = vld [vmem:[#allocation4 + $0xc] sm:$0xf]
        %v1198 = vld [vmem:[#allocation4 + $0x10] sm:$0xf]
        %v1199 = vld [vmem:[#allocation4 + $0x14] sm:$0xf]
        %v1200 = vld [vmem:[#allocation4 + $0x18] sm:$0xf]
        %v1201 = vld [vmem:[#allocation4 + $0x1c] sm:$0xf]
        %v1202 = vld [vmem:[#allocation4 + $0x20] sm:$0xf]
        %v1203 = vld [vmem:[#allocation4 + $0x24] sm:$0xf]
        %v1204 = vld [vmem:[#allocation4 + $0x28] sm:$0xf]
        %v1205 = vld [vmem:[#allocation4 + $0x2c] sm:$0xf]
        %v1206 = vld [vmem:[#allocation4 + $0x30] sm:$0xf]
        %v1207 = vld [vmem:[#allocation4 + $0x34] sm:$0xf]
        %v1208 = vld [vmem:[#allocation4 + $0x38] sm:$0xf]
        %v1209 = vld [vmem:[#allocation4 + $0x3c] sm:$0xf]
        %v1210 = vld [vmem:[#allocation6] sm:$0xf]
        %v1211 = vld [vmem:[#allocation6 + $0x4] sm:$0xf]
        %v1212 = vld [vmem:[#allocation6 + $0x8] sm:$0xf]
        %v1213 = vld [vmem:[#allocation6 + $0xc] sm:$0xf]
        %v1214 = vld [vmem:[#allocation6 + $0x10] sm:$0xf]
        %v1215 = vld [vmem:[#allocation6 + $0x14] sm:$0xf]
        %v1216 = vld [vmem:[#allocation6 + $0x18] sm:$0xf]
        %v1217 = vld [vmem:[#allocation6 + $0x1c] sm:$0xf]
        %v1218 = vld [vmem:[#allocation6 + $0x20] sm:$0xf]
        %v1219 = vld [vmem:[#allocation6 + $0x24] sm:$0xf]
        %v1220 = vld [vmem:[#allocation6 + $0x28] sm:$0xf]
        %v1221 = vld [vmem:[#allocation6 + $0x2c] sm:$0xf]
        %v1222 = vld [vmem:[#allocation6 + $0x30] sm:$0xf]
        %v1223 = vld [vmem:[#allocation6 + $0x34] sm:$0xf]
        %v1224 = vld [vmem:[#allocation6 + $0x38] sm:$0xf]
        %v1225 = vld [vmem:[#allocation6 + $0x3c] sm:$0xf]
        %v1226 = vpack.c.bf16 %v1189, %v1189
        %v1243 = vunpack.c.l.b16 %v1210
        %v1244 = vunpack.c.l.b16 %v1211
        %v1245 = vunpack.c.l.b16 %v1212
        %v1246 = vunpack.c.l.b16 %v1213
        %v1247 = vunpack.c.l.b16 %v1214
        %v1248 = vunpack.c.l.b16 %v1215
        %v1249 = vunpack.c.l.b16 %v1216
        %v1250 = vunpack.c.l.b16 %v1217
        %v1251 = vunpack.c.l.b16 %v1218
        %v1252 = vunpack.c.l.b16 %v1219
        %v1253 = vunpack.c.l.b16 %v1220
        %v1254 = vunpack.c.l.b16 %v1221
        %v1255 = vunpack.c.l.b16 %v1222
        %v1256 = vunpack.c.l.b16 %v1223
        %v1257 = vunpack.c.l.b16 %v1224
        %v1258 = vunpack.c.l.b16 %v1225
        %v1259 = vpack.c.b16 %v1244, %v1243
        %v1260 = vpack.c.b16 %v1246, %v1245
        %v1261 = vpack.c.b16 %v1248, %v1247
        %v1262 = vpack.c.b16 %v1250, %v1249
        %v1263 = vpack.c.b16 %v1252, %v1251
        %v1264 = vpack.c.b16 %v1254, %v1253
        %v1265 = vpack.c.b16 %v1256, %v1255
        %v1266 = vpack.c.b16 %v1258, %v1257
        %1275 = vmatprep.subr.bf16.mxu0 0
        %1276 = vmatpush1.bf16.msra.mxu0 %v1259
        %1277 = vmatprep.subr.bf16.mxu0 0
        %1278 = vmatpush1.bf16.msra.mxu0 %v1260
        %1279 = vmatprep.subr.bf16.mxu0 0
        %1280 = vmatpush1.bf16.msra.mxu0 %v1261
        %1281 = vmatprep.subr.bf16.mxu0 0
        %1282 = vmatpush1.bf16.msra.mxu0 %v1262
        %1283 = vmatprep.subr.bf16.mxu0 0
        %1284 = vmatpush1.bf16.msra.mxu0 %v1263
        %1285 = vmatprep.subr.bf16.mxu0 0
        %1286 = vmatpush1.bf16.msra.mxu0 %v1264
        %1287 = vmatprep.subr.bf16.mxu0 0
        %1288 = vmatpush1.bf16.msra.mxu0 %v1265
        %1289 = vmatprep.subr.bf16.mxu0 0
        %1290 = vmatpush1.bf16.msra.mxu0 %v1266
        %1291 = vmatprep.subr.bf16.mxu0 0
        %1292 = vmatpush1.bf16.msra.mxu0 0
        %1293 = vmatprep.subr.bf16.mxu0 0
        %1294 = vmatpush1.bf16.msra.mxu0 0
        %1295 = vmatprep.subr.bf16.mxu0 0
        %1296 = vmatpush1.bf16.msra.mxu0 0
        %1297 = vmatprep.subr.bf16.mxu0 0
        %1298 = vmatpush1.bf16.msra.mxu0 0
        %1299 = vmatprep.subr.bf16.mxu0 0
        %1300 = vmatpush1.bf16.msra.mxu0 0
        %1301 = vmatprep.subr.bf16.mxu0 0
        %1302 = vmatpush1.bf16.msra.mxu0 0
        %1303 = vmatprep.subr.bf16.mxu0 0
        %1304 = vmatpush1.bf16.msra.mxu0 0
        %1305 = vmatprep.subr.bf16.mxu0 0
        %1306 = vmatpush1.bf16.msra.mxu0 0
        %1307 = vmatprep.mubr.bf16.mxu0 0
        %1308 = vmatmul.mubr.bf16.gmra.mrb[0].mxu0 %v1226
        %v1309 = vpop.f32.mrb[0].mxu0
        %v1310 = vadd.f32 0.0, %v1309
        %v1311 = vpop.f32.mrb[0].mxu0
        %v1312 = vpop.f32.mrb[0].mxu0
        %v1313 = vpop.f32.mrb[0].mxu0
        %1314 = vdwg.mxu0
        %v1331 = vunpack.c.l.b16 %v1194
        %v1332 = vunpack.c.l.b16 %v1195
        %v1333 = vunpack.c.l.b16 %v1196
        %v1334 = vunpack.c.l.b16 %v1197
        %v1335 = vunpack.c.l.b16 %v1198
        %v1336 = vunpack.c.l.b16 %v1199
        %v1337 = vunpack.c.l.b16 %v1200
        %v1338 = vunpack.c.l.b16 %v1201
        %v1339 = vunpack.c.l.b16 %v1202
        %v1340 = vunpack.c.l.b16 %v1203
        %v1341 = vunpack.c.l.b16 %v1204
        %v1342 = vunpack.c.l.b16 %v1205
        %v1343 = vunpack.c.l.b16 %v1206
        %v1344 = vunpack.c.l.b16 %v1207
        %v1345 = vunpack.c.l.b16 %v1208
        %v1346 = vunpack.c.l.b16 %v1209
        %v1347 = vpack.c.b16 %v1332, %v1331
        %v1348 = vpack.c.b16 %v1334, %v1333
        %v1349 = vpack.c.b16 %v1336, %v1335
        %v1350 = vpack.c.b16 %v1338, %v1337
        %v1351 = vpack.c.b16 %v1340, %v1339
        %v1352 = vpack.c.b16 %v1342, %v1341
        %v1353 = vpack.c.b16 %v1344, %v1343
        %v1354 = vpack.c.b16 %v1346, %v1345
        %1363 = vmatprep.subr.bf16.mxu0 0
        %1364 = vmatpush1.bf16.msra.mxu0 %v1347
        %1365 = vmatprep.subr.bf16.mxu0 0
        %1366 = vmatpush1.bf16.msra.mxu0 %v1348
        %1367 = vmatprep.subr.bf16.mxu0 0
        %1368 = vmatpush1.bf16.msra.mxu0 %v1349
        %1369 = vmatprep.subr.bf16.mxu0 0
        %1370 = vmatpush1.bf16.msra.mxu0 %v1350
        %1371 = vmatprep.subr.bf16.mxu0 0
        %1372 = vmatpush1.bf16.msra.mxu0 %v1351
        %1373 = vmatprep.subr.bf16.mxu0 0
        %1374 = vmatpush1.bf16.msra.mxu0 %v1352
        %1375 = vmatprep.subr.bf16.mxu0 0
        %1376 = vmatpush1.bf16.msra.mxu0 %v1353
        %1377 = vmatprep.subr.bf16.mxu0 0
        %1378 = vmatpush1.bf16.msra.mxu0 %v1354
        %1379 = vmatprep.subr.bf16.mxu0 0
        %1380 = vmatpush1.bf16.msra.mxu0 0
        %1381 = vmatprep.subr.bf16.mxu0 0
        %1382 = vmatpush1.bf16.msra.mxu0 0
        %1383 = vmatprep.subr.bf16.mxu0 0
        %1384 = vmatpush1.bf16.msra.mxu0 0
        %1385 = vmatprep.subr.bf16.mxu0 0
        %1386 = vmatpush1.bf16.msra.mxu0 0
        %1387 = vmatprep.subr.bf16.mxu0 0
        %1388 = vmatpush1.bf16.msra.mxu0 0
        %1389 = vmatprep.subr.bf16.mxu0 0
        %1390 = vmatpush1.bf16.msra.mxu0 0
        %1391 = vmatprep.subr.bf16.mxu0 0
        %1392 = vmatpush1.bf16.msra.mxu0 0
        %1393 = vmatprep.subr.bf16.mxu0 0
        %1394 = vmatpush1.bf16.msra.mxu0 0
        %1395 = vmatprep.mubr.bf16.mxu0 0
        %1396 = vmatmul.mubr.bf16.gmra.mrb[0].mxu0 %v591
        %v1397 = vpop.f32.mrb[0].mxu0
        %v1398 = vadd.f32 %v1310, %v1397
        %v1399 = vpop.f32.mrb[0].mxu0
        %v1400 = vpop.f32.mrb[0].mxu0
        %v1401 = vpop.f32.mrb[0].mxu0
        %1402 = vdwg.mxu0
        %v1403 = vld [vmem:[%s11] sm:$0x1]
        %v1405 = vlaneseq
        %v1406 = vshrl.u32 %v1405, 7
        %v1407 = vsub.s32 0, %v1406
        %v1408 = vrot.slane %v1403, %v1407
        %v1410 = vadd.f32 %v1398, %v1408
        %v1411 = vmax.f32 %v1410, 0.0
        %1412 = vst [vmem:[%s513] sm:$0xf] %v1411
        %p1413 = scmp.lt.s32.totalorder %s30, 0
        %s1414 = scalar_select %p1413, %s30, 0
        %p1415 = scmp.lt.s32.totalorder %s29, 2
        %s1416 = scalar_select %p1415, %s29, 2
        %s1417 = smul.addr %s1414, 3
        %s1418 = sadd.s32 %s1416, %s1417
        %s1419 = smul.addr %s1418, 4
        %s1420 = scalar_lea.vmem %s12, %s1419
        // Predicated region
        $region81: #{attention_critic_forward.4} parent=67 // pred_check
          %p1421 = pneg %p323
        $region82: #{attention_critic_forward.4} parent=67 // pred_check_branch
          %1423 = sbr.rel (%p1421) target = $region84
        $region83: #{attention_critic_forward.4} parent=67 // pred_region
          _
        $region84: #{attention_critic_forward.4} parent=67 // pred_fallthru
          _
      $region68: #{attention_critic_forward.4} parent=5 // pred_fallthru
        _
      %p1424 = scmp.le.s32.totalorder 2, %s20
      // Predicated region
      $region85: #{attention_critic_forward.4} parent=5 // pred_check
        %p1425 = pneg %p1424
      $region86: #{attention_critic_forward.4} parent=5 // pred_check_branch
        %1427 = sbr.rel (%p1425) target = $region88
      $region87: #{attention_critic_forward.4} parent=5 // pred_region
        %s1428 = ssub.s32 %s20, 2
        // Predicated region
        $region89: #{attention_critic_forward.4} parent=87 // pred_check
          %p1429 = pneg %p329
        $region90: #{attention_critic_forward.4} parent=87 // pred_check_branch
          %1431 = sbr.rel (%p1429) target = $region92
        $region91: #{attention_critic_forward.4} parent=87 // pred_region
          %p1432 = scmp.lt.s32.totalorder %s32, 0
          %s1433 = scalar_select %p1432, %s32, 0
          %p1434 = scmp.lt.s32.totalorder %s31, 2
          %s1435 = scalar_select %p1434, %s31, 2
          %s1436 = smul.addr %s1433, 3
          %s1437 = sadd.s32 %s1435, %s1436
          %s1438 = smul.addr %s1437, 4
          %s1439 = scalar_lea.vmem %s12, %s1438
        $region92: #{attention_critic_forward.4} parent=87 // pred_fallthru
          _
      $region88: #{attention_critic_forward.4} parent=5 // pred_fallthru
        _
    $region6: #{attention_critic_forward.4} parent=1 // loop_footer
      %s24 = sadd.s32 1, %s20
    $region7: #{attention_critic_forward.4} parent=1 // loop_footer_branch
      %19 = sbr.rel target = $region3
    $region8: #{attention_critic_forward.4} parent=1 // loop_exit
      _
    %1440 = vsyncpa [#allocation3], 1
    %s1441 = scalar_lea.sflag [#allocation3], 1
    %1442 = vsyncpa %s1441, 1
    %1443 = vsyncpa [#allocation5], 1

// kernel: attention_critic_forward.5
$region0: #{attention_critic_forward.5}
  #allocation0 [shape = 'u32[]', space=smem, size = 0x4, offset = 0x4, fixed_abs, tag = 'smem constant byte address 0x4 - core index']
  #allocation1 [shape = 'u32[144,128]{1,0:T(1,128)}', space=vmem, size = 0x12000, scoped, tag = 'internal scratch']
  %s0 = inlined_call_operand.vmem [shape: f32[4,384], index: 0, kind: input, shape index: {}]
  %s1 = inlined_call_operand.vmem [shape: bf16[128,384], index: 1, kind: input, shape index: {}]
  %s2 = inlined_call_operand.vmem [shape: bf16[128,128], index: 2, kind: input, shape index: {}]
  %s3 = inlined_call_operand.vmem [shape: bf16[128,128], index: 3, kind: input, shape index: {}]
  %s4 = inlined_call_operand.vmem [shape: bf16[128,128], index: 4, kind: input, shape index: {}]
  %s5 = inlined_call_operand.vmem [shape: f32[1,128], index: 5, kind: input, shape index: {}]
  %s6 = inlined_call_operand.vmem [shape: f32[4,384], index: 6, kind: output, shape index: {}]
  %s7 = sld [smem:[#allocation0]]
  $region34: #{attention_critic_forward.5} parent=0
    _
  %s9 = ssub.s32 1, %s7
  %s10 = scalar_select 0, %s9, %s7
  // Predicated region
  $region2: #{attention_critic_forward.5} parent=0 // pred_check
    _
  $region3: #{attention_critic_forward.5} parent=0 // pred_check_branch
    %12 = sbr.rel (0) target = $region5
  $region4: #{attention_critic_forward.5} parent=0 // pred_region
    _
  $region5: #{attention_critic_forward.5} parent=0 // pred_fallthru
    _
  // Predicated region
  $region6: #{attention_critic_forward.5} parent=0 // pred_check
    _
  $region7: #{attention_critic_forward.5} parent=0 // pred_check_branch
    %14 = sbr.rel (0) target = $region9
  $region8: #{attention_critic_forward.5} parent=0 // pred_region
    _
  $region9: #{attention_critic_forward.5} parent=0 // pred_fallthru
    _
  // Predicated region
  $region10: #{attention_critic_forward.5} parent=0 // pred_check
    _
  $region11: #{attention_critic_forward.5} parent=0 // pred_check_branch
    %16 = sbr.rel (0) target = $region13
  $region12: #{attention_critic_forward.5} parent=0 // pred_region
    _
  $region13: #{attention_critic_forward.5} parent=0 // pred_fallthru
    _
  // Predicated region
  $region14: #{attention_critic_forward.5} parent=0 // pred_check
    _
  $region15: #{attention_critic_forward.5} parent=0 // pred_check_branch
    %18 = sbr.rel (0) target = $region17
  $region16: #{attention_critic_forward.5} parent=0 // pred_region
    _
  $region17: #{attention_critic_forward.5} parent=0 // pred_fallthru
    _
  // Predicated region
  $region18: #{attention_critic_forward.5} parent=0 // pred_check
    _
  $region19: #{attention_critic_forward.5} parent=0 // pred_check_branch
    %20 = sbr.rel (0) target = $region21
  $region20: #{attention_critic_forward.5} parent=0 // pred_region
    _
  $region21: #{attention_critic_forward.5} parent=0 // pred_fallthru
    _
  // Predicated region
  $region22: #{attention_critic_forward.5} parent=0 // pred_check
    _
  $region23: #{attention_critic_forward.5} parent=0 // pred_check_branch
    %22 = sbr.rel (0) target = $region25
  $region24: #{attention_critic_forward.5} parent=0 // pred_region
    _
  $region25: #{attention_critic_forward.5} parent=0 // pred_fallthru
    _
  %v24 = vld [vmem:[%s0] sm:$0xf]
  %v25 = vld [vmem:[%s0 + $0x4] sm:$0xf]
  %v26 = vld [vmem:[%s0 + $0x8] sm:$0xf]
  %v27 = vld [vmem:[%s1] sm:$0xff]
  %v28 = vld [vmem:[%s1 + $0x8] sm:$0xf]
  %v29 = vld [vmem:[%s1 + $0xc] sm:$0xff]
  %v30 = vld [vmem:[%s1 + $0x14] sm:$0xf]
  %v31 = vld [vmem:[%s1 + $0x18] sm:$0xff]
  %v32 = vld [vmem:[%s1 + $0x20] sm:$0xf]
  %v33 = vld [vmem:[%s1 + $0x24] sm:$0xff]
  %v34 = vld [vmem:[%s1 + $0x2c] sm:$0xf]
  %v35 = vld [vmem:[%s1 + $0x30] sm:$0xff]
  %v36 = vld [vmem:[%s1 + $0x38] sm:$0xf]
  %v37 = vld [vmem:[%s1 + $0x3c] sm:$0xff]
  %v38 = vld [vmem:[%s1 + $0x44] sm:$0xf]
  %v39 = vld [vmem:[%s1 + $0x48] sm:$0xff]
  %v40 = vld [vmem:[%s1 + $0x50] sm:$0xf]
  %v41 = vld [vmem:[%s1 + $0x54] sm:$0xff]
  %v42 = vld [vmem:[%s1 + $0x5c] sm:$0xf]
  %v43 = vld [vmem:[%s1 + $0x60] sm:$0xff]
  %v44 = vld [vmem:[%s1 + $0x68] sm:$0xf]
  %v45 = vld [vmem:[%s1 + $0x6c] sm:$0xff]
  %v46 = vld [vmem:[%s1 + $0x74] sm:$0xf]
  %v47 = vld [vmem:[%s1 + $0x78] sm:$0xff]
  %v48 = vld [vmem:[%s1 + $0x80] sm:$0xf]
  %v49 = vld [vmem:[%s1 + $0x84] sm:$0xff]
  %v50 = vld [vmem:[%s1 + $0x8c] sm:$0xf]
  %v51 = vld [vmem:[%s1 + $0x90] sm:$0xff]
  %v52 = vld [vmem:[%s1 + $0x98] sm:$0xf]
  %v53 = vld [vmem:[%s1 + $0x9c] sm:$0xff]
  %v54 = vld [vmem:[%s1 + $0xa4] sm:$0xf]
  %v55 = vld [vmem:[%s1 + $0xa8] sm:$0xff]
  %v56 = vld [vmem:[%s1 + $0xb0] sm:$0xf]
  %v57 = vld [vmem:[%s1 + $0xb4] sm:$0xff]
  %v58 = vld [vmem:[%s1 + $0xbc] sm:$0xf]
  %v59 = vpack.c.bf16 %v24, %v24
  %v92 = vunpack.c.l.b16 %v27
  %v93 = vunpack.c.h.b16 %v27
  %v94 = vunpack.c.l.b16 %v28
  %v95 = vunpack.c.l.b16 %v29
  %v96 = vunpack.c.h.b16 %v29
  %v97 = vunpack.c.l.b16 %v30
  %v98 = vunpack.c.l.b16 %v31
  %v99 = vunpack.c.h.b16 %v31
  %v100 = vunpack.c.l.b16 %v32
  %v101 = vunpack.c.l.b16 %v33
  %v102 = vunpack.c.h.b16 %v33
  %v103 = vunpack.c.l.b16 %v34
  %v104 = vunpack.c.l.b16 %v35
  %v105 = vunpack.c.h.b16 %v35
  %v106 = vunpack.c.l.b16 %v36
  %v107 = vunpack.c.l.b16 %v37
  %v108 = vunpack.c.h.b16 %v37
  %v109 = vunpack.c.l.b16 %v38
  %v110 = vunpack.c.l.b16 %v39
  %v111 = vunpack.c.h.b16 %v39
  %v112 = vunpack.c.l.b16 %v40
  %v113 = vunpack.c.l.b16 %v41
  %v114 = vunpack.c.h.b16 %v41
  %v115 = vunpack.c.l.b16 %v42
  %v116 = vunpack.c.l.b16 %v43
  %v117 = vunpack.c.h.b16 %v43
  %v118 = vunpack.c.l.b16 %v44
  %v119 = vunpack.c.l.b16 %v45
  %v120 = vunpack.c.h.b16 %v45
  %v121 = vunpack.c.l.b16 %v46
  %v122 = vunpack.c.l.b16 %v47
  %v123 = vunpack.c.h.b16 %v47
  %v124 = vunpack.c.l.b16 %v48
  %v125 = vunpack.c.l.b16 %v49
  %v126 = vunpack.c.h.b16 %v49
  %v127 = vunpack.c.l.b16 %v50
  %v128 = vunpack.c.l.b16 %v51
  %v129 = vunpack.c.h.b16 %v51
  %v130 = vunpack.c.l.b16 %v52
  %v131 = vunpack.c.l.b16 %v53
  %v132 = vunpack.c.h.b16 %v53
  %v133 = vunpack.c.l.b16 %v54
  %v134 = vunpack.c.l.b16 %v55
  %v135 = vunpack.c.h.b16 %v55
  %v136 = vunpack.c.l.b16 %v56
  %v137 = vunpack.c.l.b16 %v57
  %v138 = vunpack.c.h.b16 %v57
  %v139 = vunpack.c.l.b16 %v58
  %v140 = vpack.c.b16 %v95, %v92
  %v141 = vpack.c.b16 %v96, %v93
  %v142 = vpack.c.b16 %v97, %v94
  %v143 = vpack.c.b16 %v101, %v98
  %v144 = vpack.c.b16 %v102, %v99
  %v145 = vpack.c.b16 %v103, %v100
  %v146 = vpack.c.b16 %v107, %v104
  %v147 = vpack.c.b16 %v108, %v105
  %v148 = vpack.c.b16 %v109, %v106
  %v149 = vpack.c.b16 %v113, %v110
  %v150 = vpack.c.b16 %v114, %v111
  %v151 = vpack.c.b16 %v115, %v112
  %v152 = vpack.c.b16 %v119, %v116
  %v153 = vpack.c.b16 %v120, %v117
  %v154 = vpack.c.b16 %v121, %v118
  %v155 = vpack.c.b16 %v125, %v122
  %v156 = vpack.c.b16 %v126, %v123
  %v157 = vpack.c.b16 %v127, %v124
  %v158 = vpack.c.b16 %v131, %v128
  %v159 = vpack.c.b16 %v132, %v129
  %v160 = vpack.c.b16 %v133, %v130
  %v161 = vpack.c.b16 %v137, %v134
  %v162 = vpack.c.b16 %v138, %v135
  %v163 = vpack.c.b16 %v139, %v136
  %188 = vmatprep.subr.bf16.mxu0 %v141
  %189 = vmatpush1.bf16.msra.mxu0 %v140
  %190 = vmatprep.subr.bf16.mxu0 %v144
  %191 = vmatpush1.bf16.msra.mxu0 %v143
  %192 = vmatprep.subr.bf16.mxu0 %v147
  %193 = vmatpush1.bf16.msra.mxu0 %v146
  %194 = vmatprep.subr.bf16.mxu0 %v150
  %195 = vmatpush1.bf16.msra.mxu0 %v149
  %196 = vmatprep.subr.bf16.mxu0 %v153
  %197 = vmatpush1.bf16.msra.mxu0 %v152
  %198 = vmatprep.subr.bf16.mxu0 %v156
  %199 = vmatpush1.bf16.msra.mxu0 %v155
  %200 = vmatprep.subr.bf16.mxu0 %v159
  %201 = vmatpush1.bf16.msra.mxu0 %v158
  %202 = vmatprep.subr.bf16.mxu0 %v162
  %203 = vmatpush1.bf16.msra.mxu0 %v161
  %204 = vmatprep.subr.bf16.mxu0 0
  %205 = vmatpush1.bf16.msra.mxu0 0
  %206 = vmatprep.subr.bf16.mxu0 0
  %207 = vmatpush1.bf16.msra.mxu0 0
  %208 = vmatprep.subr.bf16.mxu0 0
  %209 = vmatpush1.bf16.msra.mxu0 0
  %210 = vmatprep.subr.bf16.mxu0 0
  %211 = vmatpush1.bf16.msra.mxu0 0
  %212 = vmatprep.subr.bf16.mxu0 0
  %213 = vmatpush1.bf16.msra.mxu0 0
  %214 = vmatprep.subr.bf16.mxu0 0
  %215 = vmatpush1.bf16.msra.mxu0 0
  %216 = vmatprep.subr.bf16.mxu0 0
  %217 = vmatpush1.bf16.msra.mxu0 0
  %218 = vmatprep.subr.bf16.mxu0 0
  %219 = vmatpush1.bf16.msra.mxu0 0
  %220 = vmatprep.mubr.bf16.mxu0 0
  %221 = vmatmul.mubr.bf16.gmra.mrb[0].mxu0 %v59
  %v222 = vpop.f32.mrb[0].mxu0
  %v223 = vadd.f32 0.0, %v222
  %v224 = vpop.f32.mrb[0].mxu0
  %v225 = vadd.f32 0.0, %v224
  %v226 = vpop.f32.mrb[0].mxu0
  %v227 = vpop.f32.mrb[0].mxu0
  %228 = vdwg.mxu0
  %229 = vmatprep.subr.bf16.mxu0 0
  %230 = vmatpush1.bf16.msra.mxu0 %v142
  %231 = vmatprep.subr.bf16.mxu0 0
  %232 = vmatpush1.bf16.msra.mxu0 %v145
  %233 = vmatprep.subr.bf16.mxu0 0
  %234 = vmatpush1.bf16.msra.mxu0 %v148
  %235 = vmatprep.subr.bf16.mxu0 0
  %236 = vmatpush1.bf16.msra.mxu0 %v151
  %237 = vmatprep.subr.bf16.mxu0 0
  %238 = vmatpush1.bf16.msra.mxu0 %v154
  %239 = vmatprep.subr.bf16.mxu0 0
  %240 = vmatpush1.bf16.msra.mxu0 %v157
  %241 = vmatprep.subr.bf16.mxu0 0
  %242 = vmatpush1.bf16.msra.mxu0 %v160
  %243 = vmatprep.subr.bf16.mxu0 0
  %244 = vmatpush1.bf16.msra.mxu0 %v163
  %245 = vmatprep.subr.bf16.mxu0 0
  %246 = vmatpush1.bf16.msra.mxu0 0
  %247 = vmatprep.subr.bf16.mxu0 0
  %248 = vmatpush1.bf16.msra.mxu0 0
  %249 = vmatprep.subr.bf16.mxu0 0
  %250 = vmatpush1.bf16.msra.mxu0 0
  %251 = vmatprep.subr.bf16.mxu0 0
  %252 = vmatpush1.bf16.msra.mxu0 0
  %253 = vmatprep.subr.bf16.mxu0 0
  %254 = vmatpush1.bf16.msra.mxu0 0
  %255 = vmatprep.subr.bf16.mxu0 0
  %256 = vmatpush1.bf16.msra.mxu0 0
  %257 = vmatprep.subr.bf16.mxu0 0
  %258 = vmatpush1.bf16.msra.mxu0 0
  %259 = vmatprep.subr.bf16.mxu0 0
  %260 = vmatpush1.bf16.msra.mxu0 0
  %261 = vmatprep.mubr.bf16.mxu0 0
  %262 = vmatmul.mubr.bf16.gmra.mrb[0].mxu0 %v59
  %v263 = vpop.f32.mrb[0].mxu0
  %v264 = vadd.f32 0.0, %v263
  %v265 = vpop.f32.mrb[0].mxu0
  %v266 = vpop.f32.mrb[0].mxu0
  %v267 = vpop.f32.mrb[0].mxu0
  %268 = vdwg.mxu0
  %v269 = vmul.f32 %v223, 0.088388346
  %v270 = vpack.c.bf16 %v25, %v25
  %271 = vmatprep.subr.bf16.mxu0 %v141
  %272 = vmatpush1.bf16.msra.mxu0 %v140
  %273 = vmatprep.subr.bf16.mxu0 %v144
  %274 = vmatpush1.bf16.msra.mxu0 %v143
  %275 = vmatprep.subr.bf16.mxu0 %v147
  %276 = vmatpush1.bf16.msra.mxu0 %v146
  %277 = vmatprep.subr.bf16.mxu0 %v150
  %278 = vmatpush1.bf16.msra.mxu0 %v149
  %279 = vmatprep.subr.bf16.mxu0 %v153
  %280 = vmatpush1.bf16.msra.mxu0 %v152
  %281 = vmatprep.subr.bf16.mxu0 %v156
  %282 = vmatpush1.bf16.msra.mxu0 %v155
  %283 = vmatprep.subr.bf16.mxu0 %v159
  %284 = vmatpush1.bf16.msra.mxu0 %v158
  %285 = vmatprep.subr.bf16.mxu0 %v162
  %286 = vmatpush1.bf16.msra.mxu0 %v161
  %287 = vmatprep.subr.bf16.mxu0 0
  %288 = vmatpush1.bf16.msra.mxu0 0
  %289 = vmatprep.subr.bf16.mxu0 0
  %290 = vmatpush1.bf16.msra.mxu0 0
  %291 = vmatprep.subr.bf16.mxu0 0
  %292 = vmatpush1.bf16.msra.mxu0 0
  %293 = vmatprep.subr.bf16.mxu0 0
  %294 = vmatpush1.bf16.msra.mxu0 0
  %295 = vmatprep.subr.bf16.mxu0 0
  %296 = vmatpush1.bf16.msra.mxu0 0
  %297 = vmatprep.subr.bf16.mxu0 0
  %298 = vmatpush1.bf16.msra.mxu0 0
  %299 = vmatprep.subr.bf16.mxu0 0
  %300 = vmatpush1.bf16.msra.mxu0 0
  %301 = vmatprep.subr.bf16.mxu0 0
  %302 = vmatpush1.bf16.msra.mxu0 0
  %303 = vmatprep.mubr.bf16.mxu0 0
  %304 = vmatmul.mubr.bf16.gmra.mrb[0].mxu0 %v270
  %v305 = vpop.f32.mrb[0].mxu0
  %v306 = vadd.f32 0.0, %v305
  %v307 = vpop.f32.mrb[0].mxu0
  %v308 = vadd.f32 0.0, %v307
  %v309 = vpop.f32.mrb[0].mxu0
  %v310 = vpop.f32.mrb[0].mxu0
  %311 = vdwg.mxu0
  %312 = vmatprep.subr.bf16.mxu0 0
  %313 = vmatpush1.bf16.msra.mxu0 %v142
  %314 = vmatprep.subr.bf16.mxu0 0
  %315 = vmatpush1.bf16.msra.mxu0 %v145
  %316 = vmatprep.subr.bf16.mxu0 0
  %317 = vmatpush1.bf16.msra.mxu0 %v148
  %318 = vmatprep.subr.bf16.mxu0 0
  %319 = vmatpush1.bf16.msra.mxu0 %v151
  %320 = vmatprep.subr.bf16.mxu0 0
  %321 = vmatpush1.bf16.msra.mxu0 %v154
  %322 = vmatprep.subr.bf16.mxu0 0
  %323 = vmatpush1.bf16.msra.mxu0 %v157
  %324 = vmatprep.subr.bf16.mxu0 0
  %325 = vmatpush1.bf16.msra.mxu0 %v160
  %326 = vmatprep.subr.bf16.mxu0 0
  %327 = vmatpush1.bf16.msra.mxu0 %v163
  %328 = vmatprep.subr.bf16.mxu0 0
  %329 = vmatpush1.bf16.msra.mxu0 0
  %330 = vmatprep.subr.bf16.mxu0 0
  %331 = vmatpush1.bf16.msra.mxu0 0
  %332 = vmatprep.subr.bf16.mxu0 0
  %333 = vmatpush1.bf16.msra.mxu0 0
  %334 = vmatprep.subr.bf16.mxu0 0
  %335 = vmatpush1.bf16.msra.mxu0 0
  %336 = vmatprep.subr.bf16.mxu0 0
  %337 = vmatpush1.bf16.msra.mxu0 0
  %338 = vmatprep.subr.bf16.mxu0 0
  %339 = vmatpush1.bf16.msra.mxu0 0
  %340 = vmatprep.subr.bf16.mxu0 0
  %341 = vmatpush1.bf16.msra.mxu0 0
  %342 = vmatprep.subr.bf16.mxu0 0
  %343 = vmatpush1.bf16.msra.mxu0 0
  %344 = vmatprep.mubr.bf16.mxu0 0
  %345 = vmatmul.mubr.bf16.gmra.mrb[0].mxu0 %v270
  %v346 = vpop.f32.mrb[0].mxu0
  %v347 = vadd.f32 0.0, %v346
  %v348 = vpop.f32.mrb[0].mxu0
  %v349 = vpop.f32.mrb[0].mxu0
  %v350 = vpop.f32.mrb[0].mxu0
  %351 = vdwg.mxu0
  %v352 = vmul.f32 %v306, 0.088388346
  %v353 = vpack.c.bf16 %v26, %v26
  %354 = vmatprep.subr.bf16.mxu0 %v141
  %355 = vmatpush1.bf16.msra.mxu0 %v140
  %356 = vmatprep.subr.bf16.mxu0 %v144
  %357 = vmatpush1.bf16.msra.mxu0 %v143
  %358 = vmatprep.subr.bf16.mxu0 %v147
  %359 = vmatpush1.bf16.msra.mxu0 %v146
  %360 = vmatprep.subr.bf16.mxu0 %v150
  %361 = vmatpush1.bf16.msra.mxu0 %v149
  %362 = vmatprep.subr.bf16.mxu0 %v153
  %363 = vmatpush1.bf16.msra.mxu0 %v152
  %364 = vmatprep.subr.bf16.mxu0 %v156
  %365 = vmatpush1.bf16.msra.mxu0 %v155
  %366 = vmatprep.subr.bf16.mxu0 %v159
  %367 = vmatpush1.bf16.msra.mxu0 %v158
  %368 = vmatprep.subr.bf16.mxu0 %v162
  %369 = vmatpush1.bf16.msra.mxu0 %v161
  %370 = vmatprep.subr.bf16.mxu0 0
  %371 = vmatpush1.bf16.msra.mxu0 0
  %372 = vmatprep.subr.bf16.mxu0 0
  %373 = vmatpush1.bf16.msra.mxu0 0
  %374 = vmatprep.subr.bf16.mxu0 0
  %375 = vmatpush1.bf16.msra.mxu0 0
  %376 = vmatprep.subr.bf16.mxu0 0
  %377 = vmatpush1.bf16.msra.mxu0 0
  %378 = vmatprep.subr.bf16.mxu0 0
  %379 = vmatpush1.bf16.msra.mxu0 0
  %380 = vmatprep.subr.bf16.mxu0 0
  %381 = vmatpush1.bf16.msra.mxu0 0
  %382 = vmatprep.subr.bf16.mxu0 0
  %383 = vmatpush1.bf16.msra.mxu0 0
  %384 = vmatprep.subr.bf16.mxu0 0
  %385 = vmatpush1.bf16.msra.mxu0 0
  %386 = vmatprep.mubr.bf16.mxu0 0
  %387 = vmatmul.mubr.bf16.gmra.mrb[0].mxu0 %v353
  %v388 = vpop.f32.mrb[0].mxu0
  %v389 = vadd.f32 0.0, %v388
  %v390 = vpop.f32.mrb[0].mxu0
  %v391 = vadd.f32 0.0, %v390
  %v392 = vpop.f32.mrb[0].mxu0
  %v393 = vpop.f32.mrb[0].mxu0
  %394 = vdwg.mxu0
  %395 = vmatprep.subr.bf16.mxu0 0
  %396 = vmatpush1.bf16.msra.mxu0 %v142
  %397 = vmatprep.subr.bf16.mxu0 0
  %398 = vmatpush1.bf16.msra.mxu0 %v145
  %399 = vmatprep.subr.bf16.mxu0 0
  %400 = vmatpush1.bf16.msra.mxu0 %v148
  %401 = vmatprep.subr.bf16.mxu0 0
  %402 = vmatpush1.bf16.msra.mxu0 %v151
  %403 = vmatprep.subr.bf16.mxu0 0
  %404 = vmatpush1.bf16.msra.mxu0 %v154
  %405 = vmatprep.subr.bf16.mxu0 0
  %406 = vmatpush1.bf16.msra.mxu0 %v157
  %407 = vmatprep.subr.bf16.mxu0 0
  %408 = vmatpush1.bf16.msra.mxu0 %v160
  %409 = vmatprep.subr.bf16.mxu0 0
  %410 = vmatpush1.bf16.msra.mxu0 %v163
  %411 = vmatprep.subr.bf16.mxu0 0
  %412 = vmatpush1.bf16.msra.mxu0 0
  %413 = vmatprep.subr.bf16.mxu0 0
  %414 = vmatpush1.bf16.msra.mxu0 0
  %415 = vmatprep.subr.bf16.mxu0 0
  %416 = vmatpush1.bf16.msra.mxu0 0
  %417 = vmatprep.subr.bf16.mxu0 0
  %418 = vmatpush1.bf16.msra.mxu0 0
  %419 = vmatprep.subr.bf16.mxu0 0
  %420 = vmatpush1.bf16.msra.mxu0 0
  %421 = vmatprep.subr.bf16.mxu0 0
  %422 = vmatpush1.bf16.msra.mxu0 0
  %423 = vmatprep.subr.bf16.mxu0 0
  %424 = vmatpush1.bf16.msra.mxu0 0
  %425 = vmatprep.subr.bf16.mxu0 0
  %426 = vmatpush1.bf16.msra.mxu0 0
  %427 = vmatprep.mubr.bf16.mxu0 0
  %428 = vmatmul.mubr.bf16.gmra.mrb[0].mxu0 %v353
  %v429 = vpop.f32.mrb[0].mxu0
  %v430 = vadd.f32 0.0, %v429
  %v431 = vpop.f32.mrb[0].mxu0
  %v432 = vpop.f32.mrb[0].mxu0
  %v433 = vpop.f32.mrb[0].mxu0
  %434 = vdwg.mxu0
  %v435 = vmul.f32 %v389, 0.088388346
  %v436 = vmul.f32 %v269, %v225
  %vm437 = vcmask 1043456
  %v438 = vsel %vm437, %v436, 0.0
  %439 = vadd.xlane.f32.xlu0 %v438
  %v440 = vpop.xlane.xlu0 %439
  %v441 = vmul.f32 %v269, %v308
  %v442 = vsel %vm437, %v441, 0.0
  %443 = vadd.xlane.f32.xlu0 %v442
  %v444 = vpop.xlane.xlu0 %443
  %v445 = vmul.f32 %v269, %v391
  %v446 = vsel %vm437, %v445, 0.0
  %447 = vadd.xlane.f32.xlu0 %v446
  %v448 = vpop.xlane.xlu0 %447
  %v449 = vmax.f32 %v440, %v444
  %v450 = vmax.f32 %v449, %v448
  %v451 = vsub.f32 %v440, %v450
  %v452 = vmul.f32 %v451, 1.442695
  %v453 = vpow.pop %v452
  %v454 = vadd.f32 %v453, 0.0
  %v455 = vmul.f32 %v453, %v264
  %v456 = vadd.f32 %v455, 0.0
  %v457 = vsub.f32 %v444, %v450
  %v458 = vmul.f32 %v457, 1.442695
  %v459 = vpow.pop %v458
  %v460 = vadd.f32 %v454, %v459
  %v461 = vmul.f32 %v459, %v347
  %v462 = vadd.f32 %v456, %v461
  %v463 = vsub.f32 %v448, %v450
  %v464 = vmul.f32 %v463, 1.442695
  %v465 = vpow.pop %v464
  %v466 = vadd.f32 %v460, %v465
  %v467 = vmul.f32 %v465, %v430
  %v468 = vadd.f32 %v462, %v467
  %v469 = vrcp.pop %v466
  %v470 = vmul.f32 %v468, %v469
  %v471 = vld [vmem:[%s2] sm:$0xf]
  %v472 = vld [vmem:[%s2 + $0x4] sm:$0xf]
  %v473 = vld [vmem:[%s2 + $0x8] sm:$0xf]
  %v474 = vld [vmem:[%s2 + $0xc] sm:$0xf]
  %v475 = vld [vmem:[%s2 + $0x10] sm:$0xf]
  %v476 = vld [vmem:[%s2 + $0x14] sm:$0xf]
  %v477 = vld [vmem:[%s2 + $0x18] sm:$0xf]
  %v478 = vld [vmem:[%s2 + $0x1c] sm:$0xf]
  %v479 = vld [vmem:[%s2 + $0x20] sm:$0xf]
  %v480 = vld [vmem:[%s2 + $0x24] sm:$0xf]
  %v481 = vld [vmem:[%s2 + $0x28] sm:$0xf]
  %v482 = vld [vmem:[%s2 + $0x2c] sm:$0xf]
  %v483 = vld [vmem:[%s2 + $0x30] sm:$0xf]
  %v484 = vld [vmem:[%s2 + $0x34] sm:$0xf]
  %v485 = vld [vmem:[%s2 + $0x38] sm:$0xf]
  %v486 = vld [vmem:[%s2 + $0x3c] sm:$0xf]
  %v487 = vpack.c.bf16 %v470, %v470
  %v504 = vunpack.c.l.b16 %v471
  %v505 = vunpack.c.l.b16 %v472
  %v506 = vunpack.c.l.b16 %v473
  %v507 = vunpack.c.l.b16 %v474
  %v508 = vunpack.c.l.b16 %v475
  %v509 = vunpack.c.l.b16 %v476
  %v510 = vunpack.c.l.b16 %v477
  %v511 = vunpack.c.l.b16 %v478
  %v512 = vunpack.c.l.b16 %v479
  %v513 = vunpack.c.l.b16 %v480
  %v514 = vunpack.c.l.b16 %v481
  %v515 = vunpack.c.l.b16 %v482
  %v516 = vunpack.c.l.b16 %v483
  %v517 = vunpack.c.l.b16 %v484
  %v518 = vunpack.c.l.b16 %v485
  %v519 = vunpack.c.l.b16 %v486
  %v520 = vpack.c.b16 %v505, %v504
  %v521 = vpack.c.b16 %v507, %v506
  %v522 = vpack.c.b16 %v509, %v508
  %v523 = vpack.c.b16 %v511, %v510
  %v524 = vpack.c.b16 %v513, %v512
  %v525 = vpack.c.b16 %v515, %v514
  %v526 = vpack.c.b16 %v517, %v516
  %v527 = vpack.c.b16 %v519, %v518
  %536 = vmatprep.subr.bf16.mxu0 0
  %537 = vmatpush1.bf16.msra.mxu0 %v520
  %538 = vmatprep.subr.bf16.mxu0 0
  %539 = vmatpush1.bf16.msra.mxu0 %v521
  %540 = vmatprep.subr.bf16.mxu0 0
  %541 = vmatpush1.bf16.msra.mxu0 %v522
  %542 = vmatprep.subr.bf16.mxu0 0
  %543 = vmatpush1.bf16.msra.mxu0 %v523
  %544 = vmatprep.subr.bf16.mxu0 0
  %545 = vmatpush1.bf16.msra.mxu0 %v524
  %546 = vmatprep.subr.bf16.mxu0 0
  %547 = vmatpush1.bf16.msra.mxu0 %v525
  %548 = vmatprep.subr.bf16.mxu0 0
  %549 = vmatpush1.bf16.msra.mxu0 %v526
  %550 = vmatprep.subr.bf16.mxu0 0
  %551 = vmatpush1.bf16.msra.mxu0 %v527
  %552 = vmatprep.subr.bf16.mxu0 0
  %553 = vmatpush1.bf16.msra.mxu0 0
  %554 = vmatprep.subr.bf16.mxu0 0
  %555 = vmatpush1.bf16.msra.mxu0 0
  %556 = vmatprep.subr.bf16.mxu0 0
  %557 = vmatpush1.bf16.msra.mxu0 0
  %558 = vmatprep.subr.bf16.mxu0 0
  %559 = vmatpush1.bf16.msra.mxu0 0
  %560 = vmatprep.subr.bf16.mxu0 0
  %561 = vmatpush1.bf16.msra.mxu0 0
  %562 = vmatprep.subr.bf16.mxu0 0
  %563 = vmatpush1.bf16.msra.mxu0 0
  %564 = vmatprep.subr.bf16.mxu0 0
  %565 = vmatpush1.bf16.msra.mxu0 0
  %566 = vmatprep.subr.bf16.mxu0 0
  %567 = vmatpush1.bf16.msra.mxu0 0
  %568 = vmatprep.mubr.bf16.mxu0 0
  %569 = vmatmul.mubr.bf16.gmra.mrb[0].mxu0 %v487
  %v570 = vpop.f32.mrb[0].mxu0
  %v571 = vadd.f32 0.0, %v570
  %v572 = vpop.f32.mrb[0].mxu0
  %v573 = vpop.f32.mrb[0].mxu0
  %v574 = vpop.f32.mrb[0].mxu0
  %575 = vdwg.mxu0
  %v576 = vld [vmem:[%s3] sm:$0xf]
  %v577 = vld [vmem:[%s3 + $0x4] sm:$0xf]
  %v578 = vld [vmem:[%s3 + $0x8] sm:$0xf]
  %v579 = vld [vmem:[%s3 + $0xc] sm:$0xf]
  %v580 = vld [vmem:[%s3 + $0x10] sm:$0xf]
  %v581 = vld [vmem:[%s3 + $0x14] sm:$0xf]
  %v582 = vld [vmem:[%s3 + $0x18] sm:$0xf]
  %v583 = vld [vmem:[%s3 + $0x1c] sm:$0xf]
  %v584 = vld [vmem:[%s3 + $0x20] sm:$0xf]
  %v585 = vld [vmem:[%s3 + $0x24] sm:$0xf]
  %v586 = vld [vmem:[%s3 + $0x28] sm:$0xf]
  %v587 = vld [vmem:[%s3 + $0x2c] sm:$0xf]
  %v588 = vld [vmem:[%s3 + $0x30] sm:$0xf]
  %v589 = vld [vmem:[%s3 + $0x34] sm:$0xf]
  %v590 = vld [vmem:[%s3 + $0x38] sm:$0xf]
  %v591 = vld [vmem:[%s3 + $0x3c] sm:$0xf]
  %v592 = vld [vmem:[%s4] sm:$0xf]
  %v593 = vld [vmem:[%s4 + $0x4] sm:$0xf]
  %v594 = vld [vmem:[%s4 + $0x8] sm:$0xf]
  %v595 = vld [vmem:[%s4 + $0xc] sm:$0xf]
  %v596 = vld [vmem:[%s4 + $0x10] sm:$0xf]
  %v597 = vld [vmem:[%s4 + $0x14] sm:$0xf]
  %v598 = vld [vmem:[%s4 + $0x18] sm:$0xf]
  %v599 = vld [vmem:[%s4 + $0x1c] sm:$0xf]
  %v600 = vld [vmem:[%s4 + $0x20] sm:$0xf]
  %v601 = vld [vmem:[%s4 + $0x24] sm:$0xf]
  %v602 = vld [vmem:[%s4 + $0x28] sm:$0xf]
  %v603 = vld [vmem:[%s4 + $0x2c] sm:$0xf]
  %v604 = vld [vmem:[%s4 + $0x30] sm:$0xf]
  %v605 = vld [vmem:[%s4 + $0x34] sm:$0xf]
  %v606 = vld [vmem:[%s4 + $0x38] sm:$0xf]
  %v607 = vld [vmem:[%s4 + $0x3c] sm:$0xf]
  %v608 = vpack.c.bf16 %v571, %v571
  %v625 = vunpack.c.l.b16 %v592
  %v626 = vunpack.c.l.b16 %v593
  %v627 = vunpack.c.l.b16 %v594
  %v628 = vunpack.c.l.b16 %v595
  %v629 = vunpack.c.l.b16 %v596
  %v630 = vunpack.c.l.b16 %v597
  %v631 = vunpack.c.l.b16 %v598
  %v632 = vunpack.c.l.b16 %v599
  %v633 = vunpack.c.l.b16 %v600
  %v634 = vunpack.c.l.b16 %v601
  %v635 = vunpack.c.l.b16 %v602
  %v636 = vunpack.c.l.b16 %v603
  %v637 = vunpack.c.l.b16 %v604
  %v638 = vunpack.c.l.b16 %v605
  %v639 = vunpack.c.l.b16 %v606
  %v640 = vunpack.c.l.b16 %v607
  %v641 = vpack.c.b16 %v626, %v625
  %v642 = vpack.c.b16 %v628, %v627
  %v643 = vpack.c.b16 %v630, %v629
  %v644 = vpack.c.b16 %v632, %v631
  %v645 = vpack.c.b16 %v634, %v633
  %v646 = vpack.c.b16 %v636, %v635
  %v647 = vpack.c.b16 %v638, %v637
  %v648 = vpack.c.b16 %v640, %v639
  %657 = vmatprep.subr.bf16.mxu0 0
  %658 = vmatpush1.bf16.msra.mxu0 %v641
  %659 = vmatprep.subr.bf16.mxu0 0
  %660 = vmatpush1.bf16.msra.mxu0 %v642
  %661 = vmatprep.subr.bf16.mxu0 0
  %662 = vmatpush1.bf16.msra.mxu0 %v643
  %663 = vmatprep.subr.bf16.mxu0 0
  %664 = vmatpush1.bf16.msra.mxu0 %v644
  %665 = vmatprep.subr.bf16.mxu0 0
  %666 = vmatpush1.bf16.msra.mxu0 %v645
  %667 = vmatprep.subr.bf16.mxu0 0
  %668 = vmatpush1.bf16.msra.mxu0 %v646
  %669 = vmatprep.subr.bf16.mxu0 0
  %670 = vmatpush1.bf16.msra.mxu0 %v647
  %671 = vmatprep.subr.bf16.mxu0 0
  %672 = vmatpush1.bf16.msra.mxu0 %v648
  %673 = vmatprep.subr.bf16.mxu0 0
  %674 = vmatpush1.bf16.msra.mxu0 0
  %675 = vmatprep.subr.bf16.mxu0 0
  %676 = vmatpush1.bf16.msra.mxu0 0
  %677 = vmatprep.subr.bf16.mxu0 0
  %678 = vmatpush1.bf16.msra.mxu0 0
  %679 = vmatprep.subr.bf16.mxu0 0
  %680 = vmatpush1.bf16.msra.mxu0 0
  %681 = vmatprep.subr.bf16.mxu0 0
  %682 = vmatpush1.bf16.msra.mxu0 0
  %683 = vmatprep.subr.bf16.mxu0 0
  %684 = vmatpush1.bf16.msra.mxu0 0
  %685 = vmatprep.subr.bf16.mxu0 0
  %686 = vmatpush1.bf16.msra.mxu0 0
  %687 = vmatprep.subr.bf16.mxu0 0
  %688 = vmatpush1.bf16.msra.mxu0 0
  %689 = vmatprep.mubr.bf16.mxu0 0
  %690 = vmatmul.mubr.bf16.gmra.mrb[0].mxu0 %v608
  %v691 = vpop.f32.mrb[0].mxu0
  %v692 = vadd.f32 0.0, %v691
  %v693 = vpop.f32.mrb[0].mxu0
  %v694 = vpop.f32.mrb[0].mxu0
  %v695 = vpop.f32.mrb[0].mxu0
  %696 = vdwg.mxu0
  %v713 = vunpack.c.l.b16 %v576
  %v714 = vunpack.c.l.b16 %v577
  %v715 = vunpack.c.l.b16 %v578
  %v716 = vunpack.c.l.b16 %v579
  %v717 = vunpack.c.l.b16 %v580
  %v718 = vunpack.c.l.b16 %v581
  %v719 = vunpack.c.l.b16 %v582
  %v720 = vunpack.c.l.b16 %v583
  %v721 = vunpack.c.l.b16 %v584
  %v722 = vunpack.c.l.b16 %v585
  %v723 = vunpack.c.l.b16 %v586
  %v724 = vunpack.c.l.b16 %v587
  %v725 = vunpack.c.l.b16 %v588
  %v726 = vunpack.c.l.b16 %v589
  %v727 = vunpack.c.l.b16 %v590
  %v728 = vunpack.c.l.b16 %v591
  %v729 = vpack.c.b16 %v714, %v713
  %v730 = vpack.c.b16 %v716, %v715
  %v731 = vpack.c.b16 %v718, %v717
  %v732 = vpack.c.b16 %v720, %v719
  %v733 = vpack.c.b16 %v722, %v721
  %v734 = vpack.c.b16 %v724, %v723
  %v735 = vpack.c.b16 %v726, %v725
  %v736 = vpack.c.b16 %v728, %v727
  %745 = vmatprep.subr.bf16.mxu0 0
  %746 = vmatpush1.bf16.msra.mxu0 %v729
  %747 = vmatprep.subr.bf16.mxu0 0
  %748 = vmatpush1.bf16.msra.mxu0 %v730
  %749 = vmatprep.subr.bf16.mxu0 0
  %750 = vmatpush1.bf16.msra.mxu0 %v731
  %751 = vmatprep.subr.bf16.mxu0 0
  %752 = vmatpush1.bf16.msra.mxu0 %v732
  %753 = vmatprep.subr.bf16.mxu0 0
  %754 = vmatpush1.bf16.msra.mxu0 %v733
  %755 = vmatprep.subr.bf16.mxu0 0
  %756 = vmatpush1.bf16.msra.mxu0 %v734
  %757 = vmatprep.subr.bf16.mxu0 0
  %758 = vmatpush1.bf16.msra.mxu0 %v735
  %759 = vmatprep.subr.bf16.mxu0 0
  %760 = vmatpush1.bf16.msra.mxu0 %v736
  %761 = vmatprep.subr.bf16.mxu0 0
  %762 = vmatpush1.bf16.msra.mxu0 0
  %763 = vmatprep.subr.bf16.mxu0 0
  %764 = vmatpush1.bf16.msra.mxu0 0
  %765 = vmatprep.subr.bf16.mxu0 0
  %766 = vmatpush1.bf16.msra.mxu0 0
  %767 = vmatprep.subr.bf16.mxu0 0
  %768 = vmatpush1.bf16.msra.mxu0 0
  %769 = vmatprep.subr.bf16.mxu0 0
  %770 = vmatpush1.bf16.msra.mxu0 0
  %771 = vmatprep.subr.bf16.mxu0 0
  %772 = vmatpush1.bf16.msra.mxu0 0
  %773 = vmatprep.subr.bf16.mxu0 0
  %774 = vmatpush1.bf16.msra.mxu0 0
  %775 = vmatprep.subr.bf16.mxu0 0
  %776 = vmatpush1.bf16.msra.mxu0 0
  %777 = vmatprep.mubr.bf16.mxu0 0
  %778 = vmatmul.mubr.bf16.gmra.mrb[0].mxu0 %v59
  %v779 = vpop.f32.mrb[0].mxu0
  %v780 = vadd.f32 %v692, %v779
  %v781 = vpop.f32.mrb[0].mxu0
  %v782 = vpop.f32.mrb[0].mxu0
  %v783 = vpop.f32.mrb[0].mxu0
  %784 = vdwg.mxu0
  %v785 = vld [vmem:[%s5] sm:$0x1]
  %v787 = vlaneseq
  %v788 = vshrl.u32 %v787, 7
  %v789 = vsub.s32 0, %v788
  %v790 = vrot.slane %v785, %v789
  %v792 = vadd.f32 %v780, %v790
  %v793 = vmax.f32 %v792, 0.0
  %v794 = vmul.f32 %v352, %v225
  %v795 = vsel %vm437, %v794, 0.0
  %796 = vadd.xlane.f32.xlu0 %v795
  %v797 = vpop.xlane.xlu0 %796
  %v798 = vmul.f32 %v352, %v308
  %v799 = vsel %vm437, %v798, 0.0
  %800 = vadd.xlane.f32.xlu0 %v799
  %v801 = vpop.xlane.xlu0 %800
  %v802 = vmul.f32 %v352, %v391
  %v803 = vsel %vm437, %v802, 0.0
  %804 = vadd.xlane.f32.xlu0 %v803
  %v805 = vpop.xlane.xlu0 %804
  %v806 = vmax.f32 %v797, %v801
  %v807 = vmax.f32 %v806, %v805
  %v808 = vsub.f32 %v797, %v807
  %v809 = vmul.f32 %v808, 1.442695
  %v810 = vpow.pop %v809
  %v811 = vadd.f32 %v810, 0.0
  %v812 = vmul.f32 %v810, %v264
  %v813 = vadd.f32 %v812, 0.0
  %v814 = vsub.f32 %v801, %v807
  %v815 = vmul.f32 %v814, 1.442695
  %v816 = vpow.pop %v815
  %v817 = vadd.f32 %v811, %v816
  %v818 = vmul.f32 %v816, %v347
  %v819 = vadd.f32 %v813, %v818
  %v820 = vsub.f32 %v805, %v807
  %v821 = vmul.f32 %v820, 1.442695
  %v822 = vpow.pop %v821
  %v823 = vadd.f32 %v817, %v822
  %v824 = vmul.f32 %v822, %v430
  %v825 = vadd.f32 %v819, %v824
  %v826 = vrcp.pop %v823
  %v827 = vmul.f32 %v825, %v826
  %v828 = vpack.c.bf16 %v827, %v827
  %829 = vmatprep.subr.bf16.mxu0 0
  %830 = vmatpush1.bf16.msra.mxu0 %v520
  %831 = vmatprep.subr.bf16.mxu0 0
  %832 = vmatpush1.bf16.msra.mxu0 %v521
  %833 = vmatprep.subr.bf16.mxu0 0
  %834 = vmatpush1.bf16.msra.mxu0 %v522
  %835 = vmatprep.subr.bf16.mxu0 0
  %836 = vmatpush1.bf16.msra.mxu0 %v523
  %837 = vmatprep.subr.bf16.mxu0 0
  %838 = vmatpush1.bf16.msra.mxu0 %v524
  %839 = vmatprep.subr.bf16.mxu0 0
  %840 = vmatpush1.bf16.msra.mxu0 %v525
  %841 = vmatprep.subr.bf16.mxu0 0
  %842 = vmatpush1.bf16.msra.mxu0 %v526
  %843 = vmatprep.subr.bf16.mxu0 0
  %844 = vmatpush1.bf16.msra.mxu0 %v527
  %845 = vmatprep.subr.bf16.mxu0 0
  %846 = vmatpush1.bf16.msra.mxu0 0
  %847 = vmatprep.subr.bf16.mxu0 0
  %848 = vmatpush1.bf16.msra.mxu0 0
  %849 = vmatprep.subr.bf16.mxu0 0
  %850 = vmatpush1.bf16.msra.mxu0 0
  %851 = vmatprep.subr.bf16.mxu0 0
  %852 = vmatpush1.bf16.msra.mxu0 0
  %853 = vmatprep.subr.bf16.mxu0 0
  %854 = vmatpush1.bf16.msra.mxu0 0
  %855 = vmatprep.subr.bf16.mxu0 0
  %856 = vmatpush1.bf16.msra.mxu0 0
  %857 = vmatprep.subr.bf16.mxu0 0
  %858 = vmatpush1.bf16.msra.mxu0 0
  %859 = vmatprep.subr.bf16.mxu0 0
  %860 = vmatpush1.bf16.msra.mxu0 0
  %861 = vmatprep.mubr.bf16.mxu0 0
  %862 = vmatmul.mubr.bf16.gmra.mrb[0].mxu0 %v828
  %v863 = vpop.f32.mrb[0].mxu0
  %v864 = vadd.f32 0.0, %v863
  %v865 = vpop.f32.mrb[0].mxu0
  %v866 = vpop.f32.mrb[0].mxu0
  %v867 = vpop.f32.mrb[0].mxu0
  %868 = vdwg.mxu0
  %v869 = vpack.c.bf16 %v864, %v864
  %870 = vmatprep.subr.bf16.mxu0 0
  %871 = vmatpush1.bf16.msra.mxu0 %v641
  %872 = vmatprep.subr.bf16.mxu0 0
  %873 = vmatpush1.bf16.msra.mxu0 %v642
  %874 = vmatprep.subr.bf16.mxu0 0
  %875 = vmatpush1.bf16.msra.mxu0 %v643
  %876 = vmatprep.subr.bf16.mxu0 0
  %877 = vmatpush1.bf16.msra.mxu0 %v644
  %878 = vmatprep.subr.bf16.mxu0 0
  %879 = vmatpush1.bf16.msra.mxu0 %v645
  %880 = vmatprep.subr.bf16.mxu0 0
  %881 = vmatpush1.bf16.msra.mxu0 %v646
  %882 = vmatprep.subr.bf16.mxu0 0
  %883 = vmatpush1.bf16.msra.mxu0 %v647
  %884 = vmatprep.subr.bf16.mxu0 0
  %885 = vmatpush1.bf16.msra.mxu0 %v648
  %886 = vmatprep.subr.bf16.mxu0 0
  %887 = vmatpush1.bf16.msra.mxu0 0
  %888 = vmatprep.subr.bf16.mxu0 0
  %889 = vmatpush1.bf16.msra.mxu0 0
  %890 = vmatprep.subr.bf16.mxu0 0
  %891 = vmatpush1.bf16.msra.mxu0 0
  %892 = vmatprep.subr.bf16.mxu0 0
  %893 = vmatpush1.bf16.msra.mxu0 0
  %894 = vmatprep.subr.bf16.mxu0 0
  %895 = vmatpush1.bf16.msra.mxu0 0
  %896 = vmatprep.subr.bf16.mxu0 0
  %897 = vmatpush1.bf16.msra.mxu0 0
  %898 = vmatprep.subr.bf16.mxu0 0
  %899 = vmatpush1.bf16.msra.mxu0 0
  %900 = vmatprep.subr.bf16.mxu0 0
  %901 = vmatpush1.bf16.msra.mxu0 0
  %902 = vmatprep.mubr.bf16.mxu0 0
  %903 = vmatmul.mubr.bf16.gmra.mrb[0].mxu0 %v869
  %v904 = vpop.f32.mrb[0].mxu0
  %v905 = vadd.f32 0.0, %v904
  %v906 = vpop.f32.mrb[0].mxu0
  %v907 = vpop.f32.mrb[0].mxu0
  %v908 = vpop.f32.mrb[0].mxu0
  %909 = vdwg.mxu0
  %910 = vmatprep.subr.bf16.mxu0 0
  %911 = vmatpush1.bf16.msra.mxu0 %v729
  %912 = vmatprep.subr.bf16.mxu0 0
  %913 = vmatpush1.bf16.msra.mxu0 %v730
  %914 = vmatprep.subr.bf16.mxu0 0
  %915 = vmatpush1.bf16.msra.mxu0 %v731
  %916 = vmatprep.subr.bf16.mxu0 0
  %917 = vmatpush1.bf16.msra.mxu0 %v732
  %918 = vmatprep.subr.bf16.mxu0 0
  %919 = vmatpush1.bf16.msra.mxu0 %v733
  %920 = vmatprep.subr.bf16.mxu0 0
  %921 = vmatpush1.bf16.msra.mxu0 %v734
  %922 = vmatprep.subr.bf16.mxu0 0
  %923 = vmatpush1.bf16.msra.mxu0 %v735
  %924 = vmatprep.subr.bf16.mxu0 0
  %925 = vmatpush1.bf16.msra.mxu0 %v736
  %926 = vmatprep.subr.bf16.mxu0 0
  %927 = vmatpush1.bf16.msra.mxu0 0
  %928 = vmatprep.subr.bf16.mxu0 0
  %929 = vmatpush1.bf16.msra.mxu0 0
  %930 = vmatprep.subr.bf16.mxu0 0
  %931 = vmatpush1.bf16.msra.mxu0 0
  %932 = vmatprep.subr.bf16.mxu0 0
  %933 = vmatpush1.bf16.msra.mxu0 0
  %934 = vmatprep.subr.bf16.mxu0 0
  %935 = vmatpush1.bf16.msra.mxu0 0
  %936 = vmatprep.subr.bf16.mxu0 0
  %937 = vmatpush1.bf16.msra.mxu0 0
  %938 = vmatprep.subr.bf16.mxu0 0
  %939 = vmatpush1.bf16.msra.mxu0 0
  %940 = vmatprep.subr.bf16.mxu0 0
  %941 = vmatpush1.bf16.msra.mxu0 0
  %942 = vmatprep.mubr.bf16.mxu0 0
  %943 = vmatmul.mubr.bf16.gmra.mrb[0].mxu0 %v270
  %v944 = vpop.f32.mrb[0].mxu0
  %v945 = vadd.f32 %v905, %v944
  %v946 = vpop.f32.mrb[0].mxu0
  %v947 = vpop.f32.mrb[0].mxu0
  %v948 = vpop.f32.mrb[0].mxu0
  %949 = vdwg.mxu0
  %v950 = vadd.f32 %v945, %v790
  %v951 = vmax.f32 %v950, 0.0
  %v952 = vmul.f32 %v435, %v225
  %v953 = vsel %vm437, %v952, 0.0
  %954 = vadd.xlane.f32.xlu0 %v953
  %v955 = vpop.xlane.xlu0 %954
  %v956 = vmul.f32 %v435, %v308
  %v957 = vsel %vm437, %v956, 0.0
  %958 = vadd.xlane.f32.xlu0 %v957
  %v959 = vpop.xlane.xlu0 %958
  %v960 = vmul.f32 %v435, %v391
  %v961 = vsel %vm437, %v960, 0.0
  %962 = vadd.xlane.f32.xlu0 %v961
  %v963 = vpop.xlane.xlu0 %962
  %v964 = vmax.f32 %v955, %v959
  %v965 = vmax.f32 %v964, %v963
  %v966 = vsub.f32 %v955, %v965
  %v967 = vmul.f32 %v966, 1.442695
  %v968 = vpow.pop %v967
  %v969 = vadd.f32 %v968, 0.0
  %v970 = vmul.f32 %v968, %v264
  %v971 = vadd.f32 %v970, 0.0
  %v972 = vsub.f32 %v959, %v965
  %v973 = vmul.f32 %v972, 1.442695
  %v974 = vpow.pop %v973
  %v975 = vadd.f32 %v969, %v974
  %v976 = vmul.f32 %v974, %v347
  %v977 = vadd.f32 %v971, %v976
  %v978 = vsub.f32 %v963, %v965
  %v979 = vmul.f32 %v978, 1.442695
  %v980 = vpow.pop %v979
  %v981 = vadd.f32 %v975, %v980
  %v982 = vmul.f32 %v980, %v430
  %v983 = vadd.f32 %v977, %v982
  %v984 = vrcp.pop %v981
  %v985 = vmul.f32 %v983, %v984
  %v986 = vpack.c.bf16 %v985, %v985
  %987 = vmatprep.subr.bf16.mxu0 0
  %988 = vmatpush1.bf16.msra.mxu0 %v520
  %989 = vmatprep.subr.bf16.mxu0 0
  %990 = vmatpush1.bf16.msra.mxu0 %v521
  %991 = vmatprep.subr.bf16.mxu0 0
  %992 = vmatpush1.bf16.msra.mxu0 %v522
  %993 = vmatprep.subr.bf16.mxu0 0
  %994 = vmatpush1.bf16.msra.mxu0 %v523
  %995 = vmatprep.subr.bf16.mxu0 0
  %996 = vmatpush1.bf16.msra.mxu0 %v524
  %997 = vmatprep.subr.bf16.mxu0 0
  %998 = vmatpush1.bf16.msra.mxu0 %v525
  %999 = vmatprep.subr.bf16.mxu0 0
  %1000 = vmatpush1.bf16.msra.mxu0 %v526
  %1001 = vmatprep.subr.bf16.mxu0 0
  %1002 = vmatpush1.bf16.msra.mxu0 %v527
  %1003 = vmatprep.subr.bf16.mxu0 0
  %1004 = vmatpush1.bf16.msra.mxu0 0
  %1005 = vmatprep.subr.bf16.mxu0 0
  %1006 = vmatpush1.bf16.msra.mxu0 0
  %1007 = vmatprep.subr.bf16.mxu0 0
  %1008 = vmatpush1.bf16.msra.mxu0 0
  %1009 = vmatprep.subr.bf16.mxu0 0
  %1010 = vmatpush1.bf16.msra.mxu0 0
  %1011 = vmatprep.subr.bf16.mxu0 0
  %1012 = vmatpush1.bf16.msra.mxu0 0
  %1013 = vmatprep.subr.bf16.mxu0 0
  %1014 = vmatpush1.bf16.msra.mxu0 0
  %1015 = vmatprep.subr.bf16.mxu0 0
  %1016 = vmatpush1.bf16.msra.mxu0 0
  %1017 = vmatprep.subr.bf16.mxu0 0
  %1018 = vmatpush1.bf16.msra.mxu0 0
  %1019 = vmatprep.mubr.bf16.mxu0 0
  %1020 = vmatmul.mubr.bf16.gmra.mrb[0].mxu0 %v986
  %v1021 = vpop.f32.mrb[0].mxu0
  %v1022 = vadd.f32 0.0, %v1021
  %v1023 = vpop.f32.mrb[0].mxu0
  %v1024 = vpop.f32.mrb[0].mxu0
  %v1025 = vpop.f32.mrb[0].mxu0
  %1026 = vdwg.mxu0
  %v1027 = vpack.c.bf16 %v1022, %v1022
  %1028 = vmatprep.subr.bf16.mxu0 0
  %1029 = vmatpush1.bf16.msra.mxu0 %v641
  %1030 = vmatprep.subr.bf16.mxu0 0
  %1031 = vmatpush1.bf16.msra.mxu0 %v642
  %1032 = vmatprep.subr.bf16.mxu0 0
  %1033 = vmatpush1.bf16.msra.mxu0 %v643
  %1034 = vmatprep.subr.bf16.mxu0 0
  %1035 = vmatpush1.bf16.msra.mxu0 %v644
  %1036 = vmatprep.subr.bf16.mxu0 0
  %1037 = vmatpush1.bf16.msra.mxu0 %v645
  %1038 = vmatprep.subr.bf16.mxu0 0
  %1039 = vmatpush1.bf16.msra.mxu0 %v646
  %1040 = vmatprep.subr.bf16.mxu0 0
  %1041 = vmatpush1.bf16.msra.mxu0 %v647
  %1042 = vmatprep.subr.bf16.mxu0 0
  %1043 = vmatpush1.bf16.msra.mxu0 %v648
  %1044 = vmatprep.subr.bf16.mxu0 0
  %1045 = vmatpush1.bf16.msra.mxu0 0
  %1046 = vmatprep.subr.bf16.mxu0 0
  %1047 = vmatpush1.bf16.msra.mxu0 0
  %1048 = vmatprep.subr.bf16.mxu0 0
  %1049 = vmatpush1.bf16.msra.mxu0 0
  %1050 = vmatprep.subr.bf16.mxu0 0
  %1051 = vmatpush1.bf16.msra.mxu0 0
  %1052 = vmatprep.subr.bf16.mxu0 0
  %1053 = vmatpush1.bf16.msra.mxu0 0
  %1054 = vmatprep.subr.bf16.mxu0 0
  %1055 = vmatpush1.bf16.msra.mxu0 0
  %1056 = vmatprep.subr.bf16.mxu0 0
  %1057 = vmatpush1.bf16.msra.mxu0 0
  %1058 = vmatprep.subr.bf16.mxu0 0
  %1059 = vmatpush1.bf16.msra.mxu0 0
  %1060 = vmatprep.mubr.bf16.mxu0 0
  %1061 = vmatmul.mubr.bf16.gmra.mrb[0].mxu0 %v1027
  %v1062 = vpop.f32.mrb[0].mxu0
  %v1063 = vadd.f32 0.0, %v1062
  %v1064 = vpop.f32.mrb[0].mxu0
  %v1065 = vpop.f32.mrb[0].mxu0
  %v1066 = vpop.f32.mrb[0].mxu0
  %1067 = vdwg.mxu0
  %1068 = vmatprep.subr.bf16.mxu0 0
  %1069 = vmatpush1.bf16.msra.mxu0 %v729
  %1070 = vmatprep.subr.bf16.mxu0 0
  %1071 = vmatpush1.bf16.msra.mxu0 %v730
  %1072 = vmatprep.subr.bf16.mxu0 0
  %1073 = vmatpush1.bf16.msra.mxu0 %v731
  %1074 = vmatprep.subr.bf16.mxu0 0
  %1075 = vmatpush1.bf16.msra.mxu0 %v732
  %1076 = vmatprep.subr.bf16.mxu0 0
  %1077 = vmatpush1.bf16.msra.mxu0 %v733
  %1078 = vmatprep.subr.bf16.mxu0 0
  %1079 = vmatpush1.bf16.msra.mxu0 %v734
  %1080 = vmatprep.subr.bf16.mxu0 0
  %1081 = vmatpush1.bf16.msra.mxu0 %v735
  %1082 = vmatprep.subr.bf16.mxu0 0
  %1083 = vmatpush1.bf16.msra.mxu0 %v736
  %1084 = vmatprep.subr.bf16.mxu0 0
  %1085 = vmatpush1.bf16.msra.mxu0 0
  %1086 = vmatprep.subr.bf16.mxu0 0
  %1087 = vmatpush1.bf16.msra.mxu0 0
  %1088 = vmatprep.subr.bf16.mxu0 0
  %1089 = vmatpush1.bf16.msra.mxu0 0
  %1090 = vmatprep.subr.bf16.mxu0 0
  %1091 = vmatpush1.bf16.msra.mxu0 0
  %1092 = vmatprep.subr.bf16.mxu0 0
  %1093 = vmatpush1.bf16.msra.mxu0 0
  %1094 = vmatprep.subr.bf16.mxu0 0
  %1095 = vmatpush1.bf16.msra.mxu0 0
  %1096 = vmatprep.subr.bf16.mxu0 0
  %1097 = vmatpush1.bf16.msra.mxu0 0
  %1098 = vmatprep.subr.bf16.mxu0 0
  %1099 = vmatpush1.bf16.msra.mxu0 0
  %1100 = vmatprep.mubr.bf16.mxu0 0
  %1101 = vmatmul.mubr.bf16.gmra.mrb[0].mxu0 %v353
  %v1102 = vpop.f32.mrb[0].mxu0
  %v1103 = vadd.f32 %v1063, %v1102
  %v1104 = vpop.f32.mrb[0].mxu0
  %v1105 = vpop.f32.mrb[0].mxu0
  %v1106 = vpop.f32.mrb[0].mxu0
  %1107 = vdwg.mxu0
  %v1108 = vadd.f32 %v1103, %v790
  %v1109 = vmax.f32 %v1108, 0.0
  %v1110 = vpack.c.bf16 %v793, %v793
  %1111 = vmatprep.subr.bf16.mxu0 %v141
  %1112 = vmatpush1.bf16.msra.mxu0 %v140
  %1113 = vmatprep.subr.bf16.mxu0 %v144
  %1114 = vmatpush1.bf16.msra.mxu0 %v143
  %1115 = vmatprep.subr.bf16.mxu0 %v147
  %1116 = vmatpush1.bf16.msra.mxu0 %v146
  %1117 = vmatprep.subr.bf16.mxu0 %v150
  %1118 = vmatpush1.bf16.msra.mxu0 %v149
  %1119 = vmatprep.subr.bf16.mxu0 %v153
  %1120 = vmatpush1.bf16.msra.mxu0 %v152
  %1121 = vmatprep.subr.bf16.mxu0 %v156
  %1122 = vmatpush1.bf16.msra.mxu0 %v155
  %1123 = vmatprep.subr.bf16.mxu0 %v159
  %1124 = vmatpush1.bf16.msra.mxu0 %v158
  %1125 = vmatprep.subr.bf16.mxu0 %v162
  %1126 = vmatpush1.bf16.msra.mxu0 %v161
  %1127 = vmatprep.subr.bf16.mxu0 0
  %1128 = vmatpush1.bf16.msra.mxu0 0
  %1129 = vmatprep.subr.bf16.mxu0 0
  %1130 = vmatpush1.bf16.msra.mxu0 0
  %1131 = vmatprep.subr.bf16.mxu0 0
  %1132 = vmatpush1.bf16.msra.mxu0 0
  %1133 = vmatprep.subr.bf16.mxu0 0
  %1134 = vmatpush1.bf16.msra.mxu0 0
  %1135 = vmatprep.subr.bf16.mxu0 0
  %1136 = vmatpush1.bf16.msra.mxu0 0
  %1137 = vmatprep.subr.bf16.mxu0 0
  %1138 = vmatpush1.bf16.msra.mxu0 0
  %1139 = vmatprep.subr.bf16.mxu0 0
  %1140 = vmatpush1.bf16.msra.mxu0 0
  %1141 = vmatprep.subr.bf16.mxu0 0
  %1142 = vmatpush1.bf16.msra.mxu0 0
  %1143 = vmatprep.mubr.bf16.mxu0 0
  %1144 = vmatmul.mubr.bf16.gmra.mrb[0].mxu0 %v1110
  %v1145 = vpop.f32.mrb[0].mxu0
  %v1146 = vadd.f32 0.0, %v1145
  %v1147 = vpop.f32.mrb[0].mxu0
  %v1148 = vadd.f32 0.0, %v1147
  %v1149 = vpop.f32.mrb[0].mxu0
  %v1150 = vpop.f32.mrb[0].mxu0
  %1151 = vdwg.mxu0
  %1152 = vmatprep.subr.bf16.mxu0 0
  %1153 = vmatpush1.bf16.msra.mxu0 %v142
  %1154 = vmatprep.subr.bf16.mxu0 0
  %1155 = vmatpush1.bf16.msra.mxu0 %v145
  %1156 = vmatprep.subr.bf16.mxu0 0
  %1157 = vmatpush1.bf16.msra.mxu0 %v148
  %1158 = vmatprep.subr.bf16.mxu0 0
  %1159 = vmatpush1.bf16.msra.mxu0 %v151
  %1160 = vmatprep.subr.bf16.mxu0 0
  %1161 = vmatpush1.bf16.msra.mxu0 %v154
  %1162 = vmatprep.subr.bf16.mxu0 0
  %1163 = vmatpush1.bf16.msra.mxu0 %v157
  %1164 = vmatprep.subr.bf16.mxu0 0
  %1165 = vmatpush1.bf16.msra.mxu0 %v160
  %1166 = vmatprep.subr.bf16.mxu0 0
  %1167 = vmatpush1.bf16.msra.mxu0 %v163
  %1168 = vmatprep.subr.bf16.mxu0 0
  %1169 = vmatpush1.bf16.msra.mxu0 0
  %1170 = vmatprep.subr.bf16.mxu0 0
  %1171 = vmatpush1.bf16.msra.mxu0 0
  %1172 = vmatprep.subr.bf16.mxu0 0
  %1173 = vmatpush1.bf16.msra.mxu0 0
  %1174 = vmatprep.subr.bf16.mxu0 0
  %1175 = vmatpush1.bf16.msra.mxu0 0
  %1176 = vmatprep.subr.bf16.mxu0 0
  %1177 = vmatpush1.bf16.msra.mxu0 0
  %1178 = vmatprep.subr.bf16.mxu0 0
  %1179 = vmatpush1.bf16.msra.mxu0 0
  %1180 = vmatprep.subr.bf16.mxu0 0
  %1181 = vmatpush1.bf16.msra.mxu0 0
  %1182 = vmatprep.subr.bf16.mxu0 0
  %1183 = vmatpush1.bf16.msra.mxu0 0
  %1184 = vmatprep.mubr.bf16.mxu0 0
  %1185 = vmatmul.mubr.bf16.gmra.mrb[0].mxu0 %v1110
  %v1186 = vpop.f32.mrb[0].mxu0
  %v1187 = vadd.f32 0.0, %v1186
  %v1188 = vpop.f32.mrb[0].mxu0
  %v1189 = vpop.f32.mrb[0].mxu0
  %v1190 = vpop.f32.mrb[0].mxu0
  %1191 = vdwg.mxu0
  %v1192 = vmul.f32 %v1146, 0.088388346
  %v1193 = vpack.c.bf16 %v951, %v951
  %1194 = vmatprep.subr.bf16.mxu0 %v141
  %1195 = vmatpush1.bf16.msra.mxu0 %v140
  %1196 = vmatprep.subr.bf16.mxu0 %v144
  %1197 = vmatpush1.bf16.msra.mxu0 %v143
  %1198 = vmatprep.subr.bf16.mxu0 %v147
  %1199 = vmatpush1.bf16.msra.mxu0 %v146
  %1200 = vmatprep.subr.bf16.mxu0 %v150
  %1201 = vmatpush1.bf16.msra.mxu0 %v149
  %1202 = vmatprep.subr.bf16.mxu0 %v153
  %1203 = vmatpush1.bf16.msra.mxu0 %v152
  %1204 = vmatprep.subr.bf16.mxu0 %v156
  %1205 = vmatpush1.bf16.msra.mxu0 %v155
  %1206 = vmatprep.subr.bf16.mxu0 %v159
  %1207 = vmatpush1.bf16.msra.mxu0 %v158
  %1208 = vmatprep.subr.bf16.mxu0 %v162
  %1209 = vmatpush1.bf16.msra.mxu0 %v161
  %1210 = vmatprep.subr.bf16.mxu0 0
  %1211 = vmatpush1.bf16.msra.mxu0 0
  %1212 = vmatprep.subr.bf16.mxu0 0
  %1213 = vmatpush1.bf16.msra.mxu0 0
  %1214 = vmatprep.subr.bf16.mxu0 0
  %1215 = vmatpush1.bf16.msra.mxu0 0
  %1216 = vmatprep.subr.bf16.mxu0 0
  %1217 = vmatpush1.bf16.msra.mxu0 0
  %1218 = vmatprep.subr.bf16.mxu0 0
  %1219 = vmatpush1.bf16.msra.mxu0 0
  %1220 = vmatprep.subr.bf16.mxu0 0
  %1221 = vmatpush1.bf16.msra.mxu0 0
  %1222 = vmatprep.subr.bf16.mxu0 0
  %1223 = vmatpush1.bf16.msra.mxu0 0
  %1224 = vmatprep.subr.bf16.mxu0 0
  %1225 = vmatpush1.bf16.msra.mxu0 0
  %1226 = vmatprep.mubr.bf16.mxu0 0
  %1227 = vmatmul.mubr.bf16.gmra.mrb[0].mxu0 %v1193
  %v1228 = vpop.f32.mrb[0].mxu0
  %v1229 = vadd.f32 0.0, %v1228
  %v1230 = vpop.f32.mrb[0].mxu0
  %v1231 = vadd.f32 0.0, %v1230
  %v1232 = vpop.f32.mrb[0].mxu0
  %v1233 = vpop.f32.mrb[0].mxu0
  %1234 = vdwg.mxu0
  %1235 = vmatprep.subr.bf16.mxu0 0
  %1236 = vmatpush1.bf16.msra.mxu0 %v142
  %1237 = vmatprep.subr.bf16.mxu0 0
  %1238 = vmatpush1.bf16.msra.mxu0 %v145
  %1239 = vmatprep.subr.bf16.mxu0 0
  %1240 = vmatpush1.bf16.msra.mxu0 %v148
  %1241 = vmatprep.subr.bf16.mxu0 0
  %1242 = vmatpush1.bf16.msra.mxu0 %v151
  %1243 = vmatprep.subr.bf16.mxu0 0
  %1244 = vmatpush1.bf16.msra.mxu0 %v154
  %1245 = vmatprep.subr.bf16.mxu0 0
  %1246 = vmatpush1.bf16.msra.mxu0 %v157
  %1247 = vmatprep.subr.bf16.mxu0 0
  %1248 = vmatpush1.bf16.msra.mxu0 %v160
  %1249 = vmatprep.subr.bf16.mxu0 0
  %1250 = vmatpush1.bf16.msra.mxu0 %v163
  %1251 = vmatprep.subr.bf16.mxu0 0
  %1252 = vmatpush1.bf16.msra.mxu0 0
  %1253 = vmatprep.subr.bf16.mxu0 0
  %1254 = vmatpush1.bf16.msra.mxu0 0
  %1255 = vmatprep.subr.bf16.mxu0 0
  %1256 = vmatpush1.bf16.msra.mxu0 0
  %1257 = vmatprep.subr.bf16.mxu0 0
  %1258 = vmatpush1.bf16.msra.mxu0 0
  %1259 = vmatprep.subr.bf16.mxu0 0
  %1260 = vmatpush1.bf16.msra.mxu0 0
  %1261 = vmatprep.subr.bf16.mxu0 0
  %1262 = vmatpush1.bf16.msra.mxu0 0
  %1263 = vmatprep.subr.bf16.mxu0 0
  %1264 = vmatpush1.bf16.msra.mxu0 0
  %1265 = vmatprep.subr.bf16.mxu0 0
  %1266 = vmatpush1.bf16.msra.mxu0 0
  %1267 = vmatprep.mubr.bf16.mxu0 0
  %1268 = vmatmul.mubr.bf16.gmra.mrb[0].mxu0 %v1193
  %v1269 = vpop.f32.mrb[0].mxu0
  %v1270 = vadd.f32 0.0, %v1269
  %v1271 = vpop.f32.mrb[0].mxu0
  %v1272 = vpop.f32.mrb[0].mxu0
  %v1273 = vpop.f32.mrb[0].mxu0
  %1274 = vdwg.mxu0
  %v1275 = vmul.f32 %v1229, 0.088388346
  %v1276 = vpack.c.bf16 %v1109, %v1109
  %1277 = vmatprep.subr.bf16.mxu0 %v141
  %1278 = vmatpush1.bf16.msra.mxu0 %v140
  %1279 = vmatprep.subr.bf16.mxu0 %v144
  %1280 = vmatpush1.bf16.msra.mxu0 %v143
  %1281 = vmatprep.subr.bf16.mxu0 %v147
  %1282 = vmatpush1.bf16.msra.mxu0 %v146
  %1283 = vmatprep.subr.bf16.mxu0 %v150
  %1284 = vmatpush1.bf16.msra.mxu0 %v149
  %1285 = vmatprep.subr.bf16.mxu0 %v153
  %1286 = vmatpush1.bf16.msra.mxu0 %v152
  %1287 = vmatprep.subr.bf16.mxu0 %v156
  %1288 = vmatpush1.bf16.msra.mxu0 %v155
  %1289 = vmatprep.subr.bf16.mxu0 %v159
  %1290 = vmatpush1.bf16.msra.mxu0 %v158
  %1291 = vmatprep.subr.bf16.mxu0 %v162
  %1292 = vmatpush1.bf16.msra.mxu0 %v161
  %1293 = vmatprep.subr.bf16.mxu0 0
  %1294 = vmatpush1.bf16.msra.mxu0 0
  %1295 = vmatprep.subr.bf16.mxu0 0
  %1296 = vmatpush1.bf16.msra.mxu0 0
  %1297 = vmatprep.subr.bf16.mxu0 0
  %1298 = vmatpush1.bf16.msra.mxu0 0
  %1299 = vmatprep.subr.bf16.mxu0 0
  %1300 = vmatpush1.bf16.msra.mxu0 0
  %1301 = vmatprep.subr.bf16.mxu0 0
  %1302 = vmatpush1.bf16.msra.mxu0 0
  %1303 = vmatprep.subr.bf16.mxu0 0
  %1304 = vmatpush1.bf16.msra.mxu0 0
  %1305 = vmatprep.subr.bf16.mxu0 0
  %1306 = vmatpush1.bf16.msra.mxu0 0
  %1307 = vmatprep.subr.bf16.mxu0 0
  %1308 = vmatpush1.bf16.msra.mxu0 0
  %1309 = vmatprep.mubr.bf16.mxu0 0
  %1310 = vmatmul.mubr.bf16.gmra.mrb[0].mxu0 %v1276
  %v1311 = vpop.f32.mrb[0].mxu0
  %v1312 = vadd.f32 0.0, %v1311
  %v1313 = vpop.f32.mrb[0].mxu0
  %v1314 = vadd.f32 0.0, %v1313
  %v1315 = vpop.f32.mrb[0].mxu0
  %v1316 = vpop.f32.mrb[0].mxu0
  %1317 = vdwg.mxu0
  %1318 = vmatprep.subr.bf16.mxu0 0
  %1319 = vmatpush1.bf16.msra.mxu0 %v142
  %1320 = vmatprep.subr.bf16.mxu0 0
  %1321 = vmatpush1.bf16.msra.mxu0 %v145
  %1322 = vmatprep.subr.bf16.mxu0 0
  %1323 = vmatpush1.bf16.msra.mxu0 %v148
  %1324 = vmatprep.subr.bf16.mxu0 0
  %1325 = vmatpush1.bf16.msra.mxu0 %v151
  %1326 = vmatprep.subr.bf16.mxu0 0
  %1327 = vmatpush1.bf16.msra.mxu0 %v154
  %1328 = vmatprep.subr.bf16.mxu0 0
  %1329 = vmatpush1.bf16.msra.mxu0 %v157
  %1330 = vmatprep.subr.bf16.mxu0 0
  %1331 = vmatpush1.bf16.msra.mxu0 %v160
  %1332 = vmatprep.subr.bf16.mxu0 0
  %1333 = vmatpush1.bf16.msra.mxu0 %v163
  %1334 = vmatprep.subr.bf16.mxu0 0
  %1335 = vmatpush1.bf16.msra.mxu0 0
  %1336 = vmatprep.subr.bf16.mxu0 0
  %1337 = vmatpush1.bf16.msra.mxu0 0
  %1338 = vmatprep.subr.bf16.mxu0 0
  %1339 = vmatpush1.bf16.msra.mxu0 0
  %1340 = vmatprep.subr.bf16.mxu0 0
  %1341 = vmatpush1.bf16.msra.mxu0 0
  %1342 = vmatprep.subr.bf16.mxu0 0
  %1343 = vmatpush1.bf16.msra.mxu0 0
  %1344 = vmatprep.subr.bf16.mxu0 0
  %1345 = vmatpush1.bf16.msra.mxu0 0
  %1346 = vmatprep.subr.bf16.mxu0 0
  %1347 = vmatpush1.bf16.msra.mxu0 0
  %1348 = vmatprep.subr.bf16.mxu0 0
  %1349 = vmatpush1.bf16.msra.mxu0 0
  %1350 = vmatprep.mubr.bf16.mxu0 0
  %1351 = vmatmul.mubr.bf16.gmra.mrb[0].mxu0 %v1276
  %v1352 = vpop.f32.mrb[0].mxu0
  %v1353 = vadd.f32 0.0, %v1352
  %v1354 = vpop.f32.mrb[0].mxu0
  %v1355 = vpop.f32.mrb[0].mxu0
  %v1356 = vpop.f32.mrb[0].mxu0
  %1357 = vdwg.mxu0
  %v1358 = vmul.f32 %v1312, 0.088388346
  %v1359 = vmul.f32 %v1192, %v1148
  %v1360 = vsel %vm437, %v1359, 0.0
  %1361 = vadd.xlane.f32.xlu0 %v1360
  %v1362 = vpop.xlane.xlu0 %1361
  %v1363 = vmul.f32 %v1192, %v1231
  %v1364 = vsel %vm437, %v1363, 0.0
  %1365 = vadd.xlane.f32.xlu0 %v1364
  %v1366 = vpop.xlane.xlu0 %1365
  %v1367 = vmul.f32 %v1192, %v1314
  %v1368 = vsel %vm437, %v1367, 0.0
  %1369 = vadd.xlane.f32.xlu0 %v1368
  %v1370 = vpop.xlane.xlu0 %1369
  %v1371 = vmax.f32 %v1362, %v1366
  %v1372 = vmax.f32 %v1371, %v1370
  %v1373 = vsub.f32 %v1362, %v1372
  %v1374 = vmul.f32 %v1373, 1.442695
  %v1375 = vpow.pop %v1374
  %v1376 = vadd.f32 %v1375, 0.0
  %v1377 = vmul.f32 %v1375, %v1187
  %v1378 = vadd.f32 %v1377, 0.0
  %v1379 = vsub.f32 %v1366, %v1372
  %v1380 = vmul.f32 %v1379, 1.442695
  %v1381 = vpow.pop %v1380
  %v1382 = vadd.f32 %v1376, %v1381
  %v1383 = vmul.f32 %v1381, %v1270
  %v1384 = vadd.f32 %v1378, %v1383
  %v1385 = vsub.f32 %v1370, %v1372
  %v1386 = vmul.f32 %v1385, 1.442695
  %v1387 = vpow.pop %v1386
  %v1388 = vadd.f32 %v1382, %v1387
  %v1389 = vmul.f32 %v1387, %v1353
  %v1390 = vadd.f32 %v1384, %v1389
  %v1391 = vrcp.pop %v1388
  %v1392 = vmul.f32 %v1390, %v1391
  %v1393 = vpack.c.bf16 %v1392, %v1392
  %1394 = vmatprep.subr.bf16.mxu0 0
  %1395 = vmatpush1.bf16.msra.mxu0 %v520
  %1396 = vmatprep.subr.bf16.mxu0 0
  %1397 = vmatpush1.bf16.msra.mxu0 %v521
  %1398 = vmatprep.subr.bf16.mxu0 0
  %1399 = vmatpush1.bf16.msra.mxu0 %v522
  %1400 = vmatprep.subr.bf16.mxu0 0
  %1401 = vmatpush1.bf16.msra.mxu0 %v523
  %1402 = vmatprep.subr.bf16.mxu0 0
  %1403 = vmatpush1.bf16.msra.mxu0 %v524
  %1404 = vmatprep.subr.bf16.mxu0 0
  %1405 = vmatpush1.bf16.msra.mxu0 %v525
  %1406 = vmatprep.subr.bf16.mxu0 0
  %1407 = vmatpush1.bf16.msra.mxu0 %v526
  %1408 = vmatprep.subr.bf16.mxu0 0
  %1409 = vmatpush1.bf16.msra.mxu0 %v527
  %1410 = vmatprep.subr.bf16.mxu0 0
  %1411 = vmatpush1.bf16.msra.mxu0 0
  %1412 = vmatprep.subr.bf16.mxu0 0
  %1413 = vmatpush1.bf16.msra.mxu0 0
  %1414 = vmatprep.subr.bf16.mxu0 0
  %1415 = vmatpush1.bf16.msra.mxu0 0
  %1416 = vmatprep.subr.bf16.mxu0 0
  %1417 = vmatpush1.bf16.msra.mxu0 0
  %1418 = vmatprep.subr.bf16.mxu0 0
  %1419 = vmatpush1.bf16.msra.mxu0 0
  %1420 = vmatprep.subr.bf16.mxu0 0
  %1421 = vmatpush1.bf16.msra.mxu0 0
  %1422 = vmatprep.subr.bf16.mxu0 0
  %1423 = vmatpush1.bf16.msra.mxu0 0
  %1424 = vmatprep.subr.bf16.mxu0 0
  %1425 = vmatpush1.bf16.msra.mxu0 0
  %1426 = vmatprep.mubr.bf16.mxu0 0
  %1427 = vmatmul.mubr.bf16.gmra.mrb[0].mxu0 %v1393
  %v1428 = vpop.f32.mrb[0].mxu0
  %v1429 = vadd.f32 0.0, %v1428
  %v1430 = vpop.f32.mrb[0].mxu0
  %v1431 = vpop.f32.mrb[0].mxu0
  %v1432 = vpop.f32.mrb[0].mxu0
  %1433 = vdwg.mxu0
  %v1434 = vpack.c.bf16 %v1429, %v1429
  %1435 = vmatprep.subr.bf16.mxu0 0
  %1436 = vmatpush1.bf16.msra.mxu0 %v641
  %1437 = vmatprep.subr.bf16.mxu0 0
  %1438 = vmatpush1.bf16.msra.mxu0 %v642
  %1439 = vmatprep.subr.bf16.mxu0 0
  %1440 = vmatpush1.bf16.msra.mxu0 %v643
  %1441 = vmatprep.subr.bf16.mxu0 0
  %1442 = vmatpush1.bf16.msra.mxu0 %v644
  %1443 = vmatprep.subr.bf16.mxu0 0
  %1444 = vmatpush1.bf16.msra.mxu0 %v645
  %1445 = vmatprep.subr.bf16.mxu0 0
  %1446 = vmatpush1.bf16.msra.mxu0 %v646
  %1447 = vmatprep.subr.bf16.mxu0 0
  %1448 = vmatpush1.bf16.msra.mxu0 %v647
  %1449 = vmatprep.subr.bf16.mxu0 0
  %1450 = vmatpush1.bf16.msra.mxu0 %v648
  %1451 = vmatprep.subr.bf16.mxu0 0
  %1452 = vmatpush1.bf16.msra.mxu0 0
  %1453 = vmatprep.subr.bf16.mxu0 0
  %1454 = vmatpush1.bf16.msra.mxu0 0
  %1455 = vmatprep.subr.bf16.mxu0 0
  %1456 = vmatpush1.bf16.msra.mxu0 0
  %1457 = vmatprep.subr.bf16.mxu0 0
  %1458 = vmatpush1.bf16.msra.mxu0 0
  %1459 = vmatprep.subr.bf16.mxu0 0
  %1460 = vmatpush1.bf16.msra.mxu0 0
  %1461 = vmatprep.subr.bf16.mxu0 0
  %1462 = vmatpush1.bf16.msra.mxu0 0
  %1463 = vmatprep.subr.bf16.mxu0 0
  %1464 = vmatpush1.bf16.msra.mxu0 0
  %1465 = vmatprep.subr.bf16.mxu0 0
  %1466 = vmatpush1.bf16.msra.mxu0 0
  %1467 = vmatprep.mubr.bf16.mxu0 0
  %1468 = vmatmul.mubr.bf16.gmra.mrb[0].mxu0 %v1434
  %v1469 = vpop.f32.mrb[0].mxu0
  %v1470 = vadd.f32 0.0, %v1469
  %v1471 = vpop.f32.mrb[0].mxu0
  %v1472 = vpop.f32.mrb[0].mxu0
  %v1473 = vpop.f32.mrb[0].mxu0
  %1474 = vdwg.mxu0
  %1475 = vmatprep.subr.bf16.mxu0 0
  %1476 = vmatpush1.bf16.msra.mxu0 %v729
  %1477 = vmatprep.subr.bf16.mxu0 0
  %1478 = vmatpush1.bf16.msra.mxu0 %v730
  %1479 = vmatprep.subr.bf16.mxu0 0
  %1480 = vmatpush1.bf16.msra.mxu0 %v731
  %1481 = vmatprep.subr.bf16.mxu0 0
  %1482 = vmatpush1.bf16.msra.mxu0 %v732
  %1483 = vmatprep.subr.bf16.mxu0 0
  %1484 = vmatpush1.bf16.msra.mxu0 %v733
  %1485 = vmatprep.subr.bf16.mxu0 0
  %1486 = vmatpush1.bf16.msra.mxu0 %v734
  %1487 = vmatprep.subr.bf16.mxu0 0
  %1488 = vmatpush1.bf16.msra.mxu0 %v735
  %1489 = vmatprep.subr.bf16.mxu0 0
  %1490 = vmatpush1.bf16.msra.mxu0 %v736
  %1491 = vmatprep.subr.bf16.mxu0 0
  %1492 = vmatpush1.bf16.msra.mxu0 0
  %1493 = vmatprep.subr.bf16.mxu0 0
  %1494 = vmatpush1.bf16.msra.mxu0 0
  %1495 = vmatprep.subr.bf16.mxu0 0
  %1496 = vmatpush1.bf16.msra.mxu0 0
  %1497 = vmatprep.subr.bf16.mxu0 0
  %1498 = vmatpush1.bf16.msra.mxu0 0
  %1499 = vmatprep.subr.bf16.mxu0 0
  %1500 = vmatpush1.bf16.msra.mxu0 0
  %1501 = vmatprep.subr.bf16.mxu0 0
  %1502 = vmatpush1.bf16.msra.mxu0 0
  %1503 = vmatprep.subr.bf16.mxu0 0
  %1504 = vmatpush1.bf16.msra.mxu0 0
  %1505 = vmatprep.subr.bf16.mxu0 0
  %1506 = vmatpush1.bf16.msra.mxu0 0
  %1507 = vmatprep.mubr.bf16.mxu0 0
  %1508 = vmatmul.mubr.bf16.gmra.mrb[0].mxu0 %v1110
  %v1509 = vpop.f32.mrb[0].mxu0
  %v1510 = vadd.f32 %v1470, %v1509
  %v1511 = vpop.f32.mrb[0].mxu0
  %v1512 = vpop.f32.mrb[0].mxu0
  %v1513 = vpop.f32.mrb[0].mxu0
  %1514 = vdwg.mxu0
  %v1515 = vadd.f32 %v1510, %v790
  %v1516 = vmax.f32 %v1515, 0.0
  %v1517 = vmul.f32 %v1275, %v1148
  %v1518 = vsel %vm437, %v1517, 0.0
  %1519 = vadd.xlane.f32.xlu0 %v1518
  %v1520 = vpop.xlane.xlu0 %1519
  %v1521 = vmul.f32 %v1275, %v1231
  %v1522 = vsel %vm437, %v1521, 0.0
  %1523 = vadd.xlane.f32.xlu0 %v1522
  %v1524 = vpop.xlane.xlu0 %1523
  %v1525 = vmul.f32 %v1275, %v1314
  %v1526 = vsel %vm437, %v1525, 0.0
  %1527 = vadd.xlane.f32.xlu0 %v1526
  %v1528 = vpop.xlane.xlu0 %1527
  %v1529 = vmax.f32 %v1520, %v1524
  %v1530 = vmax.f32 %v1529, %v1528
  %v1531 = vsub.f32 %v1520, %v1530
  %v1532 = vmul.f32 %v1531, 1.442695
  %v1533 = vpow.pop %v1532
  %v1534 = vadd.f32 %v1533, 0.0
  %v1535 = vmul.f32 %v1533, %v1187
  %v1536 = vadd.f32 %v1535, 0.0
  %v1537 = vsub.f32 %v1524, %v1530
  %v1538 = vmul.f32 %v1537, 1.442695
  %v1539 = vpow.pop %v1538
  %v1540 = vadd.f32 %v1534, %v1539
  %v1541 = vmul.f32 %v1539, %v1270
  %v1542 = vadd.f32 %v1536, %v1541
  %v1543 = vsub.f32 %v1528, %v1530
  %v1544 = vmul.f32 %v1543, 1.442695
  %v1545 = vpow.pop %v1544
  %v1546 = vadd.f32 %v1540, %v1545
  %v1547 = vmul.f32 %v1545, %v1353
  %v1548 = vadd.f32 %v1542, %v1547
  %v1549 = vrcp.pop %v1546
  %v1550 = vmul.f32 %v1548, %v1549
  %v1551 = vpack.c.bf16 %v1550, %v1550
  %1552 = vmatprep.subr.bf16.mxu0 0
  %1553 = vmatpush1.bf16.msra.mxu0 %v520
  %1554 = vmatprep.subr.bf16.mxu0 0
  %1555 = vmatpush1.bf16.msra.mxu0 %v521
  %1556 = vmatprep.subr.bf16.mxu0 0
  %1557 = vmatpush1.bf16.msra.mxu0 %v522
  %1558 = vmatprep.subr.bf16.mxu0 0
  %1559 = vmatpush1.bf16.msra.mxu0 %v523
  %1560 = vmatprep.subr.bf16.mxu0 0
  %1561 = vmatpush1.bf16.msra.mxu0 %v524
  %1562 = vmatprep.subr.bf16.mxu0 0
  %1563 = vmatpush1.bf16.msra.mxu0 %v525
  %1564 = vmatprep.subr.bf16.mxu0 0
  %1565 = vmatpush1.bf16.msra.mxu0 %v526
  %1566 = vmatprep.subr.bf16.mxu0 0
  %1567 = vmatpush1.bf16.msra.mxu0 %v527
  %1568 = vmatprep.subr.bf16.mxu0 0
  %1569 = vmatpush1.bf16.msra.mxu0 0
  %1570 = vmatprep.subr.bf16.mxu0 0
  %1571 = vmatpush1.bf16.msra.mxu0 0
  %1572 = vmatprep.subr.bf16.mxu0 0
  %1573 = vmatpush1.bf16.msra.mxu0 0
  %1574 = vmatprep.subr.bf16.mxu0 0
  %1575 = vmatpush1.bf16.msra.mxu0 0
  %1576 = vmatprep.subr.bf16.mxu0 0
  %1577 = vmatpush1.bf16.msra.mxu0 0
  %1578 = vmatprep.subr.bf16.mxu0 0
  %1579 = vmatpush1.bf16.msra.mxu0 0
  %1580 = vmatprep.subr.bf16.mxu0 0
  %1581 = vmatpush1.bf16.msra.mxu0 0
  %1582 = vmatprep.subr.bf16.mxu0 0
  %1583 = vmatpush1.bf16.msra.mxu0 0
  %1584 = vmatprep.mubr.bf16.mxu0 0
  %1585 = vmatmul.mubr.bf16.gmra.mrb[0].mxu0 %v1551
  %v1586 = vpop.f32.mrb[0].mxu0
  %v1587 = vadd.f32 0.0, %v1586
  %v1588 = vpop.f32.mrb[0].mxu0
  %v1589 = vpop.f32.mrb[0].mxu0
  %v1590 = vpop.f32.mrb[0].mxu0
  %1591 = vdwg.mxu0
  %v1592 = vpack.c.bf16 %v1587, %v1587
  %1593 = vmatprep.subr.bf16.mxu0 0
  %1594 = vmatpush1.bf16.msra.mxu0 %v641
  %1595 = vmatprep.subr.bf16.mxu0 0
  %1596 = vmatpush1.bf16.msra.mxu0 %v642
  %1597 = vmatprep.subr.bf16.mxu0 0
  %1598 = vmatpush1.bf16.msra.mxu0 %v643
  %1599 = vmatprep.subr.bf16.mxu0 0
  %1600 = vmatpush1.bf16.msra.mxu0 %v644
  %1601 = vmatprep.subr.bf16.mxu0 0
  %1602 = vmatpush1.bf16.msra.mxu0 %v645
  %1603 = vmatprep.subr.bf16.mxu0 0
  %1604 = vmatpush1.bf16.msra.mxu0 %v646
  %1605 = vmatprep.subr.bf16.mxu0 0
  %1606 = vmatpush1.bf16.msra.mxu0 %v647
  %1607 = vmatprep.subr.bf16.mxu0 0
  %1608 = vmatpush1.bf16.msra.mxu0 %v648
  %1609 = vmatprep.subr.bf16.mxu0 0
  %1610 = vmatpush1.bf16.msra.mxu0 0
  %1611 = vmatprep.subr.bf16.mxu0 0
  %1612 = vmatpush1.bf16.msra.mxu0 0
  %1613 = vmatprep.subr.bf16.mxu0 0
  %1614 = vmatpush1.bf16.msra.mxu0 0
  %1615 = vmatprep.subr.bf16.mxu0 0
  %1616 = vmatpush1.bf16.msra.mxu0 0
  %1617 = vmatprep.subr.bf16.mxu0 0
  %1618 = vmatpush1.bf16.msra.mxu0 0
  %1619 = vmatprep.subr.bf16.mxu0 0
  %1620 = vmatpush1.bf16.msra.mxu0 0
  %1621 = vmatprep.subr.bf16.mxu0 0
  %1622 = vmatpush1.bf16.msra.mxu0 0
  %1623 = vmatprep.subr.bf16.mxu0 0
  %1624 = vmatpush1.bf16.msra.mxu0 0
  %1625 = vmatprep.mubr.bf16.mxu0 0
  %1626 = vmatmul.mubr.bf16.gmra.mrb[0].mxu0 %v1592
  %v1627 = vpop.f32.mrb[0].mxu0
  %v1628 = vadd.f32 0.0, %v1627
  %v1629 = vpop.f32.mrb[0].mxu0
  %v1630 = vpop.f32.mrb[0].mxu0
  %v1631 = vpop.f32.mrb[0].mxu0
  %1632 = vdwg.mxu0
  %1633 = vmatprep.subr.bf16.mxu0 0
  %1634 = vmatpush1.bf16.msra.mxu0 %v729
  %1635 = vmatprep.subr.bf16.mxu0 0
  %1636 = vmatpush1.bf16.msra.mxu0 %v730
  %1637 = vmatprep.subr.bf16.mxu0 0
  %1638 = vmatpush1.bf16.msra.mxu0 %v731
  %1639 = vmatprep.subr.bf16.mxu0 0
  %1640 = vmatpush1.bf16.msra.mxu0 %v732
  %1641 = vmatprep.subr.bf16.mxu0 0
  %1642 = vmatpush1.bf16.msra.mxu0 %v733
  %1643 = vmatprep.subr.bf16.mxu0 0
  %1644 = vmatpush1.bf16.msra.mxu0 %v734
  %1645 = vmatprep.subr.bf16.mxu0 0
  %1646 = vmatpush1.bf16.msra.mxu0 %v735
  %1647 = vmatprep.subr.bf16.mxu0 0
  %1648 = vmatpush1.bf16.msra.mxu0 %v736
  %1649 = vmatprep.subr.bf16.mxu0 0
  %1650 = vmatpush1.bf16.msra.mxu0 0
  %1651 = vmatprep.subr.bf16.mxu0 0
  %1652 = vmatpush1.bf16.msra.mxu0 0
  %1653 = vmatprep.subr.bf16.mxu0 0
  %1654 = vmatpush1.bf16.msra.mxu0 0
  %1655 = vmatprep.subr.bf16.mxu0 0
  %1656 = vmatpush1.bf16.msra.mxu0 0
  %1657 = vmatprep.subr.bf16.mxu0 0
  %1658 = vmatpush1.bf16.msra.mxu0 0
  %1659 = vmatprep.subr.bf16.mxu0 0
  %1660 = vmatpush1.bf16.msra.mxu0 0
  %1661 = vmatprep.subr.bf16.mxu0 0
  %1662 = vmatpush1.bf16.msra.mxu0 0
  %1663 = vmatprep.subr.bf16.mxu0 0
  %1664 = vmatpush1.bf16.msra.mxu0 0
  %1665 = vmatprep.mubr.bf16.mxu0 0
  %1666 = vmatmul.mubr.bf16.gmra.mrb[0].mxu0 %v1193
  %v1667 = vpop.f32.mrb[0].mxu0
  %v1668 = vadd.f32 %v1628, %v1667
  %v1669 = vpop.f32.mrb[0].mxu0
  %v1670 = vpop.f32.mrb[0].mxu0
  %v1671 = vpop.f32.mrb[0].mxu0
  %1672 = vdwg.mxu0
  %v1673 = vadd.f32 %v1668, %v790
  %v1674 = vmax.f32 %v1673, 0.0
  %v1675 = vmul.f32 %v1358, %v1148
  %v1676 = vsel %vm437, %v1675, 0.0
  %1677 = vadd.xlane.f32.xlu0 %v1676
  %v1678 = vpop.xlane.xlu0 %1677
  %v1679 = vmul.f32 %v1358, %v1231
  %v1680 = vsel %vm437, %v1679, 0.0
  %1681 = vadd.xlane.f32.xlu0 %v1680
  %v1682 = vpop.xlane.xlu0 %1681
  %v1683 = vmul.f32 %v1358, %v1314
  %v1684 = vsel %vm437, %v1683, 0.0
  %1685 = vadd.xlane.f32.xlu0 %v1684
  %v1686 = vpop.xlane.xlu0 %1685
  %v1687 = vmax.f32 %v1678, %v1682
  %v1688 = vmax.f32 %v1687, %v1686
  %v1689 = vsub.f32 %v1678, %v1688
  %v1690 = vmul.f32 %v1689, 1.442695
  %v1691 = vpow.pop %v1690
  %v1692 = vadd.f32 %v1691, 0.0
  %v1693 = vmul.f32 %v1691, %v1187
  %v1694 = vadd.f32 %v1693, 0.0
  %v1695 = vsub.f32 %v1682, %v1688
  %v1696 = vmul.f32 %v1695, 1.442695
  %v1697 = vpow.pop %v1696
  %v1698 = vadd.f32 %v1692, %v1697
  %v1699 = vmul.f32 %v1697, %v1270
  %v1700 = vadd.f32 %v1694, %v1699
  %v1701 = vsub.f32 %v1686, %v1688
  %v1702 = vmul.f32 %v1701, 1.442695
  %v1703 = vpow.pop %v1702
  %v1704 = vadd.f32 %v1698, %v1703
  %v1705 = vmul.f32 %v1703, %v1353
  %v1706 = vadd.f32 %v1700, %v1705
  %v1707 = vrcp.pop %v1704
  %v1708 = vmul.f32 %v1706, %v1707
  %v1709 = vpack.c.bf16 %v1708, %v1708
  %1710 = vmatprep.subr.bf16.mxu0 0
  %1711 = vmatpush1.bf16.msra.mxu0 %v520
  %1712 = vmatprep.subr.bf16.mxu0 0
  %1713 = vmatpush1.bf16.msra.mxu0 %v521
  %1714 = vmatprep.subr.bf16.mxu0 0
  %1715 = vmatpush1.bf16.msra.mxu0 %v522
  %1716 = vmatprep.subr.bf16.mxu0 0
  %1717 = vmatpush1.bf16.msra.mxu0 %v523
  %1718 = vmatprep.subr.bf16.mxu0 0
  %1719 = vmatpush1.bf16.msra.mxu0 %v524
  %1720 = vmatprep.subr.bf16.mxu0 0
  %1721 = vmatpush1.bf16.msra.mxu0 %v525
  %1722 = vmatprep.subr.bf16.mxu0 0
  %1723 = vmatpush1.bf16.msra.mxu0 %v526
  %1724 = vmatprep.subr.bf16.mxu0 0
  %1725 = vmatpush1.bf16.msra.mxu0 %v527
  %1726 = vmatprep.subr.bf16.mxu0 0
  %1727 = vmatpush1.bf16.msra.mxu0 0
  %1728 = vmatprep.subr.bf16.mxu0 0
  %1729 = vmatpush1.bf16.msra.mxu0 0
  %1730 = vmatprep.subr.bf16.mxu0 0
  %1731 = vmatpush1.bf16.msra.mxu0 0
  %1732 = vmatprep.subr.bf16.mxu0 0
  %1733 = vmatpush1.bf16.msra.mxu0 0
  %1734 = vmatprep.subr.bf16.mxu0 0
  %1735 = vmatpush1.bf16.msra.mxu0 0
  %1736 = vmatprep.subr.bf16.mxu0 0
  %1737 = vmatpush1.bf16.msra.mxu0 0
  %1738 = vmatprep.subr.bf16.mxu0 0
  %1739 = vmatpush1.bf16.msra.mxu0 0
  %1740 = vmatprep.subr.bf16.mxu0 0
  %1741 = vmatpush1.bf16.msra.mxu0 0
  %1742 = vmatprep.mubr.bf16.mxu0 0
  %1743 = vmatmul.mubr.bf16.gmra.mrb[0].mxu0 %v1709
  %v1744 = vpop.f32.mrb[0].mxu0
  %v1745 = vadd.f32 0.0, %v1744
  %v1746 = vpop.f32.mrb[0].mxu0
  %v1747 = vpop.f32.mrb[0].mxu0
  %v1748 = vpop.f32.mrb[0].mxu0
  %1749 = vdwg.mxu0
  %v1750 = vpack.c.bf16 %v1745, %v1745
  %1751 = vmatprep.subr.bf16.mxu0 0
  %1752 = vmatpush1.bf16.msra.mxu0 %v641
  %1753 = vmatprep.subr.bf16.mxu0 0
  %1754 = vmatpush1.bf16.msra.mxu0 %v642
  %1755 = vmatprep.subr.bf16.mxu0 0
  %1756 = vmatpush1.bf16.msra.mxu0 %v643
  %1757 = vmatprep.subr.bf16.mxu0 0
  %1758 = vmatpush1.bf16.msra.mxu0 %v644
  %1759 = vmatprep.subr.bf16.mxu0 0
  %1760 = vmatpush1.bf16.msra.mxu0 %v645
  %1761 = vmatprep.subr.bf16.mxu0 0
  %1762 = vmatpush1.bf16.msra.mxu0 %v646
  %1763 = vmatprep.subr.bf16.mxu0 0
  %1764 = vmatpush1.bf16.msra.mxu0 %v647
  %1765 = vmatprep.subr.bf16.mxu0 0
  %1766 = vmatpush1.bf16.msra.mxu0 %v648
  %1767 = vmatprep.subr.bf16.mxu0 0
  %1768 = vmatpush1.bf16.msra.mxu0 0
  %1769 = vmatprep.subr.bf16.mxu0 0
  %1770 = vmatpush1.bf16.msra.mxu0 0
  %1771 = vmatprep.subr.bf16.mxu0 0
  %1772 = vmatpush1.bf16.msra.mxu0 0
  %1773 = vmatprep.subr.bf16.mxu0 0
  %1774 = vmatpush1.bf16.msra.mxu0 0
  %1775 = vmatprep.subr.bf16.mxu0 0
  %1776 = vmatpush1.bf16.msra.mxu0 0
  %1777 = vmatprep.subr.bf16.mxu0 0
  %1778 = vmatpush1.bf16.msra.mxu0 0
  %1779 = vmatprep.subr.bf16.mxu0 0
  %1780 = vmatpush1.bf16.msra.mxu0 0
  %1781 = vmatprep.subr.bf16.mxu0 0
  %1782 = vmatpush1.bf16.msra.mxu0 0
  %1783 = vmatprep.mubr.bf16.mxu0 0
  %1784 = vmatmul.mubr.bf16.gmra.mrb[0].mxu0 %v1750
  %v1785 = vpop.f32.mrb[0].mxu0
  %v1786 = vadd.f32 0.0, %v1785
  %v1787 = vpop.f32.mrb[0].mxu0
  %v1788 = vpop.f32.mrb[0].mxu0
  %v1789 = vpop.f32.mrb[0].mxu0
  %1790 = vdwg.mxu0
  %1791 = vmatprep.subr.bf16.mxu0 0
  %1792 = vmatpush1.bf16.msra.mxu0 %v729
  %1793 = vmatprep.subr.bf16.mxu0 0
  %1794 = vmatpush1.bf16.msra.mxu0 %v730
  %1795 = vmatprep.subr.bf16.mxu0 0
  %1796 = vmatpush1.bf16.msra.mxu0 %v731
  %1797 = vmatprep.subr.bf16.mxu0 0
  %1798 = vmatpush1.bf16.msra.mxu0 %v732
  %1799 = vmatprep.subr.bf16.mxu0 0
  %1800 = vmatpush1.bf16.msra.mxu0 %v733
  %1801 = vmatprep.subr.bf16.mxu0 0
  %1802 = vmatpush1.bf16.msra.mxu0 %v734
  %1803 = vmatprep.subr.bf16.mxu0 0
  %1804 = vmatpush1.bf16.msra.mxu0 %v735
  %1805 = vmatprep.subr.bf16.mxu0 0
  %1806 = vmatpush1.bf16.msra.mxu0 %v736
  %1807 = vmatprep.subr.bf16.mxu0 0
  %1808 = vmatpush1.bf16.msra.mxu0 0
  %1809 = vmatprep.subr.bf16.mxu0 0
  %1810 = vmatpush1.bf16.msra.mxu0 0
  %1811 = vmatprep.subr.bf16.mxu0 0
  %1812 = vmatpush1.bf16.msra.mxu0 0
  %1813 = vmatprep.subr.bf16.mxu0 0
  %1814 = vmatpush1.bf16.msra.mxu0 0
  %1815 = vmatprep.subr.bf16.mxu0 0
  %1816 = vmatpush1.bf16.msra.mxu0 0
  %1817 = vmatprep.subr.bf16.mxu0 0
  %1818 = vmatpush1.bf16.msra.mxu0 0
  %1819 = vmatprep.subr.bf16.mxu0 0
  %1820 = vmatpush1.bf16.msra.mxu0 0
  %1821 = vmatprep.subr.bf16.mxu0 0
  %1822 = vmatpush1.bf16.msra.mxu0 0
  %1823 = vmatprep.mubr.bf16.mxu0 0
  %1824 = vmatmul.mubr.bf16.gmra.mrb[0].mxu0 %v1276
  %v1825 = vpop.f32.mrb[0].mxu0
  %v1826 = vadd.f32 %v1786, %v1825
  %v1827 = vpop.f32.mrb[0].mxu0
  %v1828 = vpop.f32.mrb[0].mxu0
  %v1829 = vpop.f32.mrb[0].mxu0
  %1830 = vdwg.mxu0
  %v1831 = vadd.f32 %v1826, %v790
  %v1832 = vmax.f32 %v1831, 0.0
  %v1833 = vpack.c.bf16 %v1516, %v1516
  %1834 = vmatprep.subr.bf16.mxu0 %v141
  %1835 = vmatpush1.bf16.msra.mxu0 %v140
  %1836 = vmatprep.subr.bf16.mxu0 %v144
  %1837 = vmatpush1.bf16.msra.mxu0 %v143
  %1838 = vmatprep.subr.bf16.mxu0 %v147
  %1839 = vmatpush1.bf16.msra.mxu0 %v146
  %1840 = vmatprep.subr.bf16.mxu0 %v150
  %1841 = vmatpush1.bf16.msra.mxu0 %v149
  %1842 = vmatprep.subr.bf16.mxu0 %v153
  %1843 = vmatpush1.bf16.msra.mxu0 %v152
  %1844 = vmatprep.subr.bf16.mxu0 %v156
  %1845 = vmatpush1.bf16.msra.mxu0 %v155
  %1846 = vmatprep.subr.bf16.mxu0 %v159
  %1847 = vmatpush1.bf16.msra.mxu0 %v158
  %1848 = vmatprep.subr.bf16.mxu0 %v162
  %1849 = vmatpush1.bf16.msra.mxu0 %v161
  %1850 = vmatprep.subr.bf16.mxu0 0
  %1851 = vmatpush1.bf16.msra.mxu0 0
  %1852 = vmatprep.subr.bf16.mxu0 0
  %1853 = vmatpush1.bf16.msra.mxu0 0
  %1854 = vmatprep.subr.bf16.mxu0 0
  %1855 = vmatpush1.bf16.msra.mxu0 0
  %1856 = vmatprep.subr.bf16.mxu0 0
  %1857 = vmatpush1.bf16.msra.mxu0 0
  %1858 = vmatprep.subr.bf16.mxu0 0
  %1859 = vmatpush1.bf16.msra.mxu0 0
  %1860 = vmatprep.subr.bf16.mxu0 0
  %1861 = vmatpush1.bf16.msra.mxu0 0
  %1862 = vmatprep.subr.bf16.mxu0 0
  %1863 = vmatpush1.bf16.msra.mxu0 0
  %1864 = vmatprep.subr.bf16.mxu0 0
  %1865 = vmatpush1.bf16.msra.mxu0 0
  %1866 = vmatprep.mubr.bf16.mxu0 0
  %1867 = vmatmul.mubr.bf16.gmra.mrb[0].mxu0 %v1833
  %v1868 = vpop.f32.mrb[0].mxu0
  %v1869 = vadd.f32 0.0, %v1868
  %v1870 = vpop.f32.mrb[0].mxu0
  %v1871 = vadd.f32 0.0, %v1870
  %v1872 = vpop.f32.mrb[0].mxu0
  %v1873 = vpop.f32.mrb[0].mxu0
  %1874 = vdwg.mxu0
  %1875 = vmatprep.subr.bf16.mxu0 0
  %1876 = vmatpush1.bf16.msra.mxu0 %v142
  %1877 = vmatprep.subr.bf16.mxu0 0
  %1878 = vmatpush1.bf16.msra.mxu0 %v145
  %1879 = vmatprep.subr.bf16.mxu0 0
  %1880 = vmatpush1.bf16.msra.mxu0 %v148
  %1881 = vmatprep.subr.bf16.mxu0 0
  %1882 = vmatpush1.bf16.msra.mxu0 %v151
  %1883 = vmatprep.subr.bf16.mxu0 0
  %1884 = vmatpush1.bf16.msra.mxu0 %v154
  %1885 = vmatprep.subr.bf16.mxu0 0
  %1886 = vmatpush1.bf16.msra.mxu0 %v157
  %1887 = vmatprep.subr.bf16.mxu0 0
  %1888 = vmatpush1.bf16.msra.mxu0 %v160
  %1889 = vmatprep.subr.bf16.mxu0 0
  %1890 = vmatpush1.bf16.msra.mxu0 %v163
  %1891 = vmatprep.subr.bf16.mxu0 0
  %1892 = vmatpush1.bf16.msra.mxu0 0
  %1893 = vmatprep.subr.bf16.mxu0 0
  %1894 = vmatpush1.bf16.msra.mxu0 0
  %1895 = vmatprep.subr.bf16.mxu0 0
  %1896 = vmatpush1.bf16.msra.mxu0 0
  %1897 = vmatprep.subr.bf16.mxu0 0
  %1898 = vmatpush1.bf16.msra.mxu0 0
  %1899 = vmatprep.subr.bf16.mxu0 0
  %1900 = vmatpush1.bf16.msra.mxu0 0
  %1901 = vmatprep.subr.bf16.mxu0 0
  %1902 = vmatpush1.bf16.msra.mxu0 0
  %1903 = vmatprep.subr.bf16.mxu0 0
  %1904 = vmatpush1.bf16.msra.mxu0 0
  %1905 = vmatprep.subr.bf16.mxu0 0
  %1906 = vmatpush1.bf16.msra.mxu0 0
  %1907 = vmatprep.mubr.bf16.mxu0 0
  %1908 = vmatmul.mubr.bf16.gmra.mrb[0].mxu0 %v1833
  %v1909 = vpop.f32.mrb[0].mxu0
  %v1910 = vadd.f32 0.0, %v1909
  %v1911 = vpop.f32.mrb[0].mxu0
  %v1912 = vpop.f32.mrb[0].mxu0
  %v1913 = vpop.f32.mrb[0].mxu0
  %1914 = vdwg.mxu0
  %v1915 = vmul.f32 %v1869, 0.088388346
  %v1916 = vpack.c.bf16 %v1674, %v1674
  %1917 = vmatprep.subr.bf16.mxu0 %v141
  %1918 = vmatpush1.bf16.msra.mxu0 %v140
  %1919 = vmatprep.subr.bf16.mxu0 %v144
  %1920 = vmatpush1.bf16.msra.mxu0 %v143
  %1921 = vmatprep.subr.bf16.mxu0 %v147
  %1922 = vmatpush1.bf16.msra.mxu0 %v146
  %1923 = vmatprep.subr.bf16.mxu0 %v150
  %1924 = vmatpush1.bf16.msra.mxu0 %v149
  %1925 = vmatprep.subr.bf16.mxu0 %v153
  %1926 = vmatpush1.bf16.msra.mxu0 %v152
  %1927 = vmatprep.subr.bf16.mxu0 %v156
  %1928 = vmatpush1.bf16.msra.mxu0 %v155
  %1929 = vmatprep.subr.bf16.mxu0 %v159
  %1930 = vmatpush1.bf16.msra.mxu0 %v158
  %1931 = vmatprep.subr.bf16.mxu0 %v162
  %1932 = vmatpush1.bf16.msra.mxu0 %v161
  %1933 = vmatprep.subr.bf16.mxu0 0
  %1934 = vmatpush1.bf16.msra.mxu0 0
  %1935 = vmatprep.subr.bf16.mxu0 0
  %1936 = vmatpush1.bf16.msra.mxu0 0
  %1937 = vmatprep.subr.bf16.mxu0 0
  %1938 = vmatpush1.bf16.msra.mxu0 0
  %1939 = vmatprep.subr.bf16.mxu0 0
  %1940 = vmatpush1.bf16.msra.mxu0 0
  %1941 = vmatprep.subr.bf16.mxu0 0
  %1942 = vmatpush1.bf16.msra.mxu0 0
  %1943 = vmatprep.subr.bf16.mxu0 0
  %1944 = vmatpush1.bf16.msra.mxu0 0
  %1945 = vmatprep.subr.bf16.mxu0 0
  %1946 = vmatpush1.bf16.msra.mxu0 0
  %1947 = vmatprep.subr.bf16.mxu0 0
  %1948 = vmatpush1.bf16.msra.mxu0 0
  %1949 = vmatprep.mubr.bf16.mxu0 0
  %1950 = vmatmul.mubr.bf16.gmra.mrb[0].mxu0 %v1916
  %v1951 = vpop.f32.mrb[0].mxu0
  %v1952 = vadd.f32 0.0, %v1951
  %v1953 = vpop.f32.mrb[0].mxu0
  %v1954 = vadd.f32 0.0, %v1953
  %v1955 = vpop.f32.mrb[0].mxu0
  %v1956 = vpop.f32.mrb[0].mxu0
  %1957 = vdwg.mxu0
  %1958 = vmatprep.subr.bf16.mxu0 0
  %1959 = vmatpush1.bf16.msra.mxu0 %v142
  %1960 = vmatprep.subr.bf16.mxu0 0
  %1961 = vmatpush1.bf16.msra.mxu0 %v145
  %1962 = vmatprep.subr.bf16.mxu0 0
  %1963 = vmatpush1.bf16.msra.mxu0 %v148
  %1964 = vmatprep.subr.bf16.mxu0 0
  %1965 = vmatpush1.bf16.msra.mxu0 %v151
  %1966 = vmatprep.subr.bf16.mxu0 0
  %1967 = vmatpush1.bf16.msra.mxu0 %v154
  %1968 = vmatprep.subr.bf16.mxu0 0
  %1969 = vmatpush1.bf16.msra.mxu0 %v157
  %1970 = vmatprep.subr.bf16.mxu0 0
  %1971 = vmatpush1.bf16.msra.mxu0 %v160
  %1972 = vmatprep.subr.bf16.mxu0 0
  %1973 = vmatpush1.bf16.msra.mxu0 %v163
  %1974 = vmatprep.subr.bf16.mxu0 0
  %1975 = vmatpush1.bf16.msra.mxu0 0
  %1976 = vmatprep.subr.bf16.mxu0 0
  %1977 = vmatpush1.bf16.msra.mxu0 0
  %1978 = vmatprep.subr.bf16.mxu0 0
  %1979 = vmatpush1.bf16.msra.mxu0 0
  %1980 = vmatprep.subr.bf16.mxu0 0
  %1981 = vmatpush1.bf16.msra.mxu0 0
  %1982 = vmatprep.subr.bf16.mxu0 0
  %1983 = vmatpush1.bf16.msra.mxu0 0
  %1984 = vmatprep.subr.bf16.mxu0 0
  %1985 = vmatpush1.bf16.msra.mxu0 0
  %1986 = vmatprep.subr.bf16.mxu0 0
  %1987 = vmatpush1.bf16.msra.mxu0 0
  %1988 = vmatprep.subr.bf16.mxu0 0
  %1989 = vmatpush1.bf16.msra.mxu0 0
  %1990 = vmatprep.mubr.bf16.mxu0 0
  %1991 = vmatmul.mubr.bf16.gmra.mrb[0].mxu0 %v1916
  %v1992 = vpop.f32.mrb[0].mxu0
  %v1993 = vadd.f32 0.0, %v1992
  %v1994 = vpop.f32.mrb[0].mxu0
  %v1995 = vpop.f32.mrb[0].mxu0
  %v1996 = vpop.f32.mrb[0].mxu0
  %1997 = vdwg.mxu0
  %v1998 = vmul.f32 %v1952, 0.088388346
  %v1999 = vpack.c.bf16 %v1832, %v1832
  %2000 = vmatprep.subr.bf16.mxu0 %v141
  %2001 = vmatpush1.bf16.msra.mxu0 %v140
  %2002 = vmatprep.subr.bf16.mxu0 %v144
  %2003 = vmatpush1.bf16.msra.mxu0 %v143
  %2004 = vmatprep.subr.bf16.mxu0 %v147
  %2005 = vmatpush1.bf16.msra.mxu0 %v146
  %2006 = vmatprep.subr.bf16.mxu0 %v150
  %2007 = vmatpush1.bf16.msra.mxu0 %v149
  %2008 = vmatprep.subr.bf16.mxu0 %v153
  %2009 = vmatpush1.bf16.msra.mxu0 %v152
  %2010 = vmatprep.subr.bf16.mxu0 %v156
  %2011 = vmatpush1.bf16.msra.mxu0 %v155
  %2012 = vmatprep.subr.bf16.mxu0 %v159
  %2013 = vmatpush1.bf16.msra.mxu0 %v158
  %2014 = vmatprep.subr.bf16.mxu0 %v162
  %2015 = vmatpush1.bf16.msra.mxu0 %v161
  %2016 = vmatprep.subr.bf16.mxu0 0
  %2017 = vmatpush1.bf16.msra.mxu0 0
  %2018 = vmatprep.subr.bf16.mxu0 0
  %2019 = vmatpush1.bf16.msra.mxu0 0
  %2020 = vmatprep.subr.bf16.mxu0 0
  %2021 = vmatpush1.bf16.msra.mxu0 0
  %2022 = vmatprep.subr.bf16.mxu0 0
  %2023 = vmatpush1.bf16.msra.mxu0 0
  %2024 = vmatprep.subr.bf16.mxu0 0
  %2025 = vmatpush1.bf16.msra.mxu0 0
  %2026 = vmatprep.subr.bf16.mxu0 0
  %2027 = vmatpush1.bf16.msra.mxu0 0
  %2028 = vmatprep.subr.bf16.mxu0 0
  %2029 = vmatpush1.bf16.msra.mxu0 0
  %2030 = vmatprep.subr.bf16.mxu0 0
  %2031 = vmatpush1.bf16.msra.mxu0 0
  %2032 = vmatprep.mubr.bf16.mxu0 0
  %2033 = vmatmul.mubr.bf16.gmra.mrb[0].mxu0 %v1999
  %v2034 = vpop.f32.mrb[0].mxu0
  %v2035 = vadd.f32 0.0, %v2034
  %v2036 = vpop.f32.mrb[0].mxu0
  %v2037 = vadd.f32 0.0, %v2036
  %v2038 = vpop.f32.mrb[0].mxu0
  %v2039 = vpop.f32.mrb[0].mxu0
  %2040 = vdwg.mxu0
  %2041 = vmatprep.subr.bf16.mxu0 0
  %2042 = vmatpush1.bf16.msra.mxu0 %v142
  %2043 = vmatprep.subr.bf16.mxu0 0
  %2044 = vmatpush1.bf16.msra.mxu0 %v145
  %2045 = vmatprep.subr.bf16.mxu0 0
  %2046 = vmatpush1.bf16.msra.mxu0 %v148
  %2047 = vmatprep.subr.bf16.mxu0 0
  %2048 = vmatpush1.bf16.msra.mxu0 %v151
  %2049 = vmatprep.subr.bf16.mxu0 0
  %2050 = vmatpush1.bf16.msra.mxu0 %v154
  %2051 = vmatprep.subr.bf16.mxu0 0
  %2052 = vmatpush1.bf16.msra.mxu0 %v157
  %2053 = vmatprep.subr.bf16.mxu0 0
  %2054 = vmatpush1.bf16.msra.mxu0 %v160
  %2055 = vmatprep.subr.bf16.mxu0 0
  %2056 = vmatpush1.bf16.msra.mxu0 %v163
  %2057 = vmatprep.subr.bf16.mxu0 0
  %2058 = vmatpush1.bf16.msra.mxu0 0
  %2059 = vmatprep.subr.bf16.mxu0 0
  %2060 = vmatpush1.bf16.msra.mxu0 0
  %2061 = vmatprep.subr.bf16.mxu0 0
  %2062 = vmatpush1.bf16.msra.mxu0 0
  %2063 = vmatprep.subr.bf16.mxu0 0
  %2064 = vmatpush1.bf16.msra.mxu0 0
  %2065 = vmatprep.subr.bf16.mxu0 0
  %2066 = vmatpush1.bf16.msra.mxu0 0
  %2067 = vmatprep.subr.bf16.mxu0 0
  %2068 = vmatpush1.bf16.msra.mxu0 0
  %2069 = vmatprep.subr.bf16.mxu0 0
  %2070 = vmatpush1.bf16.msra.mxu0 0
  %2071 = vmatprep.subr.bf16.mxu0 0
  %2072 = vmatpush1.bf16.msra.mxu0 0
  %2073 = vmatprep.mubr.bf16.mxu0 0
  %2074 = vmatmul.mubr.bf16.gmra.mrb[0].mxu0 %v1999
  %v2075 = vpop.f32.mrb[0].mxu0
  %v2076 = vadd.f32 0.0, %v2075
  %v2077 = vpop.f32.mrb[0].mxu0
  %v2078 = vpop.f32.mrb[0].mxu0
  %v2079 = vpop.f32.mrb[0].mxu0
  %2080 = vdwg.mxu0
  %v2081 = vmul.f32 %v2035, 0.088388346
  %v2082 = vmul.f32 %v1915, %v1871
  %v2083 = vsel %vm437, %v2082, 0.0
  %2084 = vadd.xlane.f32.xlu0 %v2083
  %v2085 = vpop.xlane.xlu0 %2084
  %v2086 = vmul.f32 %v1915, %v1954
  %v2087 = vsel %vm437, %v2086, 0.0
  %2088 = vadd.xlane.f32.xlu0 %v2087
  %v2089 = vpop.xlane.xlu0 %2088
  %v2090 = vmul.f32 %v1915, %v2037
  %v2091 = vsel %vm437, %v2090, 0.0
  %2092 = vadd.xlane.f32.xlu0 %v2091
  %v2093 = vpop.xlane.xlu0 %2092
  %v2094 = vmax.f32 %v2085, %v2089
  %v2095 = vmax.f32 %v2094, %v2093
  %v2096 = vsub.f32 %v2085, %v2095
  %v2097 = vmul.f32 %v2096, 1.442695
  %v2098 = vpow.pop %v2097
  %v2099 = vadd.f32 %v2098, 0.0
  %v2100 = vmul.f32 %v2098, %v1910
  %v2101 = vadd.f32 %v2100, 0.0
  %v2102 = vsub.f32 %v2089, %v2095
  %v2103 = vmul.f32 %v2102, 1.442695
  %v2104 = vpow.pop %v2103
  %v2105 = vadd.f32 %v2099, %v2104
  %v2106 = vmul.f32 %v2104, %v1993
  %v2107 = vadd.f32 %v2101, %v2106
  %v2108 = vsub.f32 %v2093, %v2095
  %v2109 = vmul.f32 %v2108, 1.442695
  %v2110 = vpow.pop %v2109
  %v2111 = vadd.f32 %v2105, %v2110
  %v2112 = vmul.f32 %v2110, %v2076
  %v2113 = vadd.f32 %v2107, %v2112
  %v2114 = vrcp.pop %v2111
  %v2115 = vmul.f32 %v2113, %v2114
  %v2116 = vpack.c.bf16 %v2115, %v2115
  %2117 = vmatprep.subr.bf16.mxu0 0
  %2118 = vmatpush1.bf16.msra.mxu0 %v520
  %2119 = vmatprep.subr.bf16.mxu0 0
  %2120 = vmatpush1.bf16.msra.mxu0 %v521
  %2121 = vmatprep.subr.bf16.mxu0 0
  %2122 = vmatpush1.bf16.msra.mxu0 %v522
  %2123 = vmatprep.subr.bf16.mxu0 0
  %2124 = vmatpush1.bf16.msra.mxu0 %v523
  %2125 = vmatprep.subr.bf16.mxu0 0
  %2126 = vmatpush1.bf16.msra.mxu0 %v524
  %2127 = vmatprep.subr.bf16.mxu0 0
  %2128 = vmatpush1.bf16.msra.mxu0 %v525
  %2129 = vmatprep.subr.bf16.mxu0 0
  %2130 = vmatpush1.bf16.msra.mxu0 %v526
  %2131 = vmatprep.subr.bf16.mxu0 0
  %2132 = vmatpush1.bf16.msra.mxu0 %v527
  %2133 = vmatprep.subr.bf16.mxu0 0
  %2134 = vmatpush1.bf16.msra.mxu0 0
  %2135 = vmatprep.subr.bf16.mxu0 0
  %2136 = vmatpush1.bf16.msra.mxu0 0
  %2137 = vmatprep.subr.bf16.mxu0 0
  %2138 = vmatpush1.bf16.msra.mxu0 0
  %2139 = vmatprep.subr.bf16.mxu0 0
  %2140 = vmatpush1.bf16.msra.mxu0 0
  %2141 = vmatprep.subr.bf16.mxu0 0
  %2142 = vmatpush1.bf16.msra.mxu0 0
  %2143 = vmatprep.subr.bf16.mxu0 0
  %2144 = vmatpush1.bf16.msra.mxu0 0
  %2145 = vmatprep.subr.bf16.mxu0 0
  %2146 = vmatpush1.bf16.msra.mxu0 0
  %2147 = vmatprep.subr.bf16.mxu0 0
  %2148 = vmatpush1.bf16.msra.mxu0 0
  %2149 = vmatprep.mubr.bf16.mxu0 0
  %2150 = vmatmul.mubr.bf16.gmra.mrb[0].mxu0 %v2116
  %v2151 = vpop.f32.mrb[0].mxu0
  %v2152 = vadd.f32 0.0, %v2151
  %v2153 = vpop.f32.mrb[0].mxu0
  %v2154 = vpop.f32.mrb[0].mxu0
  %v2155 = vpop.f32.mrb[0].mxu0
  %2156 = vdwg.mxu0
  %v2157 = vpack.c.bf16 %v2152, %v2152
  %2158 = vmatprep.subr.bf16.mxu0 0
  %2159 = vmatpush1.bf16.msra.mxu0 %v641
  %2160 = vmatprep.subr.bf16.mxu0 0
  %2161 = vmatpush1.bf16.msra.mxu0 %v642
  %2162 = vmatprep.subr.bf16.mxu0 0
  %2163 = vmatpush1.bf16.msra.mxu0 %v643
  %2164 = vmatprep.subr.bf16.mxu0 0
  %2165 = vmatpush1.bf16.msra.mxu0 %v644
  %2166 = vmatprep.subr.bf16.mxu0 0
  %2167 = vmatpush1.bf16.msra.mxu0 %v645
  %2168 = vmatprep.subr.bf16.mxu0 0
  %2169 = vmatpush1.bf16.msra.mxu0 %v646
  %2170 = vmatprep.subr.bf16.mxu0 0
  %2171 = vmatpush1.bf16.msra.mxu0 %v647
  %2172 = vmatprep.subr.bf16.mxu0 0
  %2173 = vmatpush1.bf16.msra.mxu0 %v648
  %2174 = vmatprep.subr.bf16.mxu0 0
  %2175 = vmatpush1.bf16.msra.mxu0 0
  %2176 = vmatprep.subr.bf16.mxu0 0
  %2177 = vmatpush1.bf16.msra.mxu0 0
  %2178 = vmatprep.subr.bf16.mxu0 0
  %2179 = vmatpush1.bf16.msra.mxu0 0
  %2180 = vmatprep.subr.bf16.mxu0 0
  %2181 = vmatpush1.bf16.msra.mxu0 0
  %2182 = vmatprep.subr.bf16.mxu0 0
  %2183 = vmatpush1.bf16.msra.mxu0 0
  %2184 = vmatprep.subr.bf16.mxu0 0
  %2185 = vmatpush1.bf16.msra.mxu0 0
  %2186 = vmatprep.subr.bf16.mxu0 0
  %2187 = vmatpush1.bf16.msra.mxu0 0
  %2188 = vmatprep.subr.bf16.mxu0 0
  %2189 = vmatpush1.bf16.msra.mxu0 0
  %2190 = vmatprep.mubr.bf16.mxu0 0
  %2191 = vmatmul.mubr.bf16.gmra.mrb[0].mxu0 %v2157
  %v2192 = vpop.f32.mrb[0].mxu0
  %v2193 = vadd.f32 0.0, %v2192
  %v2194 = vpop.f32.mrb[0].mxu0
  %v2195 = vpop.f32.mrb[0].mxu0
  %v2196 = vpop.f32.mrb[0].mxu0
  %2197 = vdwg.mxu0
  %2198 = vmatprep.subr.bf16.mxu0 0
  %2199 = vmatpush1.bf16.msra.mxu0 %v729
  %2200 = vmatprep.subr.bf16.mxu0 0
  %2201 = vmatpush1.bf16.msra.mxu0 %v730
  %2202 = vmatprep.subr.bf16.mxu0 0
  %2203 = vmatpush1.bf16.msra.mxu0 %v731
  %2204 = vmatprep.subr.bf16.mxu0 0
  %2205 = vmatpush1.bf16.msra.mxu0 %v732
  %2206 = vmatprep.subr.bf16.mxu0 0
  %2207 = vmatpush1.bf16.msra.mxu0 %v733
  %2208 = vmatprep.subr.bf16.mxu0 0
  %2209 = vmatpush1.bf16.msra.mxu0 %v734
  %2210 = vmatprep.subr.bf16.mxu0 0
  %2211 = vmatpush1.bf16.msra.mxu0 %v735
  %2212 = vmatprep.subr.bf16.mxu0 0
  %2213 = vmatpush1.bf16.msra.mxu0 %v736
  %2214 = vmatprep.subr.bf16.mxu0 0
  %2215 = vmatpush1.bf16.msra.mxu0 0
  %2216 = vmatprep.subr.bf16.mxu0 0
  %2217 = vmatpush1.bf16.msra.mxu0 0
  %2218 = vmatprep.subr.bf16.mxu0 0
  %2219 = vmatpush1.bf16.msra.mxu0 0
  %2220 = vmatprep.subr.bf16.mxu0 0
  %2221 = vmatpush1.bf16.msra.mxu0 0
  %2222 = vmatprep.subr.bf16.mxu0 0
  %2223 = vmatpush1.bf16.msra.mxu0 0
  %2224 = vmatprep.subr.bf16.mxu0 0
  %2225 = vmatpush1.bf16.msra.mxu0 0
  %2226 = vmatprep.subr.bf16.mxu0 0
  %2227 = vmatpush1.bf16.msra.mxu0 0
  %2228 = vmatprep.subr.bf16.mxu0 0
  %2229 = vmatpush1.bf16.msra.mxu0 0
  %2230 = vmatprep.mubr.bf16.mxu0 0
  %2231 = vmatmul.mubr.bf16.gmra.mrb[0].mxu0 %v1833
  %v2232 = vpop.f32.mrb[0].mxu0
  %v2233 = vadd.f32 %v2193, %v2232
  %v2234 = vpop.f32.mrb[0].mxu0
  %v2235 = vpop.f32.mrb[0].mxu0
  %v2236 = vpop.f32.mrb[0].mxu0
  %2237 = vdwg.mxu0
  %v2238 = vadd.f32 %v2233, %v790
  %v2239 = vmax.f32 %v2238, 0.0
  %v2240 = vmul.f32 %v1998, %v1871
  %v2241 = vsel %vm437, %v2240, 0.0
  %2242 = vadd.xlane.f32.xlu0 %v2241
  %v2243 = vpop.xlane.xlu0 %2242
  %v2244 = vmul.f32 %v1998, %v1954
  %v2245 = vsel %vm437, %v2244, 0.0
  %2246 = vadd.xlane.f32.xlu0 %v2245
  %v2247 = vpop.xlane.xlu0 %2246
  %v2248 = vmul.f32 %v1998, %v2037
  %v2249 = vsel %vm437, %v2248, 0.0
  %2250 = vadd.xlane.f32.xlu0 %v2249
  %v2251 = vpop.xlane.xlu0 %2250
  %v2252 = vmax.f32 %v2243, %v2247
  %v2253 = vmax.f32 %v2252, %v2251
  %v2254 = vsub.f32 %v2243, %v2253
  %v2255 = vmul.f32 %v2254, 1.442695
  %v2256 = vpow.pop %v2255
  %v2257 = vadd.f32 %v2256, 0.0
  %v2258 = vmul.f32 %v2256, %v1910
  %v2259 = vadd.f32 %v2258, 0.0
  %v2260 = vsub.f32 %v2247, %v2253
  %v2261 = vmul.f32 %v2260, 1.442695
  %v2262 = vpow.pop %v2261
  %v2263 = vadd.f32 %v2257, %v2262
  %v2264 = vmul.f32 %v2262, %v1993
  %v2265 = vadd.f32 %v2259, %v2264
  %v2266 = vsub.f32 %v2251, %v2253
  %v2267 = vmul.f32 %v2266, 1.442695
  %v2268 = vpow.pop %v2267
  %v2269 = vadd.f32 %v2263, %v2268
  %v2270 = vmul.f32 %v2268, %v2076
  %v2271 = vadd.f32 %v2265, %v2270
  %v2272 = vrcp.pop %v2269
  %v2273 = vmul.f32 %v2271, %v2272
  %v2274 = vpack.c.bf16 %v2273, %v2273
  %2275 = vmatprep.subr.bf16.mxu0 0
  %2276 = vmatpush1.bf16.msra.mxu0 %v520
  %2277 = vmatprep.subr.bf16.mxu0 0
  %2278 = vmatpush1.bf16.msra.mxu0 %v521
  %2279 = vmatprep.subr.bf16.mxu0 0
  %2280 = vmatpush1.bf16.msra.mxu0 %v522
  %2281 = vmatprep.subr.bf16.mxu0 0
  %2282 = vmatpush1.bf16.msra.mxu0 %v523
  %2283 = vmatprep.subr.bf16.mxu0 0
  %2284 = vmatpush1.bf16.msra.mxu0 %v524
  %2285 = vmatprep.subr.bf16.mxu0 0
  %2286 = vmatpush1.bf16.msra.mxu0 %v525
  %2287 = vmatprep.subr.bf16.mxu0 0
  %2288 = vmatpush1.bf16.msra.mxu0 %v526
  %2289 = vmatprep.subr.bf16.mxu0 0
  %2290 = vmatpush1.bf16.msra.mxu0 %v527
  %2291 = vmatprep.subr.bf16.mxu0 0
  %2292 = vmatpush1.bf16.msra.mxu0 0
  %2293 = vmatprep.subr.bf16.mxu0 0
  %2294 = vmatpush1.bf16.msra.mxu0 0
  %2295 = vmatprep.subr.bf16.mxu0 0
  %2296 = vmatpush1.bf16.msra.mxu0 0
  %2297 = vmatprep.subr.bf16.mxu0 0
  %2298 = vmatpush1.bf16.msra.mxu0 0
  %2299 = vmatprep.subr.bf16.mxu0 0
  %2300 = vmatpush1.bf16.msra.mxu0 0
  %2301 = vmatprep.subr.bf16.mxu0 0
  %2302 = vmatpush1.bf16.msra.mxu0 0
  %2303 = vmatprep.subr.bf16.mxu0 0
  %2304 = vmatpush1.bf16.msra.mxu0 0
  %2305 = vmatprep.subr.bf16.mxu0 0
  %2306 = vmatpush1.bf16.msra.mxu0 0
  %2307 = vmatprep.mubr.bf16.mxu0 0
  %2308 = vmatmul.mubr.bf16.gmra.mrb[0].mxu0 %v2274
  %v2309 = vpop.f32.mrb[0].mxu0
  %v2310 = vadd.f32 0.0, %v2309
  %v2311 = vpop.f32.mrb[0].mxu0
  %v2312 = vpop.f32.mrb[0].mxu0
  %v2313 = vpop.f32.mrb[0].mxu0
  %2314 = vdwg.mxu0
  %v2315 = vpack.c.bf16 %v2310, %v2310
  %2316 = vmatprep.subr.bf16.mxu0 0
  %2317 = vmatpush1.bf16.msra.mxu0 %v641
  %2318 = vmatprep.subr.bf16.mxu0 0
  %2319 = vmatpush1.bf16.msra.mxu0 %v642
  %2320 = vmatprep.subr.bf16.mxu0 0
  %2321 = vmatpush1.bf16.msra.mxu0 %v643
  %2322 = vmatprep.subr.bf16.mxu0 0
  %2323 = vmatpush1.bf16.msra.mxu0 %v644
  %2324 = vmatprep.subr.bf16.mxu0 0
  %2325 = vmatpush1.bf16.msra.mxu0 %v645
  %2326 = vmatprep.subr.bf16.mxu0 0
  %2327 = vmatpush1.bf16.msra.mxu0 %v646
  %2328 = vmatprep.subr.bf16.mxu0 0
  %2329 = vmatpush1.bf16.msra.mxu0 %v647
  %2330 = vmatprep.subr.bf16.mxu0 0
  %2331 = vmatpush1.bf16.msra.mxu0 %v648
  %2332 = vmatprep.subr.bf16.mxu0 0
  %2333 = vmatpush1.bf16.msra.mxu0 0
  %2334 = vmatprep.subr.bf16.mxu0 0
  %2335 = vmatpush1.bf16.msra.mxu0 0
  %2336 = vmatprep.subr.bf16.mxu0 0
  %2337 = vmatpush1.bf16.msra.mxu0 0
  %2338 = vmatprep.subr.bf16.mxu0 0
  %2339 = vmatpush1.bf16.msra.mxu0 0
  %2340 = vmatprep.subr.bf16.mxu0 0
  %2341 = vmatpush1.bf16.msra.mxu0 0
  %2342 = vmatprep.subr.bf16.mxu0 0
  %2343 = vmatpush1.bf16.msra.mxu0 0
  %2344 = vmatprep.subr.bf16.mxu0 0
  %2345 = vmatpush1.bf16.msra.mxu0 0
  %2346 = vmatprep.subr.bf16.mxu0 0
  %2347 = vmatpush1.bf16.msra.mxu0 0
  %2348 = vmatprep.mubr.bf16.mxu0 0
  %2349 = vmatmul.mubr.bf16.gmra.mrb[0].mxu0 %v2315
  %v2350 = vpop.f32.mrb[0].mxu0
  %v2351 = vadd.f32 0.0, %v2350
  %v2352 = vpop.f32.mrb[0].mxu0
  %v2353 = vpop.f32.mrb[0].mxu0
  %v2354 = vpop.f32.mrb[0].mxu0
  %2355 = vdwg.mxu0
  %2356 = vmatprep.subr.bf16.mxu0 0
  %2357 = vmatpush1.bf16.msra.mxu0 %v729
  %2358 = vmatprep.subr.bf16.mxu0 0
  %2359 = vmatpush1.bf16.msra.mxu0 %v730
  %2360 = vmatprep.subr.bf16.mxu0 0
  %2361 = vmatpush1.bf16.msra.mxu0 %v731
  %2362 = vmatprep.subr.bf16.mxu0 0
  %2363 = vmatpush1.bf16.msra.mxu0 %v732
  %2364 = vmatprep.subr.bf16.mxu0 0
  %2365 = vmatpush1.bf16.msra.mxu0 %v733
  %2366 = vmatprep.subr.bf16.mxu0 0
  %2367 = vmatpush1.bf16.msra.mxu0 %v734
  %2368 = vmatprep.subr.bf16.mxu0 0
  %2369 = vmatpush1.bf16.msra.mxu0 %v735
  %2370 = vmatprep.subr.bf16.mxu0 0
  %2371 = vmatpush1.bf16.msra.mxu0 %v736
  %2372 = vmatprep.subr.bf16.mxu0 0
  %2373 = vmatpush1.bf16.msra.mxu0 0
  %2374 = vmatprep.subr.bf16.mxu0 0
  %2375 = vmatpush1.bf16.msra.mxu0 0
  %2376 = vmatprep.subr.bf16.mxu0 0
  %2377 = vmatpush1.bf16.msra.mxu0 0
  %2378 = vmatprep.subr.bf16.mxu0 0
  %2379 = vmatpush1.bf16.msra.mxu0 0
  %2380 = vmatprep.subr.bf16.mxu0 0
  %2381 = vmatpush1.bf16.msra.mxu0 0
  %2382 = vmatprep.subr.bf16.mxu0 0
  %2383 = vmatpush1.bf16.msra.mxu0 0
  %2384 = vmatprep.subr.bf16.mxu0 0
  %2385 = vmatpush1.bf16.msra.mxu0 0
  %2386 = vmatprep.subr.bf16.mxu0 0
  %2387 = vmatpush1.bf16.msra.mxu0 0
  %2388 = vmatprep.mubr.bf16.mxu0 0
  %2389 = vmatmul.mubr.bf16.gmra.mrb[0].mxu0 %v1916
  %v2390 = vpop.f32.mrb[0].mxu0
  %v2391 = vadd.f32 %v2351, %v2390
  %v2392 = vpop.f32.mrb[0].mxu0
  %v2393 = vpop.f32.mrb[0].mxu0
  %v2394 = vpop.f32.mrb[0].mxu0
  %2395 = vdwg.mxu0
  %v2396 = vadd.f32 %v2391, %v790
  %v2397 = vmax.f32 %v2396, 0.0
  %v2398 = vmul.f32 %v2081, %v1871
  %v2399 = vsel %vm437, %v2398, 0.0
  %2400 = vadd.xlane.f32.xlu0 %v2399
  %v2401 = vpop.xlane.xlu0 %2400
  %v2402 = vmul.f32 %v2081, %v1954
  %v2403 = vsel %vm437, %v2402, 0.0
  %2404 = vadd.xlane.f32.xlu0 %v2403
  %v2405 = vpop.xlane.xlu0 %2404
  %v2406 = vmul.f32 %v2081, %v2037
  %v2407 = vsel %vm437, %v2406, 0.0
  %2408 = vadd.xlane.f32.xlu0 %v2407
  %v2409 = vpop.xlane.xlu0 %2408
  %v2410 = vmax.f32 %v2401, %v2405
  %v2411 = vmax.f32 %v2410, %v2409
  %v2412 = vsub.f32 %v2401, %v2411
  %v2413 = vmul.f32 %v2412, 1.442695
  %v2414 = vpow.pop %v2413
  %v2415 = vadd.f32 %v2414, 0.0
  %v2416 = vmul.f32 %v2414, %v1910
  %v2417 = vadd.f32 %v2416, 0.0
  %v2418 = vsub.f32 %v2405, %v2411
  %v2419 = vmul.f32 %v2418, 1.442695
  %v2420 = vpow.pop %v2419
  %v2421 = vadd.f32 %v2415, %v2420
  %v2422 = vmul.f32 %v2420, %v1993
  %v2423 = vadd.f32 %v2417, %v2422
  %v2424 = vsub.f32 %v2409, %v2411
  %v2425 = vmul.f32 %v2424, 1.442695
  %v2426 = vpow.pop %v2425
  %v2427 = vadd.f32 %v2421, %v2426
  %v2428 = vmul.f32 %v2426, %v2076
  %v2429 = vadd.f32 %v2423, %v2428
  %v2430 = vrcp.pop %v2427
  %v2431 = vmul.f32 %v2429, %v2430
  %v2432 = vpack.c.bf16 %v2431, %v2431
  %2433 = vmatprep.subr.bf16.mxu0 0
  %2434 = vmatpush1.bf16.msra.mxu0 %v520
  %2435 = vmatprep.subr.bf16.mxu0 0
  %2436 = vmatpush1.bf16.msra.mxu0 %v521
  %2437 = vmatprep.subr.bf16.mxu0 0
  %2438 = vmatpush1.bf16.msra.mxu0 %v522
  %2439 = vmatprep.subr.bf16.mxu0 0
  %2440 = vmatpush1.bf16.msra.mxu0 %v523
  %2441 = vmatprep.subr.bf16.mxu0 0
  %2442 = vmatpush1.bf16.msra.mxu0 %v524
  %2443 = vmatprep.subr.bf16.mxu0 0
  %2444 = vmatpush1.bf16.msra.mxu0 %v525
  %2445 = vmatprep.subr.bf16.mxu0 0
  %2446 = vmatpush1.bf16.msra.mxu0 %v526
  %2447 = vmatprep.subr.bf16.mxu0 0
  %2448 = vmatpush1.bf16.msra.mxu0 %v527
  %2449 = vmatprep.subr.bf16.mxu0 0
  %2450 = vmatpush1.bf16.msra.mxu0 0
  %2451 = vmatprep.subr.bf16.mxu0 0
  %2452 = vmatpush1.bf16.msra.mxu0 0
  %2453 = vmatprep.subr.bf16.mxu0 0
  %2454 = vmatpush1.bf16.msra.mxu0 0
  %2455 = vmatprep.subr.bf16.mxu0 0
  %2456 = vmatpush1.bf16.msra.mxu0 0
  %2457 = vmatprep.subr.bf16.mxu0 0
  %2458 = vmatpush1.bf16.msra.mxu0 0
  %2459 = vmatprep.subr.bf16.mxu0 0
  %2460 = vmatpush1.bf16.msra.mxu0 0
  %2461 = vmatprep.subr.bf16.mxu0 0
  %2462 = vmatpush1.bf16.msra.mxu0 0
  %2463 = vmatprep.subr.bf16.mxu0 0
  %2464 = vmatpush1.bf16.msra.mxu0 0
  %2465 = vmatprep.mubr.bf16.mxu0 0
  %2466 = vmatmul.mubr.bf16.gmra.mrb[0].mxu0 %v2432
  %v2467 = vpop.f32.mrb[0].mxu0
  %v2468 = vadd.f32 0.0, %v2467
  %v2469 = vpop.f32.mrb[0].mxu0
  %v2470 = vpop.f32.mrb[0].mxu0
  %v2471 = vpop.f32.mrb[0].mxu0
  %2472 = vdwg.mxu0
  %v2473 = vpack.c.bf16 %v2468, %v2468
  %2474 = vmatprep.subr.bf16.mxu0 0
  %2475 = vmatpush1.bf16.msra.mxu0 %v641
  %2476 = vmatprep.subr.bf16.mxu0 0
  %2477 = vmatpush1.bf16.msra.mxu0 %v642
  %2478 = vmatprep.subr.bf16.mxu0 0
  %2479 = vmatpush1.bf16.msra.mxu0 %v643
  %2480 = vmatprep.subr.bf16.mxu0 0
  %2481 = vmatpush1.bf16.msra.mxu0 %v644
  %2482 = vmatprep.subr.bf16.mxu0 0
  %2483 = vmatpush1.bf16.msra.mxu0 %v645
  %2484 = vmatprep.subr.bf16.mxu0 0
  %2485 = vmatpush1.bf16.msra.mxu0 %v646
  %2486 = vmatprep.subr.bf16.mxu0 0
  %2487 = vmatpush1.bf16.msra.mxu0 %v647
  %2488 = vmatprep.subr.bf16.mxu0 0
  %2489 = vmatpush1.bf16.msra.mxu0 %v648
  %2490 = vmatprep.subr.bf16.mxu0 0
  %2491 = vmatpush1.bf16.msra.mxu0 0
  %2492 = vmatprep.subr.bf16.mxu0 0
  %2493 = vmatpush1.bf16.msra.mxu0 0
  %2494 = vmatprep.subr.bf16.mxu0 0
  %2495 = vmatpush1.bf16.msra.mxu0 0
  %2496 = vmatprep.subr.bf16.mxu0 0
  %2497 = vmatpush1.bf16.msra.mxu0 0
  %2498 = vmatprep.subr.bf16.mxu0 0
  %2499 = vmatpush1.bf16.msra.mxu0 0
  %2500 = vmatprep.subr.bf16.mxu0 0
  %2501 = vmatpush1.bf16.msra.mxu0 0
  %2502 = vmatprep.subr.bf16.mxu0 0
  %2503 = vmatpush1.bf16.msra.mxu0 0
  %2504 = vmatprep.subr.bf16.mxu0 0
  %2505 = vmatpush1.bf16.msra.mxu0 0
  %2506 = vmatprep.mubr.bf16.mxu0 0
  %2507 = vmatmul.mubr.bf16.gmra.mrb[0].mxu0 %v2473
  %v2508 = vpop.f32.mrb[0].mxu0
  %v2509 = vadd.f32 0.0, %v2508
  %v2510 = vpop.f32.mrb[0].mxu0
  %v2511 = vpop.f32.mrb[0].mxu0
  %v2512 = vpop.f32.mrb[0].mxu0
  %2513 = vdwg.mxu0
  %2514 = vmatprep.subr.bf16.mxu0 0
  %2515 = vmatpush1.bf16.msra.mxu0 %v729
  %2516 = vmatprep.subr.bf16.mxu0 0
  %2517 = vmatpush1.bf16.msra.mxu0 %v730
  %2518 = vmatprep.subr.bf16.mxu0 0
  %2519 = vmatpush1.bf16.msra.mxu0 %v731
  %2520 = vmatprep.subr.bf16.mxu0 0
  %2521 = vmatpush1.bf16.msra.mxu0 %v732
  %2522 = vmatprep.subr.bf16.mxu0 0
  %2523 = vmatpush1.bf16.msra.mxu0 %v733
  %2524 = vmatprep.subr.bf16.mxu0 0
  %2525 = vmatpush1.bf16.msra.mxu0 %v734
  %2526 = vmatprep.subr.bf16.mxu0 0
  %2527 = vmatpush1.bf16.msra.mxu0 %v735
  %2528 = vmatprep.subr.bf16.mxu0 0
  %2529 = vmatpush1.bf16.msra.mxu0 %v736
  %2530 = vmatprep.subr.bf16.mxu0 0
  %2531 = vmatpush1.bf16.msra.mxu0 0
  %2532 = vmatprep.subr.bf16.mxu0 0
  %2533 = vmatpush1.bf16.msra.mxu0 0
  %2534 = vmatprep.subr.bf16.mxu0 0
  %2535 = vmatpush1.bf16.msra.mxu0 0
  %2536 = vmatprep.subr.bf16.mxu0 0
  %2537 = vmatpush1.bf16.msra.mxu0 0
  %2538 = vmatprep.subr.bf16.mxu0 0
  %2539 = vmatpush1.bf16.msra.mxu0 0
  %2540 = vmatprep.subr.bf16.mxu0 0
  %2541 = vmatpush1.bf16.msra.mxu0 0
  %2542 = vmatprep.subr.bf16.mxu0 0
  %2543 = vmatpush1.bf16.msra.mxu0 0
  %2544 = vmatprep.subr.bf16.mxu0 0
  %2545 = vmatpush1.bf16.msra.mxu0 0
  %2546 = vmatprep.mubr.bf16.mxu0 0
  %2547 = vmatmul.mubr.bf16.gmra.mrb[0].mxu0 %v1999
  %v2548 = vpop.f32.mrb[0].mxu0
  %v2549 = vadd.f32 %v2509, %v2548
  %v2550 = vpop.f32.mrb[0].mxu0
  %v2551 = vpop.f32.mrb[0].mxu0
  %v2552 = vpop.f32.mrb[0].mxu0
  %2553 = vdwg.mxu0
  %v2554 = vadd.f32 %v2549, %v790
  %v2555 = vmax.f32 %v2554, 0.0
  %v2558 = vcombine.low %v2239, %v2397
  %2560 = vst [vmem:[%s6] sm:$0xff] %v2558
  %2561 = vst [vmem:[%s6 + $0x8] sm:$0xf] %v2555
  // Predicated region
  $region26: #{attention_critic_forward.5} parent=0 // pred_check
    _
  $region27: #{attention_critic_forward.5} parent=0 // pred_check_branch
    %2563 = sbr.rel (0) target = $region29
  $region28: #{attention_critic_forward.5} parent=0 // pred_region
    _
  $region29: #{attention_critic_forward.5} parent=0 // pred_fallthru
    _
  // Predicated region
  $region30: #{attention_critic_forward.5} parent=0 // pred_check
    _
  $region31: #{attention_critic_forward.5} parent=0 // pred_check_branch
    %2565 = sbr.rel (0) target = $region33
  $region32: #{attention_critic_forward.5} parent=0 // pred_region
    _
  $region33: #{attention_critic_forward.5} parent=0 // pred_fallthru
    _

</llo_original>
